<compile_context>
chip_gen: v7x
topology: tpu7x:2x2x1
jax: 0.10.0
libtpu: 0.0.40
codegen_flags: <defaults>
</compile_context>

<pallas_src>
import functools

import jax
import jax.numpy as jnp
import numpy as np
from jax.experimental import pallas as pl
from jax.experimental.pallas import tpu as pltpu

TRUE_T = 4000                    # sampling points, fixed by LayerNorm(4000)
PAD_T = 4096                     # lane-aligned pooled width (32 vregs)
CHUNK = 128                      # lane chunk processed per MXU dot
N_CHUNKS = PAD_T // CHUNK        # 32
GUARD = 128                      # zero guard left of data index 0 in the slab
SLAB_T = GUARD + PAD_T + CHUNK   # 4352: max slice end = 31*128 + 384
LN_EPS = 1e-5                    # torch.nn.LayerNorm default eps
POOLS = (5, 13, 7)
POOL_PROD = 5 * 13 * 7           # 455
N_SPLITS = 3                     # exact bf16 decomposition of f32


# --------------------------------------------------------------------------
# Banded weight construction (host-side, cached; exact integer counts)
# --------------------------------------------------------------------------
def _np_avg_pool(x, k):
    p = (k - 1) // 2
    t = x.shape[1]
    xp = np.pad(x, ((0, 0), (p, p)))
    return sum(xp[:, s:s + t] for s in range(k)) / float(k)


@functools.lru_cache(maxsize=1)
def _chunk_weights():
    """[3, 384, 128] float32 of exact small integers (<= 35).

    w[0]/w[1]/w[2] are the left-boundary / interior / right-boundary blocks
    of 455 * (AvgPool7 o AvgPool13 o AvgPool5) as a banded matrix, laid out
    so that output chunk j reads slab lanes [j*128, j*128+384) (the slab has
    a GUARD-lane zero region before data index 0).  Interior chunks are
    Toeplitz, hence identical; boundary chunks carry the exact clipped band.
    """
    ws = []
    for j in (0, N_CHUNKS // 2, N_CHUNKS - 1):
        c = np.arange(3 * CHUNK)
        i = j * CHUNK + c - GUARD            # data index fed by weight row c
        basis = np.zeros((3 * CHUNK, TRUE_T), np.float64)
        valid = (i >= 0) & (i < TRUE_T)
        basis[c[valid], i[valid]] = 1.0
        y = basis
        for k in POOLS:
            y = _np_avg_pool(y, k)
        y = np.pad(y, ((0, 0), (0, PAD_T - TRUE_T)))   # zero cols past 4000
        w = np.rint(y[:, j * CHUNK:(j + 1) * CHUNK] * POOL_PROD)
        ws.append(w)
    w = np.stack(ws)
    assert float(w.max()) <= 256.0           # exactly representable in bf16
    return w.astype(np.float32)


# --------------------------------------------------------------------------
# Kernel
# --------------------------------------------------------------------------
def preblock_kernel(x_ref, w_ref, g_ref, b_ref, o_ref, split_ref, pooled_ref):
    rb = x_ref.shape[0]
    zero_rows = N_SPLITS * rb

    # Exact 3-way bf16 decomposition of the f32 input: x == s0 + s1 + s2.
    x = x_ref[...]
    s0 = x.astype(jnp.bfloat16)
    r1 = x - s0.astype(jnp.float32)
    s1 = r1.astype(jnp.bfloat16)
    s2 = (r1 - s1.astype(jnp.float32)).astype(jnp.bfloat16)

    # Stage the splits into a guarded, lane-aligned slab (stacked on the
    # sublane axis).  Guard / pad lanes only ever hit zero weight rows; zero
    # them anyway so uninitialized scratch can never inject NaN/Inf.  The
    # aligned tail zeroing is issued before the data stores; ref stores are
    # sequenced, so lanes [GUARD+TRUE_T, SLAB_T) end up zero.
    split_ref[:, :GUARD] = jnp.zeros((zero_rows, GUARD), jnp.bfloat16)
    split_ref[:, SLAB_T - 2 * CHUNK:] = jnp.zeros((zero_rows, 2 * CHUNK),
                                                  jnp.bfloat16)
    split_ref[0 * rb:1 * rb, GUARD:GUARD + TRUE_T] = s0
    split_ref[1 * rb:2 * rb, GUARD:GUARD + TRUE_T] = s1
    split_ref[2 * rb:3 * rb, GUARD:GUARD + TRUE_T] = s2

    # Pooling cascade as 32 lane-aligned banded MXU matmuls.
    inv_scale = 1.0 / POOL_PROD
    for j in range(N_CHUNKS):
        widx = 0 if j == 0 else (2 if j == N_CHUNKS - 1 else 1)
        seg = split_ref[:, pl.ds(j * CHUNK, 3 * CHUNK)]        # [3rb, 384]
        d = jnp.dot(seg, w_ref[widx], preferred_element_type=jnp.float32)
        res = (d[0 * rb:1 * rb] + d[1 * rb:2 * rb] + d[2 * rb:3 * rb])
        pooled_ref[:, pl.ds(j * CHUNK, CHUNK)] = res * inv_scale

    # LayerNorm over the 4000 valid lanes (pad lanes of pooled are exactly 0
    # because the last chunk's weight columns past 4000 are zero).
    p = pooled_ref[...]                                        # [rb, 4096]
    lane = jax.lax.broadcasted_iota(jnp.int32, (1, PAD_T), 1)
    maskf = (lane < TRUE_T).astype(jnp.float32)
    mean = jnp.sum(p, axis=-1, keepdims=True) * (1.0 / TRUE_T)
    xc = (p - mean) * maskf          # zero tail so the variance sum is exact
    var = jnp.sum(xc * xc, axis=-1, keepdims=True) * (1.0 / TRUE_T)
    rstd = jax.lax.rsqrt(var + LN_EPS)
    y = xc * rstd * g_ref[...] + b_ref[...]
    o_ref[...] = y[:, :TRUE_T].astype(o_ref.dtype)


# --------------------------------------------------------------------------
# Wrapper
# --------------------------------------------------------------------------
def _round_up(a, m):
    return (a + m - 1) // m * m


def preblock_forward(x, gamma, beta, *, row_block=128):
    """x: [B, 1, C, 4000] float32 -> [B, 1, C, 4000] float32."""
    B, one, C, t = x.shape
    assert one == 1 and t == TRUE_T
    R = B * C
    # Row tile: multiple of 16 (bf16 sublane packing of the split slab).
    rb = max(16, min(_round_up(row_block, 16), _round_up(R, 16)))
    Rp = _round_up(R, rb)

    x2d = x.reshape(R, TRUE_T).astype(jnp.float32)
    if Rp != R:
        x2d = jnp.pad(x2d, ((0, Rp - R), (0, 0)))   # zero rows, sliced later

    w3 = jnp.asarray(_chunk_weights(), dtype=jnp.bfloat16)     # exact ints
    g2d = jnp.pad(gamma.reshape(1, TRUE_T).astype(jnp.float32),
                  ((0, 0), (0, PAD_T - TRUE_T)))
    b2d = jnp.pad(beta.reshape(1, TRUE_T).astype(jnp.float32),
                  ((0, 0), (0, PAD_T - TRUE_T)))

    matmul_flops = 2 * (N_SPLITS * Rp) * (3 * CHUNK) * CHUNK * N_CHUNKS
    ln_flops = 8 * Rp * PAD_T
    bytes_accessed = 2 * Rp * TRUE_T * 4 + int(w3.size) * 2 + 2 * PAD_T * 4

    out2d = pl.pallas_call(
        preblock_kernel,
        out_shape=jax.ShapeDtypeStruct((Rp, TRUE_T), jnp.float32),
        grid_spec=pltpu.PrefetchScalarGridSpec(
            num_scalar_prefetch=0,
            grid=(Rp // rb,),
            in_specs=[
                pl.BlockSpec((rb, TRUE_T), lambda i: (i, 0)),          # rows
                pl.BlockSpec((3, 3 * CHUNK, CHUNK), lambda i: (0, 0, 0)),  # W
                pl.BlockSpec((1, PAD_T), lambda i: (0, 0)),            # gamma
                pl.BlockSpec((1, PAD_T), lambda i: (0, 0)),            # beta
            ],
            out_specs=pl.BlockSpec((rb, TRUE_T), lambda i: (i, 0)),
            scratch_shapes=[
                pltpu.VMEM((N_SPLITS * rb, SLAB_T), jnp.bfloat16),  # split slab
                pltpu.VMEM((rb, PAD_T), jnp.float32),               # pooled slab
            ],
        ),
        compiler_params=pltpu.CompilerParams(
            dimension_semantics=("parallel",),
            # rb=128: ~8 MiB double-buffered I/O + ~5.5 MiB scratch + elementwise
            # temporaries; 48 MiB fits v5e/v6e (128 MiB) and v7x (64 MiB).
            vmem_limit_bytes=48 * 1024 * 1024,
        ),
        cost_estimate=pl.CostEstimate(
            flops=matmul_flops + ln_flops,
            transcendentals=Rp,
            bytes_accessed=bytes_accessed),
    )(x2d, w3, g2d, b2d)

    if Rp != R:
        out2d = out2d[:R]
    return out2d.reshape(B, 1, C, TRUE_T)


# ---- pure-JAX reference (for in-script correctness check) -----------------
def _ref_avg_pool(x2d, k):
    p = (k - 1) // 2
    xp = jnp.pad(x2d, ((0, 0), (p, p)))
    return sum(xp[:, i:i + x2d.shape[1]] for i in range(k)) / k


def preblock_ref(x, gamma, beta):
    B, _, C, t = x.shape
    x2d = x.reshape(B * C, t)
    for k in POOLS:
        x2d = _ref_avg_pool(x2d, k)
    mean = jnp.mean(x2d, axis=-1, keepdims=True)
    var = jnp.mean((x2d - mean) ** 2, axis=-1, keepdims=True)
    y = (x2d - mean) / jnp.sqrt(var + LN_EPS) * gamma + beta
    return y.reshape(B, 1, C, t)


if __name__ == "__main__":
    key = jax.random.PRNGKey(0)
    kx, kg, kb = jax.random.split(key, 3)
    B, C = 2, 4  # small batch / channel count; T=4000 fixed by LayerNorm(4000)
    x = jax.random.normal(kx, (B, 1, C, TRUE_T), dtype=jnp.float32)
    # LayerNorm params (use non-trivial values so the affine path is exercised).
    gamma = 1.0 + 0.1 * jax.random.normal(kg, (TRUE_T,), dtype=jnp.float32)
    beta = 0.1 * jax.random.normal(kb, (TRUE_T,), dtype=jnp.float32)

    out = preblock_forward(x, gamma, beta)
    out = jax.block_until_ready(out)

    ref = preblock_ref(x, gamma, beta)
    assert out.shape == (B, 1, C, TRUE_T)
    np.testing.assert_allclose(np.asarray(out), np.asarray(ref),
                               atol=3e-5, rtol=3e-5)
    print("KERNEL_OK")
</pallas_src>

<mosaic_0001>
module attributes {stable_mosaic.version = 11 : i64} {
  func.func @preblock_kernel(%arg0: i32, %arg1: memref<16x4000xf32, #tpu.memory_space<vmem>>, %arg2: memref<3x384x128xbf16, #tpu.memory_space<vmem>>, %arg3: memref<1x4096xf32, #tpu.memory_space<vmem>>, %arg4: memref<1x4096xf32, #tpu.memory_space<vmem>>, %arg5: memref<16x4000xf32, #tpu.memory_space<vmem>>, %arg6: memref<48x4352xbf16, #tpu.memory_space<vmem>>, %arg7: memref<16x4096xf32, #tpu.memory_space<vmem>>) attributes {dimension_semantics = [#tpu.dimension_semantics<parallel>], iteration_bounds = array<i64: 1>, scalar_prefetch = 0 : i64, scratch_operands = 2 : i64, tpu.core_type = #tpu.core_type<tc>, window_params = [{transform_indices = @transform_0, window_bounds = array<i64: 16, 4000>}, {pipeline_mode = #tpu.pipeline_mode<synchronous>, transform_indices = @transform_1, window_bounds = array<i64: 3, 384, 128>}, {pipeline_mode = #tpu.pipeline_mode<synchronous>, transform_indices = @transform_2, window_bounds = array<i64: 1, 4096>}, {pipeline_mode = #tpu.pipeline_mode<synchronous>, transform_indices = @transform_3, window_bounds = array<i64: 1, 4096>}, {transform_indices = @transform_4, window_bounds = array<i64: 16, 4000>}]} {
    %c0 = arith.constant 0 : index
    %c0_0 = arith.constant 0 : index
    %0 = vector.load %arg1[%c0, %c0_0] : memref<16x4000xf32, #tpu.memory_space<vmem>>, vector<16x4000xf32>
    %1 = arith.truncf %0 : vector<16x4000xf32> to vector<16x4000xbf16>
    %2 = arith.extf %1 : vector<16x4000xbf16> to vector<16x4000xf32>
    %3 = arith.subf %0, %2 : vector<16x4000xf32>
    %4 = arith.truncf %3 : vector<16x4000xf32> to vector<16x4000xbf16>
    %5 = arith.extf %4 : vector<16x4000xbf16> to vector<16x4000xf32>
    %6 = arith.subf %3, %5 : vector<16x4000xf32>
    %7 = arith.truncf %6 : vector<16x4000xf32> to vector<16x4000xbf16>
    %cst = arith.constant 0.000000e+00 : bf16
    %8 = vector.broadcast %cst : bf16 to vector<48x128xbf16>
    %c0_1 = arith.constant 0 : index
    %c0_2 = arith.constant 0 : index
    %9 = vector.load %arg6[%c0_1, %c0_2] : memref<48x4352xbf16, #tpu.memory_space<vmem>>, vector<48x128xbf16>
    tpu.vector_store %arg6[%c0_1, %c0_2], %8 {strides = array<i32>} : memref<48x4352xbf16, #tpu.memory_space<vmem>>, vector<48x128xbf16>,
    %cst_3 = arith.constant 0.000000e+00 : bf16
    %10 = vector.broadcast %cst_3 : bf16 to vector<48x256xbf16>
    %c0_4 = arith.constant 0 : index
    %c4096 = arith.constant 4096 : index
    %11 = vector.load %arg6[%c0_4, %c4096] : memref<48x4352xbf16, #tpu.memory_space<vmem>>, vector<48x256xbf16>
    tpu.vector_store %arg6[%c0_4, %c4096], %10 {strides = array<i32>} : memref<48x4352xbf16, #tpu.memory_space<vmem>>, vector<48x256xbf16>,
    %c0_5 = arith.constant 0 : index
    %c128 = arith.constant 128 : index
    %12 = vector.load %arg6[%c0_5, %c128] : memref<48x4352xbf16, #tpu.memory_space<vmem>>, vector<16x4000xbf16>
    tpu.vector_store %arg6[%c0_5, %c128], %1 {strides = array<i32>} : memref<48x4352xbf16, #tpu.memory_space<vmem>>, vector<16x4000xbf16>,
    %c16 = arith.constant 16 : index
    %c128_6 = arith.constant 128 : index
    %13 = vector.load %arg6[%c16, %c128_6] : memref<48x4352xbf16, #tpu.memory_space<vmem>>, vector<16x4000xbf16>
    tpu.vector_store %arg6[%c16, %c128_6], %4 {strides = array<i32>} : memref<48x4352xbf16, #tpu.memory_space<vmem>>, vector<16x4000xbf16>,
    %c32 = arith.constant 32 : index
    %c128_7 = arith.constant 128 : index
    %14 = vector.load %arg6[%c32, %c128_7] : memref<48x4352xbf16, #tpu.memory_space<vmem>>, vector<16x4000xbf16>
    tpu.vector_store %arg6[%c32, %c128_7], %7 {strides = array<i32>} : memref<48x4352xbf16, #tpu.memory_space<vmem>>, vector<16x4000xbf16>,
    %c0_8 = arith.constant 0 : index
    %c0_9 = arith.constant 0 : index
    %15 = vector.load %arg6[%c0_8, %c0_9] : memref<48x4352xbf16, #tpu.memory_space<vmem>>, vector<48x384xbf16>
    %c0_10 = arith.constant 0 : index
    %c0_11 = arith.constant 0 : index
    %c0_12 = arith.constant 0 : index
    %16 = vector.load %arg2[%c0_10, %c0_11, %c0_12] : memref<3x384x128xbf16, #tpu.memory_space<vmem>>, vector<1x384x128xbf16>
    %17 = vector.shape_cast %16 : vector<1x384x128xbf16> to vector<384x128xbf16>
    %cst_13 = arith.constant dense<0.000000e+00> : vector<48x128xf32>
    %18 = tpu.matmul %15, %17, %cst_13 {dimension_numbers = #tpu.dot_dimension_numbers<[1], [0], [0], [1], [0, 0, 1, 1], [], []>} : vector<48x384xbf16>, vector<384x128xbf16>, vector<48x128xf32> -> vector<48x128xf32>
    %19 = vector.extract_strided_slice %18 {offsets = [0, 0], sizes = [16, 128], strides = [1, 1]} : vector<48x128xf32> to vector<16x128xf32>
    %20 = vector.extract_strided_slice %18 {offsets = [16, 0], sizes = [16, 128], strides = [1, 1]} : vector<48x128xf32> to vector<16x128xf32>
    %21 = arith.addf %19, %20 : vector<16x128xf32>
    %22 = vector.extract_strided_slice %18 {offsets = [32, 0], sizes = [16, 128], strides = [1, 1]} : vector<48x128xf32> to vector<16x128xf32>
    %23 = arith.addf %21, %22 : vector<16x128xf32>
    %cst_14 = arith.constant 0.0021978023 : f32
    %24 = vector.broadcast %cst_14 : f32 to vector<16x128xf32>
    %25 = arith.mulf %23, %24 : vector<16x128xf32>
    %c0_15 = arith.constant 0 : index
    %c0_16 = arith.constant 0 : index
    %26 = vector.load %arg7[%c0_15, %c0_16] : memref<16x4096xf32, #tpu.memory_space<vmem>>, vector<16x128xf32>
    tpu.vector_store %arg7[%c0_15, %c0_16], %25 {strides = array<i32>} : memref<16x4096xf32, #tpu.memory_space<vmem>>, vector<16x128xf32>,
    %c0_17 = arith.constant 0 : index
    %c128_18 = arith.constant 128 : index
    %27 = vector.load %arg6[%c0_17, %c128_18] : memref<48x4352xbf16, #tpu.memory_space<vmem>>, vector<48x384xbf16>
    %c1 = arith.constant 1 : index
    %c0_19 = arith.constant 0 : index
    %c0_20 = arith.constant 0 : index
    %28 = vector.load %arg2[%c1, %c0_19, %c0_20] : memref<3x384x128xbf16, #tpu.memory_space<vmem>>, vector<1x384x128xbf16>
    %29 = vector.shape_cast %28 : vector<1x384x128xbf16> to vector<384x128xbf16>
    %cst_21 = arith.constant dense<0.000000e+00> : vector<48x128xf32>
    %30 = tpu.matmul %27, %29, %cst_21 {dimension_numbers = #tpu.dot_dimension_numbers<[1], [0], [0], [1], [0, 0, 1, 1], [], []>} : vector<48x384xbf16>, vector<384x128xbf16>, vector<48x128xf32> -> vector<48x128xf32>
    %31 = vector.extract_strided_slice %30 {offsets = [0, 0], sizes = [16, 128], strides = [1, 1]} : vector<48x128xf32> to vector<16x128xf32>
    %32 = vector.extract_strided_slice %30 {offsets = [16, 0], sizes = [16, 128], strides = [1, 1]} : vector<48x128xf32> to vector<16x128xf32>
    %33 = arith.addf %31, %32 : vector<16x128xf32>
    %34 = vector.extract_strided_slice %30 {offsets = [32, 0], sizes = [16, 128], strides = [1, 1]} : vector<48x128xf32> to vector<16x128xf32>
    %35 = arith.addf %33, %34 : vector<16x128xf32>
    %cst_22 = arith.constant 0.0021978023 : f32
    %36 = vector.broadcast %cst_22 : f32 to vector<16x128xf32>
    %37 = arith.mulf %35, %36 : vector<16x128xf32>
    %c0_23 = arith.constant 0 : index
    %c128_24 = arith.constant 128 : index
    %38 = vector.load %arg7[%c0_23, %c128_24] : memref<16x4096xf32, #tpu.memory_space<vmem>>, vector<16x128xf32>
    tpu.vector_store %arg7[%c0_23, %c128_24], %37 {strides = array<i32>} : memref<16x4096xf32, #tpu.memory_space<vmem>>, vector<16x128xf32>,
    %c0_25 = arith.constant 0 : index
    %c256 = arith.constant 256 : index
    %39 = vector.load %arg6[%c0_25, %c256] : memref<48x4352xbf16, #tpu.memory_space<vmem>>, vector<48x384xbf16>
    %c1_26 = arith.constant 1 : index
    %c0_27 = arith.constant 0 : index
    %c0_28 = arith.constant 0 : index
    %40 = vector.load %arg2[%c1_26, %c0_27, %c0_28] : memref<3x384x128xbf16, #tpu.memory_space<vmem>>, vector<1x384x128xbf16>
    %41 = vector.shape_cast %40 : vector<1x384x128xbf16> to vector<384x128xbf16>
    %cst_29 = arith.constant dense<0.000000e+00> : vector<48x128xf32>
    %42 = tpu.matmul %39, %41, %cst_29 {dimension_numbers = #tpu.dot_dimension_numbers<[1], [0], [0], [1], [0, 0, 1, 1], [], []>} : vector<48x384xbf16>, vector<384x128xbf16>, vector<48x128xf32> -> vector<48x128xf32>
    %43 = vector.extract_strided_slice %42 {offsets = [0, 0], sizes = [16, 128], strides = [1, 1]} : vector<48x128xf32> to vector<16x128xf32>
    %44 = vector.extract_strided_slice %42 {offsets = [16, 0], sizes = [16, 128], strides = [1, 1]} : vector<48x128xf32> to vector<16x128xf32>
    %45 = arith.addf %43, %44 : vector<16x128xf32>
    %46 = vector.extract_strided_slice %42 {offsets = [32, 0], sizes = [16, 128], strides = [1, 1]} : vector<48x128xf32> to vector<16x128xf32>
    %47 = arith.addf %45, %46 : vector<16x128xf32>
    %cst_30 = arith.constant 0.0021978023 : f32
    %48 = vector.broadcast %cst_30 : f32 to vector<16x128xf32>
    %49 = arith.mulf %47, %48 : vector<16x128xf32>
    %c0_31 = arith.constant 0 : index
    %c256_32 = arith.constant 256 : index
    %50 = vector.load %arg7[%c0_31, %c256_32] : memref<16x4096xf32, #tpu.memory_space<vmem>>, vector<16x128xf32>
    tpu.vector_store %arg7[%c0_31, %c256_32], %49 {strides = array<i32>} : memref<16x4096xf32, #tpu.memory_space<vmem>>, vector<16x128xf32>,
    %c0_33 = arith.constant 0 : index
    %c384 = arith.constant 384 : index
    %51 = vector.load %arg6[%c0_33, %c384] : memref<48x4352xbf16, #tpu.memory_space<vmem>>, vector<48x384xbf16>
    %c1_34 = arith.constant 1 : index
    %c0_35 = arith.constant 0 : index
    %c0_36 = arith.constant 0 : index
    %52 = vector.load %arg2[%c1_34, %c0_35, %c0_36] : memref<3x384x128xbf16, #tpu.memory_space<vmem>>, vector<1x384x128xbf16>
    %53 = vector.shape_cast %52 : vector<1x384x128xbf16> to vector<384x128xbf16>
    %cst_37 = arith.constant dense<0.000000e+00> : vector<48x128xf32>
    %54 = tpu.matmul %51, %53, %cst_37 {dimension_numbers = #tpu.dot_dimension_numbers<[1], [0], [0], [1], [0, 0, 1, 1], [], []>} : vector<48x384xbf16>, vector<384x128xbf16>, vector<48x128xf32> -> vector<48x128xf32>
    %55 = vector.extract_strided_slice %54 {offsets = [0, 0], sizes = [16, 128], strides = [1, 1]} : vector<48x128xf32> to vector<16x128xf32>
    %56 = vector.extract_strided_slice %54 {offsets = [16, 0], sizes = [16, 128], strides = [1, 1]} : vector<48x128xf32> to vector<16x128xf32>
    %57 = arith.addf %55, %56 : vector<16x128xf32>
    %58 = vector.extract_strided_slice %54 {offsets = [32, 0], sizes = [16, 128], strides = [1, 1]} : vector<48x128xf32> to vector<16x128xf32>
    %59 = arith.addf %57, %58 : vector<16x128xf32>
    %cst_38 = arith.constant 0.0021978023 : f32
    %60 = vector.broadcast %cst_38 : f32 to vector<16x128xf32>
    %61 = arith.mulf %59, %60 : vector<16x128xf32>
    %c0_39 = arith.constant 0 : index
    %c384_40 = arith.constant 384 : index
    %62 = vector.load %arg7[%c0_39, %c384_40] : memref<16x4096xf32, #tpu.memory_space<vmem>>, vector<16x128xf32>
    tpu.vector_store %arg7[%c0_39, %c384_40], %61 {strides = array<i32>} : memref<16x4096xf32, #tpu.memory_space<vmem>>, vector<16x128xf32>,
    %c0_41 = arith.constant 0 : index
    %c512 = arith.constant 512 : index
    %63 = vector.load %arg6[%c0_41, %c512] : memref<48x4352xbf16, #tpu.memory_space<vmem>>, vector<48x384xbf16>
    %c1_42 = arith.constant 1 : index
    %c0_43 = arith.constant 0 : index
    %c0_44 = arith.constant 0 : index
    %64 = vector.load %arg2[%c1_42, %c0_43, %c0_44] : memref<3x384x128xbf16, #tpu.memory_space<vmem>>, vector<1x384x128xbf16>
    %65 = vector.shape_cast %64 : vector<1x384x128xbf16> to vector<384x128xbf16>
    %cst_45 = arith.constant dense<0.000000e+00> : vector<48x128xf32>
    %66 = tpu.matmul %63, %65, %cst_45 {dimension_numbers = #tpu.dot_dimension_numbers<[1], [0], [0], [1], [0, 0, 1, 1], [], []>} : vector<48x384xbf16>, vector<384x128xbf16>, vector<48x128xf32> -> vector<48x128xf32>
    %67 = vector.extract_strided_slice %66 {offsets = [0, 0], sizes = [16, 128], strides = [1, 1]} : vector<48x128xf32> to vector<16x128xf32>
    %68 = vector.extract_strided_slice %66 {offsets = [16, 0], sizes = [16, 128], strides = [1, 1]} : vector<48x128xf32> to vector<16x128xf32>
    %69 = arith.addf %67, %68 : vector<16x128xf32>
    %70 = vector.extract_strided_slice %66 {offsets = [32, 0], sizes = [16, 128], strides = [1, 1]} : vector<48x128xf32> to vector<16x128xf32>
    %71 = arith.addf %69, %70 : vector<16x128xf32>
    %cst_46 = arith.constant 0.0021978023 : f32
    %72 = vector.broadcast %cst_46 : f32 to vector<16x128xf32>
    %73 = arith.mulf %71, %72 : vector<16x128xf32>
    %c0_47 = arith.constant 0 : index
    %c512_48 = arith.constant 512 : index
    %74 = vector.load %arg7[%c0_47, %c512_48] : memref<16x4096xf32, #tpu.memory_space<vmem>>, vector<16x128xf32>
    tpu.vector_store %arg7[%c0_47, %c512_48], %73 {strides = array<i32>} : memref<16x4096xf32, #tpu.memory_space<vmem>>, vector<16x128xf32>,
    %c0_49 = arith.constant 0 : index
    %c640 = arith.constant 640 : index
    %75 = vector.load %arg6[%c0_49, %c640] : memref<48x4352xbf16, #tpu.memory_space<vmem>>, vector<48x384xbf16>
    %c1_50 = arith.constant 1 : index
    %c0_51 = arith.constant 0 : index
    %c0_52 = arith.constant 0 : index
    %76 = vector.load %arg2[%c1_50, %c0_51, %c0_52] : memref<3x384x128xbf16, #tpu.memory_space<vmem>>, vector<1x384x128xbf16>
    %77 = vector.shape_cast %76 : vector<1x384x128xbf16> to vector<384x128xbf16>
    %cst_53 = arith.constant dense<0.000000e+00> : vector<48x128xf32>
    %78 = tpu.matmul %75, %77, %cst_53 {dimension_numbers = #tpu.dot_dimension_numbers<[1], [0], [0], [1], [0, 0, 1, 1], [], []>} : vector<48x384xbf16>, vector<384x128xbf16>, vector<48x128xf32> -> vector<48x128xf32>
    %79 = vector.extract_strided_slice %78 {offsets = [0, 0], sizes = [16, 128], strides = [1, 1]} : vector<48x128xf32> to vector<16x128xf32>
    %80 = vector.extract_strided_slice %78 {offsets = [16, 0], sizes = [16, 128], strides = [1, 1]} : vector<48x128xf32> to vector<16x128xf32>
    %81 = arith.addf %79, %80 : vector<16x128xf32>
    %82 = vector.extract_strided_slice %78 {offsets = [32, 0], sizes = [16, 128], strides = [1, 1]} : vector<48x128xf32> to vector<16x128xf32>
    %83 = arith.addf %81, %82 : vector<16x128xf32>
    %cst_54 = arith.constant 0.0021978023 : f32
    %84 = vector.broadcast %cst_54 : f32 to vector<16x128xf32>
    %85 = arith.mulf %83, %84 : vector<16x128xf32>
    %c0_55 = arith.constant 0 : index
    %c640_56 = arith.constant 640 : index
    %86 = vector.load %arg7[%c0_55, %c640_56] : memref<16x4096xf32, #tpu.memory_space<vmem>>, vector<16x128xf32>
    tpu.vector_store %arg7[%c0_55, %c640_56], %85 {strides = array<i32>} : memref<16x4096xf32, #tpu.memory_space<vmem>>, vector<16x128xf32>,
    %c0_57 = arith.constant 0 : index
    %c768 = arith.constant 768 : index
    %87 = vector.load %arg6[%c0_57, %c768] : memref<48x4352xbf16, #tpu.memory_space<vmem>>, vector<48x384xbf16>
    %c1_58 = arith.constant 1 : index
    %c0_59 = arith.constant 0 : index
    %c0_60 = arith.constant 0 : index
    %88 = vector.load %arg2[%c1_58, %c0_59, %c0_60] : memref<3x384x128xbf16, #tpu.memory_space<vmem>>, vector<1x384x128xbf16>
    %89 = vector.shape_cast %88 : vector<1x384x128xbf16> to vector<384x128xbf16>
    %cst_61 = arith.constant dense<0.000000e+00> : vector<48x128xf32>
    %90 = tpu.matmul %87, %89, %cst_61 {dimension_numbers = #tpu.dot_dimension_numbers<[1], [0], [0], [1], [0, 0, 1, 1], [], []>} : vector<48x384xbf16>, vector<384x128xbf16>, vector<48x128xf32> -> vector<48x128xf32>
    %91 = vector.extract_strided_slice %90 {offsets = [0, 0], sizes = [16, 128], strides = [1, 1]} : vector<48x128xf32> to vector<16x128xf32>
    %92 = vector.extract_strided_slice %90 {offsets = [16, 0], sizes = [16, 128], strides = [1, 1]} : vector<48x128xf32> to vector<16x128xf32>
    %93 = arith.addf %91, %92 : vector<16x128xf32>
    %94 = vector.extract_strided_slice %90 {offsets = [32, 0], sizes = [16, 128], strides = [1, 1]} : vector<48x128xf32> to vector<16x128xf32>
    %95 = arith.addf %93, %94 : vector<16x128xf32>
    %cst_62 = arith.constant 0.0021978023 : f32
    %96 = vector.broadcast %cst_62 : f32 to vector<16x128xf32>
    %97 = arith.mulf %95, %96 : vector<16x128xf32>
    %c0_63 = arith.constant 0 : index
    %c768_64 = arith.constant 768 : index
    %98 = vector.load %arg7[%c0_63, %c768_64] : memref<16x4096xf32, #tpu.memory_space<vmem>>, vector<16x128xf32>
    tpu.vector_store %arg7[%c0_63, %c768_64], %97 {strides = array<i32>} : memref<16x4096xf32, #tpu.memory_space<vmem>>, vector<16x128xf32>,
    %c0_65 = arith.constant 0 : index
    %c896 = arith.constant 896 : index
    %99 = vector.load %arg6[%c0_65, %c896] : memref<48x4352xbf16, #tpu.memory_space<vmem>>, vector<48x384xbf16>
    %c1_66 = arith.constant 1 : index
    %c0_67 = arith.constant 0 : index
    %c0_68 = arith.constant 0 : index
    %100 = vector.load %arg2[%c1_66, %c0_67, %c0_68] : memref<3x384x128xbf16, #tpu.memory_space<vmem>>, vector<1x384x128xbf16>
    %101 = vector.shape_cast %100 : vector<1x384x128xbf16> to vector<384x128xbf16>
    %cst_69 = arith.constant dense<0.000000e+00> : vector<48x128xf32>
    %102 = tpu.matmul %99, %101, %cst_69 {dimension_numbers = #tpu.dot_dimension_numbers<[1], [0], [0], [1], [0, 0, 1, 1], [], []>} : vector<48x384xbf16>, vector<384x128xbf16>, vector<48x128xf32> -> vector<48x128xf32>
    %103 = vector.extract_strided_slice %102 {offsets = [0, 0], sizes = [16, 128], strides = [1, 1]} : vector<48x128xf32> to vector<16x128xf32>
    %104 = vector.extract_strided_slice %102 {offsets = [16, 0], sizes = [16, 128], strides = [1, 1]} : vector<48x128xf32> to vector<16x128xf32>
    %105 = arith.addf %103, %104 : vector<16x128xf32>
    %106 = vector.extract_strided_slice %102 {offsets = [32, 0], sizes = [16, 128], strides = [1, 1]} : vector<48x128xf32> to vector<16x128xf32>
    %107 = arith.addf %105, %106 : vector<16x128xf32>
    %cst_70 = arith.constant 0.0021978023 : f32
    %108 = vector.broadcast %cst_70 : f32 to vector<16x128xf32>
    %109 = arith.mulf %107, %108 : vector<16x128xf32>
    %c0_71 = arith.constant 0 : index
    %c896_72 = arith.constant 896 : index
    %110 = vector.load %arg7[%c0_71, %c896_72] : memref<16x4096xf32, #tpu.memory_space<vmem>>, vector<16x128xf32>
    tpu.vector_store %arg7[%c0_71, %c896_72], %109 {strides = array<i32>} : memref<16x4096xf32, #tpu.memory_space<vmem>>, vector<16x128xf32>,
    %c0_73 = arith.constant 0 : index
    %c1024 = arith.constant 1024 : index
    %111 = vector.load %arg6[%c0_73, %c1024] : memref<48x4352xbf16, #tpu.memory_space<vmem>>, vector<48x384xbf16>
    %c1_74 = arith.constant 1 : index
    %c0_75 = arith.constant 0 : index
    %c0_76 = arith.constant 0 : index
    %112 = vector.load %arg2[%c1_74, %c0_75, %c0_76] : memref<3x384x128xbf16, #tpu.memory_space<vmem>>, vector<1x384x128xbf16>
    %113 = vector.shape_cast %112 : vector<1x384x128xbf16> to vector<384x128xbf16>
    %cst_77 = arith.constant dense<0.000000e+00> : vector<48x128xf32>
    %114 = tpu.matmul %111, %113, %cst_77 {dimension_numbers = #tpu.dot_dimension_numbers<[1], [0], [0], [1], [0, 0, 1, 1], [], []>} : vector<48x384xbf16>, vector<384x128xbf16>, vector<48x128xf32> -> vector<48x128xf32>
    %115 = vector.extract_strided_slice %114 {offsets = [0, 0], sizes = [16, 128], strides = [1, 1]} : vector<48x128xf32> to vector<16x128xf32>
    %116 = vector.extract_strided_slice %114 {offsets = [16, 0], sizes = [16, 128], strides = [1, 1]} : vector<48x128xf32> to vector<16x128xf32>
    %117 = arith.addf %115, %116 : vector<16x128xf32>
    %118 = vector.extract_strided_slice %114 {offsets = [32, 0], sizes = [16, 128], strides = [1, 1]} : vector<48x128xf32> to vector<16x128xf32>
    %119 = arith.addf %117, %118 : vector<16x128xf32>
    %cst_78 = arith.constant 0.0021978023 : f32
    %120 = vector.broadcast %cst_78 : f32 to vector<16x128xf32>
    %121 = arith.mulf %119, %120 : vector<16x128xf32>
    %c0_79 = arith.constant 0 : index
    %c1024_80 = arith.constant 1024 : index
    %122 = vector.load %arg7[%c0_79, %c1024_80] : memref<16x4096xf32, #tpu.memory_space<vmem>>, vector<16x128xf32>
    tpu.vector_store %arg7[%c0_79, %c1024_80], %121 {strides = array<i32>} : memref<16x4096xf32, #tpu.memory_space<vmem>>, vector<16x128xf32>,
    %c0_81 = arith.constant 0 : index
    %c1152 = arith.constant 1152 : index
    %123 = vector.load %arg6[%c0_81, %c1152] : memref<48x4352xbf16, #tpu.memory_space<vmem>>, vector<48x384xbf16>
    %c1_82 = arith.constant 1 : index
    %c0_83 = arith.constant 0 : index
    %c0_84 = arith.constant 0 : index
    %124 = vector.load %arg2[%c1_82, %c0_83, %c0_84] : memref<3x384x128xbf16, #tpu.memory_space<vmem>>, vector<1x384x128xbf16>
    %125 = vector.shape_cast %124 : vector<1x384x128xbf16> to vector<384x128xbf16>
    %cst_85 = arith.constant dense<0.000000e+00> : vector<48x128xf32>
    %126 = tpu.matmul %123, %125, %cst_85 {dimension_numbers = #tpu.dot_dimension_numbers<[1], [0], [0], [1], [0, 0, 1, 1], [], []>} : vector<48x384xbf16>, vector<384x128xbf16>, vector<48x128xf32> -> vector<48x128xf32>
    %127 = vector.extract_strided_slice %126 {offsets = [0, 0], sizes = [16, 128], strides = [1, 1]} : vector<48x128xf32> to vector<16x128xf32>
    %128 = vector.extract_strided_slice %126 {offsets = [16, 0], sizes = [16, 128], strides = [1, 1]} : vector<48x128xf32> to vector<16x128xf32>
    %129 = arith.addf %127, %128 : vector<16x128xf32>
    %130 = vector.extract_strided_slice %126 {offsets = [32, 0], sizes = [16, 128], strides = [1, 1]} : vector<48x128xf32> to vector<16x128xf32>
    %131 = arith.addf %129, %130 : vector<16x128xf32>
    %cst_86 = arith.constant 0.0021978023 : f32
    %132 = vector.broadcast %cst_86 : f32 to vector<16x128xf32>
    %133 = arith.mulf %131, %132 : vector<16x128xf32>
    %c0_87 = arith.constant 0 : index
    %c1152_88 = arith.constant 1152 : index
    %134 = vector.load %arg7[%c0_87, %c1152_88] : memref<16x4096xf32, #tpu.memory_space<vmem>>, vector<16x128xf32>
    tpu.vector_store %arg7[%c0_87, %c1152_88], %133 {strides = array<i32>} : memref<16x4096xf32, #tpu.memory_space<vmem>>, vector<16x128xf32>,
    %c0_89 = arith.constant 0 : index
    %c1280 = arith.constant 1280 : index
    %135 = vector.load %arg6[%c0_89, %c1280] : memref<48x4352xbf16, #tpu.memory_space<vmem>>, vector<48x384xbf16>
    %c1_90 = arith.constant 1 : index
    %c0_91 = arith.constant 0 : index
    %c0_92 = arith.constant 0 : index
    %136 = vector.load %arg2[%c1_90, %c0_91, %c0_92] : memref<3x384x128xbf16, #tpu.memory_space<vmem>>, vector<1x384x128xbf16>
    %137 = vector.shape_cast %136 : vector<1x384x128xbf16> to vector<384x128xbf16>
    %cst_93 = arith.constant dense<0.000000e+00> : vector<48x128xf32>
    %138 = tpu.matmul %135, %137, %cst_93 {dimension_numbers = #tpu.dot_dimension_numbers<[1], [0], [0], [1], [0, 0, 1, 1], [], []>} : vector<48x384xbf16>, vector<384x128xbf16>, vector<48x128xf32> -> vector<48x128xf32>
    %139 = vector.extract_strided_slice %138 {offsets = [0, 0], sizes = [16, 128], strides = [1, 1]} : vector<48x128xf32> to vector<16x128xf32>
    %140 = vector.extract_strided_slice %138 {offsets = [16, 0], sizes = [16, 128], strides = [1, 1]} : vector<48x128xf32> to vector<16x128xf32>
    %141 = arith.addf %139, %140 : vector<16x128xf32>
    %142 = vector.extract_strided_slice %138 {offsets = [32, 0], sizes = [16, 128], strides = [1, 1]} : vector<48x128xf32> to vector<16x128xf32>
    %143 = arith.addf %141, %142 : vector<16x128xf32>
    %cst_94 = arith.constant 0.0021978023 : f32
    %144 = vector.broadcast %cst_94 : f32 to vector<16x128xf32>
    %145 = arith.mulf %143, %144 : vector<16x128xf32>
    %c0_95 = arith.constant 0 : index
    %c1280_96 = arith.constant 1280 : index
    %146 = vector.load %arg7[%c0_95, %c1280_96] : memref<16x4096xf32, #tpu.memory_space<vmem>>, vector<16x128xf32>
    tpu.vector_store %arg7[%c0_95, %c1280_96], %145 {strides = array<i32>} : memref<16x4096xf32, #tpu.memory_space<vmem>>, vector<16x128xf32>,
    %c0_97 = arith.constant 0 : index
    %c1408 = arith.constant 1408 : index
    %147 = vector.load %arg6[%c0_97, %c1408] : memref<48x4352xbf16, #tpu.memory_space<vmem>>, vector<48x384xbf16>
    %c1_98 = arith.constant 1 : index
    %c0_99 = arith.constant 0 : index
    %c0_100 = arith.constant 0 : index
    %148 = vector.load %arg2[%c1_98, %c0_99, %c0_100] : memref<3x384x128xbf16, #tpu.memory_space<vmem>>, vector<1x384x128xbf16>
    %149 = vector.shape_cast %148 : vector<1x384x128xbf16> to vector<384x128xbf16>
    %cst_101 = arith.constant dense<0.000000e+00> : vector<48x128xf32>
    %150 = tpu.matmul %147, %149, %cst_101 {dimension_numbers = #tpu.dot_dimension_numbers<[1], [0], [0], [1], [0, 0, 1, 1], [], []>} : vector<48x384xbf16>, vector<384x128xbf16>, vector<48x128xf32> -> vector<48x128xf32>
    %151 = vector.extract_strided_slice %150 {offsets = [0, 0], sizes = [16, 128], strides = [1, 1]} : vector<48x128xf32> to vector<16x128xf32>
    %152 = vector.extract_strided_slice %150 {offsets = [16, 0], sizes = [16, 128], strides = [1, 1]} : vector<48x128xf32> to vector<16x128xf32>
    %153 = arith.addf %151, %152 : vector<16x128xf32>
    %154 = vector.extract_strided_slice %150 {offsets = [32, 0], sizes = [16, 128], strides = [1, 1]} : vector<48x128xf32> to vector<16x128xf32>
    %155 = arith.addf %153, %154 : vector<16x128xf32>
    %cst_102 = arith.constant 0.0021978023 : f32
    %156 = vector.broadcast %cst_102 : f32 to vector<16x128xf32>
    %157 = arith.mulf %155, %156 : vector<16x128xf32>
    %c0_103 = arith.constant 0 : index
    %c1408_104 = arith.constant 1408 : index
    %158 = vector.load %arg7[%c0_103, %c1408_104] : memref<16x4096xf32, #tpu.memory_space<vmem>>, vector<16x128xf32>
    tpu.vector_store %arg7[%c0_103, %c1408_104], %157 {strides = array<i32>} : memref<16x4096xf32, #tpu.memory_space<vmem>>, vector<16x128xf32>,
    %c0_105 = arith.constant 0 : index
    %c1536 = arith.constant 1536 : index
    %159 = vector.load %arg6[%c0_105, %c1536] : memref<48x4352xbf16, #tpu.memory_space<vmem>>, vector<48x384xbf16>
    %c1_106 = arith.constant 1 : index
    %c0_107 = arith.constant 0 : index
    %c0_108 = arith.constant 0 : index
    %160 = vector.load %arg2[%c1_106, %c0_107, %c0_108] : memref<3x384x128xbf16, #tpu.memory_space<vmem>>, vector<1x384x128xbf16>
    %161 = vector.shape_cast %160 : vector<1x384x128xbf16> to vector<384x128xbf16>
    %cst_109 = arith.constant dense<0.000000e+00> : vector<48x128xf32>
    %162 = tpu.matmul %159, %161, %cst_109 {dimension_numbers = #tpu.dot_dimension_numbers<[1], [0], [0], [1], [0, 0, 1, 1], [], []>} : vector<48x384xbf16>, vector<384x128xbf16>, vector<48x128xf32> -> vector<48x128xf32>
    %163 = vector.extract_strided_slice %162 {offsets = [0, 0], sizes = [16, 128], strides = [1, 1]} : vector<48x128xf32> to vector<16x128xf32>
    %164 = vector.extract_strided_slice %162 {offsets = [16, 0], sizes = [16, 128], strides = [1, 1]} : vector<48x128xf32> to vector<16x128xf32>
    %165 = arith.addf %163, %164 : vector<16x128xf32>
    %166 = vector.extract_strided_slice %162 {offsets = [32, 0], sizes = [16, 128], strides = [1, 1]} : vector<48x128xf32> to vector<16x128xf32>
    %167 = arith.addf %165, %166 : vector<16x128xf32>
    %cst_110 = arith.constant 0.0021978023 : f32
    %168 = vector.broadcast %cst_110 : f32 to vector<16x128xf32>
    %169 = arith.mulf %167, %168 : vector<16x128xf32>
    %c0_111 = arith.constant 0 : index
    %c1536_112 = arith.constant 1536 : index
    %170 = vector.load %arg7[%c0_111, %c1536_112] : memref<16x4096xf32, #tpu.memory_space<vmem>>, vector<16x128xf32>
    tpu.vector_store %arg7[%c0_111, %c1536_112], %169 {strides = array<i32>} : memref<16x4096xf32, #tpu.memory_space<vmem>>, vector<16x128xf32>,
    %c0_113 = arith.constant 0 : index
    %c1664 = arith.constant 1664 : index
    %171 = vector.load %arg6[%c0_113, %c1664] : memref<48x4352xbf16, #tpu.memory_space<vmem>>, vector<48x384xbf16>
    %c1_114 = arith.constant 1 : index
    %c0_115 = arith.constant 0 : index
    %c0_116 = arith.constant 0 : index
    %172 = vector.load %arg2[%c1_114, %c0_115, %c0_116] : memref<3x384x128xbf16, #tpu.memory_space<vmem>>, vector<1x384x128xbf16>
    %173 = vector.shape_cast %172 : vector<1x384x128xbf16> to vector<384x128xbf16>
    %cst_117 = arith.constant dense<0.000000e+00> : vector<48x128xf32>
    %174 = tpu.matmul %171, %173, %cst_117 {dimension_numbers = #tpu.dot_dimension_numbers<[1], [0], [0], [1], [0, 0, 1, 1], [], []>} : vector<48x384xbf16>, vector<384x128xbf16>, vector<48x128xf32> -> vector<48x128xf32>
    %175 = vector.extract_strided_slice %174 {offsets = [0, 0], sizes = [16, 128], strides = [1, 1]} : vector<48x128xf32> to vector<16x128xf32>
    %176 = vector.extract_strided_slice %174 {offsets = [16, 0], sizes = [16, 128], strides = [1, 1]} : vector<48x128xf32> to vector<16x128xf32>
    %177 = arith.addf %175, %176 : vector<16x128xf32>
    %178 = vector.extract_strided_slice %174 {offsets = [32, 0], sizes = [16, 128], strides = [1, 1]} : vector<48x128xf32> to vector<16x128xf32>
    %179 = arith.addf %177, %178 : vector<16x128xf32>
    %cst_118 = arith.constant 0.0021978023 : f32
    %180 = vector.broadcast %cst_118 : f32 to vector<16x128xf32>
    %181 = arith.mulf %179, %180 : vector<16x128xf32>
    %c0_119 = arith.constant 0 : index
    %c1664_120 = arith.constant 1664 : index
    %182 = vector.load %arg7[%c0_119, %c1664_120] : memref<16x4096xf32, #tpu.memory_space<vmem>>, vector<16x128xf32>
    tpu.vector_store %arg7[%c0_119, %c1664_120], %181 {strides = array<i32>} : memref<16x4096xf32, #tpu.memory_space<vmem>>, vector<16x128xf32>,
    %c0_121 = arith.constant 0 : index
    %c1792 = arith.constant 1792 : index
    %183 = vector.load %arg6[%c0_121, %c1792] : memref<48x4352xbf16, #tpu.memory_space<vmem>>, vector<48x384xbf16>
    %c1_122 = arith.constant 1 : index
    %c0_123 = arith.constant 0 : index
    %c0_124 = arith.constant 0 : index
    %184 = vector.load %arg2[%c1_122, %c0_123, %c0_124] : memref<3x384x128xbf16, #tpu.memory_space<vmem>>, vector<1x384x128xbf16>
    %185 = vector.shape_cast %184 : vector<1x384x128xbf16> to vector<384x128xbf16>
    %cst_125 = arith.constant dense<0.000000e+00> : vector<48x128xf32>
    %186 = tpu.matmul %183, %185, %cst_125 {dimension_numbers = #tpu.dot_dimension_numbers<[1], [0], [0], [1], [0, 0, 1, 1], [], []>} : vector<48x384xbf16>, vector<384x128xbf16>, vector<48x128xf32> -> vector<48x128xf32>
    %187 = vector.extract_strided_slice %186 {offsets = [0, 0], sizes = [16, 128], strides = [1, 1]} : vector<48x128xf32> to vector<16x128xf32>
    %188 = vector.extract_strided_slice %186 {offsets = [16, 0], sizes = [16, 128], strides = [1, 1]} : vector<48x128xf32> to vector<16x128xf32>
    %189 = arith.addf %187, %188 : vector<16x128xf32>
    %190 = vector.extract_strided_slice %186 {offsets = [32, 0], sizes = [16, 128], strides = [1, 1]} : vector<48x128xf32> to vector<16x128xf32>
    %191 = arith.addf %189, %190 : vector<16x128xf32>
    %cst_126 = arith.constant 0.0021978023 : f32
    %192 = vector.broadcast %cst_126 : f32 to vector<16x128xf32>
    %193 = arith.mulf %191, %192 : vector<16x128xf32>
    %c0_127 = arith.constant 0 : index
    %c1792_128 = arith.constant 1792 : index
    %194 = vector.load %arg7[%c0_127, %c1792_128] : memref<16x4096xf32, #tpu.memory_space<vmem>>, vector<16x128xf32>
    tpu.vector_store %arg7[%c0_127, %c1792_128], %193 {strides = array<i32>} : memref<16x4096xf32, #tpu.memory_space<vmem>>, vector<16x128xf32>,
    %c0_129 = arith.constant 0 : index
    %c1920 = arith.constant 1920 : index
    %195 = vector.load %arg6[%c0_129, %c1920] : memref<48x4352xbf16, #tpu.memory_space<vmem>>, vector<48x384xbf16>
    %c1_130 = arith.constant 1 : index
    %c0_131 = arith.constant 0 : index
    %c0_132 = arith.constant 0 : index
    %196 = vector.load %arg2[%c1_130, %c0_131, %c0_132] : memref<3x384x128xbf16, #tpu.memory_space<vmem>>, vector<1x384x128xbf16>
    %197 = vector.shape_cast %196 : vector<1x384x128xbf16> to vector<384x128xbf16>
    %cst_133 = arith.constant dense<0.000000e+00> : vector<48x128xf32>
    %198 = tpu.matmul %195, %197, %cst_133 {dimension_numbers = #tpu.dot_dimension_numbers<[1], [0], [0], [1], [0, 0, 1, 1], [], []>} : vector<48x384xbf16>, vector<384x128xbf16>, vector<48x128xf32> -> vector<48x128xf32>
    %199 = vector.extract_strided_slice %198 {offsets = [0, 0], sizes = [16, 128], strides = [1, 1]} : vector<48x128xf32> to vector<16x128xf32>
    %200 = vector.extract_strided_slice %198 {offsets = [16, 0], sizes = [16, 128], strides = [1, 1]} : vector<48x128xf32> to vector<16x128xf32>
    %201 = arith.addf %199, %200 : vector<16x128xf32>
    %202 = vector.extract_strided_slice %198 {offsets = [32, 0], sizes = [16, 128], strides = [1, 1]} : vector<48x128xf32> to vector<16x128xf32>
    %203 = arith.addf %201, %202 : vector<16x128xf32>
    %cst_134 = arith.constant 0.0021978023 : f32
    %204 = vector.broadcast %cst_134 : f32 to vector<16x128xf32>
    %205 = arith.mulf %203, %204 : vector<16x128xf32>
    %c0_135 = arith.constant 0 : index
    %c1920_136 = arith.constant 1920 : index
    %206 = vector.load %arg7[%c0_135, %c1920_136] : memref<16x4096xf32, #tpu.memory_space<vmem>>, vector<16x128xf32>
    tpu.vector_store %arg7[%c0_135, %c1920_136], %205 {strides = array<i32>} : memref<16x4096xf32, #tpu.memory_space<vmem>>, vector<16x128xf32>,
    %c0_137 = arith.constant 0 : index
    %c2048 = arith.constant 2048 : index
    %207 = vector.load %arg6[%c0_137, %c2048] : memref<48x4352xbf16, #tpu.memory_space<vmem>>, vector<48x384xbf16>
    %c1_138 = arith.constant 1 : index
    %c0_139 = arith.constant 0 : index
    %c0_140 = arith.constant 0 : index
    %208 = vector.load %arg2[%c1_138, %c0_139, %c0_140] : memref<3x384x128xbf16, #tpu.memory_space<vmem>>, vector<1x384x128xbf16>
    %209 = vector.shape_cast %208 : vector<1x384x128xbf16> to vector<384x128xbf16>
    %cst_141 = arith.constant dense<0.000000e+00> : vector<48x128xf32>
    %210 = tpu.matmul %207, %209, %cst_141 {dimension_numbers = #tpu.dot_dimension_numbers<[1], [0], [0], [1], [0, 0, 1, 1], [], []>} : vector<48x384xbf16>, vector<384x128xbf16>, vector<48x128xf32> -> vector<48x128xf32>
    %211 = vector.extract_strided_slice %210 {offsets = [0, 0], sizes = [16, 128], strides = [1, 1]} : vector<48x128xf32> to vector<16x128xf32>
    %212 = vector.extract_strided_slice %210 {offsets = [16, 0], sizes = [16, 128], strides = [1, 1]} : vector<48x128xf32> to vector<16x128xf32>
    %213 = arith.addf %211, %212 : vector<16x128xf32>
    %214 = vector.extract_strided_slice %210 {offsets = [32, 0], sizes = [16, 128], strides = [1, 1]} : vector<48x128xf32> to vector<16x128xf32>
    %215 = arith.addf %213, %214 : vector<16x128xf32>
    %cst_142 = arith.constant 0.0021978023 : f32
    %216 = vector.broadcast %cst_142 : f32 to vector<16x128xf32>
    %217 = arith.mulf %215, %216 : vector<16x128xf32>
    %c0_143 = arith.constant 0 : index
    %c2048_144 = arith.constant 2048 : index
    %218 = vector.load %arg7[%c0_143, %c2048_144] : memref<16x4096xf32, #tpu.memory_space<vmem>>, vector<16x128xf32>
    tpu.vector_store %arg7[%c0_143, %c2048_144], %217 {strides = array<i32>} : memref<16x4096xf32, #tpu.memory_space<vmem>>, vector<16x128xf32>,
    %c0_145 = arith.constant 0 : index
    %c2176 = arith.constant 2176 : index
    %219 = vector.load %arg6[%c0_145, %c2176] : memref<48x4352xbf16, #tpu.memory_space<vmem>>, vector<48x384xbf16>
    %c1_146 = arith.constant 1 : index
    %c0_147 = arith.constant 0 : index
    %c0_148 = arith.constant 0 : index
    %220 = vector.load %arg2[%c1_146, %c0_147, %c0_148] : memref<3x384x128xbf16, #tpu.memory_space<vmem>>, vector<1x384x128xbf16>
    %221 = vector.shape_cast %220 : vector<1x384x128xbf16> to vector<384x128xbf16>
    %cst_149 = arith.constant dense<0.000000e+00> : vector<48x128xf32>
    %222 = tpu.matmul %219, %221, %cst_149 {dimension_numbers = #tpu.dot_dimension_numbers<[1], [0], [0], [1], [0, 0, 1, 1], [], []>} : vector<48x384xbf16>, vector<384x128xbf16>, vector<48x128xf32> -> vector<48x128xf32>
    %223 = vector.extract_strided_slice %222 {offsets = [0, 0], sizes = [16, 128], strides = [1, 1]} : vector<48x128xf32> to vector<16x128xf32>
    %224 = vector.extract_strided_slice %222 {offsets = [16, 0], sizes = [16, 128], strides = [1, 1]} : vector<48x128xf32> to vector<16x128xf32>
    %225 = arith.addf %223, %224 : vector<16x128xf32>
    %226 = vector.extract_strided_slice %222 {offsets = [32, 0], sizes = [16, 128], strides = [1, 1]} : vector<48x128xf32> to vector<16x128xf32>
    %227 = arith.addf %225, %226 : vector<16x128xf32>
    %cst_150 = arith.constant 0.0021978023 : f32
    %228 = vector.broadcast %cst_150 : f32 to vector<16x128xf32>
    %229 = arith.mulf %227, %228 : vector<16x128xf32>
    %c0_151 = arith.constant 0 : index
    %c2176_152 = arith.constant 2176 : index
    %230 = vector.load %arg7[%c0_151, %c2176_152] : memref<16x4096xf32, #tpu.memory_space<vmem>>, vector<16x128xf32>
    tpu.vector_store %arg7[%c0_151, %c2176_152], %229 {strides = array<i32>} : memref<16x4096xf32, #tpu.memory_space<vmem>>, vector<16x128xf32>,
    %c0_153 = arith.constant 0 : index
    %c2304 = arith.constant 2304 : index
    %231 = vector.load %arg6[%c0_153, %c2304] : memref<48x4352xbf16, #tpu.memory_space<vmem>>, vector<48x384xbf16>
    %c1_154 = arith.constant 1 : index
    %c0_155 = arith.constant 0 : index
    %c0_156 = arith.constant 0 : index
    %232 = vector.load %arg2[%c1_154, %c0_155, %c0_156] : memref<3x384x128xbf16, #tpu.memory_space<vmem>>, vector<1x384x128xbf16>
    %233 = vector.shape_cast %232 : vector<1x384x128xbf16> to vector<384x128xbf16>
    %cst_157 = arith.constant dense<0.000000e+00> : vector<48x128xf32>
    %234 = tpu.matmul %231, %233, %cst_157 {dimension_numbers = #tpu.dot_dimension_numbers<[1], [0], [0], [1], [0, 0, 1, 1], [], []>} : vector<48x384xbf16>, vector<384x128xbf16>, vector<48x128xf32> -> vector<48x128xf32>
    %235 = vector.extract_strided_slice %234 {offsets = [0, 0], sizes = [16, 128], strides = [1, 1]} : vector<48x128xf32> to vector<16x128xf32>
    %236 = vector.extract_strided_slice %234 {offsets = [16, 0], sizes = [16, 128], strides = [1, 1]} : vector<48x128xf32> to vector<16x128xf32>
    %237 = arith.addf %235, %236 : vector<16x128xf32>
    %238 = vector.extract_strided_slice %234 {offsets = [32, 0], sizes = [16, 128], strides = [1, 1]} : vector<48x128xf32> to vector<16x128xf32>
    %239 = arith.addf %237, %238 : vector<16x128xf32>
    %cst_158 = arith.constant 0.0021978023 : f32
    %240 = vector.broadcast %cst_158 : f32 to vector<16x128xf32>
    %241 = arith.mulf %239, %240 : vector<16x128xf32>
    %c0_159 = arith.constant 0 : index
    %c2304_160 = arith.constant 2304 : index
    %242 = vector.load %arg7[%c0_159, %c2304_160] : memref<16x4096xf32, #tpu.memory_space<vmem>>, vector<16x128xf32>
    tpu.vector_store %arg7[%c0_159, %c2304_160], %241 {strides = array<i32>} : memref<16x4096xf32, #tpu.memory_space<vmem>>, vector<16x128xf32>,
    %c0_161 = arith.constant 0 : index
    %c2432 = arith.constant 2432 : index
    %243 = vector.load %arg6[%c0_161, %c2432] : memref<48x4352xbf16, #tpu.memory_space<vmem>>, vector<48x384xbf16>
    %c1_162 = arith.constant 1 : index
    %c0_163 = arith.constant 0 : index
    %c0_164 = arith.constant 0 : index
    %244 = vector.load %arg2[%c1_162, %c0_163, %c0_164] : memref<3x384x128xbf16, #tpu.memory_space<vmem>>, vector<1x384x128xbf16>
    %245 = vector.shape_cast %244 : vector<1x384x128xbf16> to vector<384x128xbf16>
    %cst_165 = arith.constant dense<0.000000e+00> : vector<48x128xf32>
    %246 = tpu.matmul %243, %245, %cst_165 {dimension_numbers = #tpu.dot_dimension_numbers<[1], [0], [0], [1], [0, 0, 1, 1], [], []>} : vector<48x384xbf16>, vector<384x128xbf16>, vector<48x128xf32> -> vector<48x128xf32>
    %247 = vector.extract_strided_slice %246 {offsets = [0, 0], sizes = [16, 128], strides = [1, 1]} : vector<48x128xf32> to vector<16x128xf32>
    %248 = vector.extract_strided_slice %246 {offsets = [16, 0], sizes = [16, 128], strides = [1, 1]} : vector<48x128xf32> to vector<16x128xf32>
    %249 = arith.addf %247, %248 : vector<16x128xf32>
    %250 = vector.extract_strided_slice %246 {offsets = [32, 0], sizes = [16, 128], strides = [1, 1]} : vector<48x128xf32> to vector<16x128xf32>
    %251 = arith.addf %249, %250 : vector<16x128xf32>
    %cst_166 = arith.constant 0.0021978023 : f32
    %252 = vector.broadcast %cst_166 : f32 to vector<16x128xf32>
    %253 = arith.mulf %251, %252 : vector<16x128xf32>
    %c0_167 = arith.constant 0 : index
    %c2432_168 = arith.constant 2432 : index
    %254 = vector.load %arg7[%c0_167, %c2432_168] : memref<16x4096xf32, #tpu.memory_space<vmem>>, vector<16x128xf32>
    tpu.vector_store %arg7[%c0_167, %c2432_168], %253 {strides = array<i32>} : memref<16x4096xf32, #tpu.memory_space<vmem>>, vector<16x128xf32>,
    %c0_169 = arith.constant 0 : index
    %c2560 = arith.constant 2560 : index
    %255 = vector.load %arg6[%c0_169, %c2560] : memref<48x4352xbf16, #tpu.memory_space<vmem>>, vector<48x384xbf16>
    %c1_170 = arith.constant 1 : index
    %c0_171 = arith.constant 0 : index
    %c0_172 = arith.constant 0 : index
    %256 = vector.load %arg2[%c1_170, %c0_171, %c0_172] : memref<3x384x128xbf16, #tpu.memory_space<vmem>>, vector<1x384x128xbf16>
    %257 = vector.shape_cast %256 : vector<1x384x128xbf16> to vector<384x128xbf16>
    %cst_173 = arith.constant dense<0.000000e+00> : vector<48x128xf32>
    %258 = tpu.matmul %255, %257, %cst_173 {dimension_numbers = #tpu.dot_dimension_numbers<[1], [0], [0], [1], [0, 0, 1, 1], [], []>} : vector<48x384xbf16>, vector<384x128xbf16>, vector<48x128xf32> -> vector<48x128xf32>
    %259 = vector.extract_strided_slice %258 {offsets = [0, 0], sizes = [16, 128], strides = [1, 1]} : vector<48x128xf32> to vector<16x128xf32>
    %260 = vector.extract_strided_slice %258 {offsets = [16, 0], sizes = [16, 128], strides = [1, 1]} : vector<48x128xf32> to vector<16x128xf32>
    %261 = arith.addf %259, %260 : vector<16x128xf32>
    %262 = vector.extract_strided_slice %258 {offsets = [32, 0], sizes = [16, 128], strides = [1, 1]} : vector<48x128xf32> to vector<16x128xf32>
    %263 = arith.addf %261, %262 : vector<16x128xf32>
    %cst_174 = arith.constant 0.0021978023 : f32
    %264 = vector.broadcast %cst_174 : f32 to vector<16x128xf32>
    %265 = arith.mulf %263, %264 : vector<16x128xf32>
    %c0_175 = arith.constant 0 : index
    %c2560_176 = arith.constant 2560 : index
    %266 = vector.load %arg7[%c0_175, %c2560_176] : memref<16x4096xf32, #tpu.memory_space<vmem>>, vector<16x128xf32>
    tpu.vector_store %arg7[%c0_175, %c2560_176], %265 {strides = array<i32>} : memref<16x4096xf32, #tpu.memory_space<vmem>>, vector<16x128xf32>,
    %c0_177 = arith.constant 0 : index
    %c2688 = arith.constant 2688 : index
    %267 = vector.load %arg6[%c0_177, %c2688] : memref<48x4352xbf16, #tpu.memory_space<vmem>>, vector<48x384xbf16>
    %c1_178 = arith.constant 1 : index
    %c0_179 = arith.constant 0 : index
    %c0_180 = arith.constant 0 : index
    %268 = vector.load %arg2[%c1_178, %c0_179, %c0_180] : memref<3x384x128xbf16, #tpu.memory_space<vmem>>, vector<1x384x128xbf16>
    %269 = vector.shape_cast %268 : vector<1x384x128xbf16> to vector<384x128xbf16>
    %cst_181 = arith.constant dense<0.000000e+00> : vector<48x128xf32>
    %270 = tpu.matmul %267, %269, %cst_181 {dimension_numbers = #tpu.dot_dimension_numbers<[1], [0], [0], [1], [0, 0, 1, 1], [], []>} : vector<48x384xbf16>, vector<384x128xbf16>, vector<48x128xf32> -> vector<48x128xf32>
    %271 = vector.extract_strided_slice %270 {offsets = [0, 0], sizes = [16, 128], strides = [1, 1]} : vector<48x128xf32> to vector<16x128xf32>
    %272 = vector.extract_strided_slice %270 {offsets = [16, 0], sizes = [16, 128], strides = [1, 1]} : vector<48x128xf32> to vector<16x128xf32>
    %273 = arith.addf %271, %272 : vector<16x128xf32>
    %274 = vector.extract_strided_slice %270 {offsets = [32, 0], sizes = [16, 128], strides = [1, 1]} : vector<48x128xf32> to vector<16x128xf32>
    %275 = arith.addf %273, %274 : vector<16x128xf32>
    %cst_182 = arith.constant 0.0021978023 : f32
    %276 = vector.broadcast %cst_182 : f32 to vector<16x128xf32>
    %277 = arith.mulf %275, %276 : vector<16x128xf32>
    %c0_183 = arith.constant 0 : index
    %c2688_184 = arith.constant 2688 : index
    %278 = vector.load %arg7[%c0_183, %c2688_184] : memref<16x4096xf32, #tpu.memory_space<vmem>>, vector<16x128xf32>
    tpu.vector_store %arg7[%c0_183, %c2688_184], %277 {strides = array<i32>} : memref<16x4096xf32, #tpu.memory_space<vmem>>, vector<16x128xf32>,
    %c0_185 = arith.constant 0 : index
    %c2816 = arith.constant 2816 : index
    %279 = vector.load %arg6[%c0_185, %c2816] : memref<48x4352xbf16, #tpu.memory_space<vmem>>, vector<48x384xbf16>
    %c1_186 = arith.constant 1 : index
    %c0_187 = arith.constant 0 : index
    %c0_188 = arith.constant 0 : index
    %280 = vector.load %arg2[%c1_186, %c0_187, %c0_188] : memref<3x384x128xbf16, #tpu.memory_space<vmem>>, vector<1x384x128xbf16>
    %281 = vector.shape_cast %280 : vector<1x384x128xbf16> to vector<384x128xbf16>
    %cst_189 = arith.constant dense<0.000000e+00> : vector<48x128xf32>
    %282 = tpu.matmul %279, %281, %cst_189 {dimension_numbers = #tpu.dot_dimension_numbers<[1], [0], [0], [1], [0, 0, 1, 1], [], []>} : vector<48x384xbf16>, vector<384x128xbf16>, vector<48x128xf32> -> vector<48x128xf32>
    %283 = vector.extract_strided_slice %282 {offsets = [0, 0], sizes = [16, 128], strides = [1, 1]} : vector<48x128xf32> to vector<16x128xf32>
    %284 = vector.extract_strided_slice %282 {offsets = [16, 0], sizes = [16, 128], strides = [1, 1]} : vector<48x128xf32> to vector<16x128xf32>
    %285 = arith.addf %283, %284 : vector<16x128xf32>
    %286 = vector.extract_strided_slice %282 {offsets = [32, 0], sizes = [16, 128], strides = [1, 1]} : vector<48x128xf32> to vector<16x128xf32>
    %287 = arith.addf %285, %286 : vector<16x128xf32>
    %cst_190 = arith.constant 0.0021978023 : f32
    %288 = vector.broadcast %cst_190 : f32 to vector<16x128xf32>
    %289 = arith.mulf %287, %288 : vector<16x128xf32>
    %c0_191 = arith.constant 0 : index
    %c2816_192 = arith.constant 2816 : index
    %290 = vector.load %arg7[%c0_191, %c2816_192] : memref<16x4096xf32, #tpu.memory_space<vmem>>, vector<16x128xf32>
    tpu.vector_store %arg7[%c0_191, %c2816_192], %289 {strides = array<i32>} : memref<16x4096xf32, #tpu.memory_space<vmem>>, vector<16x128xf32>,
    %c0_193 = arith.constant 0 : index
    %c2944 = arith.constant 2944 : index
    %291 = vector.load %arg6[%c0_193, %c2944] : memref<48x4352xbf16, #tpu.memory_space<vmem>>, vector<48x384xbf16>
    %c1_194 = arith.constant 1 : index
    %c0_195 = arith.constant 0 : index
    %c0_196 = arith.constant 0 : index
    %292 = vector.load %arg2[%c1_194, %c0_195, %c0_196] : memref<3x384x128xbf16, #tpu.memory_space<vmem>>, vector<1x384x128xbf16>
    %293 = vector.shape_cast %292 : vector<1x384x128xbf16> to vector<384x128xbf16>
    %cst_197 = arith.constant dense<0.000000e+00> : vector<48x128xf32>
    %294 = tpu.matmul %291, %293, %cst_197 {dimension_numbers = #tpu.dot_dimension_numbers<[1], [0], [0], [1], [0, 0, 1, 1], [], []>} : vector<48x384xbf16>, vector<384x128xbf16>, vector<48x128xf32> -> vector<48x128xf32>
    %295 = vector.extract_strided_slice %294 {offsets = [0, 0], sizes = [16, 128], strides = [1, 1]} : vector<48x128xf32> to vector<16x128xf32>
    %296 = vector.extract_strided_slice %294 {offsets = [16, 0], sizes = [16, 128], strides = [1, 1]} : vector<48x128xf32> to vector<16x128xf32>
    %297 = arith.addf %295, %296 : vector<16x128xf32>
    %298 = vector.extract_strided_slice %294 {offsets = [32, 0], sizes = [16, 128], strides = [1, 1]} : vector<48x128xf32> to vector<16x128xf32>
    %299 = arith.addf %297, %298 : vector<16x128xf32>
    %cst_198 = arith.constant 0.0021978023 : f32
    %300 = vector.broadcast %cst_198 : f32 to vector<16x128xf32>
    %301 = arith.mulf %299, %300 : vector<16x128xf32>
    %c0_199 = arith.constant 0 : index
    %c2944_200 = arith.constant 2944 : index
    %302 = vector.load %arg7[%c0_199, %c2944_200] : memref<16x4096xf32, #tpu.memory_space<vmem>>, vector<16x128xf32>
    tpu.vector_store %arg7[%c0_199, %c2944_200], %301 {strides = array<i32>} : memref<16x4096xf32, #tpu.memory_space<vmem>>, vector<16x128xf32>,
    %c0_201 = arith.constant 0 : index
    %c3072 = arith.constant 3072 : index
    %303 = vector.load %arg6[%c0_201, %c3072] : memref<48x4352xbf16, #tpu.memory_space<vmem>>, vector<48x384xbf16>
    %c1_202 = arith.constant 1 : index
    %c0_203 = arith.constant 0 : index
    %c0_204 = arith.constant 0 : index
    %304 = vector.load %arg2[%c1_202, %c0_203, %c0_204] : memref<3x384x128xbf16, #tpu.memory_space<vmem>>, vector<1x384x128xbf16>
    %305 = vector.shape_cast %304 : vector<1x384x128xbf16> to vector<384x128xbf16>
    %cst_205 = arith.constant dense<0.000000e+00> : vector<48x128xf32>
    %306 = tpu.matmul %303, %305, %cst_205 {dimension_numbers = #tpu.dot_dimension_numbers<[1], [0], [0], [1], [0, 0, 1, 1], [], []>} : vector<48x384xbf16>, vector<384x128xbf16>, vector<48x128xf32> -> vector<48x128xf32>
    %307 = vector.extract_strided_slice %306 {offsets = [0, 0], sizes = [16, 128], strides = [1, 1]} : vector<48x128xf32> to vector<16x128xf32>
    %308 = vector.extract_strided_slice %306 {offsets = [16, 0], sizes = [16, 128], strides = [1, 1]} : vector<48x128xf32> to vector<16x128xf32>
    %309 = arith.addf %307, %308 : vector<16x128xf32>
    %310 = vector.extract_strided_slice %306 {offsets = [32, 0], sizes = [16, 128], strides = [1, 1]} : vector<48x128xf32> to vector<16x128xf32>
    %311 = arith.addf %309, %310 : vector<16x128xf32>
    %cst_206 = arith.constant 0.0021978023 : f32
    %312 = vector.broadcast %cst_206 : f32 to vector<16x128xf32>
    %313 = arith.mulf %311, %312 : vector<16x128xf32>
    %c0_207 = arith.constant 0 : index
    %c3072_208 = arith.constant 3072 : index
    %314 = vector.load %arg7[%c0_207, %c3072_208] : memref<16x4096xf32, #tpu.memory_space<vmem>>, vector<16x128xf32>
    tpu.vector_store %arg7[%c0_207, %c3072_208], %313 {strides = array<i32>} : memref<16x4096xf32, #tpu.memory_space<vmem>>, vector<16x128xf32>,
    %c0_209 = arith.constant 0 : index
    %c3200 = arith.constant 3200 : index
    %315 = vector.load %arg6[%c0_209, %c3200] : memref<48x4352xbf16, #tpu.memory_space<vmem>>, vector<48x384xbf16>
    %c1_210 = arith.constant 1 : index
    %c0_211 = arith.constant 0 : index
    %c0_212 = arith.constant 0 : index
    %316 = vector.load %arg2[%c1_210, %c0_211, %c0_212] : memref<3x384x128xbf16, #tpu.memory_space<vmem>>, vector<1x384x128xbf16>
    %317 = vector.shape_cast %316 : vector<1x384x128xbf16> to vector<384x128xbf16>
    %cst_213 = arith.constant dense<0.000000e+00> : vector<48x128xf32>
    %318 = tpu.matmul %315, %317, %cst_213 {dimension_numbers = #tpu.dot_dimension_numbers<[1], [0], [0], [1], [0, 0, 1, 1], [], []>} : vector<48x384xbf16>, vector<384x128xbf16>, vector<48x128xf32> -> vector<48x128xf32>
    %319 = vector.extract_strided_slice %318 {offsets = [0, 0], sizes = [16, 128], strides = [1, 1]} : vector<48x128xf32> to vector<16x128xf32>
    %320 = vector.extract_strided_slice %318 {offsets = [16, 0], sizes = [16, 128], strides = [1, 1]} : vector<48x128xf32> to vector<16x128xf32>
    %321 = arith.addf %319, %320 : vector<16x128xf32>
    %322 = vector.extract_strided_slice %318 {offsets = [32, 0], sizes = [16, 128], strides = [1, 1]} : vector<48x128xf32> to vector<16x128xf32>
    %323 = arith.addf %321, %322 : vector<16x128xf32>
    %cst_214 = arith.constant 0.0021978023 : f32
    %324 = vector.broadcast %cst_214 : f32 to vector<16x128xf32>
    %325 = arith.mulf %323, %324 : vector<16x128xf32>
    %c0_215 = arith.constant 0 : index
    %c3200_216 = arith.constant 3200 : index
    %326 = vector.load %arg7[%c0_215, %c3200_216] : memref<16x4096xf32, #tpu.memory_space<vmem>>, vector<16x128xf32>
    tpu.vector_store %arg7[%c0_215, %c3200_216], %325 {strides = array<i32>} : memref<16x4096xf32, #tpu.memory_space<vmem>>, vector<16x128xf32>,
    %c0_217 = arith.constant 0 : index
    %c3328 = arith.constant 3328 : index
    %327 = vector.load %arg6[%c0_217, %c3328] : memref<48x4352xbf16, #tpu.memory_space<vmem>>, vector<48x384xbf16>
    %c1_218 = arith.constant 1 : index
    %c0_219 = arith.constant 0 : index
    %c0_220 = arith.constant 0 : index
    %328 = vector.load %arg2[%c1_218, %c0_219, %c0_220] : memref<3x384x128xbf16, #tpu.memory_space<vmem>>, vector<1x384x128xbf16>
    %329 = vector.shape_cast %328 : vector<1x384x128xbf16> to vector<384x128xbf16>
    %cst_221 = arith.constant dense<0.000000e+00> : vector<48x128xf32>
    %330 = tpu.matmul %327, %329, %cst_221 {dimension_numbers = #tpu.dot_dimension_numbers<[1], [0], [0], [1], [0, 0, 1, 1], [], []>} : vector<48x384xbf16>, vector<384x128xbf16>, vector<48x128xf32> -> vector<48x128xf32>
    %331 = vector.extract_strided_slice %330 {offsets = [0, 0], sizes = [16, 128], strides = [1, 1]} : vector<48x128xf32> to vector<16x128xf32>
    %332 = vector.extract_strided_slice %330 {offsets = [16, 0], sizes = [16, 128], strides = [1, 1]} : vector<48x128xf32> to vector<16x128xf32>
    %333 = arith.addf %331, %332 : vector<16x128xf32>
    %334 = vector.extract_strided_slice %330 {offsets = [32, 0], sizes = [16, 128], strides = [1, 1]} : vector<48x128xf32> to vector<16x128xf32>
    %335 = arith.addf %333, %334 : vector<16x128xf32>
    %cst_222 = arith.constant 0.0021978023 : f32
    %336 = vector.broadcast %cst_222 : f32 to vector<16x128xf32>
    %337 = arith.mulf %335, %336 : vector<16x128xf32>
    %c0_223 = arith.constant 0 : index
    %c3328_224 = arith.constant 3328 : index
    %338 = vector.load %arg7[%c0_223, %c3328_224] : memref<16x4096xf32, #tpu.memory_space<vmem>>, vector<16x128xf32>
    tpu.vector_store %arg7[%c0_223, %c3328_224], %337 {strides = array<i32>} : memref<16x4096xf32, #tpu.memory_space<vmem>>, vector<16x128xf32>,
    %c0_225 = arith.constant 0 : index
    %c3456 = arith.constant 3456 : index
    %339 = vector.load %arg6[%c0_225, %c3456] : memref<48x4352xbf16, #tpu.memory_space<vmem>>, vector<48x384xbf16>
    %c1_226 = arith.constant 1 : index
    %c0_227 = arith.constant 0 : index
    %c0_228 = arith.constant 0 : index
    %340 = vector.load %arg2[%c1_226, %c0_227, %c0_228] : memref<3x384x128xbf16, #tpu.memory_space<vmem>>, vector<1x384x128xbf16>
    %341 = vector.shape_cast %340 : vector<1x384x128xbf16> to vector<384x128xbf16>
    %cst_229 = arith.constant dense<0.000000e+00> : vector<48x128xf32>
    %342 = tpu.matmul %339, %341, %cst_229 {dimension_numbers = #tpu.dot_dimension_numbers<[1], [0], [0], [1], [0, 0, 1, 1], [], []>} : vector<48x384xbf16>, vector<384x128xbf16>, vector<48x128xf32> -> vector<48x128xf32>
    %343 = vector.extract_strided_slice %342 {offsets = [0, 0], sizes = [16, 128], strides = [1, 1]} : vector<48x128xf32> to vector<16x128xf32>
    %344 = vector.extract_strided_slice %342 {offsets = [16, 0], sizes = [16, 128], strides = [1, 1]} : vector<48x128xf32> to vector<16x128xf32>
    %345 = arith.addf %343, %344 : vector<16x128xf32>
    %346 = vector.extract_strided_slice %342 {offsets = [32, 0], sizes = [16, 128], strides = [1, 1]} : vector<48x128xf32> to vector<16x128xf32>
    %347 = arith.addf %345, %346 : vector<16x128xf32>
    %cst_230 = arith.constant 0.0021978023 : f32
    %348 = vector.broadcast %cst_230 : f32 to vector<16x128xf32>
    %349 = arith.mulf %347, %348 : vector<16x128xf32>
    %c0_231 = arith.constant 0 : index
    %c3456_232 = arith.constant 3456 : index
    %350 = vector.load %arg7[%c0_231, %c3456_232] : memref<16x4096xf32, #tpu.memory_space<vmem>>, vector<16x128xf32>
    tpu.vector_store %arg7[%c0_231, %c3456_232], %349 {strides = array<i32>} : memref<16x4096xf32, #tpu.memory_space<vmem>>, vector<16x128xf32>,
    %c0_233 = arith.constant 0 : index
    %c3584 = arith.constant 3584 : index
    %351 = vector.load %arg6[%c0_233, %c3584] : memref<48x4352xbf16, #tpu.memory_space<vmem>>, vector<48x384xbf16>
    %c1_234 = arith.constant 1 : index
    %c0_235 = arith.constant 0 : index
    %c0_236 = arith.constant 0 : index
    %352 = vector.load %arg2[%c1_234, %c0_235, %c0_236] : memref<3x384x128xbf16, #tpu.memory_space<vmem>>, vector<1x384x128xbf16>
    %353 = vector.shape_cast %352 : vector<1x384x128xbf16> to vector<384x128xbf16>
    %cst_237 = arith.constant dense<0.000000e+00> : vector<48x128xf32>
    %354 = tpu.matmul %351, %353, %cst_237 {dimension_numbers = #tpu.dot_dimension_numbers<[1], [0], [0], [1], [0, 0, 1, 1], [], []>} : vector<48x384xbf16>, vector<384x128xbf16>, vector<48x128xf32> -> vector<48x128xf32>
    %355 = vector.extract_strided_slice %354 {offsets = [0, 0], sizes = [16, 128], strides = [1, 1]} : vector<48x128xf32> to vector<16x128xf32>
    %356 = vector.extract_strided_slice %354 {offsets = [16, 0], sizes = [16, 128], strides = [1, 1]} : vector<48x128xf32> to vector<16x128xf32>
    %357 = arith.addf %355, %356 : vector<16x128xf32>
    %358 = vector.extract_strided_slice %354 {offsets = [32, 0], sizes = [16, 128], strides = [1, 1]} : vector<48x128xf32> to vector<16x128xf32>
    %359 = arith.addf %357, %358 : vector<16x128xf32>
    %cst_238 = arith.constant 0.0021978023 : f32
    %360 = vector.broadcast %cst_238 : f32 to vector<16x128xf32>
    %361 = arith.mulf %359, %360 : vector<16x128xf32>
    %c0_239 = arith.constant 0 : index
    %c3584_240 = arith.constant 3584 : index
    %362 = vector.load %arg7[%c0_239, %c3584_240] : memref<16x4096xf32, #tpu.memory_space<vmem>>, vector<16x128xf32>
    tpu.vector_store %arg7[%c0_239, %c3584_240], %361 {strides = array<i32>} : memref<16x4096xf32, #tpu.memory_space<vmem>>, vector<16x128xf32>,
    %c0_241 = arith.constant 0 : index
    %c3712 = arith.constant 3712 : index
    %363 = vector.load %arg6[%c0_241, %c3712] : memref<48x4352xbf16, #tpu.memory_space<vmem>>, vector<48x384xbf16>
    %c1_242 = arith.constant 1 : index
    %c0_243 = arith.constant 0 : index
    %c0_244 = arith.constant 0 : index
    %364 = vector.load %arg2[%c1_242, %c0_243, %c0_244] : memref<3x384x128xbf16, #tpu.memory_space<vmem>>, vector<1x384x128xbf16>
    %365 = vector.shape_cast %364 : vector<1x384x128xbf16> to vector<384x128xbf16>
    %cst_245 = arith.constant dense<0.000000e+00> : vector<48x128xf32>
    %366 = tpu.matmul %363, %365, %cst_245 {dimension_numbers = #tpu.dot_dimension_numbers<[1], [0], [0], [1], [0, 0, 1, 1], [], []>} : vector<48x384xbf16>, vector<384x128xbf16>, vector<48x128xf32> -> vector<48x128xf32>
    %367 = vector.extract_strided_slice %366 {offsets = [0, 0], sizes = [16, 128], strides = [1, 1]} : vector<48x128xf32> to vector<16x128xf32>
    %368 = vector.extract_strided_slice %366 {offsets = [16, 0], sizes = [16, 128], strides = [1, 1]} : vector<48x128xf32> to vector<16x128xf32>
    %369 = arith.addf %367, %368 : vector<16x128xf32>
    %370 = vector.extract_strided_slice %366 {offsets = [32, 0], sizes = [16, 128], strides = [1, 1]} : vector<48x128xf32> to vector<16x128xf32>
    %371 = arith.addf %369, %370 : vector<16x128xf32>
    %cst_246 = arith.constant 0.0021978023 : f32
    %372 = vector.broadcast %cst_246 : f32 to vector<16x128xf32>
    %373 = arith.mulf %371, %372 : vector<16x128xf32>
    %c0_247 = arith.constant 0 : index
    %c3712_248 = arith.constant 3712 : index
    %374 = vector.load %arg7[%c0_247, %c3712_248] : memref<16x4096xf32, #tpu.memory_space<vmem>>, vector<16x128xf32>
    tpu.vector_store %arg7[%c0_247, %c3712_248], %373 {strides = array<i32>} : memref<16x4096xf32, #tpu.memory_space<vmem>>, vector<16x128xf32>,
    %c0_249 = arith.constant 0 : index
    %c3840 = arith.constant 3840 : index
    %375 = vector.load %arg6[%c0_249, %c3840] : memref<48x4352xbf16, #tpu.memory_space<vmem>>, vector<48x384xbf16>
    %c1_250 = arith.constant 1 : index
    %c0_251 = arith.constant 0 : index
    %c0_252 = arith.constant 0 : index
    %376 = vector.load %arg2[%c1_250, %c0_251, %c0_252] : memref<3x384x128xbf16, #tpu.memory_space<vmem>>, vector<1x384x128xbf16>
    %377 = vector.shape_cast %376 : vector<1x384x128xbf16> to vector<384x128xbf16>
    %cst_253 = arith.constant dense<0.000000e+00> : vector<48x128xf32>
    %378 = tpu.matmul %375, %377, %cst_253 {dimension_numbers = #tpu.dot_dimension_numbers<[1], [0], [0], [1], [0, 0, 1, 1], [], []>} : vector<48x384xbf16>, vector<384x128xbf16>, vector<48x128xf32> -> vector<48x128xf32>
    %379 = vector.extract_strided_slice %378 {offsets = [0, 0], sizes = [16, 128], strides = [1, 1]} : vector<48x128xf32> to vector<16x128xf32>
    %380 = vector.extract_strided_slice %378 {offsets = [16, 0], sizes = [16, 128], strides = [1, 1]} : vector<48x128xf32> to vector<16x128xf32>
    %381 = arith.addf %379, %380 : vector<16x128xf32>
    %382 = vector.extract_strided_slice %378 {offsets = [32, 0], sizes = [16, 128], strides = [1, 1]} : vector<48x128xf32> to vector<16x128xf32>
    %383 = arith.addf %381, %382 : vector<16x128xf32>
    %cst_254 = arith.constant 0.0021978023 : f32
    %384 = vector.broadcast %cst_254 : f32 to vector<16x128xf32>
    %385 = arith.mulf %383, %384 : vector<16x128xf32>
    %c0_255 = arith.constant 0 : index
    %c3840_256 = arith.constant 3840 : index
    %386 = vector.load %arg7[%c0_255, %c3840_256] : memref<16x4096xf32, #tpu.memory_space<vmem>>, vector<16x128xf32>
    tpu.vector_store %arg7[%c0_255, %c3840_256], %385 {strides = array<i32>} : memref<16x4096xf32, #tpu.memory_space<vmem>>, vector<16x128xf32>,
    %c0_257 = arith.constant 0 : index
    %c3968 = arith.constant 3968 : index
    %387 = vector.load %arg6[%c0_257, %c3968] : memref<48x4352xbf16, #tpu.memory_space<vmem>>, vector<48x384xbf16>
    %c2 = arith.constant 2 : index
    %c0_258 = arith.constant 0 : index
    %c0_259 = arith.constant 0 : index
    %388 = vector.load %arg2[%c2, %c0_258, %c0_259] : memref<3x384x128xbf16, #tpu.memory_space<vmem>>, vector<1x384x128xbf16>
    %389 = vector.shape_cast %388 : vector<1x384x128xbf16> to vector<384x128xbf16>
    %cst_260 = arith.constant dense<0.000000e+00> : vector<48x128xf32>
    %390 = tpu.matmul %387, %389, %cst_260 {dimension_numbers = #tpu.dot_dimension_numbers<[1], [0], [0], [1], [0, 0, 1, 1], [], []>} : vector<48x384xbf16>, vector<384x128xbf16>, vector<48x128xf32> -> vector<48x128xf32>
    %391 = vector.extract_strided_slice %390 {offsets = [0, 0], sizes = [16, 128], strides = [1, 1]} : vector<48x128xf32> to vector<16x128xf32>
    %392 = vector.extract_strided_slice %390 {offsets = [16, 0], sizes = [16, 128], strides = [1, 1]} : vector<48x128xf32> to vector<16x128xf32>
    %393 = arith.addf %391, %392 : vector<16x128xf32>
    %394 = vector.extract_strided_slice %390 {offsets = [32, 0], sizes = [16, 128], strides = [1, 1]} : vector<48x128xf32> to vector<16x128xf32>
    %395 = arith.addf %393, %394 : vector<16x128xf32>
    %cst_261 = arith.constant 0.0021978023 : f32
    %396 = vector.broadcast %cst_261 : f32 to vector<16x128xf32>
    %397 = arith.mulf %395, %396 : vector<16x128xf32>
    %c0_262 = arith.constant 0 : index
    %c3968_263 = arith.constant 3968 : index
    %398 = vector.load %arg7[%c0_262, %c3968_263] : memref<16x4096xf32, #tpu.memory_space<vmem>>, vector<16x128xf32>
    tpu.vector_store %arg7[%c0_262, %c3968_263], %397 {strides = array<i32>} : memref<16x4096xf32, #tpu.memory_space<vmem>>, vector<16x128xf32>,
    %c0_264 = arith.constant 0 : index
    %c0_265 = arith.constant 0 : index
    %399 = vector.load %arg7[%c0_264, %c0_265] : memref<16x4096xf32, #tpu.memory_space<vmem>>, vector<16x4096xf32>
    %400 = tpu.iota {dimensions = array<i32: 1>} : vector<1x4096xi32>
    %c4000_i32 = arith.constant 4000 : i32
    %401 = vector.broadcast %c4000_i32 : i32 to vector<1x4096xi32>
    %402 = arith.cmpi slt, %400, %401 : vector<1x4096xi32>
    %403 = arith.extui %402 : vector<1x4096xi1> to vector<1x4096xi32>
    %404 = arith.sitofp %403 : vector<1x4096xi32> to vector<1x4096xf32>
    %cst_266 = arith.constant dense<0.000000e+00> : vector<16xf32>
    %405 = vector.multi_reduction <add>, %399, %cst_266 [1] : vector<16x4096xf32> to vector<16xf32>
    %406 = vector.shape_cast %405 : vector<16xf32> to vector<16x1xf32>
    %cst_267 = arith.constant 2.500000e-04 : f32
    %407 = vector.broadcast %cst_267 : f32 to vector<16x1xf32>
    %408 = arith.mulf %406, %407 : vector<16x1xf32>
    %409 = vector.broadcast %408 : vector<16x1xf32> to vector<16x4096xf32>
    %410 = arith.subf %399, %409 : vector<16x4096xf32>
    %411 = vector.broadcast %404 : vector<1x4096xf32> to vector<16x4096xf32>
    %412 = arith.mulf %410, %411 : vector<16x4096xf32>
    %413 = arith.mulf %412, %412 : vector<16x4096xf32>
    %cst_268 = arith.constant dense<0.000000e+00> : vector<16xf32>
    %414 = vector.multi_reduction <add>, %413, %cst_268 [1] : vector<16x4096xf32> to vector<16xf32>
    %415 = vector.shape_cast %414 : vector<16xf32> to vector<16x1xf32>
    %cst_269 = arith.constant 2.500000e-04 : f32
    %416 = vector.broadcast %cst_269 : f32 to vector<16x1xf32>
    %417 = arith.mulf %415, %416 : vector<16x1xf32>
    %cst_270 = arith.constant 9.99999974E-6 : f32
    %418 = vector.broadcast %cst_270 : f32 to vector<16x1xf32>
    %419 = arith.addf %417, %418 : vector<16x1xf32>
    %420 = math.rsqrt %419 : vector<16x1xf32>
    %421 = vector.broadcast %420 : vector<16x1xf32> to vector<16x4096xf32>
    %422 = arith.mulf %412, %421 : vector<16x4096xf32>
    %c0_271 = arith.constant 0 : index
    %c0_272 = arith.constant 0 : index
    %423 = vector.load %arg3[%c0_271, %c0_272] : memref<1x4096xf32, #tpu.memory_space<vmem>>, vector<1x4096xf32>
    %424 = vector.broadcast %423 : vector<1x4096xf32> to vector<16x4096xf32>
    %425 = arith.mulf %422, %424 : vector<16x4096xf32>
    %c0_273 = arith.constant 0 : index
    %c0_274 = arith.constant 0 : index
    %426 = vector.load %arg4[%c0_273, %c0_274] : memref<1x4096xf32, #tpu.memory_space<vmem>>, vector<1x4096xf32>
    %427 = vector.broadcast %426 : vector<1x4096xf32> to vector<16x4096xf32>
    %428 = arith.addf %425, %427 : vector<16x4096xf32>
    %429 = vector.extract_strided_slice %428 {offsets = [0, 0], sizes = [16, 4000], strides = [1, 1]} : vector<16x4096xf32> to vector<16x4000xf32>
    %c0_275 = arith.constant 0 : index
    %c0_276 = arith.constant 0 : index
    %430 = vector.load %arg5[%c0_275, %c0_276] : memref<16x4000xf32, #tpu.memory_space<vmem>>, vector<16x4000xf32>
    tpu.vector_store %arg5[%c0_275, %c0_276], %429 {strides = array<i32>} : memref<16x4000xf32, #tpu.memory_space<vmem>>, vector<16x4000xf32>,
    return
  }
  func.func @transform_0(%arg0: i32) -> (i32, i32) {
    %c0_i32 = arith.constant 0 : i32
    %c0_i32_0 = arith.constant 0 : i32
    return %arg0, %c0_i32 : i32, i32
  }
  func.func @transform_1(%arg0: i32) -> (i32, i32, i32) {
    %c0_i32 = arith.constant 0 : i32
    %c0_i32_0 = arith.constant 0 : i32
    %c0_i32_1 = arith.constant 0 : i32
    %c0_i32_2 = arith.constant 0 : i32
    return %c0_i32, %c0_i32_0, %c0_i32_1 : i32, i32, i32
  }
  func.func @transform_2(%arg0: i32) -> (i32, i32) {
    %c0_i32 = arith.constant 0 : i32
    %c0_i32_0 = arith.constant 0 : i32
    %c0_i32_1 = arith.constant 0 : i32
    return %c0_i32, %c0_i32_0 : i32, i32
  }
  func.func @transform_3(%arg0: i32) -> (i32, i32) {
    %c0_i32 = arith.constant 0 : i32
    %c0_i32_0 = arith.constant 0 : i32
    %c0_i32_1 = arith.constant 0 : i32
    return %c0_i32, %c0_i32_0 : i32, i32
  }
  func.func @transform_4(%arg0: i32) -> (i32, i32) {
    %c0_i32 = arith.constant 0 : i32
    %c0_i32_0 = arith.constant 0 : i32
    return %arg0, %c0_i32 : i32, i32
  }
}

</mosaic_0001>

<llo_original>
// kernel: tpu_custom_call.1
$region0: #{tpu_custom_call.1}
  #allocation0 [shape = 'u32[]', space=smem, size = 0x4, offset = 0x4, fixed_abs, tag = 'smem constant byte address 0x4 - core index']
  #allocation1 [shape = 'u32[144,128]{1,0:T(1,128)}', space=vmem, size = 0x12000, scoped, tag = 'internal scratch']
  #allocation2 [shape = 'bf16[48,4352]{1,0:T(16,128)(2,1)}', space=vmem, size = 0x66000, scoped, tag = 'scratch operand']
  #allocation3 [shape = 'f32[16,4096]{1,0:T(8,128)}', space=vmem, size = 0x40000, scoped, tag = 'scratch operand']
  %s0 = inlined_call_operand.hbm [shape: f32[16,4000], index: 0, kind: input, shape index: {}]
  %s1 = inlined_call_operand.hbm [shape: bf16[3,384,128], index: 1, kind: input, shape index: {}]
  %s2 = inlined_call_operand.hbm [shape: f32[1,4096], index: 2, kind: input, shape index: {}]
  %s3 = inlined_call_operand.hbm [shape: f32[1,4096], index: 3, kind: input, shape index: {}]
  %s4 = inlined_call_operand.hbm [shape: f32[16,4000], index: 4, kind: output, shape index: {}]
  %s5 = sld [smem:[#allocation0]]
  $region42: #{tpu_custom_call.1} parent=0
    _
  %s7 = ssub.s32 1, %s5
  %s8 = scalar_select 0, %s7, %s5
  $region1: #{tpu_custom_call.1} parent=0
    #allocation4 [shape = 'u8[262144]{0}', space=vmem, size = 0x40000, scoped, tag = 'input window, operand 0, single buffered']
    #allocation5 [shape = 's32[1]{0}', space=sflag, size = 0x4, scoped, tag = 'scoped memory for tpu_custom_call.1']
    #allocation6 [shape = 's32[1]{0}', space=sflag, size = 0x4, scoped, tag = 'scoped memory for tpu_custom_call.1']
    #allocation7 [shape = 'u8[294912]{0}', space=vmem, size = 0x48000, scoped, tag = 'input window, operand 1, single buffered']
    #allocation8 [shape = 's32[1]{0}', space=sflag, size = 0x4, scoped, tag = 'scoped memory for tpu_custom_call.1']
    #allocation9 [shape = 'u8[16384]{0}', space=vmem, size = 0x4000, scoped, tag = 'input window, operand 2, single buffered']
    #allocation10 [shape = 'u8[16384]{0}', space=vmem, size = 0x4000, scoped, tag = 'input window, operand 3, single buffered']
    #allocation11 [shape = 's32[1]{0}', space=sflag, size = 0x4, scoped, tag = 'scoped memory for tpu_custom_call.1']
    #allocation12 [shape = 'u8[262144]{0}', space=vmem, size = 0x40000, scoped, tag = 'output window, operand 0, single buffered']
    %9 = vsyncpa [#allocation5], 0
    %10 = vsyncpa [#allocation8], 0
    %11 = vsyncpa [#allocation11], 0
    %12 = vsyncpa [#allocation6], 0
    // Predicated region
    $region2: #{tpu_custom_call.1} parent=1 // pred_check
      _
    $region3: #{tpu_custom_call.1} parent=1 // pred_check_branch
      %14 = sbr.rel (0) target = $region5
    $region4: #{tpu_custom_call.1} parent=1 // pred_region
      %s16 = ssub.s32 8192, 8192
      %17 = vsyncadd [#allocation5], %s16
      %s18 = sshll.u32 [#allocation4], 4
      %s19 = int_to_ptr.vmem [resolvable:$true] %s18
      %24 = dma.hbm_to_vmem [thread:$0]  %s0, 8192, %s19, [#allocation5], 4096, 4096, 256
    $region5: #{tpu_custom_call.1} parent=1 // pred_fallthru
      _
    // Predicated region
    $region6: #{tpu_custom_call.1} parent=1 // pred_check
      _
    $region7: #{tpu_custom_call.1} parent=1 // pred_check_branch
      %26 = sbr.rel (0) target = $region9
    $region8: #{tpu_custom_call.1} parent=1 // pred_region
      %s28 = ssub.s32 9216, 9216
      %29 = vsyncadd [#allocation8], %s28
      %s30 = sshll.u32 [#allocation7], 4
      %s31 = int_to_ptr.vmem [resolvable:$true] %s30
      %36 = dma.hbm_to_vmem [thread:$0]  %s1, 9216, %s31, [#allocation8], 64, 64, 4
    $region9: #{tpu_custom_call.1} parent=1 // pred_fallthru
      _
    // Predicated region
    $region10: #{tpu_custom_call.1} parent=1 // pred_check
      _
    $region11: #{tpu_custom_call.1} parent=1 // pred_check_branch
      %38 = sbr.rel (0) target = $region13
    $region12: #{tpu_custom_call.1} parent=1 // pred_region
      %s40 = ssub.s32 512, 512
      %41 = vsyncadd [#allocation8], %s40
      %s43 = sshll.u32 [#allocation9], 4
      %s44 = int_to_ptr.vmem [resolvable:$true] %s43
      %46 = dma.hbm_to_vmem [thread:$0]  %s2, 512, %s44, [#allocation8]
    $region13: #{tpu_custom_call.1} parent=1 // pred_fallthru
      _
    // Predicated region
    $region14: #{tpu_custom_call.1} parent=1 // pred_check
      _
    $region15: #{tpu_custom_call.1} parent=1 // pred_check_branch
      %48 = sbr.rel (0) target = $region17
    $region16: #{tpu_custom_call.1} parent=1 // pred_region
      %s50 = ssub.s32 512, 512
      %51 = vsyncadd [#allocation11], %s50
      %s53 = sshll.u32 [#allocation10], 4
      %s54 = int_to_ptr.vmem [resolvable:$true] %s53
      %56 = dma.hbm_to_vmem [thread:$0]  %s3, 512, %s54, [#allocation11]
    $region17: #{tpu_custom_call.1} parent=1 // pred_fallthru
      _
    // Predicated region
    $region18: #{tpu_custom_call.1} parent=1 // pred_check
      _
    $region19: #{tpu_custom_call.1} parent=1 // pred_check_branch
      %58 = sbr.rel (0) target = $region21
    $region20: #{tpu_custom_call.1} parent=1 // pred_region
      %59 = dma.done [#allocation5], 8192
    $region21: #{tpu_custom_call.1} parent=1 // pred_fallthru
      _
    // Predicated region
    $region22: #{tpu_custom_call.1} parent=1 // pred_check
      _
    $region23: #{tpu_custom_call.1} parent=1 // pred_check_branch
      %61 = sbr.rel (0) target = $region25
    $region24: #{tpu_custom_call.1} parent=1 // pred_region
      %62 = dma.done [#allocation8], 9216
    $region25: #{tpu_custom_call.1} parent=1 // pred_fallthru
      _
    // Predicated region
    $region26: #{tpu_custom_call.1} parent=1 // pred_check
      _
    $region27: #{tpu_custom_call.1} parent=1 // pred_check_branch
      %64 = sbr.rel (0) target = $region29
    $region28: #{tpu_custom_call.1} parent=1 // pred_region
      %65 = dma.done [#allocation8], 512
    $region29: #{tpu_custom_call.1} parent=1 // pred_fallthru
      _
    // Predicated region
    $region30: #{tpu_custom_call.1} parent=1 // pred_check
      _
    $region31: #{tpu_custom_call.1} parent=1 // pred_check_branch
      %67 = sbr.rel (0) target = $region33
    $region32: #{tpu_custom_call.1} parent=1 // pred_region
      %68 = dma.done [#allocation11], 512
    $region33: #{tpu_custom_call.1} parent=1 // pred_fallthru
      _
    %v70 = vld [vmem:[#allocation4] sm:$0xff]
    %v71 = vld [vmem:[#allocation4 + $0x8] sm:$0xff]
    %v72 = vld [vmem:[#allocation4 + $0x10] sm:$0xff]
    %v73 = vld [vmem:[#allocation4 + $0x18] sm:$0xff]
    %v74 = vld [vmem:[#allocation4 + $0x20] sm:$0xff]
    %v75 = vld [vmem:[#allocation4 + $0x28] sm:$0xff]
    %v76 = vld [vmem:[#allocation4 + $0x30] sm:$0xff]
    %v77 = vld [vmem:[#allocation4 + $0x38] sm:$0xff]
    %v78 = vld [vmem:[#allocation4 + $0x40] sm:$0xff]
    %v79 = vld [vmem:[#allocation4 + $0x48] sm:$0xff]
    %v80 = vld [vmem:[#allocation4 + $0x50] sm:$0xff]
    %v81 = vld [vmem:[#allocation4 + $0x58] sm:$0xff]
    %v82 = vld [vmem:[#allocation4 + $0x60] sm:$0xff]
    %v83 = vld [vmem:[#allocation4 + $0x68] sm:$0xff]
    %v84 = vld [vmem:[#allocation4 + $0x70] sm:$0xff]
    %v85 = vld [vmem:[#allocation4 + $0x78] sm:$0xff]
    %v86 = vld [vmem:[#allocation4 + $0x80] sm:$0xff]
    %v87 = vld [vmem:[#allocation4 + $0x88] sm:$0xff]
    %v88 = vld [vmem:[#allocation4 + $0x90] sm:$0xff]
    %v89 = vld [vmem:[#allocation4 + $0x98] sm:$0xff]
    %v90 = vld [vmem:[#allocation4 + $0xa0] sm:$0xff]
    %v91 = vld [vmem:[#allocation4 + $0xa8] sm:$0xff]
    %v92 = vld [vmem:[#allocation4 + $0xb0] sm:$0xff]
    %v93 = vld [vmem:[#allocation4 + $0xb8] sm:$0xff]
    %v94 = vld [vmem:[#allocation4 + $0xc0] sm:$0xff]
    %v95 = vld [vmem:[#allocation4 + $0xc8] sm:$0xff]
    %v96 = vld [vmem:[#allocation4 + $0xd0] sm:$0xff]
    %v97 = vld [vmem:[#allocation4 + $0xd8] sm:$0xff]
    %v98 = vld [vmem:[#allocation4 + $0xe0] sm:$0xff]
    %v99 = vld [vmem:[#allocation4 + $0xe8] sm:$0xff]
    %v100 = vld [vmem:[#allocation4 + $0xf0] sm:$0xff]
    %v101 = vld [vmem:[#allocation4 + $0xf8] sm:$0xff]
    %v102 = vld [vmem:[#allocation4 + $0x100] sm:$0xff]
    %v103 = vld [vmem:[#allocation4 + $0x108] sm:$0xff]
    %v104 = vld [vmem:[#allocation4 + $0x110] sm:$0xff]
    %v105 = vld [vmem:[#allocation4 + $0x118] sm:$0xff]
    %v106 = vld [vmem:[#allocation4 + $0x120] sm:$0xff]
    %v107 = vld [vmem:[#allocation4 + $0x128] sm:$0xff]
    %v108 = vld [vmem:[#allocation4 + $0x130] sm:$0xff]
    %v109 = vld [vmem:[#allocation4 + $0x138] sm:$0xff]
    %v110 = vld [vmem:[#allocation4 + $0x140] sm:$0xff]
    %v111 = vld [vmem:[#allocation4 + $0x148] sm:$0xff]
    %v112 = vld [vmem:[#allocation4 + $0x150] sm:$0xff]
    %v113 = vld [vmem:[#allocation4 + $0x158] sm:$0xff]
    %v114 = vld [vmem:[#allocation4 + $0x160] sm:$0xff]
    %v115 = vld [vmem:[#allocation4 + $0x168] sm:$0xff]
    %v116 = vld [vmem:[#allocation4 + $0x170] sm:$0xff]
    %v117 = vld [vmem:[#allocation4 + $0x178] sm:$0xff]
    %v118 = vld [vmem:[#allocation4 + $0x180] sm:$0xff]
    %v119 = vld [vmem:[#allocation4 + $0x188] sm:$0xff]
    %v120 = vld [vmem:[#allocation4 + $0x190] sm:$0xff]
    %v121 = vld [vmem:[#allocation4 + $0x198] sm:$0xff]
    %v122 = vld [vmem:[#allocation4 + $0x1a0] sm:$0xff]
    %v123 = vld [vmem:[#allocation4 + $0x1a8] sm:$0xff]
    %v124 = vld [vmem:[#allocation4 + $0x1b0] sm:$0xff]
    %v125 = vld [vmem:[#allocation4 + $0x1b8] sm:$0xff]
    %v126 = vld [vmem:[#allocation4 + $0x1c0] sm:$0xff]
    %v127 = vld [vmem:[#allocation4 + $0x1c8] sm:$0xff]
    %v128 = vld [vmem:[#allocation4 + $0x1d0] sm:$0xff]
    %v129 = vld [vmem:[#allocation4 + $0x1d8] sm:$0xff]
    %v130 = vld [vmem:[#allocation4 + $0x1e0] sm:$0xff]
    %v131 = vld [vmem:[#allocation4 + $0x1e8] sm:$0xff]
    %v132 = vld [vmem:[#allocation4 + $0x1f0] sm:$0xff]
    %v133 = vld [vmem:[#allocation4 + $0x1f8] sm:$0xff]
    %v134 = vpack.c.bf16 %v102, %v70
    %v135 = vpack.c.bf16 %v103, %v71
    %v136 = vpack.c.bf16 %v104, %v72
    %v137 = vpack.c.bf16 %v105, %v73
    %v138 = vpack.c.bf16 %v106, %v74
    %v139 = vpack.c.bf16 %v107, %v75
    %v140 = vpack.c.bf16 %v108, %v76
    %v141 = vpack.c.bf16 %v109, %v77
    %v142 = vpack.c.bf16 %v110, %v78
    %v143 = vpack.c.bf16 %v111, %v79
    %v144 = vpack.c.bf16 %v112, %v80
    %v145 = vpack.c.bf16 %v113, %v81
    %v146 = vpack.c.bf16 %v114, %v82
    %v147 = vpack.c.bf16 %v115, %v83
    %v148 = vpack.c.bf16 %v116, %v84
    %v149 = vpack.c.bf16 %v117, %v85
    %v150 = vpack.c.bf16 %v118, %v86
    %v151 = vpack.c.bf16 %v119, %v87
    %v152 = vpack.c.bf16 %v120, %v88
    %v153 = vpack.c.bf16 %v121, %v89
    %v154 = vpack.c.bf16 %v122, %v90
    %v155 = vpack.c.bf16 %v123, %v91
    %v156 = vpack.c.bf16 %v124, %v92
    %v157 = vpack.c.bf16 %v125, %v93
    %v158 = vpack.c.bf16 %v126, %v94
    %v159 = vpack.c.bf16 %v127, %v95
    %v160 = vpack.c.bf16 %v128, %v96
    %v161 = vpack.c.bf16 %v129, %v97
    %v162 = vpack.c.bf16 %v130, %v98
    %v163 = vpack.c.bf16 %v131, %v99
    %v164 = vpack.c.bf16 %v132, %v100
    %v165 = vpack.c.bf16 %v133, %v101
    %v166 = vunpack.c.l.bf16 %v134
    %v167 = vunpack.c.l.bf16 %v135
    %v168 = vunpack.c.l.bf16 %v136
    %v169 = vunpack.c.l.bf16 %v137
    %v170 = vunpack.c.l.bf16 %v138
    %v171 = vunpack.c.l.bf16 %v139
    %v172 = vunpack.c.l.bf16 %v140
    %v173 = vunpack.c.l.bf16 %v141
    %v174 = vunpack.c.l.bf16 %v142
    %v175 = vunpack.c.l.bf16 %v143
    %v176 = vunpack.c.l.bf16 %v144
    %v177 = vunpack.c.l.bf16 %v145
    %v178 = vunpack.c.l.bf16 %v146
    %v179 = vunpack.c.l.bf16 %v147
    %v180 = vunpack.c.l.bf16 %v148
    %v181 = vunpack.c.l.bf16 %v149
    %v182 = vunpack.c.l.bf16 %v150
    %v183 = vunpack.c.l.bf16 %v151
    %v184 = vunpack.c.l.bf16 %v152
    %v185 = vunpack.c.l.bf16 %v153
    %v186 = vunpack.c.l.bf16 %v154
    %v187 = vunpack.c.l.bf16 %v155
    %v188 = vunpack.c.l.bf16 %v156
    %v189 = vunpack.c.l.bf16 %v157
    %v190 = vunpack.c.l.bf16 %v158
    %v191 = vunpack.c.l.bf16 %v159
    %v192 = vunpack.c.l.bf16 %v160
    %v193 = vunpack.c.l.bf16 %v161
    %v194 = vunpack.c.l.bf16 %v162
    %v195 = vunpack.c.l.bf16 %v163
    %v196 = vunpack.c.l.bf16 %v164
    %v197 = vunpack.c.l.bf16 %v165
    %v198 = vunpack.c.h.bf16 %v134
    %v199 = vunpack.c.h.bf16 %v135
    %v200 = vunpack.c.h.bf16 %v136
    %v201 = vunpack.c.h.bf16 %v137
    %v202 = vunpack.c.h.bf16 %v138
    %v203 = vunpack.c.h.bf16 %v139
    %v204 = vunpack.c.h.bf16 %v140
    %v205 = vunpack.c.h.bf16 %v141
    %v206 = vunpack.c.h.bf16 %v142
    %v207 = vunpack.c.h.bf16 %v143
    %v208 = vunpack.c.h.bf16 %v144
    %v209 = vunpack.c.h.bf16 %v145
    %v210 = vunpack.c.h.bf16 %v146
    %v211 = vunpack.c.h.bf16 %v147
    %v212 = vunpack.c.h.bf16 %v148
    %v213 = vunpack.c.h.bf16 %v149
    %v214 = vunpack.c.h.bf16 %v150
    %v215 = vunpack.c.h.bf16 %v151
    %v216 = vunpack.c.h.bf16 %v152
    %v217 = vunpack.c.h.bf16 %v153
    %v218 = vunpack.c.h.bf16 %v154
    %v219 = vunpack.c.h.bf16 %v155
    %v220 = vunpack.c.h.bf16 %v156
    %v221 = vunpack.c.h.bf16 %v157
    %v222 = vunpack.c.h.bf16 %v158
    %v223 = vunpack.c.h.bf16 %v159
    %v224 = vunpack.c.h.bf16 %v160
    %v225 = vunpack.c.h.bf16 %v161
    %v226 = vunpack.c.h.bf16 %v162
    %v227 = vunpack.c.h.bf16 %v163
    %v228 = vunpack.c.h.bf16 %v164
    %v229 = vunpack.c.h.bf16 %v165
    %v230 = vsub.f32 %v70, %v166
    %v231 = vsub.f32 %v71, %v167
    %v232 = vsub.f32 %v72, %v168
    %v233 = vsub.f32 %v73, %v169
    %v234 = vsub.f32 %v74, %v170
    %v235 = vsub.f32 %v75, %v171
    %v236 = vsub.f32 %v76, %v172
    %v237 = vsub.f32 %v77, %v173
    %v238 = vsub.f32 %v78, %v174
    %v239 = vsub.f32 %v79, %v175
    %v240 = vsub.f32 %v80, %v176
    %v241 = vsub.f32 %v81, %v177
    %v242 = vsub.f32 %v82, %v178
    %v243 = vsub.f32 %v83, %v179
    %v244 = vsub.f32 %v84, %v180
    %v245 = vsub.f32 %v85, %v181
    %v246 = vsub.f32 %v86, %v182
    %v247 = vsub.f32 %v87, %v183
    %v248 = vsub.f32 %v88, %v184
    %v249 = vsub.f32 %v89, %v185
    %v250 = vsub.f32 %v90, %v186
    %v251 = vsub.f32 %v91, %v187
    %v252 = vsub.f32 %v92, %v188
    %v253 = vsub.f32 %v93, %v189
    %v254 = vsub.f32 %v94, %v190
    %v255 = vsub.f32 %v95, %v191
    %v256 = vsub.f32 %v96, %v192
    %v257 = vsub.f32 %v97, %v193
    %v258 = vsub.f32 %v98, %v194
    %v259 = vsub.f32 %v99, %v195
    %v260 = vsub.f32 %v100, %v196
    %v261 = vsub.f32 %v101, %v197
    %v262 = vsub.f32 %v102, %v198
    %v263 = vsub.f32 %v103, %v199
    %v264 = vsub.f32 %v104, %v200
    %v265 = vsub.f32 %v105, %v201
    %v266 = vsub.f32 %v106, %v202
    %v267 = vsub.f32 %v107, %v203
    %v268 = vsub.f32 %v108, %v204
    %v269 = vsub.f32 %v109, %v205
    %v270 = vsub.f32 %v110, %v206
    %v271 = vsub.f32 %v111, %v207
    %v272 = vsub.f32 %v112, %v208
    %v273 = vsub.f32 %v113, %v209
    %v274 = vsub.f32 %v114, %v210
    %v275 = vsub.f32 %v115, %v211
    %v276 = vsub.f32 %v116, %v212
    %v277 = vsub.f32 %v117, %v213
    %v278 = vsub.f32 %v118, %v214
    %v279 = vsub.f32 %v119, %v215
    %v280 = vsub.f32 %v120, %v216
    %v281 = vsub.f32 %v121, %v217
    %v282 = vsub.f32 %v122, %v218
    %v283 = vsub.f32 %v123, %v219
    %v284 = vsub.f32 %v124, %v220
    %v285 = vsub.f32 %v125, %v221
    %v286 = vsub.f32 %v126, %v222
    %v287 = vsub.f32 %v127, %v223
    %v288 = vsub.f32 %v128, %v224
    %v289 = vsub.f32 %v129, %v225
    %v290 = vsub.f32 %v130, %v226
    %v291 = vsub.f32 %v131, %v227
    %v292 = vsub.f32 %v132, %v228
    %v293 = vsub.f32 %v133, %v229
    %v294 = vpack.c.bf16 %v262, %v230
    %v295 = vpack.c.bf16 %v263, %v231
    %v296 = vpack.c.bf16 %v264, %v232
    %v297 = vpack.c.bf16 %v265, %v233
    %v298 = vpack.c.bf16 %v266, %v234
    %v299 = vpack.c.bf16 %v267, %v235
    %v300 = vpack.c.bf16 %v268, %v236
    %v301 = vpack.c.bf16 %v269, %v237
    %v302 = vpack.c.bf16 %v270, %v238
    %v303 = vpack.c.bf16 %v271, %v239
    %v304 = vpack.c.bf16 %v272, %v240
    %v305 = vpack.c.bf16 %v273, %v241
    %v306 = vpack.c.bf16 %v274, %v242
    %v307 = vpack.c.bf16 %v275, %v243
    %v308 = vpack.c.bf16 %v276, %v244
    %v309 = vpack.c.bf16 %v277, %v245
    %v310 = vpack.c.bf16 %v278, %v246
    %v311 = vpack.c.bf16 %v279, %v247
    %v312 = vpack.c.bf16 %v280, %v248
    %v313 = vpack.c.bf16 %v281, %v249
    %v314 = vpack.c.bf16 %v282, %v250
    %v315 = vpack.c.bf16 %v283, %v251
    %v316 = vpack.c.bf16 %v284, %v252
    %v317 = vpack.c.bf16 %v285, %v253
    %v318 = vpack.c.bf16 %v286, %v254
    %v319 = vpack.c.bf16 %v287, %v255
    %v320 = vpack.c.bf16 %v288, %v256
    %v321 = vpack.c.bf16 %v289, %v257
    %v322 = vpack.c.bf16 %v290, %v258
    %v323 = vpack.c.bf16 %v291, %v259
    %v324 = vpack.c.bf16 %v292, %v260
    %v325 = vpack.c.bf16 %v293, %v261
    %v326 = vunpack.c.l.bf16 %v294
    %v327 = vunpack.c.l.bf16 %v295
    %v328 = vunpack.c.l.bf16 %v296
    %v329 = vunpack.c.l.bf16 %v297
    %v330 = vunpack.c.l.bf16 %v298
    %v331 = vunpack.c.l.bf16 %v299
    %v332 = vunpack.c.l.bf16 %v300
    %v333 = vunpack.c.l.bf16 %v301
    %v334 = vunpack.c.l.bf16 %v302
    %v335 = vunpack.c.l.bf16 %v303
    %v336 = vunpack.c.l.bf16 %v304
    %v337 = vunpack.c.l.bf16 %v305
    %v338 = vunpack.c.l.bf16 %v306
    %v339 = vunpack.c.l.bf16 %v307
    %v340 = vunpack.c.l.bf16 %v308
    %v341 = vunpack.c.l.bf16 %v309
    %v342 = vunpack.c.l.bf16 %v310
    %v343 = vunpack.c.l.bf16 %v311
    %v344 = vunpack.c.l.bf16 %v312
    %v345 = vunpack.c.l.bf16 %v313
    %v346 = vunpack.c.l.bf16 %v314
    %v347 = vunpack.c.l.bf16 %v315
    %v348 = vunpack.c.l.bf16 %v316
    %v349 = vunpack.c.l.bf16 %v317
    %v350 = vunpack.c.l.bf16 %v318
    %v351 = vunpack.c.l.bf16 %v319
    %v352 = vunpack.c.l.bf16 %v320
    %v353 = vunpack.c.l.bf16 %v321
    %v354 = vunpack.c.l.bf16 %v322
    %v355 = vunpack.c.l.bf16 %v323
    %v356 = vunpack.c.l.bf16 %v324
    %v357 = vunpack.c.l.bf16 %v325
    %v358 = vunpack.c.h.bf16 %v294
    %v359 = vunpack.c.h.bf16 %v295
    %v360 = vunpack.c.h.bf16 %v296
    %v361 = vunpack.c.h.bf16 %v297
    %v362 = vunpack.c.h.bf16 %v298
    %v363 = vunpack.c.h.bf16 %v299
    %v364 = vunpack.c.h.bf16 %v300
    %v365 = vunpack.c.h.bf16 %v301
    %v366 = vunpack.c.h.bf16 %v302
    %v367 = vunpack.c.h.bf16 %v303
    %v368 = vunpack.c.h.bf16 %v304
    %v369 = vunpack.c.h.bf16 %v305
    %v370 = vunpack.c.h.bf16 %v306
    %v371 = vunpack.c.h.bf16 %v307
    %v372 = vunpack.c.h.bf16 %v308
    %v373 = vunpack.c.h.bf16 %v309
    %v374 = vunpack.c.h.bf16 %v310
    %v375 = vunpack.c.h.bf16 %v311
    %v376 = vunpack.c.h.bf16 %v312
    %v377 = vunpack.c.h.bf16 %v313
    %v378 = vunpack.c.h.bf16 %v314
    %v379 = vunpack.c.h.bf16 %v315
    %v380 = vunpack.c.h.bf16 %v316
    %v381 = vunpack.c.h.bf16 %v317
    %v382 = vunpack.c.h.bf16 %v318
    %v383 = vunpack.c.h.bf16 %v319
    %v384 = vunpack.c.h.bf16 %v320
    %v385 = vunpack.c.h.bf16 %v321
    %v386 = vunpack.c.h.bf16 %v322
    %v387 = vunpack.c.h.bf16 %v323
    %v388 = vunpack.c.h.bf16 %v324
    %v389 = vunpack.c.h.bf16 %v325
    %v390 = vsub.f32 %v230, %v326
    %v391 = vsub.f32 %v231, %v327
    %v392 = vsub.f32 %v232, %v328
    %v393 = vsub.f32 %v233, %v329
    %v394 = vsub.f32 %v234, %v330
    %v395 = vsub.f32 %v235, %v331
    %v396 = vsub.f32 %v236, %v332
    %v397 = vsub.f32 %v237, %v333
    %v398 = vsub.f32 %v238, %v334
    %v399 = vsub.f32 %v239, %v335
    %v400 = vsub.f32 %v240, %v336
    %v401 = vsub.f32 %v241, %v337
    %v402 = vsub.f32 %v242, %v338
    %v403 = vsub.f32 %v243, %v339
    %v404 = vsub.f32 %v244, %v340
    %v405 = vsub.f32 %v245, %v341
    %v406 = vsub.f32 %v246, %v342
    %v407 = vsub.f32 %v247, %v343
    %v408 = vsub.f32 %v248, %v344
    %v409 = vsub.f32 %v249, %v345
    %v410 = vsub.f32 %v250, %v346
    %v411 = vsub.f32 %v251, %v347
    %v412 = vsub.f32 %v252, %v348
    %v413 = vsub.f32 %v253, %v349
    %v414 = vsub.f32 %v254, %v350
    %v415 = vsub.f32 %v255, %v351
    %v416 = vsub.f32 %v256, %v352
    %v417 = vsub.f32 %v257, %v353
    %v418 = vsub.f32 %v258, %v354
    %v419 = vsub.f32 %v259, %v355
    %v420 = vsub.f32 %v260, %v356
    %v421 = vsub.f32 %v261, %v357
    %v422 = vsub.f32 %v262, %v358
    %v423 = vsub.f32 %v263, %v359
    %v424 = vsub.f32 %v264, %v360
    %v425 = vsub.f32 %v265, %v361
    %v426 = vsub.f32 %v266, %v362
    %v427 = vsub.f32 %v267, %v363
    %v428 = vsub.f32 %v268, %v364
    %v429 = vsub.f32 %v269, %v365
    %v430 = vsub.f32 %v270, %v366
    %v431 = vsub.f32 %v271, %v367
    %v432 = vsub.f32 %v272, %v368
    %v433 = vsub.f32 %v273, %v369
    %v434 = vsub.f32 %v274, %v370
    %v435 = vsub.f32 %v275, %v371
    %v436 = vsub.f32 %v276, %v372
    %v437 = vsub.f32 %v277, %v373
    %v438 = vsub.f32 %v278, %v374
    %v439 = vsub.f32 %v279, %v375
    %v440 = vsub.f32 %v280, %v376
    %v441 = vsub.f32 %v281, %v377
    %v442 = vsub.f32 %v282, %v378
    %v443 = vsub.f32 %v283, %v379
    %v444 = vsub.f32 %v284, %v380
    %v445 = vsub.f32 %v285, %v381
    %v446 = vsub.f32 %v286, %v382
    %v447 = vsub.f32 %v287, %v383
    %v448 = vsub.f32 %v288, %v384
    %v449 = vsub.f32 %v289, %v385
    %v450 = vsub.f32 %v290, %v386
    %v451 = vsub.f32 %v291, %v387
    %v452 = vsub.f32 %v292, %v388
    %v453 = vsub.f32 %v293, %v389
    %v454 = vpack.c.bf16 %v422, %v390
    %v455 = vpack.c.bf16 %v423, %v391
    %v456 = vpack.c.bf16 %v424, %v392
    %v457 = vpack.c.bf16 %v425, %v393
    %v458 = vpack.c.bf16 %v426, %v394
    %v459 = vpack.c.bf16 %v427, %v395
    %v460 = vpack.c.bf16 %v428, %v396
    %v461 = vpack.c.bf16 %v429, %v397
    %v462 = vpack.c.bf16 %v430, %v398
    %v463 = vpack.c.bf16 %v431, %v399
    %v464 = vpack.c.bf16 %v432, %v400
    %v465 = vpack.c.bf16 %v433, %v401
    %v466 = vpack.c.bf16 %v434, %v402
    %v467 = vpack.c.bf16 %v435, %v403
    %v468 = vpack.c.bf16 %v436, %v404
    %v469 = vpack.c.bf16 %v437, %v405
    %v470 = vpack.c.bf16 %v438, %v406
    %v471 = vpack.c.bf16 %v439, %v407
    %v472 = vpack.c.bf16 %v440, %v408
    %v473 = vpack.c.bf16 %v441, %v409
    %v474 = vpack.c.bf16 %v442, %v410
    %v475 = vpack.c.bf16 %v443, %v411
    %v476 = vpack.c.bf16 %v444, %v412
    %v477 = vpack.c.bf16 %v445, %v413
    %v478 = vpack.c.bf16 %v446, %v414
    %v479 = vpack.c.bf16 %v447, %v415
    %v480 = vpack.c.bf16 %v448, %v416
    %v481 = vpack.c.bf16 %v449, %v417
    %v482 = vpack.c.bf16 %v450, %v418
    %v483 = vpack.c.bf16 %v451, %v419
    %v484 = vpack.c.bf16 %v452, %v420
    %v485 = vpack.c.bf16 %v453, %v421
    %486 = vst [vmem:[#allocation2] sm:$0xff] 0
    %487 = vst [vmem:[#allocation2 + $0x110] sm:$0xff] 0
    %488 = vst [vmem:[#allocation2 + $0x220] sm:$0xff] 0
    %489 = vst [vmem:[#allocation2 + $0x100] sm:$0xff] 0
    %490 = vst [vmem:[#allocation2 + $0x108] sm:$0xff] 0
    %491 = vst [vmem:[#allocation2 + $0x210] sm:$0xff] 0
    %492 = vst [vmem:[#allocation2 + $0x218] sm:$0xff] 0
    %493 = vst [vmem:[#allocation2 + $0x320] sm:$0xff] 0
    %494 = vst [vmem:[#allocation2 + $0x328] sm:$0xff] 0
    %495 = vst [vmem:[#allocation2 + $0x8] sm:$0xff] %v134
    %496 = vst [vmem:[#allocation2 + $0x10] sm:$0xff] %v135
    %497 = vst [vmem:[#allocation2 + $0x18] sm:$0xff] %v136
    %498 = vst [vmem:[#allocation2 + $0x20] sm:$0xff] %v137
    %499 = vst [vmem:[#allocation2 + $0x28] sm:$0xff] %v138
    %500 = vst [vmem:[#allocation2 + $0x30] sm:$0xff] %v139
    %501 = vst [vmem:[#allocation2 + $0x38] sm:$0xff] %v140
    %502 = vst [vmem:[#allocation2 + $0x40] sm:$0xff] %v141
    %503 = vst [vmem:[#allocation2 + $0x48] sm:$0xff] %v142
    %504 = vst [vmem:[#allocation2 + $0x50] sm:$0xff] %v143
    %505 = vst [vmem:[#allocation2 + $0x58] sm:$0xff] %v144
    %506 = vst [vmem:[#allocation2 + $0x60] sm:$0xff] %v145
    %507 = vst [vmem:[#allocation2 + $0x68] sm:$0xff] %v146
    %508 = vst [vmem:[#allocation2 + $0x70] sm:$0xff] %v147
    %509 = vst [vmem:[#allocation2 + $0x78] sm:$0xff] %v148
    %510 = vst [vmem:[#allocation2 + $0x80] sm:$0xff] %v149
    %511 = vst [vmem:[#allocation2 + $0x88] sm:$0xff] %v150
    %512 = vst [vmem:[#allocation2 + $0x90] sm:$0xff] %v151
    %513 = vst [vmem:[#allocation2 + $0x98] sm:$0xff] %v152
    %514 = vst [vmem:[#allocation2 + $0xa0] sm:$0xff] %v153
    %515 = vst [vmem:[#allocation2 + $0xa8] sm:$0xff] %v154
    %516 = vst [vmem:[#allocation2 + $0xb0] sm:$0xff] %v155
    %517 = vst [vmem:[#allocation2 + $0xb8] sm:$0xff] %v156
    %518 = vst [vmem:[#allocation2 + $0xc0] sm:$0xff] %v157
    %519 = vst [vmem:[#allocation2 + $0xc8] sm:$0xff] %v158
    %520 = vst [vmem:[#allocation2 + $0xd0] sm:$0xff] %v159
    %521 = vst [vmem:[#allocation2 + $0xd8] sm:$0xff] %v160
    %522 = vst [vmem:[#allocation2 + $0xe0] sm:$0xff] %v161
    %523 = vst [vmem:[#allocation2 + $0xe8] sm:$0xff] %v162
    %524 = vst [vmem:[#allocation2 + $0xf0] sm:$0xff] %v163
    %525 = vst [vmem:[#allocation2 + $0xf8] sm:$0xff] %v164
    %vm526 = vcmask 261120
    %527 = vst.msk [vmem:[#allocation2 + $0x100] sm:$0xff] %vm526, %v165
    %528 = vst [vmem:[#allocation2 + $0x118] sm:$0xff] %v294
    %529 = vst [vmem:[#allocation2 + $0x120] sm:$0xff] %v295
    %530 = vst [vmem:[#allocation2 + $0x128] sm:$0xff] %v296
    %531 = vst [vmem:[#allocation2 + $0x130] sm:$0xff] %v297
    %532 = vst [vmem:[#allocation2 + $0x138] sm:$0xff] %v298
    %533 = vst [vmem:[#allocation2 + $0x140] sm:$0xff] %v299
    %534 = vst [vmem:[#allocation2 + $0x148] sm:$0xff] %v300
    %535 = vst [vmem:[#allocation2 + $0x150] sm:$0xff] %v301
    %536 = vst [vmem:[#allocation2 + $0x158] sm:$0xff] %v302
    %537 = vst [vmem:[#allocation2 + $0x160] sm:$0xff] %v303
    %538 = vst [vmem:[#allocation2 + $0x168] sm:$0xff] %v304
    %539 = vst [vmem:[#allocation2 + $0x170] sm:$0xff] %v305
    %540 = vst [vmem:[#allocation2 + $0x178] sm:$0xff] %v306
    %541 = vst [vmem:[#allocation2 + $0x180] sm:$0xff] %v307
    %542 = vst [vmem:[#allocation2 + $0x188] sm:$0xff] %v308
    %543 = vst [vmem:[#allocation2 + $0x190] sm:$0xff] %v309
    %544 = vst [vmem:[#allocation2 + $0x198] sm:$0xff] %v310
    %545 = vst [vmem:[#allocation2 + $0x1a0] sm:$0xff] %v311
    %546 = vst [vmem:[#allocation2 + $0x1a8] sm:$0xff] %v312
    %547 = vst [vmem:[#allocation2 + $0x1b0] sm:$0xff] %v313
    %548 = vst [vmem:[#allocation2 + $0x1b8] sm:$0xff] %v314
    %549 = vst [vmem:[#allocation2 + $0x1c0] sm:$0xff] %v315
    %550 = vst [vmem:[#allocation2 + $0x1c8] sm:$0xff] %v316
    %551 = vst [vmem:[#allocation2 + $0x1d0] sm:$0xff] %v317
    %552 = vst [vmem:[#allocation2 + $0x1d8] sm:$0xff] %v318
    %553 = vst [vmem:[#allocation2 + $0x1e0] sm:$0xff] %v319
    %554 = vst [vmem:[#allocation2 + $0x1e8] sm:$0xff] %v320
    %555 = vst [vmem:[#allocation2 + $0x1f0] sm:$0xff] %v321
    %556 = vst [vmem:[#allocation2 + $0x1f8] sm:$0xff] %v322
    %557 = vst [vmem:[#allocation2 + $0x200] sm:$0xff] %v323
    %558 = vst [vmem:[#allocation2 + $0x208] sm:$0xff] %v324
    %559 = vst.msk [vmem:[#allocation2 + $0x210] sm:$0xff] %vm526, %v325
    %560 = vst [vmem:[#allocation2 + $0x228] sm:$0xff] %v454
    %561 = vst [vmem:[#allocation2 + $0x230] sm:$0xff] %v455
    %562 = vst [vmem:[#allocation2 + $0x238] sm:$0xff] %v456
    %563 = vst [vmem:[#allocation2 + $0x240] sm:$0xff] %v457
    %564 = vst [vmem:[#allocation2 + $0x248] sm:$0xff] %v458
    %565 = vst [vmem:[#allocation2 + $0x250] sm:$0xff] %v459
    %566 = vst [vmem:[#allocation2 + $0x258] sm:$0xff] %v460
    %567 = vst [vmem:[#allocation2 + $0x260] sm:$0xff] %v461
    %568 = vst [vmem:[#allocation2 + $0x268] sm:$0xff] %v462
    %569 = vst [vmem:[#allocation2 + $0x270] sm:$0xff] %v463
    %570 = vst [vmem:[#allocation2 + $0x278] sm:$0xff] %v464
    %571 = vst [vmem:[#allocation2 + $0x280] sm:$0xff] %v465
    %572 = vst [vmem:[#allocation2 + $0x288] sm:$0xff] %v466
    %573 = vst [vmem:[#allocation2 + $0x290] sm:$0xff] %v467
    %574 = vst [vmem:[#allocation2 + $0x298] sm:$0xff] %v468
    %575 = vst [vmem:[#allocation2 + $0x2a0] sm:$0xff] %v469
    %576 = vst [vmem:[#allocation2 + $0x2a8] sm:$0xff] %v470
    %577 = vst [vmem:[#allocation2 + $0x2b0] sm:$0xff] %v471
    %578 = vst [vmem:[#allocation2 + $0x2b8] sm:$0xff] %v472
    %579 = vst [vmem:[#allocation2 + $0x2c0] sm:$0xff] %v473
    %580 = vst [vmem:[#allocation2 + $0x2c8] sm:$0xff] %v474
    %581 = vst [vmem:[#allocation2 + $0x2d0] sm:$0xff] %v475
    %582 = vst [vmem:[#allocation2 + $0x2d8] sm:$0xff] %v476
    %583 = vst [vmem:[#allocation2 + $0x2e0] sm:$0xff] %v477
    %584 = vst [vmem:[#allocation2 + $0x2e8] sm:$0xff] %v478
    %585 = vst [vmem:[#allocation2 + $0x2f0] sm:$0xff] %v479
    %586 = vst [vmem:[#allocation2 + $0x2f8] sm:$0xff] %v480
    %587 = vst [vmem:[#allocation2 + $0x300] sm:$0xff] %v481
    %588 = vst [vmem:[#allocation2 + $0x308] sm:$0xff] %v482
    %589 = vst [vmem:[#allocation2 + $0x310] sm:$0xff] %v483
    %590 = vst [vmem:[#allocation2 + $0x318] sm:$0xff] %v484
    %591 = vst.msk [vmem:[#allocation2 + $0x320] sm:$0xff] %vm526, %v485
    %v592 = vld [vmem:[#allocation2] sm:$0xff]
    %v593 = vld [vmem:[#allocation2 + $0x8] sm:$0xff]
    %v594 = vld [vmem:[#allocation2 + $0x10] sm:$0xff]
    %v595 = vld [vmem:[#allocation2 + $0x110] sm:$0xff]
    %v596 = vld [vmem:[#allocation2 + $0x118] sm:$0xff]
    %v597 = vld [vmem:[#allocation2 + $0x120] sm:$0xff]
    %v598 = vld [vmem:[#allocation2 + $0x220] sm:$0xff]
    %v599 = vld [vmem:[#allocation2 + $0x228] sm:$0xff]
    %v600 = vld [vmem:[#allocation2 + $0x230] sm:$0xff]
    %v601 = vld [vmem:[#allocation7] sm:$0xf]
    %v602 = vld [vmem:[#allocation7 + $0x4] sm:$0xf]
    %v603 = vld [vmem:[#allocation7 + $0x8] sm:$0xf]
    %v604 = vld [vmem:[#allocation7 + $0xc] sm:$0xf]
    %v605 = vld [vmem:[#allocation7 + $0x10] sm:$0xf]
    %v606 = vld [vmem:[#allocation7 + $0x14] sm:$0xf]
    %v607 = vld [vmem:[#allocation7 + $0x18] sm:$0xf]
    %v608 = vld [vmem:[#allocation7 + $0x1c] sm:$0xf]
    %v609 = vld [vmem:[#allocation7 + $0x20] sm:$0xf]
    %v610 = vld [vmem:[#allocation7 + $0x24] sm:$0xf]
    %v611 = vld [vmem:[#allocation7 + $0x28] sm:$0xf]
    %v612 = vld [vmem:[#allocation7 + $0x2c] sm:$0xf]
    %v613 = vld [vmem:[#allocation7 + $0x30] sm:$0xf]
    %v614 = vld [vmem:[#allocation7 + $0x34] sm:$0xf]
    %v615 = vld [vmem:[#allocation7 + $0x38] sm:$0xf]
    %v616 = vld [vmem:[#allocation7 + $0x3c] sm:$0xf]
    %v617 = vld [vmem:[#allocation7 + $0x40] sm:$0xf]
    %v618 = vld [vmem:[#allocation7 + $0x44] sm:$0xf]
    %v619 = vld [vmem:[#allocation7 + $0x48] sm:$0xf]
    %v620 = vld [vmem:[#allocation7 + $0x4c] sm:$0xf]
    %v621 = vld [vmem:[#allocation7 + $0x50] sm:$0xf]
    %v622 = vld [vmem:[#allocation7 + $0x54] sm:$0xf]
    %v623 = vld [vmem:[#allocation7 + $0x58] sm:$0xf]
    %v624 = vld [vmem:[#allocation7 + $0x5c] sm:$0xf]
    %v625 = vld [vmem:[#allocation7 + $0x60] sm:$0xf]
    %v626 = vld [vmem:[#allocation7 + $0x64] sm:$0xf]
    %v627 = vld [vmem:[#allocation7 + $0x68] sm:$0xf]
    %v628 = vld [vmem:[#allocation7 + $0x6c] sm:$0xf]
    %v629 = vld [vmem:[#allocation7 + $0x70] sm:$0xf]
    %v630 = vld [vmem:[#allocation7 + $0x74] sm:$0xf]
    %v631 = vld [vmem:[#allocation7 + $0x78] sm:$0xf]
    %v632 = vld [vmem:[#allocation7 + $0x7c] sm:$0xf]
    %v633 = vld [vmem:[#allocation7 + $0x80] sm:$0xf]
    %v634 = vld [vmem:[#allocation7 + $0x84] sm:$0xf]
    %v635 = vld [vmem:[#allocation7 + $0x88] sm:$0xf]
    %v636 = vld [vmem:[#allocation7 + $0x8c] sm:$0xf]
    %v637 = vld [vmem:[#allocation7 + $0x90] sm:$0xf]
    %v638 = vld [vmem:[#allocation7 + $0x94] sm:$0xf]
    %v639 = vld [vmem:[#allocation7 + $0x98] sm:$0xf]
    %v640 = vld [vmem:[#allocation7 + $0x9c] sm:$0xf]
    %v641 = vld [vmem:[#allocation7 + $0xa0] sm:$0xf]
    %v642 = vld [vmem:[#allocation7 + $0xa4] sm:$0xf]
    %v643 = vld [vmem:[#allocation7 + $0xa8] sm:$0xf]
    %v644 = vld [vmem:[#allocation7 + $0xac] sm:$0xf]
    %v645 = vld [vmem:[#allocation7 + $0xb0] sm:$0xf]
    %v646 = vld [vmem:[#allocation7 + $0xb4] sm:$0xf]
    %v647 = vld [vmem:[#allocation7 + $0xb8] sm:$0xf]
    %v648 = vld [vmem:[#allocation7 + $0xbc] sm:$0xf]
    %v697 = vunpack.c.l.b16 %v601
    %v698 = vunpack.c.l.b16 %v602
    %v699 = vunpack.c.l.b16 %v603
    %v700 = vunpack.c.l.b16 %v604
    %v701 = vunpack.c.l.b16 %v605
    %v702 = vunpack.c.l.b16 %v606
    %v703 = vunpack.c.l.b16 %v607
    %v704 = vunpack.c.l.b16 %v608
    %v705 = vunpack.c.l.b16 %v609
    %v706 = vunpack.c.l.b16 %v610
    %v707 = vunpack.c.l.b16 %v611
    %v708 = vunpack.c.l.b16 %v612
    %v709 = vunpack.c.l.b16 %v613
    %v710 = vunpack.c.l.b16 %v614
    %v711 = vunpack.c.l.b16 %v615
    %v712 = vunpack.c.l.b16 %v616
    %v713 = vunpack.c.l.b16 %v617
    %v714 = vunpack.c.l.b16 %v618
    %v715 = vunpack.c.l.b16 %v619
    %v716 = vunpack.c.l.b16 %v620
    %v717 = vunpack.c.l.b16 %v621
    %v718 = vunpack.c.l.b16 %v622
    %v719 = vunpack.c.l.b16 %v623
    %v720 = vunpack.c.l.b16 %v624
    %v721 = vunpack.c.l.b16 %v625
    %v722 = vunpack.c.l.b16 %v626
    %v723 = vunpack.c.l.b16 %v627
    %v724 = vunpack.c.l.b16 %v628
    %v725 = vunpack.c.l.b16 %v629
    %v726 = vunpack.c.l.b16 %v630
    %v727 = vunpack.c.l.b16 %v631
    %v728 = vunpack.c.l.b16 %v632
    %v729 = vunpack.c.l.b16 %v633
    %v730 = vunpack.c.l.b16 %v634
    %v731 = vunpack.c.l.b16 %v635
    %v732 = vunpack.c.l.b16 %v636
    %v733 = vunpack.c.l.b16 %v637
    %v734 = vunpack.c.l.b16 %v638
    %v735 = vunpack.c.l.b16 %v639
    %v736 = vunpack.c.l.b16 %v640
    %v737 = vunpack.c.l.b16 %v641
    %v738 = vunpack.c.l.b16 %v642
    %v739 = vunpack.c.l.b16 %v643
    %v740 = vunpack.c.l.b16 %v644
    %v741 = vunpack.c.l.b16 %v645
    %v742 = vunpack.c.l.b16 %v646
    %v743 = vunpack.c.l.b16 %v647
    %v744 = vunpack.c.l.b16 %v648
    %v745 = vpack.c.b16 %v698, %v697
    %v746 = vpack.c.b16 %v700, %v699
    %v747 = vpack.c.b16 %v702, %v701
    %v748 = vpack.c.b16 %v704, %v703
    %v749 = vpack.c.b16 %v706, %v705
    %v750 = vpack.c.b16 %v708, %v707
    %v751 = vpack.c.b16 %v710, %v709
    %v752 = vpack.c.b16 %v712, %v711
    %v753 = vpack.c.b16 %v714, %v713
    %v754 = vpack.c.b16 %v716, %v715
    %v755 = vpack.c.b16 %v718, %v717
    %v756 = vpack.c.b16 %v720, %v719
    %v757 = vpack.c.b16 %v722, %v721
    %v758 = vpack.c.b16 %v724, %v723
    %v759 = vpack.c.b16 %v726, %v725
    %v760 = vpack.c.b16 %v728, %v727
    %v761 = vpack.c.b16 %v730, %v729
    %v762 = vpack.c.b16 %v732, %v731
    %v763 = vpack.c.b16 %v734, %v733
    %v764 = vpack.c.b16 %v736, %v735
    %v765 = vpack.c.b16 %v738, %v737
    %v766 = vpack.c.b16 %v740, %v739
    %v767 = vpack.c.b16 %v742, %v741
    %v768 = vpack.c.b16 %v744, %v743
    %793 = vmatprep.subr.bf16.mxu0 0
    %794 = vmatpush1.bf16.msra.mxu0 %v745
    %795 = vmatprep.subr.bf16.mxu0 0
    %796 = vmatpush1.bf16.msra.mxu0 %v746
    %797 = vmatprep.subr.bf16.mxu0 0
    %798 = vmatpush1.bf16.msra.mxu0 %v747
    %799 = vmatprep.subr.bf16.mxu0 0
    %800 = vmatpush1.bf16.msra.mxu0 %v748
    %801 = vmatprep.subr.bf16.mxu0 0
    %802 = vmatpush1.bf16.msra.mxu0 %v749
    %803 = vmatprep.subr.bf16.mxu0 0
    %804 = vmatpush1.bf16.msra.mxu0 %v750
    %805 = vmatprep.subr.bf16.mxu0 0
    %806 = vmatpush1.bf16.msra.mxu0 %v751
    %807 = vmatprep.subr.bf16.mxu0 0
    %808 = vmatpush1.bf16.msra.mxu0 %v752
    %809 = vmatprep.subr.bf16.mxu0 0
    %810 = vmatpush1.bf16.msra.mxu0 %v753
    %811 = vmatprep.subr.bf16.mxu0 0
    %812 = vmatpush1.bf16.msra.mxu0 %v754
    %813 = vmatprep.subr.bf16.mxu0 0
    %814 = vmatpush1.bf16.msra.mxu0 %v755
    %815 = vmatprep.subr.bf16.mxu0 0
    %816 = vmatpush1.bf16.msra.mxu0 %v756
    %817 = vmatprep.subr.bf16.mxu0 0
    %818 = vmatpush1.bf16.msra.mxu0 %v757
    %819 = vmatprep.subr.bf16.mxu0 0
    %820 = vmatpush1.bf16.msra.mxu0 %v758
    %821 = vmatprep.subr.bf16.mxu0 0
    %822 = vmatpush1.bf16.msra.mxu0 %v759
    %823 = vmatprep.subr.bf16.mxu0 0
    %824 = vmatpush1.bf16.msra.mxu0 %v760
    %825 = vmatprep.mubr.bf16.mxu0 %v593
    %826 = vmatmul.mubr.bf16.gmra.mrb[0].mxu0 %v592
    %v827 = vpop.f32.mrb[0].mxu0
    %v828 = vadd.f32 0.0, %v827
    %v829 = vpop.f32.mrb[0].mxu0
    %v830 = vpop.f32.mrb[0].mxu0
    %v831 = vadd.f32 0.0, %v830
    %v832 = vpop.f32.mrb[0].mxu0
    %833 = vmatprep.mubr.bf16.mxu0 %v596
    %834 = vmatmul.mubr.bf16.gmra.mrb[0].mxu0 %v595
    %v835 = vpop.f32.mrb[0].mxu0
    %v836 = vadd.f32 0.0, %v835
    %v837 = vpop.f32.mrb[0].mxu0
    %v838 = vpop.f32.mrb[0].mxu0
    %v839 = vadd.f32 0.0, %v838
    %v840 = vpop.f32.mrb[0].mxu0
    %841 = vmatprep.mubr.bf16.mxu0 %v599
    %842 = vmatmul.mubr.bf16.gmra.mrb[0].mxu0 %v598
    %v843 = vpop.f32.mrb[0].mxu0
    %v844 = vadd.f32 0.0, %v843
    %v845 = vpop.f32.mrb[0].mxu0
    %v846 = vpop.f32.mrb[0].mxu0
    %v847 = vadd.f32 0.0, %v846
    %v848 = vpop.f32.mrb[0].mxu0
    %849 = vdwg.mxu0
    %850 = vmatprep.subr.bf16.mxu0 0
    %851 = vmatpush1.bf16.msra.mxu0 %v761
    %852 = vmatprep.subr.bf16.mxu0 0
    %853 = vmatpush1.bf16.msra.mxu0 %v762
    %854 = vmatprep.subr.bf16.mxu0 0
    %855 = vmatpush1.bf16.msra.mxu0 %v763
    %856 = vmatprep.subr.bf16.mxu0 0
    %857 = vmatpush1.bf16.msra.mxu0 %v764
    %858 = vmatprep.subr.bf16.mxu0 0
    %859 = vmatpush1.bf16.msra.mxu0 %v765
    %860 = vmatprep.subr.bf16.mxu0 0
    %861 = vmatpush1.bf16.msra.mxu0 %v766
    %862 = vmatprep.subr.bf16.mxu0 0
    %863 = vmatpush1.bf16.msra.mxu0 %v767
    %864 = vmatprep.subr.bf16.mxu0 0
    %865 = vmatpush1.bf16.msra.mxu0 %v768
    %866 = vmatprep.subr.bf16.mxu0 0
    %867 = vmatpush1.bf16.msra.mxu0 0
    %868 = vmatprep.subr.bf16.mxu0 0
    %869 = vmatpush1.bf16.msra.mxu0 0
    %870 = vmatprep.subr.bf16.mxu0 0
    %871 = vmatpush1.bf16.msra.mxu0 0
    %872 = vmatprep.subr.bf16.mxu0 0
    %873 = vmatpush1.bf16.msra.mxu0 0
    %874 = vmatprep.subr.bf16.mxu0 0
    %875 = vmatpush1.bf16.msra.mxu0 0
    %876 = vmatprep.subr.bf16.mxu0 0
    %877 = vmatpush1.bf16.msra.mxu0 0
    %878 = vmatprep.subr.bf16.mxu0 0
    %879 = vmatpush1.bf16.msra.mxu0 0
    %880 = vmatprep.subr.bf16.mxu0 0
    %881 = vmatpush1.bf16.msra.mxu0 0
    %882 = vmatprep.mubr.bf16.mxu0 0
    %883 = vmatmul.mubr.bf16.gmra.mrb[0].mxu0 %v594
    %v884 = vpop.f32.mrb[0].mxu0
    %v885 = vadd.f32 %v828, %v884
    %v886 = vpop.f32.mrb[0].mxu0
    %v887 = vpop.f32.mrb[0].mxu0
    %v888 = vadd.f32 %v831, %v887
    %v889 = vpop.f32.mrb[0].mxu0
    %890 = vmatprep.mubr.bf16.mxu0 0
    %891 = vmatmul.mubr.bf16.gmra.mrb[0].mxu0 %v597
    %v892 = vpop.f32.mrb[0].mxu0
    %v893 = vadd.f32 %v836, %v892
    %v894 = vpop.f32.mrb[0].mxu0
    %v895 = vpop.f32.mrb[0].mxu0
    %v896 = vadd.f32 %v839, %v895
    %v897 = vpop.f32.mrb[0].mxu0
    %898 = vmatprep.mubr.bf16.mxu0 0
    %899 = vmatmul.mubr.bf16.gmra.mrb[0].mxu0 %v600
    %v900 = vpop.f32.mrb[0].mxu0
    %v901 = vadd.f32 %v844, %v900
    %v902 = vpop.f32.mrb[0].mxu0
    %v903 = vpop.f32.mrb[0].mxu0
    %v904 = vadd.f32 %v847, %v903
    %v905 = vpop.f32.mrb[0].mxu0
    %906 = vdwg.mxu0
    %v907 = vadd.f32 %v885, %v893
    %v908 = vadd.f32 %v888, %v896
    %v909 = vadd.f32 %v907, %v901
    %v910 = vadd.f32 %v908, %v904
    %v911 = vmul.f32 %v909, 0.0021978023
    %v912 = vmul.f32 %v910, 0.0021978023
    %913 = vst [vmem:[#allocation3] sm:$0xff] %v911
    %914 = vst [vmem:[#allocation3 + $0x100] sm:$0xff] %v912
    %v915 = vld [vmem:[#allocation2 + $0x8] sm:$0xff]
    %v916 = vld [vmem:[#allocation2 + $0x10] sm:$0xff]
    %v917 = vld [vmem:[#allocation2 + $0x18] sm:$0xff]
    %v918 = vld [vmem:[#allocation2 + $0x118] sm:$0xff]
    %v919 = vld [vmem:[#allocation2 + $0x120] sm:$0xff]
    %v920 = vld [vmem:[#allocation2 + $0x128] sm:$0xff]
    %v921 = vld [vmem:[#allocation2 + $0x228] sm:$0xff]
    %v922 = vld [vmem:[#allocation2 + $0x230] sm:$0xff]
    %v923 = vld [vmem:[#allocation2 + $0x238] sm:$0xff]
    %s924 = scalar_lea.vmem [#allocation7], 192
    %v925 = vld [vmem:[%s924] sm:$0xf]
    %v926 = vld [vmem:[%s924 + $0x4] sm:$0xf]
    %v927 = vld [vmem:[%s924 + $0x8] sm:$0xf]
    %v928 = vld [vmem:[%s924 + $0xc] sm:$0xf]
    %v929 = vld [vmem:[%s924 + $0x10] sm:$0xf]
    %v930 = vld [vmem:[%s924 + $0x14] sm:$0xf]
    %v931 = vld [vmem:[%s924 + $0x18] sm:$0xf]
    %v932 = vld [vmem:[%s924 + $0x1c] sm:$0xf]
    %v933 = vld [vmem:[%s924 + $0x20] sm:$0xf]
    %v934 = vld [vmem:[%s924 + $0x24] sm:$0xf]
    %v935 = vld [vmem:[%s924 + $0x28] sm:$0xf]
    %v936 = vld [vmem:[%s924 + $0x2c] sm:$0xf]
    %v937 = vld [vmem:[%s924 + $0x30] sm:$0xf]
    %v938 = vld [vmem:[%s924 + $0x34] sm:$0xf]
    %v939 = vld [vmem:[%s924 + $0x38] sm:$0xf]
    %v940 = vld [vmem:[%s924 + $0x3c] sm:$0xf]
    %v941 = vld [vmem:[%s924 + $0x40] sm:$0xf]
    %v942 = vld [vmem:[%s924 + $0x44] sm:$0xf]
    %v943 = vld [vmem:[%s924 + $0x48] sm:$0xf]
    %v944 = vld [vmem:[%s924 + $0x4c] sm:$0xf]
    %v945 = vld [vmem:[%s924 + $0x50] sm:$0xf]
    %v946 = vld [vmem:[%s924 + $0x54] sm:$0xf]
    %v947 = vld [vmem:[%s924 + $0x58] sm:$0xf]
    %v948 = vld [vmem:[%s924 + $0x5c] sm:$0xf]
    %v949 = vld [vmem:[%s924 + $0x60] sm:$0xf]
    %v950 = vld [vmem:[%s924 + $0x64] sm:$0xf]
    %v951 = vld [vmem:[%s924 + $0x68] sm:$0xf]
    %v952 = vld [vmem:[%s924 + $0x6c] sm:$0xf]
    %v953 = vld [vmem:[%s924 + $0x70] sm:$0xf]
    %v954 = vld [vmem:[%s924 + $0x74] sm:$0xf]
    %v955 = vld [vmem:[%s924 + $0x78] sm:$0xf]
    %v956 = vld [vmem:[%s924 + $0x7c] sm:$0xf]
    %v957 = vld [vmem:[%s924 + $0x80] sm:$0xf]
    %v958 = vld [vmem:[%s924 + $0x84] sm:$0xf]
    %v959 = vld [vmem:[%s924 + $0x88] sm:$0xf]
    %v960 = vld [vmem:[%s924 + $0x8c] sm:$0xf]
    %v961 = vld [vmem:[%s924 + $0x90] sm:$0xf]
    %v962 = vld [vmem:[%s924 + $0x94] sm:$0xf]
    %v963 = vld [vmem:[%s924 + $0x98] sm:$0xf]
    %v964 = vld [vmem:[%s924 + $0x9c] sm:$0xf]
    %v965 = vld [vmem:[%s924 + $0xa0] sm:$0xf]
    %v966 = vld [vmem:[%s924 + $0xa4] sm:$0xf]
    %v967 = vld [vmem:[%s924 + $0xa8] sm:$0xf]
    %v968 = vld [vmem:[%s924 + $0xac] sm:$0xf]
    %v969 = vld [vmem:[%s924 + $0xb0] sm:$0xf]
    %v970 = vld [vmem:[%s924 + $0xb4] sm:$0xf]
    %v971 = vld [vmem:[%s924 + $0xb8] sm:$0xf]
    %v972 = vld [vmem:[%s924 + $0xbc] sm:$0xf]
    %v1021 = vunpack.c.l.b16 %v925
    %v1022 = vunpack.c.l.b16 %v926
    %v1023 = vunpack.c.l.b16 %v927
    %v1024 = vunpack.c.l.b16 %v928
    %v1025 = vunpack.c.l.b16 %v929
    %v1026 = vunpack.c.l.b16 %v930
    %v1027 = vunpack.c.l.b16 %v931
    %v1028 = vunpack.c.l.b16 %v932
    %v1029 = vunpack.c.l.b16 %v933
    %v1030 = vunpack.c.l.b16 %v934
    %v1031 = vunpack.c.l.b16 %v935
    %v1032 = vunpack.c.l.b16 %v936
    %v1033 = vunpack.c.l.b16 %v937
    %v1034 = vunpack.c.l.b16 %v938
    %v1035 = vunpack.c.l.b16 %v939
    %v1036 = vunpack.c.l.b16 %v940
    %v1037 = vunpack.c.l.b16 %v941
    %v1038 = vunpack.c.l.b16 %v942
    %v1039 = vunpack.c.l.b16 %v943
    %v1040 = vunpack.c.l.b16 %v944
    %v1041 = vunpack.c.l.b16 %v945
    %v1042 = vunpack.c.l.b16 %v946
    %v1043 = vunpack.c.l.b16 %v947
    %v1044 = vunpack.c.l.b16 %v948
    %v1045 = vunpack.c.l.b16 %v949
    %v1046 = vunpack.c.l.b16 %v950
    %v1047 = vunpack.c.l.b16 %v951
    %v1048 = vunpack.c.l.b16 %v952
    %v1049 = vunpack.c.l.b16 %v953
    %v1050 = vunpack.c.l.b16 %v954
    %v1051 = vunpack.c.l.b16 %v955
    %v1052 = vunpack.c.l.b16 %v956
    %v1053 = vunpack.c.l.b16 %v957
    %v1054 = vunpack.c.l.b16 %v958
    %v1055 = vunpack.c.l.b16 %v959
    %v1056 = vunpack.c.l.b16 %v960
    %v1057 = vunpack.c.l.b16 %v961
    %v1058 = vunpack.c.l.b16 %v962
    %v1059 = vunpack.c.l.b16 %v963
    %v1060 = vunpack.c.l.b16 %v964
    %v1061 = vunpack.c.l.b16 %v965
    %v1062 = vunpack.c.l.b16 %v966
    %v1063 = vunpack.c.l.b16 %v967
    %v1064 = vunpack.c.l.b16 %v968
    %v1065 = vunpack.c.l.b16 %v969
    %v1066 = vunpack.c.l.b16 %v970
    %v1067 = vunpack.c.l.b16 %v971
    %v1068 = vunpack.c.l.b16 %v972
    %v1069 = vpack.c.b16 %v1022, %v1021
    %v1070 = vpack.c.b16 %v1024, %v1023
    %v1071 = vpack.c.b16 %v1026, %v1025
    %v1072 = vpack.c.b16 %v1028, %v1027
    %v1073 = vpack.c.b16 %v1030, %v1029
    %v1074 = vpack.c.b16 %v1032, %v1031
    %v1075 = vpack.c.b16 %v1034, %v1033
    %v1076 = vpack.c.b16 %v1036, %v1035
    %v1077 = vpack.c.b16 %v1038, %v1037
    %v1078 = vpack.c.b16 %v1040, %v1039
    %v1079 = vpack.c.b16 %v1042, %v1041
    %v1080 = vpack.c.b16 %v1044, %v1043
    %v1081 = vpack.c.b16 %v1046, %v1045
    %v1082 = vpack.c.b16 %v1048, %v1047
    %v1083 = vpack.c.b16 %v1050, %v1049
    %v1084 = vpack.c.b16 %v1052, %v1051
    %v1085 = vpack.c.b16 %v1054, %v1053
    %v1086 = vpack.c.b16 %v1056, %v1055
    %v1087 = vpack.c.b16 %v1058, %v1057
    %v1088 = vpack.c.b16 %v1060, %v1059
    %v1089 = vpack.c.b16 %v1062, %v1061
    %v1090 = vpack.c.b16 %v1064, %v1063
    %v1091 = vpack.c.b16 %v1066, %v1065
    %v1092 = vpack.c.b16 %v1068, %v1067
    %1117 = vmatprep.subr.bf16.mxu0 0
    %1118 = vmatpush1.bf16.msra.mxu0 %v1069
    %1119 = vmatprep.subr.bf16.mxu0 0
    %1120 = vmatpush1.bf16.msra.mxu0 %v1070
    %1121 = vmatprep.subr.bf16.mxu0 0
    %1122 = vmatpush1.bf16.msra.mxu0 %v1071
    %1123 = vmatprep.subr.bf16.mxu0 0
    %1124 = vmatpush1.bf16.msra.mxu0 %v1072
    %1125 = vmatprep.subr.bf16.mxu0 0
    %1126 = vmatpush1.bf16.msra.mxu0 %v1073
    %1127 = vmatprep.subr.bf16.mxu0 0
    %1128 = vmatpush1.bf16.msra.mxu0 %v1074
    %1129 = vmatprep.subr.bf16.mxu0 0
    %1130 = vmatpush1.bf16.msra.mxu0 %v1075
    %1131 = vmatprep.subr.bf16.mxu0 0
    %1132 = vmatpush1.bf16.msra.mxu0 %v1076
    %1133 = vmatprep.subr.bf16.mxu0 0
    %1134 = vmatpush1.bf16.msra.mxu0 %v1077
    %1135 = vmatprep.subr.bf16.mxu0 0
    %1136 = vmatpush1.bf16.msra.mxu0 %v1078
    %1137 = vmatprep.subr.bf16.mxu0 0
    %1138 = vmatpush1.bf16.msra.mxu0 %v1079
    %1139 = vmatprep.subr.bf16.mxu0 0
    %1140 = vmatpush1.bf16.msra.mxu0 %v1080
    %1141 = vmatprep.subr.bf16.mxu0 0
    %1142 = vmatpush1.bf16.msra.mxu0 %v1081
    %1143 = vmatprep.subr.bf16.mxu0 0
    %1144 = vmatpush1.bf16.msra.mxu0 %v1082
    %1145 = vmatprep.subr.bf16.mxu0 0
    %1146 = vmatpush1.bf16.msra.mxu0 %v1083
    %1147 = vmatprep.subr.bf16.mxu0 0
    %1148 = vmatpush1.bf16.msra.mxu0 %v1084
    %1149 = vmatprep.mubr.bf16.mxu0 %v916
    %1150 = vmatmul.mubr.bf16.gmra.mrb[0].mxu0 %v915
    %v1151 = vpop.f32.mrb[0].mxu0
    %v1152 = vadd.f32 0.0, %v1151
    %v1153 = vpop.f32.mrb[0].mxu0
    %v1154 = vpop.f32.mrb[0].mxu0
    %v1155 = vadd.f32 0.0, %v1154
    %v1156 = vpop.f32.mrb[0].mxu0
    %1157 = vmatprep.mubr.bf16.mxu0 %v919
    %1158 = vmatmul.mubr.bf16.gmra.mrb[0].mxu0 %v918
    %v1159 = vpop.f32.mrb[0].mxu0
    %v1160 = vadd.f32 0.0, %v1159
    %v1161 = vpop.f32.mrb[0].mxu0
    %v1162 = vpop.f32.mrb[0].mxu0
    %v1163 = vadd.f32 0.0, %v1162
    %v1164 = vpop.f32.mrb[0].mxu0
    %1165 = vmatprep.mubr.bf16.mxu0 %v922
    %1166 = vmatmul.mubr.bf16.gmra.mrb[0].mxu0 %v921
    %v1167 = vpop.f32.mrb[0].mxu0
    %v1168 = vadd.f32 0.0, %v1167
    %v1169 = vpop.f32.mrb[0].mxu0
    %v1170 = vpop.f32.mrb[0].mxu0
    %v1171 = vadd.f32 0.0, %v1170
    %v1172 = vpop.f32.mrb[0].mxu0
    %1173 = vdwg.mxu0
    %1174 = vmatprep.subr.bf16.mxu0 0
    %1175 = vmatpush1.bf16.msra.mxu0 %v1085
    %1176 = vmatprep.subr.bf16.mxu0 0
    %1177 = vmatpush1.bf16.msra.mxu0 %v1086
    %1178 = vmatprep.subr.bf16.mxu0 0
    %1179 = vmatpush1.bf16.msra.mxu0 %v1087
    %1180 = vmatprep.subr.bf16.mxu0 0
    %1181 = vmatpush1.bf16.msra.mxu0 %v1088
    %1182 = vmatprep.subr.bf16.mxu0 0
    %1183 = vmatpush1.bf16.msra.mxu0 %v1089
    %1184 = vmatprep.subr.bf16.mxu0 0
    %1185 = vmatpush1.bf16.msra.mxu0 %v1090
    %1186 = vmatprep.subr.bf16.mxu0 0
    %1187 = vmatpush1.bf16.msra.mxu0 %v1091
    %1188 = vmatprep.subr.bf16.mxu0 0
    %1189 = vmatpush1.bf16.msra.mxu0 %v1092
    %1190 = vmatprep.subr.bf16.mxu0 0
    %1191 = vmatpush1.bf16.msra.mxu0 0
    %1192 = vmatprep.subr.bf16.mxu0 0
    %1193 = vmatpush1.bf16.msra.mxu0 0
    %1194 = vmatprep.subr.bf16.mxu0 0
    %1195 = vmatpush1.bf16.msra.mxu0 0
    %1196 = vmatprep.subr.bf16.mxu0 0
    %1197 = vmatpush1.bf16.msra.mxu0 0
    %1198 = vmatprep.subr.bf16.mxu0 0
    %1199 = vmatpush1.bf16.msra.mxu0 0
    %1200 = vmatprep.subr.bf16.mxu0 0
    %1201 = vmatpush1.bf16.msra.mxu0 0
    %1202 = vmatprep.subr.bf16.mxu0 0
    %1203 = vmatpush1.bf16.msra.mxu0 0
    %1204 = vmatprep.subr.bf16.mxu0 0
    %1205 = vmatpush1.bf16.msra.mxu0 0
    %1206 = vmatprep.mubr.bf16.mxu0 0
    %1207 = vmatmul.mubr.bf16.gmra.mrb[0].mxu0 %v917
    %v1208 = vpop.f32.mrb[0].mxu0
    %v1209 = vadd.f32 %v1152, %v1208
    %v1210 = vpop.f32.mrb[0].mxu0
    %v1211 = vpop.f32.mrb[0].mxu0
    %v1212 = vadd.f32 %v1155, %v1211
    %v1213 = vpop.f32.mrb[0].mxu0
    %1214 = vmatprep.mubr.bf16.mxu0 0
    %1215 = vmatmul.mubr.bf16.gmra.mrb[0].mxu0 %v920
    %v1216 = vpop.f32.mrb[0].mxu0
    %v1217 = vadd.f32 %v1160, %v1216
    %v1218 = vpop.f32.mrb[0].mxu0
    %v1219 = vpop.f32.mrb[0].mxu0
    %v1220 = vadd.f32 %v1163, %v1219
    %v1221 = vpop.f32.mrb[0].mxu0
    %1222 = vmatprep.mubr.bf16.mxu0 0
    %1223 = vmatmul.mubr.bf16.gmra.mrb[0].mxu0 %v923
    %v1224 = vpop.f32.mrb[0].mxu0
    %v1225 = vadd.f32 %v1168, %v1224
    %v1226 = vpop.f32.mrb[0].mxu0
    %v1227 = vpop.f32.mrb[0].mxu0
    %v1228 = vadd.f32 %v1171, %v1227
    %v1229 = vpop.f32.mrb[0].mxu0
    %1230 = vdwg.mxu0
    %v1231 = vadd.f32 %v1209, %v1217
    %v1232 = vadd.f32 %v1212, %v1220
    %v1233 = vadd.f32 %v1231, %v1225
    %v1234 = vadd.f32 %v1232, %v1228
    %v1235 = vmul.f32 %v1233, 0.0021978023
    %v1236 = vmul.f32 %v1234, 0.0021978023
    %1237 = vst [vmem:[#allocation3 + $0x8] sm:$0xff] %v1235
    %1238 = vst [vmem:[#allocation3 + $0x108] sm:$0xff] %v1236
    %v1239 = vld [vmem:[#allocation2 + $0x10] sm:$0xff]
    %v1240 = vld [vmem:[#allocation2 + $0x18] sm:$0xff]
    %v1241 = vld [vmem:[#allocation2 + $0x20] sm:$0xff]
    %v1242 = vld [vmem:[#allocation2 + $0x120] sm:$0xff]
    %v1243 = vld [vmem:[#allocation2 + $0x128] sm:$0xff]
    %v1244 = vld [vmem:[#allocation2 + $0x130] sm:$0xff]
    %v1245 = vld [vmem:[#allocation2 + $0x230] sm:$0xff]
    %v1246 = vld [vmem:[#allocation2 + $0x238] sm:$0xff]
    %v1247 = vld [vmem:[#allocation2 + $0x240] sm:$0xff]
    %v1248 = vld [vmem:[%s924] sm:$0xf]
    %v1249 = vld [vmem:[%s924 + $0x4] sm:$0xf]
    %v1250 = vld [vmem:[%s924 + $0x8] sm:$0xf]
    %v1251 = vld [vmem:[%s924 + $0xc] sm:$0xf]
    %v1252 = vld [vmem:[%s924 + $0x10] sm:$0xf]
    %v1253 = vld [vmem:[%s924 + $0x14] sm:$0xf]
    %v1254 = vld [vmem:[%s924 + $0x18] sm:$0xf]
    %v1255 = vld [vmem:[%s924 + $0x1c] sm:$0xf]
    %v1256 = vld [vmem:[%s924 + $0x20] sm:$0xf]
    %v1257 = vld [vmem:[%s924 + $0x24] sm:$0xf]
    %v1258 = vld [vmem:[%s924 + $0x28] sm:$0xf]
    %v1259 = vld [vmem:[%s924 + $0x2c] sm:$0xf]
    %v1260 = vld [vmem:[%s924 + $0x30] sm:$0xf]
    %v1261 = vld [vmem:[%s924 + $0x34] sm:$0xf]
    %v1262 = vld [vmem:[%s924 + $0x38] sm:$0xf]
    %v1263 = vld [vmem:[%s924 + $0x3c] sm:$0xf]
    %v1264 = vld [vmem:[%s924 + $0x40] sm:$0xf]
    %v1265 = vld [vmem:[%s924 + $0x44] sm:$0xf]
    %v1266 = vld [vmem:[%s924 + $0x48] sm:$0xf]
    %v1267 = vld [vmem:[%s924 + $0x4c] sm:$0xf]
    %v1268 = vld [vmem:[%s924 + $0x50] sm:$0xf]
    %v1269 = vld [vmem:[%s924 + $0x54] sm:$0xf]
    %v1270 = vld [vmem:[%s924 + $0x58] sm:$0xf]
    %v1271 = vld [vmem:[%s924 + $0x5c] sm:$0xf]
    %v1272 = vld [vmem:[%s924 + $0x60] sm:$0xf]
    %v1273 = vld [vmem:[%s924 + $0x64] sm:$0xf]
    %v1274 = vld [vmem:[%s924 + $0x68] sm:$0xf]
    %v1275 = vld [vmem:[%s924 + $0x6c] sm:$0xf]
    %v1276 = vld [vmem:[%s924 + $0x70] sm:$0xf]
    %v1277 = vld [vmem:[%s924 + $0x74] sm:$0xf]
    %v1278 = vld [vmem:[%s924 + $0x78] sm:$0xf]
    %v1279 = vld [vmem:[%s924 + $0x7c] sm:$0xf]
    %v1280 = vld [vmem:[%s924 + $0x80] sm:$0xf]
    %v1281 = vld [vmem:[%s924 + $0x84] sm:$0xf]
    %v1282 = vld [vmem:[%s924 + $0x88] sm:$0xf]
    %v1283 = vld [vmem:[%s924 + $0x8c] sm:$0xf]
    %v1284 = vld [vmem:[%s924 + $0x90] sm:$0xf]
    %v1285 = vld [vmem:[%s924 + $0x94] sm:$0xf]
    %v1286 = vld [vmem:[%s924 + $0x98] sm:$0xf]
    %v1287 = vld [vmem:[%s924 + $0x9c] sm:$0xf]
    %v1288 = vld [vmem:[%s924 + $0xa0] sm:$0xf]
    %v1289 = vld [vmem:[%s924 + $0xa4] sm:$0xf]
    %v1290 = vld [vmem:[%s924 + $0xa8] sm:$0xf]
    %v1291 = vld [vmem:[%s924 + $0xac] sm:$0xf]
    %v1292 = vld [vmem:[%s924 + $0xb0] sm:$0xf]
    %v1293 = vld [vmem:[%s924 + $0xb4] sm:$0xf]
    %v1294 = vld [vmem:[%s924 + $0xb8] sm:$0xf]
    %v1295 = vld [vmem:[%s924 + $0xbc] sm:$0xf]
    %v1344 = vunpack.c.l.b16 %v1248
    %v1345 = vunpack.c.l.b16 %v1249
    %v1346 = vunpack.c.l.b16 %v1250
    %v1347 = vunpack.c.l.b16 %v1251
    %v1348 = vunpack.c.l.b16 %v1252
    %v1349 = vunpack.c.l.b16 %v1253
    %v1350 = vunpack.c.l.b16 %v1254
    %v1351 = vunpack.c.l.b16 %v1255
    %v1352 = vunpack.c.l.b16 %v1256
    %v1353 = vunpack.c.l.b16 %v1257
    %v1354 = vunpack.c.l.b16 %v1258
    %v1355 = vunpack.c.l.b16 %v1259
    %v1356 = vunpack.c.l.b16 %v1260
    %v1357 = vunpack.c.l.b16 %v1261
    %v1358 = vunpack.c.l.b16 %v1262
    %v1359 = vunpack.c.l.b16 %v1263
    %v1360 = vunpack.c.l.b16 %v1264
    %v1361 = vunpack.c.l.b16 %v1265
    %v1362 = vunpack.c.l.b16 %v1266
    %v1363 = vunpack.c.l.b16 %v1267
    %v1364 = vunpack.c.l.b16 %v1268
    %v1365 = vunpack.c.l.b16 %v1269
    %v1366 = vunpack.c.l.b16 %v1270
    %v1367 = vunpack.c.l.b16 %v1271
    %v1368 = vunpack.c.l.b16 %v1272
    %v1369 = vunpack.c.l.b16 %v1273
    %v1370 = vunpack.c.l.b16 %v1274
    %v1371 = vunpack.c.l.b16 %v1275
    %v1372 = vunpack.c.l.b16 %v1276
    %v1373 = vunpack.c.l.b16 %v1277
    %v1374 = vunpack.c.l.b16 %v1278
    %v1375 = vunpack.c.l.b16 %v1279
    %v1376 = vunpack.c.l.b16 %v1280
    %v1377 = vunpack.c.l.b16 %v1281
    %v1378 = vunpack.c.l.b16 %v1282
    %v1379 = vunpack.c.l.b16 %v1283
    %v1380 = vunpack.c.l.b16 %v1284
    %v1381 = vunpack.c.l.b16 %v1285
    %v1382 = vunpack.c.l.b16 %v1286
    %v1383 = vunpack.c.l.b16 %v1287
    %v1384 = vunpack.c.l.b16 %v1288
    %v1385 = vunpack.c.l.b16 %v1289
    %v1386 = vunpack.c.l.b16 %v1290
    %v1387 = vunpack.c.l.b16 %v1291
    %v1388 = vunpack.c.l.b16 %v1292
    %v1389 = vunpack.c.l.b16 %v1293
    %v1390 = vunpack.c.l.b16 %v1294
    %v1391 = vunpack.c.l.b16 %v1295
    %v1392 = vpack.c.b16 %v1345, %v1344
    %v1393 = vpack.c.b16 %v1347, %v1346
    %v1394 = vpack.c.b16 %v1349, %v1348
    %v1395 = vpack.c.b16 %v1351, %v1350
    %v1396 = vpack.c.b16 %v1353, %v1352
    %v1397 = vpack.c.b16 %v1355, %v1354
    %v1398 = vpack.c.b16 %v1357, %v1356
    %v1399 = vpack.c.b16 %v1359, %v1358
    %v1400 = vpack.c.b16 %v1361, %v1360
    %v1401 = vpack.c.b16 %v1363, %v1362
    %v1402 = vpack.c.b16 %v1365, %v1364
    %v1403 = vpack.c.b16 %v1367, %v1366
    %v1404 = vpack.c.b16 %v1369, %v1368
    %v1405 = vpack.c.b16 %v1371, %v1370
    %v1406 = vpack.c.b16 %v1373, %v1372
    %v1407 = vpack.c.b16 %v1375, %v1374
    %v1408 = vpack.c.b16 %v1377, %v1376
    %v1409 = vpack.c.b16 %v1379, %v1378
    %v1410 = vpack.c.b16 %v1381, %v1380
    %v1411 = vpack.c.b16 %v1383, %v1382
    %v1412 = vpack.c.b16 %v1385, %v1384
    %v1413 = vpack.c.b16 %v1387, %v1386
    %v1414 = vpack.c.b16 %v1389, %v1388
    %v1415 = vpack.c.b16 %v1391, %v1390
    %1440 = vmatprep.subr.bf16.mxu0 0
    %1441 = vmatpush1.bf16.msra.mxu0 %v1392
    %1442 = vmatprep.subr.bf16.mxu0 0
    %1443 = vmatpush1.bf16.msra.mxu0 %v1393
    %1444 = vmatprep.subr.bf16.mxu0 0
    %1445 = vmatpush1.bf16.msra.mxu0 %v1394
    %1446 = vmatprep.subr.bf16.mxu0 0
    %1447 = vmatpush1.bf16.msra.mxu0 %v1395
    %1448 = vmatprep.subr.bf16.mxu0 0
    %1449 = vmatpush1.bf16.msra.mxu0 %v1396
    %1450 = vmatprep.subr.bf16.mxu0 0
    %1451 = vmatpush1.bf16.msra.mxu0 %v1397
    %1452 = vmatprep.subr.bf16.mxu0 0
    %1453 = vmatpush1.bf16.msra.mxu0 %v1398
    %1454 = vmatprep.subr.bf16.mxu0 0
    %1455 = vmatpush1.bf16.msra.mxu0 %v1399
    %1456 = vmatprep.subr.bf16.mxu0 0
    %1457 = vmatpush1.bf16.msra.mxu0 %v1400
    %1458 = vmatprep.subr.bf16.mxu0 0
    %1459 = vmatpush1.bf16.msra.mxu0 %v1401
    %1460 = vmatprep.subr.bf16.mxu0 0
    %1461 = vmatpush1.bf16.msra.mxu0 %v1402
    %1462 = vmatprep.subr.bf16.mxu0 0
    %1463 = vmatpush1.bf16.msra.mxu0 %v1403
    %1464 = vmatprep.subr.bf16.mxu0 0
    %1465 = vmatpush1.bf16.msra.mxu0 %v1404
    %1466 = vmatprep.subr.bf16.mxu0 0
    %1467 = vmatpush1.bf16.msra.mxu0 %v1405
    %1468 = vmatprep.subr.bf16.mxu0 0
    %1469 = vmatpush1.bf16.msra.mxu0 %v1406
    %1470 = vmatprep.subr.bf16.mxu0 0
    %1471 = vmatpush1.bf16.msra.mxu0 %v1407
    %1472 = vmatprep.mubr.bf16.mxu0 %v1240
    %1473 = vmatmul.mubr.bf16.gmra.mrb[0].mxu0 %v1239
    %v1474 = vpop.f32.mrb[0].mxu0
    %v1475 = vadd.f32 0.0, %v1474
    %v1476 = vpop.f32.mrb[0].mxu0
    %v1477 = vpop.f32.mrb[0].mxu0
    %v1478 = vadd.f32 0.0, %v1477
    %v1479 = vpop.f32.mrb[0].mxu0
    %1480 = vmatprep.mubr.bf16.mxu0 %v1243
    %1481 = vmatmul.mubr.bf16.gmra.mrb[0].mxu0 %v1242
    %v1482 = vpop.f32.mrb[0].mxu0
    %v1483 = vadd.f32 0.0, %v1482
    %v1484 = vpop.f32.mrb[0].mxu0
    %v1485 = vpop.f32.mrb[0].mxu0
    %v1486 = vadd.f32 0.0, %v1485
    %v1487 = vpop.f32.mrb[0].mxu0
    %1488 = vmatprep.mubr.bf16.mxu0 %v1246
    %1489 = vmatmul.mubr.bf16.gmra.mrb[0].mxu0 %v1245
    %v1490 = vpop.f32.mrb[0].mxu0
    %v1491 = vadd.f32 0.0, %v1490
    %v1492 = vpop.f32.mrb[0].mxu0
    %v1493 = vpop.f32.mrb[0].mxu0
    %v1494 = vadd.f32 0.0, %v1493
    %v1495 = vpop.f32.mrb[0].mxu0
    %1496 = vdwg.mxu0
    %1497 = vmatprep.subr.bf16.mxu0 0
    %1498 = vmatpush1.bf16.msra.mxu0 %v1408
    %1499 = vmatprep.subr.bf16.mxu0 0
    %1500 = vmatpush1.bf16.msra.mxu0 %v1409
    %1501 = vmatprep.subr.bf16.mxu0 0
    %1502 = vmatpush1.bf16.msra.mxu0 %v1410
    %1503 = vmatprep.subr.bf16.mxu0 0
    %1504 = vmatpush1.bf16.msra.mxu0 %v1411
    %1505 = vmatprep.subr.bf16.mxu0 0
    %1506 = vmatpush1.bf16.msra.mxu0 %v1412
    %1507 = vmatprep.subr.bf16.mxu0 0
    %1508 = vmatpush1.bf16.msra.mxu0 %v1413
    %1509 = vmatprep.subr.bf16.mxu0 0
    %1510 = vmatpush1.bf16.msra.mxu0 %v1414
    %1511 = vmatprep.subr.bf16.mxu0 0
    %1512 = vmatpush1.bf16.msra.mxu0 %v1415
    %1513 = vmatprep.subr.bf16.mxu0 0
    %1514 = vmatpush1.bf16.msra.mxu0 0
    %1515 = vmatprep.subr.bf16.mxu0 0
    %1516 = vmatpush1.bf16.msra.mxu0 0
    %1517 = vmatprep.subr.bf16.mxu0 0
    %1518 = vmatpush1.bf16.msra.mxu0 0
    %1519 = vmatprep.subr.bf16.mxu0 0
    %1520 = vmatpush1.bf16.msra.mxu0 0
    %1521 = vmatprep.subr.bf16.mxu0 0
    %1522 = vmatpush1.bf16.msra.mxu0 0
    %1523 = vmatprep.subr.bf16.mxu0 0
    %1524 = vmatpush1.bf16.msra.mxu0 0
    %1525 = vmatprep.subr.bf16.mxu0 0
    %1526 = vmatpush1.bf16.msra.mxu0 0
    %1527 = vmatprep.subr.bf16.mxu0 0
    %1528 = vmatpush1.bf16.msra.mxu0 0
    %1529 = vmatprep.mubr.bf16.mxu0 0
    %1530 = vmatmul.mubr.bf16.gmra.mrb[0].mxu0 %v1241
    %v1531 = vpop.f32.mrb[0].mxu0
    %v1532 = vadd.f32 %v1475, %v1531
    %v1533 = vpop.f32.mrb[0].mxu0
    %v1534 = vpop.f32.mrb[0].mxu0
    %v1535 = vadd.f32 %v1478, %v1534
    %v1536 = vpop.f32.mrb[0].mxu0
    %1537 = vmatprep.mubr.bf16.mxu0 0
    %1538 = vmatmul.mubr.bf16.gmra.mrb[0].mxu0 %v1244
    %v1539 = vpop.f32.mrb[0].mxu0
    %v1540 = vadd.f32 %v1483, %v1539
    %v1541 = vpop.f32.mrb[0].mxu0
    %v1542 = vpop.f32.mrb[0].mxu0
    %v1543 = vadd.f32 %v1486, %v1542
    %v1544 = vpop.f32.mrb[0].mxu0
    %1545 = vmatprep.mubr.bf16.mxu0 0
    %1546 = vmatmul.mubr.bf16.gmra.mrb[0].mxu0 %v1247
    %v1547 = vpop.f32.mrb[0].mxu0
    %v1548 = vadd.f32 %v1491, %v1547
    %v1549 = vpop.f32.mrb[0].mxu0
    %v1550 = vpop.f32.mrb[0].mxu0
    %v1551 = vadd.f32 %v1494, %v1550
    %v1552 = vpop.f32.mrb[0].mxu0
    %1553 = vdwg.mxu0
    %v1554 = vadd.f32 %v1532, %v1540
    %v1555 = vadd.f32 %v1535, %v1543
    %v1556 = vadd.f32 %v1554, %v1548
    %v1557 = vadd.f32 %v1555, %v1551
    %v1558 = vmul.f32 %v1556, 0.0021978023
    %v1559 = vmul.f32 %v1557, 0.0021978023
    %1560 = vst [vmem:[#allocation3 + $0x10] sm:$0xff] %v1558
    %1561 = vst [vmem:[#allocation3 + $0x110] sm:$0xff] %v1559
    %v1562 = vld [vmem:[#allocation2 + $0x18] sm:$0xff]
    %v1563 = vld [vmem:[#allocation2 + $0x20] sm:$0xff]
    %v1564 = vld [vmem:[#allocation2 + $0x28] sm:$0xff]
    %v1565 = vld [vmem:[#allocation2 + $0x128] sm:$0xff]
    %v1566 = vld [vmem:[#allocation2 + $0x130] sm:$0xff]
    %v1567 = vld [vmem:[#allocation2 + $0x138] sm:$0xff]
    %v1568 = vld [vmem:[#allocation2 + $0x238] sm:$0xff]
    %v1569 = vld [vmem:[#allocation2 + $0x240] sm:$0xff]
    %v1570 = vld [vmem:[#allocation2 + $0x248] sm:$0xff]
    %v1571 = vld [vmem:[%s924] sm:$0xf]
    %v1572 = vld [vmem:[%s924 + $0x4] sm:$0xf]
    %v1573 = vld [vmem:[%s924 + $0x8] sm:$0xf]
    %v1574 = vld [vmem:[%s924 + $0xc] sm:$0xf]
    %v1575 = vld [vmem:[%s924 + $0x10] sm:$0xf]
    %v1576 = vld [vmem:[%s924 + $0x14] sm:$0xf]
    %v1577 = vld [vmem:[%s924 + $0x18] sm:$0xf]
    %v1578 = vld [vmem:[%s924 + $0x1c] sm:$0xf]
    %v1579 = vld [vmem:[%s924 + $0x20] sm:$0xf]
    %v1580 = vld [vmem:[%s924 + $0x24] sm:$0xf]
    %v1581 = vld [vmem:[%s924 + $0x28] sm:$0xf]
    %v1582 = vld [vmem:[%s924 + $0x2c] sm:$0xf]
    %v1583 = vld [vmem:[%s924 + $0x30] sm:$0xf]
    %v1584 = vld [vmem:[%s924 + $0x34] sm:$0xf]
    %v1585 = vld [vmem:[%s924 + $0x38] sm:$0xf]
    %v1586 = vld [vmem:[%s924 + $0x3c] sm:$0xf]
    %v1587 = vld [vmem:[%s924 + $0x40] sm:$0xf]
    %v1588 = vld [vmem:[%s924 + $0x44] sm:$0xf]
    %v1589 = vld [vmem:[%s924 + $0x48] sm:$0xf]
    %v1590 = vld [vmem:[%s924 + $0x4c] sm:$0xf]
    %v1591 = vld [vmem:[%s924 + $0x50] sm:$0xf]
    %v1592 = vld [vmem:[%s924 + $0x54] sm:$0xf]
    %v1593 = vld [vmem:[%s924 + $0x58] sm:$0xf]
    %v1594 = vld [vmem:[%s924 + $0x5c] sm:$0xf]
    %v1595 = vld [vmem:[%s924 + $0x60] sm:$0xf]
    %v1596 = vld [vmem:[%s924 + $0x64] sm:$0xf]
    %v1597 = vld [vmem:[%s924 + $0x68] sm:$0xf]
    %v1598 = vld [vmem:[%s924 + $0x6c] sm:$0xf]
    %v1599 = vld [vmem:[%s924 + $0x70] sm:$0xf]
    %v1600 = vld [vmem:[%s924 + $0x74] sm:$0xf]
    %v1601 = vld [vmem:[%s924 + $0x78] sm:$0xf]
    %v1602 = vld [vmem:[%s924 + $0x7c] sm:$0xf]
    %v1603 = vld [vmem:[%s924 + $0x80] sm:$0xf]
    %v1604 = vld [vmem:[%s924 + $0x84] sm:$0xf]
    %v1605 = vld [vmem:[%s924 + $0x88] sm:$0xf]
    %v1606 = vld [vmem:[%s924 + $0x8c] sm:$0xf]
    %v1607 = vld [vmem:[%s924 + $0x90] sm:$0xf]
    %v1608 = vld [vmem:[%s924 + $0x94] sm:$0xf]
    %v1609 = vld [vmem:[%s924 + $0x98] sm:$0xf]
    %v1610 = vld [vmem:[%s924 + $0x9c] sm:$0xf]
    %v1611 = vld [vmem:[%s924 + $0xa0] sm:$0xf]
    %v1612 = vld [vmem:[%s924 + $0xa4] sm:$0xf]
    %v1613 = vld [vmem:[%s924 + $0xa8] sm:$0xf]
    %v1614 = vld [vmem:[%s924 + $0xac] sm:$0xf]
    %v1615 = vld [vmem:[%s924 + $0xb0] sm:$0xf]
    %v1616 = vld [vmem:[%s924 + $0xb4] sm:$0xf]
    %v1617 = vld [vmem:[%s924 + $0xb8] sm:$0xf]
    %v1618 = vld [vmem:[%s924 + $0xbc] sm:$0xf]
    %v1667 = vunpack.c.l.b16 %v1571
    %v1668 = vunpack.c.l.b16 %v1572
    %v1669 = vunpack.c.l.b16 %v1573
    %v1670 = vunpack.c.l.b16 %v1574
    %v1671 = vunpack.c.l.b16 %v1575
    %v1672 = vunpack.c.l.b16 %v1576
    %v1673 = vunpack.c.l.b16 %v1577
    %v1674 = vunpack.c.l.b16 %v1578
    %v1675 = vunpack.c.l.b16 %v1579
    %v1676 = vunpack.c.l.b16 %v1580
    %v1677 = vunpack.c.l.b16 %v1581
    %v1678 = vunpack.c.l.b16 %v1582
    %v1679 = vunpack.c.l.b16 %v1583
    %v1680 = vunpack.c.l.b16 %v1584
    %v1681 = vunpack.c.l.b16 %v1585
    %v1682 = vunpack.c.l.b16 %v1586
    %v1683 = vunpack.c.l.b16 %v1587
    %v1684 = vunpack.c.l.b16 %v1588
    %v1685 = vunpack.c.l.b16 %v1589
    %v1686 = vunpack.c.l.b16 %v1590
    %v1687 = vunpack.c.l.b16 %v1591
    %v1688 = vunpack.c.l.b16 %v1592
    %v1689 = vunpack.c.l.b16 %v1593
    %v1690 = vunpack.c.l.b16 %v1594
    %v1691 = vunpack.c.l.b16 %v1595
    %v1692 = vunpack.c.l.b16 %v1596
    %v1693 = vunpack.c.l.b16 %v1597
    %v1694 = vunpack.c.l.b16 %v1598
    %v1695 = vunpack.c.l.b16 %v1599
    %v1696 = vunpack.c.l.b16 %v1600
    %v1697 = vunpack.c.l.b16 %v1601
    %v1698 = vunpack.c.l.b16 %v1602
    %v1699 = vunpack.c.l.b16 %v1603
    %v1700 = vunpack.c.l.b16 %v1604
    %v1701 = vunpack.c.l.b16 %v1605
    %v1702 = vunpack.c.l.b16 %v1606
    %v1703 = vunpack.c.l.b16 %v1607
    %v1704 = vunpack.c.l.b16 %v1608
    %v1705 = vunpack.c.l.b16 %v1609
    %v1706 = vunpack.c.l.b16 %v1610
    %v1707 = vunpack.c.l.b16 %v1611
    %v1708 = vunpack.c.l.b16 %v1612
    %v1709 = vunpack.c.l.b16 %v1613
    %v1710 = vunpack.c.l.b16 %v1614
    %v1711 = vunpack.c.l.b16 %v1615
    %v1712 = vunpack.c.l.b16 %v1616
    %v1713 = vunpack.c.l.b16 %v1617
    %v1714 = vunpack.c.l.b16 %v1618
    %v1715 = vpack.c.b16 %v1668, %v1667
    %v1716 = vpack.c.b16 %v1670, %v1669
    %v1717 = vpack.c.b16 %v1672, %v1671
    %v1718 = vpack.c.b16 %v1674, %v1673
    %v1719 = vpack.c.b16 %v1676, %v1675
    %v1720 = vpack.c.b16 %v1678, %v1677
    %v1721 = vpack.c.b16 %v1680, %v1679
    %v1722 = vpack.c.b16 %v1682, %v1681
    %v1723 = vpack.c.b16 %v1684, %v1683
    %v1724 = vpack.c.b16 %v1686, %v1685
    %v1725 = vpack.c.b16 %v1688, %v1687
    %v1726 = vpack.c.b16 %v1690, %v1689
    %v1727 = vpack.c.b16 %v1692, %v1691
    %v1728 = vpack.c.b16 %v1694, %v1693
    %v1729 = vpack.c.b16 %v1696, %v1695
    %v1730 = vpack.c.b16 %v1698, %v1697
    %v1731 = vpack.c.b16 %v1700, %v1699
    %v1732 = vpack.c.b16 %v1702, %v1701
    %v1733 = vpack.c.b16 %v1704, %v1703
    %v1734 = vpack.c.b16 %v1706, %v1705
    %v1735 = vpack.c.b16 %v1708, %v1707
    %v1736 = vpack.c.b16 %v1710, %v1709
    %v1737 = vpack.c.b16 %v1712, %v1711
    %v1738 = vpack.c.b16 %v1714, %v1713
    %1763 = vmatprep.subr.bf16.mxu0 0
    %1764 = vmatpush1.bf16.msra.mxu0 %v1715
    %1765 = vmatprep.subr.bf16.mxu0 0
    %1766 = vmatpush1.bf16.msra.mxu0 %v1716
    %1767 = vmatprep.subr.bf16.mxu0 0
    %1768 = vmatpush1.bf16.msra.mxu0 %v1717
    %1769 = vmatprep.subr.bf16.mxu0 0
    %1770 = vmatpush1.bf16.msra.mxu0 %v1718
    %1771 = vmatprep.subr.bf16.mxu0 0
    %1772 = vmatpush1.bf16.msra.mxu0 %v1719
    %1773 = vmatprep.subr.bf16.mxu0 0
    %1774 = vmatpush1.bf16.msra.mxu0 %v1720
    %1775 = vmatprep.subr.bf16.mxu0 0
    %1776 = vmatpush1.bf16.msra.mxu0 %v1721
    %1777 = vmatprep.subr.bf16.mxu0 0
    %1778 = vmatpush1.bf16.msra.mxu0 %v1722
    %1779 = vmatprep.subr.bf16.mxu0 0
    %1780 = vmatpush1.bf16.msra.mxu0 %v1723
    %1781 = vmatprep.subr.bf16.mxu0 0
    %1782 = vmatpush1.bf16.msra.mxu0 %v1724
    %1783 = vmatprep.subr.bf16.mxu0 0
    %1784 = vmatpush1.bf16.msra.mxu0 %v1725
    %1785 = vmatprep.subr.bf16.mxu0 0
    %1786 = vmatpush1.bf16.msra.mxu0 %v1726
    %1787 = vmatprep.subr.bf16.mxu0 0
    %1788 = vmatpush1.bf16.msra.mxu0 %v1727
    %1789 = vmatprep.subr.bf16.mxu0 0
    %1790 = vmatpush1.bf16.msra.mxu0 %v1728
    %1791 = vmatprep.subr.bf16.mxu0 0
    %1792 = vmatpush1.bf16.msra.mxu0 %v1729
    %1793 = vmatprep.subr.bf16.mxu0 0
    %1794 = vmatpush1.bf16.msra.mxu0 %v1730
    %1795 = vmatprep.mubr.bf16.mxu0 %v1563
    %1796 = vmatmul.mubr.bf16.gmra.mrb[0].mxu0 %v1562
    %v1797 = vpop.f32.mrb[0].mxu0
    %v1798 = vadd.f32 0.0, %v1797
    %v1799 = vpop.f32.mrb[0].mxu0
    %v1800 = vpop.f32.mrb[0].mxu0
    %v1801 = vadd.f32 0.0, %v1800
    %v1802 = vpop.f32.mrb[0].mxu0
    %1803 = vmatprep.mubr.bf16.mxu0 %v1566
    %1804 = vmatmul.mubr.bf16.gmra.mrb[0].mxu0 %v1565
    %v1805 = vpop.f32.mrb[0].mxu0
    %v1806 = vadd.f32 0.0, %v1805
    %v1807 = vpop.f32.mrb[0].mxu0
    %v1808 = vpop.f32.mrb[0].mxu0
    %v1809 = vadd.f32 0.0, %v1808
    %v1810 = vpop.f32.mrb[0].mxu0
    %1811 = vmatprep.mubr.bf16.mxu0 %v1569
    %1812 = vmatmul.mubr.bf16.gmra.mrb[0].mxu0 %v1568
    %v1813 = vpop.f32.mrb[0].mxu0
    %v1814 = vadd.f32 0.0, %v1813
    %v1815 = vpop.f32.mrb[0].mxu0
    %v1816 = vpop.f32.mrb[0].mxu0
    %v1817 = vadd.f32 0.0, %v1816
    %v1818 = vpop.f32.mrb[0].mxu0
    %1819 = vdwg.mxu0
    %1820 = vmatprep.subr.bf16.mxu0 0
    %1821 = vmatpush1.bf16.msra.mxu0 %v1731
    %1822 = vmatprep.subr.bf16.mxu0 0
    %1823 = vmatpush1.bf16.msra.mxu0 %v1732
    %1824 = vmatprep.subr.bf16.mxu0 0
    %1825 = vmatpush1.bf16.msra.mxu0 %v1733
    %1826 = vmatprep.subr.bf16.mxu0 0
    %1827 = vmatpush1.bf16.msra.mxu0 %v1734
    %1828 = vmatprep.subr.bf16.mxu0 0
    %1829 = vmatpush1.bf16.msra.mxu0 %v1735
    %1830 = vmatprep.subr.bf16.mxu0 0
    %1831 = vmatpush1.bf16.msra.mxu0 %v1736
    %1832 = vmatprep.subr.bf16.mxu0 0
    %1833 = vmatpush1.bf16.msra.mxu0 %v1737
    %1834 = vmatprep.subr.bf16.mxu0 0
    %1835 = vmatpush1.bf16.msra.mxu0 %v1738
    %1836 = vmatprep.subr.bf16.mxu0 0
    %1837 = vmatpush1.bf16.msra.mxu0 0
    %1838 = vmatprep.subr.bf16.mxu0 0
    %1839 = vmatpush1.bf16.msra.mxu0 0
    %1840 = vmatprep.subr.bf16.mxu0 0
    %1841 = vmatpush1.bf16.msra.mxu0 0
    %1842 = vmatprep.subr.bf16.mxu0 0
    %1843 = vmatpush1.bf16.msra.mxu0 0
    %1844 = vmatprep.subr.bf16.mxu0 0
    %1845 = vmatpush1.bf16.msra.mxu0 0
    %1846 = vmatprep.subr.bf16.mxu0 0
    %1847 = vmatpush1.bf16.msra.mxu0 0
    %1848 = vmatprep.subr.bf16.mxu0 0
    %1849 = vmatpush1.bf16.msra.mxu0 0
    %1850 = vmatprep.subr.bf16.mxu0 0
    %1851 = vmatpush1.bf16.msra.mxu0 0
    %1852 = vmatprep.mubr.bf16.mxu0 0
    %1853 = vmatmul.mubr.bf16.gmra.mrb[0].mxu0 %v1564
    %v1854 = vpop.f32.mrb[0].mxu0
    %v1855 = vadd.f32 %v1798, %v1854
    %v1856 = vpop.f32.mrb[0].mxu0
    %v1857 = vpop.f32.mrb[0].mxu0
    %v1858 = vadd.f32 %v1801, %v1857
    %v1859 = vpop.f32.mrb[0].mxu0
    %1860 = vmatprep.mubr.bf16.mxu0 0
    %1861 = vmatmul.mubr.bf16.gmra.mrb[0].mxu0 %v1567
    %v1862 = vpop.f32.mrb[0].mxu0
    %v1863 = vadd.f32 %v1806, %v1862
    %v1864 = vpop.f32.mrb[0].mxu0
    %v1865 = vpop.f32.mrb[0].mxu0
    %v1866 = vadd.f32 %v1809, %v1865
    %v1867 = vpop.f32.mrb[0].mxu0
    %1868 = vmatprep.mubr.bf16.mxu0 0
    %1869 = vmatmul.mubr.bf16.gmra.mrb[0].mxu0 %v1570
    %v1870 = vpop.f32.mrb[0].mxu0
    %v1871 = vadd.f32 %v1814, %v1870
    %v1872 = vpop.f32.mrb[0].mxu0
    %v1873 = vpop.f32.mrb[0].mxu0
    %v1874 = vadd.f32 %v1817, %v1873
    %v1875 = vpop.f32.mrb[0].mxu0
    %1876 = vdwg.mxu0
    %v1877 = vadd.f32 %v1855, %v1863
    %v1878 = vadd.f32 %v1858, %v1866
    %v1879 = vadd.f32 %v1877, %v1871
    %v1880 = vadd.f32 %v1878, %v1874
    %v1881 = vmul.f32 %v1879, 0.0021978023
    %v1882 = vmul.f32 %v1880, 0.0021978023
    %1883 = vst [vmem:[#allocation3 + $0x18] sm:$0xff] %v1881
    %1884 = vst [vmem:[#allocation3 + $0x118] sm:$0xff] %v1882
    %v1885 = vld [vmem:[#allocation2 + $0x20] sm:$0xff]
    %v1886 = vld [vmem:[#allocation2 + $0x28] sm:$0xff]
    %v1887 = vld [vmem:[#allocation2 + $0x30] sm:$0xff]
    %v1888 = vld [vmem:[#allocation2 + $0x130] sm:$0xff]
    %v1889 = vld [vmem:[#allocation2 + $0x138] sm:$0xff]
    %v1890 = vld [vmem:[#allocation2 + $0x140] sm:$0xff]
    %v1891 = vld [vmem:[#allocation2 + $0x240] sm:$0xff]
    %v1892 = vld [vmem:[#allocation2 + $0x248] sm:$0xff]
    %v1893 = vld [vmem:[#allocation2 + $0x250] sm:$0xff]
    %v1894 = vld [vmem:[%s924] sm:$0xf]
    %v1895 = vld [vmem:[%s924 + $0x4] sm:$0xf]
    %v1896 = vld [vmem:[%s924 + $0x8] sm:$0xf]
    %v1897 = vld [vmem:[%s924 + $0xc] sm:$0xf]
    %v1898 = vld [vmem:[%s924 + $0x10] sm:$0xf]
    %v1899 = vld [vmem:[%s924 + $0x14] sm:$0xf]
    %v1900 = vld [vmem:[%s924 + $0x18] sm:$0xf]
    %v1901 = vld [vmem:[%s924 + $0x1c] sm:$0xf]
    %v1902 = vld [vmem:[%s924 + $0x20] sm:$0xf]
    %v1903 = vld [vmem:[%s924 + $0x24] sm:$0xf]
    %v1904 = vld [vmem:[%s924 + $0x28] sm:$0xf]
    %v1905 = vld [vmem:[%s924 + $0x2c] sm:$0xf]
    %v1906 = vld [vmem:[%s924 + $0x30] sm:$0xf]
    %v1907 = vld [vmem:[%s924 + $0x34] sm:$0xf]
    %v1908 = vld [vmem:[%s924 + $0x38] sm:$0xf]
    %v1909 = vld [vmem:[%s924 + $0x3c] sm:$0xf]
    %v1910 = vld [vmem:[%s924 + $0x40] sm:$0xf]
    %v1911 = vld [vmem:[%s924 + $0x44] sm:$0xf]
    %v1912 = vld [vmem:[%s924 + $0x48] sm:$0xf]
    %v1913 = vld [vmem:[%s924 + $0x4c] sm:$0xf]
    %v1914 = vld [vmem:[%s924 + $0x50] sm:$0xf]
    %v1915 = vld [vmem:[%s924 + $0x54] sm:$0xf]
    %v1916 = vld [vmem:[%s924 + $0x58] sm:$0xf]
    %v1917 = vld [vmem:[%s924 + $0x5c] sm:$0xf]
    %v1918 = vld [vmem:[%s924 + $0x60] sm:$0xf]
    %v1919 = vld [vmem:[%s924 + $0x64] sm:$0xf]
    %v1920 = vld [vmem:[%s924 + $0x68] sm:$0xf]
    %v1921 = vld [vmem:[%s924 + $0x6c] sm:$0xf]
    %v1922 = vld [vmem:[%s924 + $0x70] sm:$0xf]
    %v1923 = vld [vmem:[%s924 + $0x74] sm:$0xf]
    %v1924 = vld [vmem:[%s924 + $0x78] sm:$0xf]
    %v1925 = vld [vmem:[%s924 + $0x7c] sm:$0xf]
    %v1926 = vld [vmem:[%s924 + $0x80] sm:$0xf]
    %v1927 = vld [vmem:[%s924 + $0x84] sm:$0xf]
    %v1928 = vld [vmem:[%s924 + $0x88] sm:$0xf]
    %v1929 = vld [vmem:[%s924 + $0x8c] sm:$0xf]
    %v1930 = vld [vmem:[%s924 + $0x90] sm:$0xf]
    %v1931 = vld [vmem:[%s924 + $0x94] sm:$0xf]
    %v1932 = vld [vmem:[%s924 + $0x98] sm:$0xf]
    %v1933 = vld [vmem:[%s924 + $0x9c] sm:$0xf]
    %v1934 = vld [vmem:[%s924 + $0xa0] sm:$0xf]
    %v1935 = vld [vmem:[%s924 + $0xa4] sm:$0xf]
    %v1936 = vld [vmem:[%s924 + $0xa8] sm:$0xf]
    %v1937 = vld [vmem:[%s924 + $0xac] sm:$0xf]
    %v1938 = vld [vmem:[%s924 + $0xb0] sm:$0xf]
    %v1939 = vld [vmem:[%s924 + $0xb4] sm:$0xf]
    %v1940 = vld [vmem:[%s924 + $0xb8] sm:$0xf]
    %v1941 = vld [vmem:[%s924 + $0xbc] sm:$0xf]
    %v1990 = vunpack.c.l.b16 %v1894
    %v1991 = vunpack.c.l.b16 %v1895
    %v1992 = vunpack.c.l.b16 %v1896
    %v1993 = vunpack.c.l.b16 %v1897
    %v1994 = vunpack.c.l.b16 %v1898
    %v1995 = vunpack.c.l.b16 %v1899
    %v1996 = vunpack.c.l.b16 %v1900
    %v1997 = vunpack.c.l.b16 %v1901
    %v1998 = vunpack.c.l.b16 %v1902
    %v1999 = vunpack.c.l.b16 %v1903
    %v2000 = vunpack.c.l.b16 %v1904
    %v2001 = vunpack.c.l.b16 %v1905
    %v2002 = vunpack.c.l.b16 %v1906
    %v2003 = vunpack.c.l.b16 %v1907
    %v2004 = vunpack.c.l.b16 %v1908
    %v2005 = vunpack.c.l.b16 %v1909
    %v2006 = vunpack.c.l.b16 %v1910
    %v2007 = vunpack.c.l.b16 %v1911
    %v2008 = vunpack.c.l.b16 %v1912
    %v2009 = vunpack.c.l.b16 %v1913
    %v2010 = vunpack.c.l.b16 %v1914
    %v2011 = vunpack.c.l.b16 %v1915
    %v2012 = vunpack.c.l.b16 %v1916
    %v2013 = vunpack.c.l.b16 %v1917
    %v2014 = vunpack.c.l.b16 %v1918
    %v2015 = vunpack.c.l.b16 %v1919
    %v2016 = vunpack.c.l.b16 %v1920
    %v2017 = vunpack.c.l.b16 %v1921
    %v2018 = vunpack.c.l.b16 %v1922
    %v2019 = vunpack.c.l.b16 %v1923
    %v2020 = vunpack.c.l.b16 %v1924
    %v2021 = vunpack.c.l.b16 %v1925
    %v2022 = vunpack.c.l.b16 %v1926
    %v2023 = vunpack.c.l.b16 %v1927
    %v2024 = vunpack.c.l.b16 %v1928
    %v2025 = vunpack.c.l.b16 %v1929
    %v2026 = vunpack.c.l.b16 %v1930
    %v2027 = vunpack.c.l.b16 %v1931
    %v2028 = vunpack.c.l.b16 %v1932
    %v2029 = vunpack.c.l.b16 %v1933
    %v2030 = vunpack.c.l.b16 %v1934
    %v2031 = vunpack.c.l.b16 %v1935
    %v2032 = vunpack.c.l.b16 %v1936
    %v2033 = vunpack.c.l.b16 %v1937
    %v2034 = vunpack.c.l.b16 %v1938
    %v2035 = vunpack.c.l.b16 %v1939
    %v2036 = vunpack.c.l.b16 %v1940
    %v2037 = vunpack.c.l.b16 %v1941
    %v2038 = vpack.c.b16 %v1991, %v1990
    %v2039 = vpack.c.b16 %v1993, %v1992
    %v2040 = vpack.c.b16 %v1995, %v1994
    %v2041 = vpack.c.b16 %v1997, %v1996
    %v2042 = vpack.c.b16 %v1999, %v1998
    %v2043 = vpack.c.b16 %v2001, %v2000
    %v2044 = vpack.c.b16 %v2003, %v2002
    %v2045 = vpack.c.b16 %v2005, %v2004
    %v2046 = vpack.c.b16 %v2007, %v2006
    %v2047 = vpack.c.b16 %v2009, %v2008
    %v2048 = vpack.c.b16 %v2011, %v2010
    %v2049 = vpack.c.b16 %v2013, %v2012
    %v2050 = vpack.c.b16 %v2015, %v2014
    %v2051 = vpack.c.b16 %v2017, %v2016
    %v2052 = vpack.c.b16 %v2019, %v2018
    %v2053 = vpack.c.b16 %v2021, %v2020
    %v2054 = vpack.c.b16 %v2023, %v2022
    %v2055 = vpack.c.b16 %v2025, %v2024
    %v2056 = vpack.c.b16 %v2027, %v2026
    %v2057 = vpack.c.b16 %v2029, %v2028
    %v2058 = vpack.c.b16 %v2031, %v2030
    %v2059 = vpack.c.b16 %v2033, %v2032
    %v2060 = vpack.c.b16 %v2035, %v2034
    %v2061 = vpack.c.b16 %v2037, %v2036
    %2086 = vmatprep.subr.bf16.mxu0 0
    %2087 = vmatpush1.bf16.msra.mxu0 %v2038
    %2088 = vmatprep.subr.bf16.mxu0 0
    %2089 = vmatpush1.bf16.msra.mxu0 %v2039
    %2090 = vmatprep.subr.bf16.mxu0 0
    %2091 = vmatpush1.bf16.msra.mxu0 %v2040
    %2092 = vmatprep.subr.bf16.mxu0 0
    %2093 = vmatpush1.bf16.msra.mxu0 %v2041
    %2094 = vmatprep.subr.bf16.mxu0 0
    %2095 = vmatpush1.bf16.msra.mxu0 %v2042
    %2096 = vmatprep.subr.bf16.mxu0 0
    %2097 = vmatpush1.bf16.msra.mxu0 %v2043
    %2098 = vmatprep.subr.bf16.mxu0 0
    %2099 = vmatpush1.bf16.msra.mxu0 %v2044
    %2100 = vmatprep.subr.bf16.mxu0 0
    %2101 = vmatpush1.bf16.msra.mxu0 %v2045
    %2102 = vmatprep.subr.bf16.mxu0 0
    %2103 = vmatpush1.bf16.msra.mxu0 %v2046
    %2104 = vmatprep.subr.bf16.mxu0 0
    %2105 = vmatpush1.bf16.msra.mxu0 %v2047
    %2106 = vmatprep.subr.bf16.mxu0 0
    %2107 = vmatpush1.bf16.msra.mxu0 %v2048
    %2108 = vmatprep.subr.bf16.mxu0 0
    %2109 = vmatpush1.bf16.msra.mxu0 %v2049
    %2110 = vmatprep.subr.bf16.mxu0 0
    %2111 = vmatpush1.bf16.msra.mxu0 %v2050
    %2112 = vmatprep.subr.bf16.mxu0 0
    %2113 = vmatpush1.bf16.msra.mxu0 %v2051
    %2114 = vmatprep.subr.bf16.mxu0 0
    %2115 = vmatpush1.bf16.msra.mxu0 %v2052
    %2116 = vmatprep.subr.bf16.mxu0 0
    %2117 = vmatpush1.bf16.msra.mxu0 %v2053
    %2118 = vmatprep.mubr.bf16.mxu0 %v1886
    %2119 = vmatmul.mubr.bf16.gmra.mrb[0].mxu0 %v1885
    %v2120 = vpop.f32.mrb[0].mxu0
    %v2121 = vadd.f32 0.0, %v2120
    %v2122 = vpop.f32.mrb[0].mxu0
    %v2123 = vpop.f32.mrb[0].mxu0
    %v2124 = vadd.f32 0.0, %v2123
    %v2125 = vpop.f32.mrb[0].mxu0
    %2126 = vmatprep.mubr.bf16.mxu0 %v1889
    %2127 = vmatmul.mubr.bf16.gmra.mrb[0].mxu0 %v1888
    %v2128 = vpop.f32.mrb[0].mxu0
    %v2129 = vadd.f32 0.0, %v2128
    %v2130 = vpop.f32.mrb[0].mxu0
    %v2131 = vpop.f32.mrb[0].mxu0
    %v2132 = vadd.f32 0.0, %v2131
    %v2133 = vpop.f32.mrb[0].mxu0
    %2134 = vmatprep.mubr.bf16.mxu0 %v1892
    %2135 = vmatmul.mubr.bf16.gmra.mrb[0].mxu0 %v1891
    %v2136 = vpop.f32.mrb[0].mxu0
    %v2137 = vadd.f32 0.0, %v2136
    %v2138 = vpop.f32.mrb[0].mxu0
    %v2139 = vpop.f32.mrb[0].mxu0
    %v2140 = vadd.f32 0.0, %v2139
    %v2141 = vpop.f32.mrb[0].mxu0
    %2142 = vdwg.mxu0
    %2143 = vmatprep.subr.bf16.mxu0 0
    %2144 = vmatpush1.bf16.msra.mxu0 %v2054
    %2145 = vmatprep.subr.bf16.mxu0 0
    %2146 = vmatpush1.bf16.msra.mxu0 %v2055
    %2147 = vmatprep.subr.bf16.mxu0 0
    %2148 = vmatpush1.bf16.msra.mxu0 %v2056
    %2149 = vmatprep.subr.bf16.mxu0 0
    %2150 = vmatpush1.bf16.msra.mxu0 %v2057
    %2151 = vmatprep.subr.bf16.mxu0 0
    %2152 = vmatpush1.bf16.msra.mxu0 %v2058
    %2153 = vmatprep.subr.bf16.mxu0 0
    %2154 = vmatpush1.bf16.msra.mxu0 %v2059
    %2155 = vmatprep.subr.bf16.mxu0 0
    %2156 = vmatpush1.bf16.msra.mxu0 %v2060
    %2157 = vmatprep.subr.bf16.mxu0 0
    %2158 = vmatpush1.bf16.msra.mxu0 %v2061
    %2159 = vmatprep.subr.bf16.mxu0 0
    %2160 = vmatpush1.bf16.msra.mxu0 0
    %2161 = vmatprep.subr.bf16.mxu0 0
    %2162 = vmatpush1.bf16.msra.mxu0 0
    %2163 = vmatprep.subr.bf16.mxu0 0
    %2164 = vmatpush1.bf16.msra.mxu0 0
    %2165 = vmatprep.subr.bf16.mxu0 0
    %2166 = vmatpush1.bf16.msra.mxu0 0
    %2167 = vmatprep.subr.bf16.mxu0 0
    %2168 = vmatpush1.bf16.msra.mxu0 0
    %2169 = vmatprep.subr.bf16.mxu0 0
    %2170 = vmatpush1.bf16.msra.mxu0 0
    %2171 = vmatprep.subr.bf16.mxu0 0
    %2172 = vmatpush1.bf16.msra.mxu0 0
    %2173 = vmatprep.subr.bf16.mxu0 0
    %2174 = vmatpush1.bf16.msra.mxu0 0
    %2175 = vmatprep.mubr.bf16.mxu0 0
    %2176 = vmatmul.mubr.bf16.gmra.mrb[0].mxu0 %v1887
    %v2177 = vpop.f32.mrb[0].mxu0
    %v2178 = vadd.f32 %v2121, %v2177
    %v2179 = vpop.f32.mrb[0].mxu0
    %v2180 = vpop.f32.mrb[0].mxu0
    %v2181 = vadd.f32 %v2124, %v2180
    %v2182 = vpop.f32.mrb[0].mxu0
    %2183 = vmatprep.mubr.bf16.mxu0 0
    %2184 = vmatmul.mubr.bf16.gmra.mrb[0].mxu0 %v1890
    %v2185 = vpop.f32.mrb[0].mxu0
    %v2186 = vadd.f32 %v2129, %v2185
    %v2187 = vpop.f32.mrb[0].mxu0
    %v2188 = vpop.f32.mrb[0].mxu0
    %v2189 = vadd.f32 %v2132, %v2188
    %v2190 = vpop.f32.mrb[0].mxu0
    %2191 = vmatprep.mubr.bf16.mxu0 0
    %2192 = vmatmul.mubr.bf16.gmra.mrb[0].mxu0 %v1893
    %v2193 = vpop.f32.mrb[0].mxu0
    %v2194 = vadd.f32 %v2137, %v2193
    %v2195 = vpop.f32.mrb[0].mxu0
    %v2196 = vpop.f32.mrb[0].mxu0
    %v2197 = vadd.f32 %v2140, %v2196
    %v2198 = vpop.f32.mrb[0].mxu0
    %2199 = vdwg.mxu0
    %v2200 = vadd.f32 %v2178, %v2186
    %v2201 = vadd.f32 %v2181, %v2189
    %v2202 = vadd.f32 %v2200, %v2194
    %v2203 = vadd.f32 %v2201, %v2197
    %v2204 = vmul.f32 %v2202, 0.0021978023
    %v2205 = vmul.f32 %v2203, 0.0021978023
    %2206 = vst [vmem:[#allocation3 + $0x20] sm:$0xff] %v2204
    %2207 = vst [vmem:[#allocation3 + $0x120] sm:$0xff] %v2205
    %v2208 = vld [vmem:[#allocation2 + $0x28] sm:$0xff]
    %v2209 = vld [vmem:[#allocation2 + $0x30] sm:$0xff]
    %v2210 = vld [vmem:[#allocation2 + $0x38] sm:$0xff]
    %v2211 = vld [vmem:[#allocation2 + $0x138] sm:$0xff]
    %v2212 = vld [vmem:[#allocation2 + $0x140] sm:$0xff]
    %v2213 = vld [vmem:[#allocation2 + $0x148] sm:$0xff]
    %v2214 = vld [vmem:[#allocation2 + $0x248] sm:$0xff]
    %v2215 = vld [vmem:[#allocation2 + $0x250] sm:$0xff]
    %v2216 = vld [vmem:[#allocation2 + $0x258] sm:$0xff]
    %v2217 = vld [vmem:[%s924] sm:$0xf]
    %v2218 = vld [vmem:[%s924 + $0x4] sm:$0xf]
    %v2219 = vld [vmem:[%s924 + $0x8] sm:$0xf]
    %v2220 = vld [vmem:[%s924 + $0xc] sm:$0xf]
    %v2221 = vld [vmem:[%s924 + $0x10] sm:$0xf]
    %v2222 = vld [vmem:[%s924 + $0x14] sm:$0xf]
    %v2223 = vld [vmem:[%s924 + $0x18] sm:$0xf]
    %v2224 = vld [vmem:[%s924 + $0x1c] sm:$0xf]
    %v2225 = vld [vmem:[%s924 + $0x20] sm:$0xf]
    %v2226 = vld [vmem:[%s924 + $0x24] sm:$0xf]
    %v2227 = vld [vmem:[%s924 + $0x28] sm:$0xf]
    %v2228 = vld [vmem:[%s924 + $0x2c] sm:$0xf]
    %v2229 = vld [vmem:[%s924 + $0x30] sm:$0xf]
    %v2230 = vld [vmem:[%s924 + $0x34] sm:$0xf]
    %v2231 = vld [vmem:[%s924 + $0x38] sm:$0xf]
    %v2232 = vld [vmem:[%s924 + $0x3c] sm:$0xf]
    %v2233 = vld [vmem:[%s924 + $0x40] sm:$0xf]
    %v2234 = vld [vmem:[%s924 + $0x44] sm:$0xf]
    %v2235 = vld [vmem:[%s924 + $0x48] sm:$0xf]
    %v2236 = vld [vmem:[%s924 + $0x4c] sm:$0xf]
    %v2237 = vld [vmem:[%s924 + $0x50] sm:$0xf]
    %v2238 = vld [vmem:[%s924 + $0x54] sm:$0xf]
    %v2239 = vld [vmem:[%s924 + $0x58] sm:$0xf]
    %v2240 = vld [vmem:[%s924 + $0x5c] sm:$0xf]
    %v2241 = vld [vmem:[%s924 + $0x60] sm:$0xf]
    %v2242 = vld [vmem:[%s924 + $0x64] sm:$0xf]
    %v2243 = vld [vmem:[%s924 + $0x68] sm:$0xf]
    %v2244 = vld [vmem:[%s924 + $0x6c] sm:$0xf]
    %v2245 = vld [vmem:[%s924 + $0x70] sm:$0xf]
    %v2246 = vld [vmem:[%s924 + $0x74] sm:$0xf]
    %v2247 = vld [vmem:[%s924 + $0x78] sm:$0xf]
    %v2248 = vld [vmem:[%s924 + $0x7c] sm:$0xf]
    %v2249 = vld [vmem:[%s924 + $0x80] sm:$0xf]
    %v2250 = vld [vmem:[%s924 + $0x84] sm:$0xf]
    %v2251 = vld [vmem:[%s924 + $0x88] sm:$0xf]
    %v2252 = vld [vmem:[%s924 + $0x8c] sm:$0xf]
    %v2253 = vld [vmem:[%s924 + $0x90] sm:$0xf]
    %v2254 = vld [vmem:[%s924 + $0x94] sm:$0xf]
    %v2255 = vld [vmem:[%s924 + $0x98] sm:$0xf]
    %v2256 = vld [vmem:[%s924 + $0x9c] sm:$0xf]
    %v2257 = vld [vmem:[%s924 + $0xa0] sm:$0xf]
    %v2258 = vld [vmem:[%s924 + $0xa4] sm:$0xf]
    %v2259 = vld [vmem:[%s924 + $0xa8] sm:$0xf]
    %v2260 = vld [vmem:[%s924 + $0xac] sm:$0xf]
    %v2261 = vld [vmem:[%s924 + $0xb0] sm:$0xf]
    %v2262 = vld [vmem:[%s924 + $0xb4] sm:$0xf]
    %v2263 = vld [vmem:[%s924 + $0xb8] sm:$0xf]
    %v2264 = vld [vmem:[%s924 + $0xbc] sm:$0xf]
    %v2313 = vunpack.c.l.b16 %v2217
    %v2314 = vunpack.c.l.b16 %v2218
    %v2315 = vunpack.c.l.b16 %v2219
    %v2316 = vunpack.c.l.b16 %v2220
    %v2317 = vunpack.c.l.b16 %v2221
    %v2318 = vunpack.c.l.b16 %v2222
    %v2319 = vunpack.c.l.b16 %v2223
    %v2320 = vunpack.c.l.b16 %v2224
    %v2321 = vunpack.c.l.b16 %v2225
    %v2322 = vunpack.c.l.b16 %v2226
    %v2323 = vunpack.c.l.b16 %v2227
    %v2324 = vunpack.c.l.b16 %v2228
    %v2325 = vunpack.c.l.b16 %v2229
    %v2326 = vunpack.c.l.b16 %v2230
    %v2327 = vunpack.c.l.b16 %v2231
    %v2328 = vunpack.c.l.b16 %v2232
    %v2329 = vunpack.c.l.b16 %v2233
    %v2330 = vunpack.c.l.b16 %v2234
    %v2331 = vunpack.c.l.b16 %v2235
    %v2332 = vunpack.c.l.b16 %v2236
    %v2333 = vunpack.c.l.b16 %v2237
    %v2334 = vunpack.c.l.b16 %v2238
    %v2335 = vunpack.c.l.b16 %v2239
    %v2336 = vunpack.c.l.b16 %v2240
    %v2337 = vunpack.c.l.b16 %v2241
    %v2338 = vunpack.c.l.b16 %v2242
    %v2339 = vunpack.c.l.b16 %v2243
    %v2340 = vunpack.c.l.b16 %v2244
    %v2341 = vunpack.c.l.b16 %v2245
    %v2342 = vunpack.c.l.b16 %v2246
    %v2343 = vunpack.c.l.b16 %v2247
    %v2344 = vunpack.c.l.b16 %v2248
    %v2345 = vunpack.c.l.b16 %v2249
    %v2346 = vunpack.c.l.b16 %v2250
    %v2347 = vunpack.c.l.b16 %v2251
    %v2348 = vunpack.c.l.b16 %v2252
    %v2349 = vunpack.c.l.b16 %v2253
    %v2350 = vunpack.c.l.b16 %v2254
    %v2351 = vunpack.c.l.b16 %v2255
    %v2352 = vunpack.c.l.b16 %v2256
    %v2353 = vunpack.c.l.b16 %v2257
    %v2354 = vunpack.c.l.b16 %v2258
    %v2355 = vunpack.c.l.b16 %v2259
    %v2356 = vunpack.c.l.b16 %v2260
    %v2357 = vunpack.c.l.b16 %v2261
    %v2358 = vunpack.c.l.b16 %v2262
    %v2359 = vunpack.c.l.b16 %v2263
    %v2360 = vunpack.c.l.b16 %v2264
    %v2361 = vpack.c.b16 %v2314, %v2313
    %v2362 = vpack.c.b16 %v2316, %v2315
    %v2363 = vpack.c.b16 %v2318, %v2317
    %v2364 = vpack.c.b16 %v2320, %v2319
    %v2365 = vpack.c.b16 %v2322, %v2321
    %v2366 = vpack.c.b16 %v2324, %v2323
    %v2367 = vpack.c.b16 %v2326, %v2325
    %v2368 = vpack.c.b16 %v2328, %v2327
    %v2369 = vpack.c.b16 %v2330, %v2329
    %v2370 = vpack.c.b16 %v2332, %v2331
    %v2371 = vpack.c.b16 %v2334, %v2333
    %v2372 = vpack.c.b16 %v2336, %v2335
    %v2373 = vpack.c.b16 %v2338, %v2337
    %v2374 = vpack.c.b16 %v2340, %v2339
    %v2375 = vpack.c.b16 %v2342, %v2341
    %v2376 = vpack.c.b16 %v2344, %v2343
    %v2377 = vpack.c.b16 %v2346, %v2345
    %v2378 = vpack.c.b16 %v2348, %v2347
    %v2379 = vpack.c.b16 %v2350, %v2349
    %v2380 = vpack.c.b16 %v2352, %v2351
    %v2381 = vpack.c.b16 %v2354, %v2353
    %v2382 = vpack.c.b16 %v2356, %v2355
    %v2383 = vpack.c.b16 %v2358, %v2357
    %v2384 = vpack.c.b16 %v2360, %v2359
    %2409 = vmatprep.subr.bf16.mxu0 0
    %2410 = vmatpush1.bf16.msra.mxu0 %v2361
    %2411 = vmatprep.subr.bf16.mxu0 0
    %2412 = vmatpush1.bf16.msra.mxu0 %v2362
    %2413 = vmatprep.subr.bf16.mxu0 0
    %2414 = vmatpush1.bf16.msra.mxu0 %v2363
    %2415 = vmatprep.subr.bf16.mxu0 0
    %2416 = vmatpush1.bf16.msra.mxu0 %v2364
    %2417 = vmatprep.subr.bf16.mxu0 0
    %2418 = vmatpush1.bf16.msra.mxu0 %v2365
    %2419 = vmatprep.subr.bf16.mxu0 0
    %2420 = vmatpush1.bf16.msra.mxu0 %v2366
    %2421 = vmatprep.subr.bf16.mxu0 0
    %2422 = vmatpush1.bf16.msra.mxu0 %v2367
    %2423 = vmatprep.subr.bf16.mxu0 0
    %2424 = vmatpush1.bf16.msra.mxu0 %v2368
    %2425 = vmatprep.subr.bf16.mxu0 0
    %2426 = vmatpush1.bf16.msra.mxu0 %v2369
    %2427 = vmatprep.subr.bf16.mxu0 0
    %2428 = vmatpush1.bf16.msra.mxu0 %v2370
    %2429 = vmatprep.subr.bf16.mxu0 0
    %2430 = vmatpush1.bf16.msra.mxu0 %v2371
    %2431 = vmatprep.subr.bf16.mxu0 0
    %2432 = vmatpush1.bf16.msra.mxu0 %v2372
    %2433 = vmatprep.subr.bf16.mxu0 0
    %2434 = vmatpush1.bf16.msra.mxu0 %v2373
    %2435 = vmatprep.subr.bf16.mxu0 0
    %2436 = vmatpush1.bf16.msra.mxu0 %v2374
    %2437 = vmatprep.subr.bf16.mxu0 0
    %2438 = vmatpush1.bf16.msra.mxu0 %v2375
    %2439 = vmatprep.subr.bf16.mxu0 0
    %2440 = vmatpush1.bf16.msra.mxu0 %v2376
    %2441 = vmatprep.mubr.bf16.mxu0 %v2209
    %2442 = vmatmul.mubr.bf16.gmra.mrb[0].mxu0 %v2208
    %v2443 = vpop.f32.mrb[0].mxu0
    %v2444 = vadd.f32 0.0, %v2443
    %v2445 = vpop.f32.mrb[0].mxu0
    %v2446 = vpop.f32.mrb[0].mxu0
    %v2447 = vadd.f32 0.0, %v2446
    %v2448 = vpop.f32.mrb[0].mxu0
    %2449 = vmatprep.mubr.bf16.mxu0 %v2212
    %2450 = vmatmul.mubr.bf16.gmra.mrb[0].mxu0 %v2211
    %v2451 = vpop.f32.mrb[0].mxu0
    %v2452 = vadd.f32 0.0, %v2451
    %v2453 = vpop.f32.mrb[0].mxu0
    %v2454 = vpop.f32.mrb[0].mxu0
    %v2455 = vadd.f32 0.0, %v2454
    %v2456 = vpop.f32.mrb[0].mxu0
    %2457 = vmatprep.mubr.bf16.mxu0 %v2215
    %2458 = vmatmul.mubr.bf16.gmra.mrb[0].mxu0 %v2214
    %v2459 = vpop.f32.mrb[0].mxu0
    %v2460 = vadd.f32 0.0, %v2459
    %v2461 = vpop.f32.mrb[0].mxu0
    %v2462 = vpop.f32.mrb[0].mxu0
    %v2463 = vadd.f32 0.0, %v2462
    %v2464 = vpop.f32.mrb[0].mxu0
    %2465 = vdwg.mxu0
    %2466 = vmatprep.subr.bf16.mxu0 0
    %2467 = vmatpush1.bf16.msra.mxu0 %v2377
    %2468 = vmatprep.subr.bf16.mxu0 0
    %2469 = vmatpush1.bf16.msra.mxu0 %v2378
    %2470 = vmatprep.subr.bf16.mxu0 0
    %2471 = vmatpush1.bf16.msra.mxu0 %v2379
    %2472 = vmatprep.subr.bf16.mxu0 0
    %2473 = vmatpush1.bf16.msra.mxu0 %v2380
    %2474 = vmatprep.subr.bf16.mxu0 0
    %2475 = vmatpush1.bf16.msra.mxu0 %v2381
    %2476 = vmatprep.subr.bf16.mxu0 0
    %2477 = vmatpush1.bf16.msra.mxu0 %v2382
    %2478 = vmatprep.subr.bf16.mxu0 0
    %2479 = vmatpush1.bf16.msra.mxu0 %v2383
    %2480 = vmatprep.subr.bf16.mxu0 0
    %2481 = vmatpush1.bf16.msra.mxu0 %v2384
    %2482 = vmatprep.subr.bf16.mxu0 0
    %2483 = vmatpush1.bf16.msra.mxu0 0
    %2484 = vmatprep.subr.bf16.mxu0 0
    %2485 = vmatpush1.bf16.msra.mxu0 0
    %2486 = vmatprep.subr.bf16.mxu0 0
    %2487 = vmatpush1.bf16.msra.mxu0 0
    %2488 = vmatprep.subr.bf16.mxu0 0
    %2489 = vmatpush1.bf16.msra.mxu0 0
    %2490 = vmatprep.subr.bf16.mxu0 0
    %2491 = vmatpush1.bf16.msra.mxu0 0
    %2492 = vmatprep.subr.bf16.mxu0 0
    %2493 = vmatpush1.bf16.msra.mxu0 0
    %2494 = vmatprep.subr.bf16.mxu0 0
    %2495 = vmatpush1.bf16.msra.mxu0 0
    %2496 = vmatprep.subr.bf16.mxu0 0
    %2497 = vmatpush1.bf16.msra.mxu0 0
    %2498 = vmatprep.mubr.bf16.mxu0 0
    %2499 = vmatmul.mubr.bf16.gmra.mrb[0].mxu0 %v2210
    %v2500 = vpop.f32.mrb[0].mxu0
    %v2501 = vadd.f32 %v2444, %v2500
    %v2502 = vpop.f32.mrb[0].mxu0
    %v2503 = vpop.f32.mrb[0].mxu0
    %v2504 = vadd.f32 %v2447, %v2503
    %v2505 = vpop.f32.mrb[0].mxu0
    %2506 = vmatprep.mubr.bf16.mxu0 0
    %2507 = vmatmul.mubr.bf16.gmra.mrb[0].mxu0 %v2213
    %v2508 = vpop.f32.mrb[0].mxu0
    %v2509 = vadd.f32 %v2452, %v2508
    %v2510 = vpop.f32.mrb[0].mxu0
    %v2511 = vpop.f32.mrb[0].mxu0
    %v2512 = vadd.f32 %v2455, %v2511
    %v2513 = vpop.f32.mrb[0].mxu0
    %2514 = vmatprep.mubr.bf16.mxu0 0
    %2515 = vmatmul.mubr.bf16.gmra.mrb[0].mxu0 %v2216
    %v2516 = vpop.f32.mrb[0].mxu0
    %v2517 = vadd.f32 %v2460, %v2516
    %v2518 = vpop.f32.mrb[0].mxu0
    %v2519 = vpop.f32.mrb[0].mxu0
    %v2520 = vadd.f32 %v2463, %v2519
    %v2521 = vpop.f32.mrb[0].mxu0
    %2522 = vdwg.mxu0
    %v2523 = vadd.f32 %v2501, %v2509
    %v2524 = vadd.f32 %v2504, %v2512
    %v2525 = vadd.f32 %v2523, %v2517
    %v2526 = vadd.f32 %v2524, %v2520
    %v2527 = vmul.f32 %v2525, 0.0021978023
    %v2528 = vmul.f32 %v2526, 0.0021978023
    %2529 = vst [vmem:[#allocation3 + $0x28] sm:$0xff] %v2527
    %2530 = vst [vmem:[#allocation3 + $0x128] sm:$0xff] %v2528
    %v2531 = vld [vmem:[#allocation2 + $0x30] sm:$0xff]
    %v2532 = vld [vmem:[#allocation2 + $0x38] sm:$0xff]
    %v2533 = vld [vmem:[#allocation2 + $0x40] sm:$0xff]
    %v2534 = vld [vmem:[#allocation2 + $0x140] sm:$0xff]
    %v2535 = vld [vmem:[#allocation2 + $0x148] sm:$0xff]
    %v2536 = vld [vmem:[#allocation2 + $0x150] sm:$0xff]
    %v2537 = vld [vmem:[#allocation2 + $0x250] sm:$0xff]
    %v2538 = vld [vmem:[#allocation2 + $0x258] sm:$0xff]
    %v2539 = vld [vmem:[#allocation2 + $0x260] sm:$0xff]
    %v2540 = vld [vmem:[%s924] sm:$0xf]
    %v2541 = vld [vmem:[%s924 + $0x4] sm:$0xf]
    %v2542 = vld [vmem:[%s924 + $0x8] sm:$0xf]
    %v2543 = vld [vmem:[%s924 + $0xc] sm:$0xf]
    %v2544 = vld [vmem:[%s924 + $0x10] sm:$0xf]
    %v2545 = vld [vmem:[%s924 + $0x14] sm:$0xf]
    %v2546 = vld [vmem:[%s924 + $0x18] sm:$0xf]
    %v2547 = vld [vmem:[%s924 + $0x1c] sm:$0xf]
    %v2548 = vld [vmem:[%s924 + $0x20] sm:$0xf]
    %v2549 = vld [vmem:[%s924 + $0x24] sm:$0xf]
    %v2550 = vld [vmem:[%s924 + $0x28] sm:$0xf]
    %v2551 = vld [vmem:[%s924 + $0x2c] sm:$0xf]
    %v2552 = vld [vmem:[%s924 + $0x30] sm:$0xf]
    %v2553 = vld [vmem:[%s924 + $0x34] sm:$0xf]
    %v2554 = vld [vmem:[%s924 + $0x38] sm:$0xf]
    %v2555 = vld [vmem:[%s924 + $0x3c] sm:$0xf]
    %v2556 = vld [vmem:[%s924 + $0x40] sm:$0xf]
    %v2557 = vld [vmem:[%s924 + $0x44] sm:$0xf]
    %v2558 = vld [vmem:[%s924 + $0x48] sm:$0xf]
    %v2559 = vld [vmem:[%s924 + $0x4c] sm:$0xf]
    %v2560 = vld [vmem:[%s924 + $0x50] sm:$0xf]
    %v2561 = vld [vmem:[%s924 + $0x54] sm:$0xf]
    %v2562 = vld [vmem:[%s924 + $0x58] sm:$0xf]
    %v2563 = vld [vmem:[%s924 + $0x5c] sm:$0xf]
    %v2564 = vld [vmem:[%s924 + $0x60] sm:$0xf]
    %v2565 = vld [vmem:[%s924 + $0x64] sm:$0xf]
    %v2566 = vld [vmem:[%s924 + $0x68] sm:$0xf]
    %v2567 = vld [vmem:[%s924 + $0x6c] sm:$0xf]
    %v2568 = vld [vmem:[%s924 + $0x70] sm:$0xf]
    %v2569 = vld [vmem:[%s924 + $0x74] sm:$0xf]
    %v2570 = vld [vmem:[%s924 + $0x78] sm:$0xf]
    %v2571 = vld [vmem:[%s924 + $0x7c] sm:$0xf]
    %v2572 = vld [vmem:[%s924 + $0x80] sm:$0xf]
    %v2573 = vld [vmem:[%s924 + $0x84] sm:$0xf]
    %v2574 = vld [vmem:[%s924 + $0x88] sm:$0xf]
    %v2575 = vld [vmem:[%s924 + $0x8c] sm:$0xf]
    %v2576 = vld [vmem:[%s924 + $0x90] sm:$0xf]
    %v2577 = vld [vmem:[%s924 + $0x94] sm:$0xf]
    %v2578 = vld [vmem:[%s924 + $0x98] sm:$0xf]
    %v2579 = vld [vmem:[%s924 + $0x9c] sm:$0xf]
    %v2580 = vld [vmem:[%s924 + $0xa0] sm:$0xf]
    %v2581 = vld [vmem:[%s924 + $0xa4] sm:$0xf]
    %v2582 = vld [vmem:[%s924 + $0xa8] sm:$0xf]
    %v2583 = vld [vmem:[%s924 + $0xac] sm:$0xf]
    %v2584 = vld [vmem:[%s924 + $0xb0] sm:$0xf]
    %v2585 = vld [vmem:[%s924 + $0xb4] sm:$0xf]
    %v2586 = vld [vmem:[%s924 + $0xb8] sm:$0xf]
    %v2587 = vld [vmem:[%s924 + $0xbc] sm:$0xf]
    %v2636 = vunpack.c.l.b16 %v2540
    %v2637 = vunpack.c.l.b16 %v2541
    %v2638 = vunpack.c.l.b16 %v2542
    %v2639 = vunpack.c.l.b16 %v2543
    %v2640 = vunpack.c.l.b16 %v2544
    %v2641 = vunpack.c.l.b16 %v2545
    %v2642 = vunpack.c.l.b16 %v2546
    %v2643 = vunpack.c.l.b16 %v2547
    %v2644 = vunpack.c.l.b16 %v2548
    %v2645 = vunpack.c.l.b16 %v2549
    %v2646 = vunpack.c.l.b16 %v2550
    %v2647 = vunpack.c.l.b16 %v2551
    %v2648 = vunpack.c.l.b16 %v2552
    %v2649 = vunpack.c.l.b16 %v2553
    %v2650 = vunpack.c.l.b16 %v2554
    %v2651 = vunpack.c.l.b16 %v2555
    %v2652 = vunpack.c.l.b16 %v2556
    %v2653 = vunpack.c.l.b16 %v2557
    %v2654 = vunpack.c.l.b16 %v2558
    %v2655 = vunpack.c.l.b16 %v2559
    %v2656 = vunpack.c.l.b16 %v2560
    %v2657 = vunpack.c.l.b16 %v2561
    %v2658 = vunpack.c.l.b16 %v2562
    %v2659 = vunpack.c.l.b16 %v2563
    %v2660 = vunpack.c.l.b16 %v2564
    %v2661 = vunpack.c.l.b16 %v2565
    %v2662 = vunpack.c.l.b16 %v2566
    %v2663 = vunpack.c.l.b16 %v2567
    %v2664 = vunpack.c.l.b16 %v2568
    %v2665 = vunpack.c.l.b16 %v2569
    %v2666 = vunpack.c.l.b16 %v2570
    %v2667 = vunpack.c.l.b16 %v2571
    %v2668 = vunpack.c.l.b16 %v2572
    %v2669 = vunpack.c.l.b16 %v2573
    %v2670 = vunpack.c.l.b16 %v2574
    %v2671 = vunpack.c.l.b16 %v2575
    %v2672 = vunpack.c.l.b16 %v2576
    %v2673 = vunpack.c.l.b16 %v2577
    %v2674 = vunpack.c.l.b16 %v2578
    %v2675 = vunpack.c.l.b16 %v2579
    %v2676 = vunpack.c.l.b16 %v2580
    %v2677 = vunpack.c.l.b16 %v2581
    %v2678 = vunpack.c.l.b16 %v2582
    %v2679 = vunpack.c.l.b16 %v2583
    %v2680 = vunpack.c.l.b16 %v2584
    %v2681 = vunpack.c.l.b16 %v2585
    %v2682 = vunpack.c.l.b16 %v2586
    %v2683 = vunpack.c.l.b16 %v2587
    %v2684 = vpack.c.b16 %v2637, %v2636
    %v2685 = vpack.c.b16 %v2639, %v2638
    %v2686 = vpack.c.b16 %v2641, %v2640
    %v2687 = vpack.c.b16 %v2643, %v2642
    %v2688 = vpack.c.b16 %v2645, %v2644
    %v2689 = vpack.c.b16 %v2647, %v2646
    %v2690 = vpack.c.b16 %v2649, %v2648
    %v2691 = vpack.c.b16 %v2651, %v2650
    %v2692 = vpack.c.b16 %v2653, %v2652
    %v2693 = vpack.c.b16 %v2655, %v2654
    %v2694 = vpack.c.b16 %v2657, %v2656
    %v2695 = vpack.c.b16 %v2659, %v2658
    %v2696 = vpack.c.b16 %v2661, %v2660
    %v2697 = vpack.c.b16 %v2663, %v2662
    %v2698 = vpack.c.b16 %v2665, %v2664
    %v2699 = vpack.c.b16 %v2667, %v2666
    %v2700 = vpack.c.b16 %v2669, %v2668
    %v2701 = vpack.c.b16 %v2671, %v2670
    %v2702 = vpack.c.b16 %v2673, %v2672
    %v2703 = vpack.c.b16 %v2675, %v2674
    %v2704 = vpack.c.b16 %v2677, %v2676
    %v2705 = vpack.c.b16 %v2679, %v2678
    %v2706 = vpack.c.b16 %v2681, %v2680
    %v2707 = vpack.c.b16 %v2683, %v2682
    %2732 = vmatprep.subr.bf16.mxu0 0
    %2733 = vmatpush1.bf16.msra.mxu0 %v2684
    %2734 = vmatprep.subr.bf16.mxu0 0
    %2735 = vmatpush1.bf16.msra.mxu0 %v2685
    %2736 = vmatprep.subr.bf16.mxu0 0
    %2737 = vmatpush1.bf16.msra.mxu0 %v2686
    %2738 = vmatprep.subr.bf16.mxu0 0
    %2739 = vmatpush1.bf16.msra.mxu0 %v2687
    %2740 = vmatprep.subr.bf16.mxu0 0
    %2741 = vmatpush1.bf16.msra.mxu0 %v2688
    %2742 = vmatprep.subr.bf16.mxu0 0
    %2743 = vmatpush1.bf16.msra.mxu0 %v2689
    %2744 = vmatprep.subr.bf16.mxu0 0
    %2745 = vmatpush1.bf16.msra.mxu0 %v2690
    %2746 = vmatprep.subr.bf16.mxu0 0
    %2747 = vmatpush1.bf16.msra.mxu0 %v2691
    %2748 = vmatprep.subr.bf16.mxu0 0
    %2749 = vmatpush1.bf16.msra.mxu0 %v2692
    %2750 = vmatprep.subr.bf16.mxu0 0
    %2751 = vmatpush1.bf16.msra.mxu0 %v2693
    %2752 = vmatprep.subr.bf16.mxu0 0
    %2753 = vmatpush1.bf16.msra.mxu0 %v2694
    %2754 = vmatprep.subr.bf16.mxu0 0
    %2755 = vmatpush1.bf16.msra.mxu0 %v2695
    %2756 = vmatprep.subr.bf16.mxu0 0
    %2757 = vmatpush1.bf16.msra.mxu0 %v2696
    %2758 = vmatprep.subr.bf16.mxu0 0
    %2759 = vmatpush1.bf16.msra.mxu0 %v2697
    %2760 = vmatprep.subr.bf16.mxu0 0
    %2761 = vmatpush1.bf16.msra.mxu0 %v2698
    %2762 = vmatprep.subr.bf16.mxu0 0
    %2763 = vmatpush1.bf16.msra.mxu0 %v2699
    %2764 = vmatprep.mubr.bf16.mxu0 %v2532
    %2765 = vmatmul.mubr.bf16.gmra.mrb[0].mxu0 %v2531
    %v2766 = vpop.f32.mrb[0].mxu0
    %v2767 = vadd.f32 0.0, %v2766
    %v2768 = vpop.f32.mrb[0].mxu0
    %v2769 = vpop.f32.mrb[0].mxu0
    %v2770 = vadd.f32 0.0, %v2769
    %v2771 = vpop.f32.mrb[0].mxu0
    %2772 = vmatprep.mubr.bf16.mxu0 %v2535
    %2773 = vmatmul.mubr.bf16.gmra.mrb[0].mxu0 %v2534
    %v2774 = vpop.f32.mrb[0].mxu0
    %v2775 = vadd.f32 0.0, %v2774
    %v2776 = vpop.f32.mrb[0].mxu0
    %v2777 = vpop.f32.mrb[0].mxu0
    %v2778 = vadd.f32 0.0, %v2777
    %v2779 = vpop.f32.mrb[0].mxu0
    %2780 = vmatprep.mubr.bf16.mxu0 %v2538
    %2781 = vmatmul.mubr.bf16.gmra.mrb[0].mxu0 %v2537
    %v2782 = vpop.f32.mrb[0].mxu0
    %v2783 = vadd.f32 0.0, %v2782
    %v2784 = vpop.f32.mrb[0].mxu0
    %v2785 = vpop.f32.mrb[0].mxu0
    %v2786 = vadd.f32 0.0, %v2785
    %v2787 = vpop.f32.mrb[0].mxu0
    %2788 = vdwg.mxu0
    %2789 = vmatprep.subr.bf16.mxu0 0
    %2790 = vmatpush1.bf16.msra.mxu0 %v2700
    %2791 = vmatprep.subr.bf16.mxu0 0
    %2792 = vmatpush1.bf16.msra.mxu0 %v2701
    %2793 = vmatprep.subr.bf16.mxu0 0
    %2794 = vmatpush1.bf16.msra.mxu0 %v2702
    %2795 = vmatprep.subr.bf16.mxu0 0
    %2796 = vmatpush1.bf16.msra.mxu0 %v2703
    %2797 = vmatprep.subr.bf16.mxu0 0
    %2798 = vmatpush1.bf16.msra.mxu0 %v2704
    %2799 = vmatprep.subr.bf16.mxu0 0
    %2800 = vmatpush1.bf16.msra.mxu0 %v2705
    %2801 = vmatprep.subr.bf16.mxu0 0
    %2802 = vmatpush1.bf16.msra.mxu0 %v2706
    %2803 = vmatprep.subr.bf16.mxu0 0
    %2804 = vmatpush1.bf16.msra.mxu0 %v2707
    %2805 = vmatprep.subr.bf16.mxu0 0
    %2806 = vmatpush1.bf16.msra.mxu0 0
    %2807 = vmatprep.subr.bf16.mxu0 0
    %2808 = vmatpush1.bf16.msra.mxu0 0
    %2809 = vmatprep.subr.bf16.mxu0 0
    %2810 = vmatpush1.bf16.msra.mxu0 0
    %2811 = vmatprep.subr.bf16.mxu0 0
    %2812 = vmatpush1.bf16.msra.mxu0 0
    %2813 = vmatprep.subr.bf16.mxu0 0
    %2814 = vmatpush1.bf16.msra.mxu0 0
    %2815 = vmatprep.subr.bf16.mxu0 0
    %2816 = vmatpush1.bf16.msra.mxu0 0
    %2817 = vmatprep.subr.bf16.mxu0 0
    %2818 = vmatpush1.bf16.msra.mxu0 0
    %2819 = vmatprep.subr.bf16.mxu0 0
    %2820 = vmatpush1.bf16.msra.mxu0 0
    %2821 = vmatprep.mubr.bf16.mxu0 0
    %2822 = vmatmul.mubr.bf16.gmra.mrb[0].mxu0 %v2533
    %v2823 = vpop.f32.mrb[0].mxu0
    %v2824 = vadd.f32 %v2767, %v2823
    %v2825 = vpop.f32.mrb[0].mxu0
    %v2826 = vpop.f32.mrb[0].mxu0
    %v2827 = vadd.f32 %v2770, %v2826
    %v2828 = vpop.f32.mrb[0].mxu0
    %2829 = vmatprep.mubr.bf16.mxu0 0
    %2830 = vmatmul.mubr.bf16.gmra.mrb[0].mxu0 %v2536
    %v2831 = vpop.f32.mrb[0].mxu0
    %v2832 = vadd.f32 %v2775, %v2831
    %v2833 = vpop.f32.mrb[0].mxu0
    %v2834 = vpop.f32.mrb[0].mxu0
    %v2835 = vadd.f32 %v2778, %v2834
    %v2836 = vpop.f32.mrb[0].mxu0
    %2837 = vmatprep.mubr.bf16.mxu0 0
    %2838 = vmatmul.mubr.bf16.gmra.mrb[0].mxu0 %v2539
    %v2839 = vpop.f32.mrb[0].mxu0
    %v2840 = vadd.f32 %v2783, %v2839
    %v2841 = vpop.f32.mrb[0].mxu0
    %v2842 = vpop.f32.mrb[0].mxu0
    %v2843 = vadd.f32 %v2786, %v2842
    %v2844 = vpop.f32.mrb[0].mxu0
    %2845 = vdwg.mxu0
    %v2846 = vadd.f32 %v2824, %v2832
    %v2847 = vadd.f32 %v2827, %v2835
    %v2848 = vadd.f32 %v2846, %v2840
    %v2849 = vadd.f32 %v2847, %v2843
    %v2850 = vmul.f32 %v2848, 0.0021978023
    %v2851 = vmul.f32 %v2849, 0.0021978023
    %2852 = vst [vmem:[#allocation3 + $0x30] sm:$0xff] %v2850
    %2853 = vst [vmem:[#allocation3 + $0x130] sm:$0xff] %v2851
    %v2854 = vld [vmem:[#allocation2 + $0x38] sm:$0xff]
    %v2855 = vld [vmem:[#allocation2 + $0x40] sm:$0xff]
    %v2856 = vld [vmem:[#allocation2 + $0x48] sm:$0xff]
    %v2857 = vld [vmem:[#allocation2 + $0x148] sm:$0xff]
    %v2858 = vld [vmem:[#allocation2 + $0x150] sm:$0xff]
    %v2859 = vld [vmem:[#allocation2 + $0x158] sm:$0xff]
    %v2860 = vld [vmem:[#allocation2 + $0x258] sm:$0xff]
    %v2861 = vld [vmem:[#allocation2 + $0x260] sm:$0xff]
    %v2862 = vld [vmem:[#allocation2 + $0x268] sm:$0xff]
    %v2863 = vld [vmem:[%s924] sm:$0xf]
    %v2864 = vld [vmem:[%s924 + $0x4] sm:$0xf]
    %v2865 = vld [vmem:[%s924 + $0x8] sm:$0xf]
    %v2866 = vld [vmem:[%s924 + $0xc] sm:$0xf]
    %v2867 = vld [vmem:[%s924 + $0x10] sm:$0xf]
    %v2868 = vld [vmem:[%s924 + $0x14] sm:$0xf]
    %v2869 = vld [vmem:[%s924 + $0x18] sm:$0xf]
    %v2870 = vld [vmem:[%s924 + $0x1c] sm:$0xf]
    %v2871 = vld [vmem:[%s924 + $0x20] sm:$0xf]
    %v2872 = vld [vmem:[%s924 + $0x24] sm:$0xf]
    %v2873 = vld [vmem:[%s924 + $0x28] sm:$0xf]
    %v2874 = vld [vmem:[%s924 + $0x2c] sm:$0xf]
    %v2875 = vld [vmem:[%s924 + $0x30] sm:$0xf]
    %v2876 = vld [vmem:[%s924 + $0x34] sm:$0xf]
    %v2877 = vld [vmem:[%s924 + $0x38] sm:$0xf]
    %v2878 = vld [vmem:[%s924 + $0x3c] sm:$0xf]
    %v2879 = vld [vmem:[%s924 + $0x40] sm:$0xf]
    %v2880 = vld [vmem:[%s924 + $0x44] sm:$0xf]
    %v2881 = vld [vmem:[%s924 + $0x48] sm:$0xf]
    %v2882 = vld [vmem:[%s924 + $0x4c] sm:$0xf]
    %v2883 = vld [vmem:[%s924 + $0x50] sm:$0xf]
    %v2884 = vld [vmem:[%s924 + $0x54] sm:$0xf]
    %v2885 = vld [vmem:[%s924 + $0x58] sm:$0xf]
    %v2886 = vld [vmem:[%s924 + $0x5c] sm:$0xf]
    %v2887 = vld [vmem:[%s924 + $0x60] sm:$0xf]
    %v2888 = vld [vmem:[%s924 + $0x64] sm:$0xf]
    %v2889 = vld [vmem:[%s924 + $0x68] sm:$0xf]
    %v2890 = vld [vmem:[%s924 + $0x6c] sm:$0xf]
    %v2891 = vld [vmem:[%s924 + $0x70] sm:$0xf]
    %v2892 = vld [vmem:[%s924 + $0x74] sm:$0xf]
    %v2893 = vld [vmem:[%s924 + $0x78] sm:$0xf]
    %v2894 = vld [vmem:[%s924 + $0x7c] sm:$0xf]
    %v2895 = vld [vmem:[%s924 + $0x80] sm:$0xf]
    %v2896 = vld [vmem:[%s924 + $0x84] sm:$0xf]
    %v2897 = vld [vmem:[%s924 + $0x88] sm:$0xf]
    %v2898 = vld [vmem:[%s924 + $0x8c] sm:$0xf]
    %v2899 = vld [vmem:[%s924 + $0x90] sm:$0xf]
    %v2900 = vld [vmem:[%s924 + $0x94] sm:$0xf]
    %v2901 = vld [vmem:[%s924 + $0x98] sm:$0xf]
    %v2902 = vld [vmem:[%s924 + $0x9c] sm:$0xf]
    %v2903 = vld [vmem:[%s924 + $0xa0] sm:$0xf]
    %v2904 = vld [vmem:[%s924 + $0xa4] sm:$0xf]
    %v2905 = vld [vmem:[%s924 + $0xa8] sm:$0xf]
    %v2906 = vld [vmem:[%s924 + $0xac] sm:$0xf]
    %v2907 = vld [vmem:[%s924 + $0xb0] sm:$0xf]
    %v2908 = vld [vmem:[%s924 + $0xb4] sm:$0xf]
    %v2909 = vld [vmem:[%s924 + $0xb8] sm:$0xf]
    %v2910 = vld [vmem:[%s924 + $0xbc] sm:$0xf]
    %v2959 = vunpack.c.l.b16 %v2863
    %v2960 = vunpack.c.l.b16 %v2864
    %v2961 = vunpack.c.l.b16 %v2865
    %v2962 = vunpack.c.l.b16 %v2866
    %v2963 = vunpack.c.l.b16 %v2867
    %v2964 = vunpack.c.l.b16 %v2868
    %v2965 = vunpack.c.l.b16 %v2869
    %v2966 = vunpack.c.l.b16 %v2870
    %v2967 = vunpack.c.l.b16 %v2871
    %v2968 = vunpack.c.l.b16 %v2872
    %v2969 = vunpack.c.l.b16 %v2873
    %v2970 = vunpack.c.l.b16 %v2874
    %v2971 = vunpack.c.l.b16 %v2875
    %v2972 = vunpack.c.l.b16 %v2876
    %v2973 = vunpack.c.l.b16 %v2877
    %v2974 = vunpack.c.l.b16 %v2878
    %v2975 = vunpack.c.l.b16 %v2879
    %v2976 = vunpack.c.l.b16 %v2880
    %v2977 = vunpack.c.l.b16 %v2881
    %v2978 = vunpack.c.l.b16 %v2882
    %v2979 = vunpack.c.l.b16 %v2883
    %v2980 = vunpack.c.l.b16 %v2884
    %v2981 = vunpack.c.l.b16 %v2885
    %v2982 = vunpack.c.l.b16 %v2886
    %v2983 = vunpack.c.l.b16 %v2887
    %v2984 = vunpack.c.l.b16 %v2888
    %v2985 = vunpack.c.l.b16 %v2889
    %v2986 = vunpack.c.l.b16 %v2890
    %v2987 = vunpack.c.l.b16 %v2891
    %v2988 = vunpack.c.l.b16 %v2892
    %v2989 = vunpack.c.l.b16 %v2893
    %v2990 = vunpack.c.l.b16 %v2894
    %v2991 = vunpack.c.l.b16 %v2895
    %v2992 = vunpack.c.l.b16 %v2896
    %v2993 = vunpack.c.l.b16 %v2897
    %v2994 = vunpack.c.l.b16 %v2898
    %v2995 = vunpack.c.l.b16 %v2899
    %v2996 = vunpack.c.l.b16 %v2900
    %v2997 = vunpack.c.l.b16 %v2901
    %v2998 = vunpack.c.l.b16 %v2902
    %v2999 = vunpack.c.l.b16 %v2903
    %v3000 = vunpack.c.l.b16 %v2904
    %v3001 = vunpack.c.l.b16 %v2905
    %v3002 = vunpack.c.l.b16 %v2906
    %v3003 = vunpack.c.l.b16 %v2907
    %v3004 = vunpack.c.l.b16 %v2908
    %v3005 = vunpack.c.l.b16 %v2909
    %v3006 = vunpack.c.l.b16 %v2910
    %v3007 = vpack.c.b16 %v2960, %v2959
    %v3008 = vpack.c.b16 %v2962, %v2961
    %v3009 = vpack.c.b16 %v2964, %v2963
    %v3010 = vpack.c.b16 %v2966, %v2965
    %v3011 = vpack.c.b16 %v2968, %v2967
    %v3012 = vpack.c.b16 %v2970, %v2969
    %v3013 = vpack.c.b16 %v2972, %v2971
    %v3014 = vpack.c.b16 %v2974, %v2973
    %v3015 = vpack.c.b16 %v2976, %v2975
    %v3016 = vpack.c.b16 %v2978, %v2977
    %v3017 = vpack.c.b16 %v2980, %v2979
    %v3018 = vpack.c.b16 %v2982, %v2981
    %v3019 = vpack.c.b16 %v2984, %v2983
    %v3020 = vpack.c.b16 %v2986, %v2985
    %v3021 = vpack.c.b16 %v2988, %v2987
    %v3022 = vpack.c.b16 %v2990, %v2989
    %v3023 = vpack.c.b16 %v2992, %v2991
    %v3024 = vpack.c.b16 %v2994, %v2993
    %v3025 = vpack.c.b16 %v2996, %v2995
    %v3026 = vpack.c.b16 %v2998, %v2997
    %v3027 = vpack.c.b16 %v3000, %v2999
    %v3028 = vpack.c.b16 %v3002, %v3001
    %v3029 = vpack.c.b16 %v3004, %v3003
    %v3030 = vpack.c.b16 %v3006, %v3005
    %3055 = vmatprep.subr.bf16.mxu0 0
    %3056 = vmatpush1.bf16.msra.mxu0 %v3007
    %3057 = vmatprep.subr.bf16.mxu0 0
    %3058 = vmatpush1.bf16.msra.mxu0 %v3008
    %3059 = vmatprep.subr.bf16.mxu0 0
    %3060 = vmatpush1.bf16.msra.mxu0 %v3009
    %3061 = vmatprep.subr.bf16.mxu0 0
    %3062 = vmatpush1.bf16.msra.mxu0 %v3010
    %3063 = vmatprep.subr.bf16.mxu0 0
    %3064 = vmatpush1.bf16.msra.mxu0 %v3011
    %3065 = vmatprep.subr.bf16.mxu0 0
    %3066 = vmatpush1.bf16.msra.mxu0 %v3012
    %3067 = vmatprep.subr.bf16.mxu0 0
    %3068 = vmatpush1.bf16.msra.mxu0 %v3013
    %3069 = vmatprep.subr.bf16.mxu0 0
    %3070 = vmatpush1.bf16.msra.mxu0 %v3014
    %3071 = vmatprep.subr.bf16.mxu0 0
    %3072 = vmatpush1.bf16.msra.mxu0 %v3015
    %3073 = vmatprep.subr.bf16.mxu0 0
    %3074 = vmatpush1.bf16.msra.mxu0 %v3016
    %3075 = vmatprep.subr.bf16.mxu0 0
    %3076 = vmatpush1.bf16.msra.mxu0 %v3017
    %3077 = vmatprep.subr.bf16.mxu0 0
    %3078 = vmatpush1.bf16.msra.mxu0 %v3018
    %3079 = vmatprep.subr.bf16.mxu0 0
    %3080 = vmatpush1.bf16.msra.mxu0 %v3019
    %3081 = vmatprep.subr.bf16.mxu0 0
    %3082 = vmatpush1.bf16.msra.mxu0 %v3020
    %3083 = vmatprep.subr.bf16.mxu0 0
    %3084 = vmatpush1.bf16.msra.mxu0 %v3021
    %3085 = vmatprep.subr.bf16.mxu0 0
    %3086 = vmatpush1.bf16.msra.mxu0 %v3022
    %3087 = vmatprep.mubr.bf16.mxu0 %v2855
    %3088 = vmatmul.mubr.bf16.gmra.mrb[0].mxu0 %v2854
    %v3089 = vpop.f32.mrb[0].mxu0
    %v3090 = vadd.f32 0.0, %v3089
    %v3091 = vpop.f32.mrb[0].mxu0
    %v3092 = vpop.f32.mrb[0].mxu0
    %v3093 = vadd.f32 0.0, %v3092
    %v3094 = vpop.f32.mrb[0].mxu0
    %3095 = vmatprep.mubr.bf16.mxu0 %v2858
    %3096 = vmatmul.mubr.bf16.gmra.mrb[0].mxu0 %v2857
    %v3097 = vpop.f32.mrb[0].mxu0
    %v3098 = vadd.f32 0.0, %v3097
    %v3099 = vpop.f32.mrb[0].mxu0
    %v3100 = vpop.f32.mrb[0].mxu0
    %v3101 = vadd.f32 0.0, %v3100
    %v3102 = vpop.f32.mrb[0].mxu0
    %3103 = vmatprep.mubr.bf16.mxu0 %v2861
    %3104 = vmatmul.mubr.bf16.gmra.mrb[0].mxu0 %v2860
    %v3105 = vpop.f32.mrb[0].mxu0
    %v3106 = vadd.f32 0.0, %v3105
    %v3107 = vpop.f32.mrb[0].mxu0
    %v3108 = vpop.f32.mrb[0].mxu0
    %v3109 = vadd.f32 0.0, %v3108
    %v3110 = vpop.f32.mrb[0].mxu0
    %3111 = vdwg.mxu0
    %3112 = vmatprep.subr.bf16.mxu0 0
    %3113 = vmatpush1.bf16.msra.mxu0 %v3023
    %3114 = vmatprep.subr.bf16.mxu0 0
    %3115 = vmatpush1.bf16.msra.mxu0 %v3024
    %3116 = vmatprep.subr.bf16.mxu0 0
    %3117 = vmatpush1.bf16.msra.mxu0 %v3025
    %3118 = vmatprep.subr.bf16.mxu0 0
    %3119 = vmatpush1.bf16.msra.mxu0 %v3026
    %3120 = vmatprep.subr.bf16.mxu0 0
    %3121 = vmatpush1.bf16.msra.mxu0 %v3027
    %3122 = vmatprep.subr.bf16.mxu0 0
    %3123 = vmatpush1.bf16.msra.mxu0 %v3028
    %3124 = vmatprep.subr.bf16.mxu0 0
    %3125 = vmatpush1.bf16.msra.mxu0 %v3029
    %3126 = vmatprep.subr.bf16.mxu0 0
    %3127 = vmatpush1.bf16.msra.mxu0 %v3030
    %3128 = vmatprep.subr.bf16.mxu0 0
    %3129 = vmatpush1.bf16.msra.mxu0 0
    %3130 = vmatprep.subr.bf16.mxu0 0
    %3131 = vmatpush1.bf16.msra.mxu0 0
    %3132 = vmatprep.subr.bf16.mxu0 0
    %3133 = vmatpush1.bf16.msra.mxu0 0
    %3134 = vmatprep.subr.bf16.mxu0 0
    %3135 = vmatpush1.bf16.msra.mxu0 0
    %3136 = vmatprep.subr.bf16.mxu0 0
    %3137 = vmatpush1.bf16.msra.mxu0 0
    %3138 = vmatprep.subr.bf16.mxu0 0
    %3139 = vmatpush1.bf16.msra.mxu0 0
    %3140 = vmatprep.subr.bf16.mxu0 0
    %3141 = vmatpush1.bf16.msra.mxu0 0
    %3142 = vmatprep.subr.bf16.mxu0 0
    %3143 = vmatpush1.bf16.msra.mxu0 0
    %3144 = vmatprep.mubr.bf16.mxu0 0
    %3145 = vmatmul.mubr.bf16.gmra.mrb[0].mxu0 %v2856
    %v3146 = vpop.f32.mrb[0].mxu0
    %v3147 = vadd.f32 %v3090, %v3146
    %v3148 = vpop.f32.mrb[0].mxu0
    %v3149 = vpop.f32.mrb[0].mxu0
    %v3150 = vadd.f32 %v3093, %v3149
    %v3151 = vpop.f32.mrb[0].mxu0
    %3152 = vmatprep.mubr.bf16.mxu0 0
    %3153 = vmatmul.mubr.bf16.gmra.mrb[0].mxu0 %v2859
    %v3154 = vpop.f32.mrb[0].mxu0
    %v3155 = vadd.f32 %v3098, %v3154
    %v3156 = vpop.f32.mrb[0].mxu0
    %v3157 = vpop.f32.mrb[0].mxu0
    %v3158 = vadd.f32 %v3101, %v3157
    %v3159 = vpop.f32.mrb[0].mxu0
    %3160 = vmatprep.mubr.bf16.mxu0 0
    %3161 = vmatmul.mubr.bf16.gmra.mrb[0].mxu0 %v2862
    %v3162 = vpop.f32.mrb[0].mxu0
    %v3163 = vadd.f32 %v3106, %v3162
    %v3164 = vpop.f32.mrb[0].mxu0
    %v3165 = vpop.f32.mrb[0].mxu0
    %v3166 = vadd.f32 %v3109, %v3165
    %v3167 = vpop.f32.mrb[0].mxu0
    %3168 = vdwg.mxu0
    %v3169 = vadd.f32 %v3147, %v3155
    %v3170 = vadd.f32 %v3150, %v3158
    %v3171 = vadd.f32 %v3169, %v3163
    %v3172 = vadd.f32 %v3170, %v3166
    %v3173 = vmul.f32 %v3171, 0.0021978023
    %v3174 = vmul.f32 %v3172, 0.0021978023
    %3175 = vst [vmem:[#allocation3 + $0x38] sm:$0xff] %v3173
    %3176 = vst [vmem:[#allocation3 + $0x138] sm:$0xff] %v3174
    %v3177 = vld [vmem:[#allocation2 + $0x40] sm:$0xff]
    %v3178 = vld [vmem:[#allocation2 + $0x48] sm:$0xff]
    %v3179 = vld [vmem:[#allocation2 + $0x50] sm:$0xff]
    %v3180 = vld [vmem:[#allocation2 + $0x150] sm:$0xff]
    %v3181 = vld [vmem:[#allocation2 + $0x158] sm:$0xff]
    %v3182 = vld [vmem:[#allocation2 + $0x160] sm:$0xff]
    %v3183 = vld [vmem:[#allocation2 + $0x260] sm:$0xff]
    %v3184 = vld [vmem:[#allocation2 + $0x268] sm:$0xff]
    %v3185 = vld [vmem:[#allocation2 + $0x270] sm:$0xff]
    %v3186 = vld [vmem:[%s924] sm:$0xf]
    %v3187 = vld [vmem:[%s924 + $0x4] sm:$0xf]
    %v3188 = vld [vmem:[%s924 + $0x8] sm:$0xf]
    %v3189 = vld [vmem:[%s924 + $0xc] sm:$0xf]
    %v3190 = vld [vmem:[%s924 + $0x10] sm:$0xf]
    %v3191 = vld [vmem:[%s924 + $0x14] sm:$0xf]
    %v3192 = vld [vmem:[%s924 + $0x18] sm:$0xf]
    %v3193 = vld [vmem:[%s924 + $0x1c] sm:$0xf]
    %v3194 = vld [vmem:[%s924 + $0x20] sm:$0xf]
    %v3195 = vld [vmem:[%s924 + $0x24] sm:$0xf]
    %v3196 = vld [vmem:[%s924 + $0x28] sm:$0xf]
    %v3197 = vld [vmem:[%s924 + $0x2c] sm:$0xf]
    %v3198 = vld [vmem:[%s924 + $0x30] sm:$0xf]
    %v3199 = vld [vmem:[%s924 + $0x34] sm:$0xf]
    %v3200 = vld [vmem:[%s924 + $0x38] sm:$0xf]
    %v3201 = vld [vmem:[%s924 + $0x3c] sm:$0xf]
    %v3202 = vld [vmem:[%s924 + $0x40] sm:$0xf]
    %v3203 = vld [vmem:[%s924 + $0x44] sm:$0xf]
    %v3204 = vld [vmem:[%s924 + $0x48] sm:$0xf]
    %v3205 = vld [vmem:[%s924 + $0x4c] sm:$0xf]
    %v3206 = vld [vmem:[%s924 + $0x50] sm:$0xf]
    %v3207 = vld [vmem:[%s924 + $0x54] sm:$0xf]
    %v3208 = vld [vmem:[%s924 + $0x58] sm:$0xf]
    %v3209 = vld [vmem:[%s924 + $0x5c] sm:$0xf]
    %v3210 = vld [vmem:[%s924 + $0x60] sm:$0xf]
    %v3211 = vld [vmem:[%s924 + $0x64] sm:$0xf]
    %v3212 = vld [vmem:[%s924 + $0x68] sm:$0xf]
    %v3213 = vld [vmem:[%s924 + $0x6c] sm:$0xf]
    %v3214 = vld [vmem:[%s924 + $0x70] sm:$0xf]
    %v3215 = vld [vmem:[%s924 + $0x74] sm:$0xf]
    %v3216 = vld [vmem:[%s924 + $0x78] sm:$0xf]
    %v3217 = vld [vmem:[%s924 + $0x7c] sm:$0xf]
    %v3218 = vld [vmem:[%s924 + $0x80] sm:$0xf]
    %v3219 = vld [vmem:[%s924 + $0x84] sm:$0xf]
    %v3220 = vld [vmem:[%s924 + $0x88] sm:$0xf]
    %v3221 = vld [vmem:[%s924 + $0x8c] sm:$0xf]
    %v3222 = vld [vmem:[%s924 + $0x90] sm:$0xf]
    %v3223 = vld [vmem:[%s924 + $0x94] sm:$0xf]
    %v3224 = vld [vmem:[%s924 + $0x98] sm:$0xf]
    %v3225 = vld [vmem:[%s924 + $0x9c] sm:$0xf]
    %v3226 = vld [vmem:[%s924 + $0xa0] sm:$0xf]
    %v3227 = vld [vmem:[%s924 + $0xa4] sm:$0xf]
    %v3228 = vld [vmem:[%s924 + $0xa8] sm:$0xf]
    %v3229 = vld [vmem:[%s924 + $0xac] sm:$0xf]
    %v3230 = vld [vmem:[%s924 + $0xb0] sm:$0xf]
    %v3231 = vld [vmem:[%s924 + $0xb4] sm:$0xf]
    %v3232 = vld [vmem:[%s924 + $0xb8] sm:$0xf]
    %v3233 = vld [vmem:[%s924 + $0xbc] sm:$0xf]
    %v3282 = vunpack.c.l.b16 %v3186
    %v3283 = vunpack.c.l.b16 %v3187
    %v3284 = vunpack.c.l.b16 %v3188
    %v3285 = vunpack.c.l.b16 %v3189
    %v3286 = vunpack.c.l.b16 %v3190
    %v3287 = vunpack.c.l.b16 %v3191
    %v3288 = vunpack.c.l.b16 %v3192
    %v3289 = vunpack.c.l.b16 %v3193
    %v3290 = vunpack.c.l.b16 %v3194
    %v3291 = vunpack.c.l.b16 %v3195
    %v3292 = vunpack.c.l.b16 %v3196
    %v3293 = vunpack.c.l.b16 %v3197
    %v3294 = vunpack.c.l.b16 %v3198
    %v3295 = vunpack.c.l.b16 %v3199
    %v3296 = vunpack.c.l.b16 %v3200
    %v3297 = vunpack.c.l.b16 %v3201
    %v3298 = vunpack.c.l.b16 %v3202
    %v3299 = vunpack.c.l.b16 %v3203
    %v3300 = vunpack.c.l.b16 %v3204
    %v3301 = vunpack.c.l.b16 %v3205
    %v3302 = vunpack.c.l.b16 %v3206
    %v3303 = vunpack.c.l.b16 %v3207
    %v3304 = vunpack.c.l.b16 %v3208
    %v3305 = vunpack.c.l.b16 %v3209
    %v3306 = vunpack.c.l.b16 %v3210
    %v3307 = vunpack.c.l.b16 %v3211
    %v3308 = vunpack.c.l.b16 %v3212
    %v3309 = vunpack.c.l.b16 %v3213
    %v3310 = vunpack.c.l.b16 %v3214
    %v3311 = vunpack.c.l.b16 %v3215
    %v3312 = vunpack.c.l.b16 %v3216
    %v3313 = vunpack.c.l.b16 %v3217
    %v3314 = vunpack.c.l.b16 %v3218
    %v3315 = vunpack.c.l.b16 %v3219
    %v3316 = vunpack.c.l.b16 %v3220
    %v3317 = vunpack.c.l.b16 %v3221
    %v3318 = vunpack.c.l.b16 %v3222
    %v3319 = vunpack.c.l.b16 %v3223
    %v3320 = vunpack.c.l.b16 %v3224
    %v3321 = vunpack.c.l.b16 %v3225
    %v3322 = vunpack.c.l.b16 %v3226
    %v3323 = vunpack.c.l.b16 %v3227
    %v3324 = vunpack.c.l.b16 %v3228
    %v3325 = vunpack.c.l.b16 %v3229
    %v3326 = vunpack.c.l.b16 %v3230
    %v3327 = vunpack.c.l.b16 %v3231
    %v3328 = vunpack.c.l.b16 %v3232
    %v3329 = vunpack.c.l.b16 %v3233
    %v3330 = vpack.c.b16 %v3283, %v3282
    %v3331 = vpack.c.b16 %v3285, %v3284
    %v3332 = vpack.c.b16 %v3287, %v3286
    %v3333 = vpack.c.b16 %v3289, %v3288
    %v3334 = vpack.c.b16 %v3291, %v3290
    %v3335 = vpack.c.b16 %v3293, %v3292
    %v3336 = vpack.c.b16 %v3295, %v3294
    %v3337 = vpack.c.b16 %v3297, %v3296
    %v3338 = vpack.c.b16 %v3299, %v3298
    %v3339 = vpack.c.b16 %v3301, %v3300
    %v3340 = vpack.c.b16 %v3303, %v3302
    %v3341 = vpack.c.b16 %v3305, %v3304
    %v3342 = vpack.c.b16 %v3307, %v3306
    %v3343 = vpack.c.b16 %v3309, %v3308
    %v3344 = vpack.c.b16 %v3311, %v3310
    %v3345 = vpack.c.b16 %v3313, %v3312
    %v3346 = vpack.c.b16 %v3315, %v3314
    %v3347 = vpack.c.b16 %v3317, %v3316
    %v3348 = vpack.c.b16 %v3319, %v3318
    %v3349 = vpack.c.b16 %v3321, %v3320
    %v3350 = vpack.c.b16 %v3323, %v3322
    %v3351 = vpack.c.b16 %v3325, %v3324
    %v3352 = vpack.c.b16 %v3327, %v3326
    %v3353 = vpack.c.b16 %v3329, %v3328
    %3378 = vmatprep.subr.bf16.mxu0 0
    %3379 = vmatpush1.bf16.msra.mxu0 %v3330
    %3380 = vmatprep.subr.bf16.mxu0 0
    %3381 = vmatpush1.bf16.msra.mxu0 %v3331
    %3382 = vmatprep.subr.bf16.mxu0 0
    %3383 = vmatpush1.bf16.msra.mxu0 %v3332
    %3384 = vmatprep.subr.bf16.mxu0 0
    %3385 = vmatpush1.bf16.msra.mxu0 %v3333
    %3386 = vmatprep.subr.bf16.mxu0 0
    %3387 = vmatpush1.bf16.msra.mxu0 %v3334
    %3388 = vmatprep.subr.bf16.mxu0 0
    %3389 = vmatpush1.bf16.msra.mxu0 %v3335
    %3390 = vmatprep.subr.bf16.mxu0 0
    %3391 = vmatpush1.bf16.msra.mxu0 %v3336
    %3392 = vmatprep.subr.bf16.mxu0 0
    %3393 = vmatpush1.bf16.msra.mxu0 %v3337
    %3394 = vmatprep.subr.bf16.mxu0 0
    %3395 = vmatpush1.bf16.msra.mxu0 %v3338
    %3396 = vmatprep.subr.bf16.mxu0 0
    %3397 = vmatpush1.bf16.msra.mxu0 %v3339
    %3398 = vmatprep.subr.bf16.mxu0 0
    %3399 = vmatpush1.bf16.msra.mxu0 %v3340
    %3400 = vmatprep.subr.bf16.mxu0 0
    %3401 = vmatpush1.bf16.msra.mxu0 %v3341
    %3402 = vmatprep.subr.bf16.mxu0 0
    %3403 = vmatpush1.bf16.msra.mxu0 %v3342
    %3404 = vmatprep.subr.bf16.mxu0 0
    %3405 = vmatpush1.bf16.msra.mxu0 %v3343
    %3406 = vmatprep.subr.bf16.mxu0 0
    %3407 = vmatpush1.bf16.msra.mxu0 %v3344
    %3408 = vmatprep.subr.bf16.mxu0 0
    %3409 = vmatpush1.bf16.msra.mxu0 %v3345
    %3410 = vmatprep.mubr.bf16.mxu0 %v3178
    %3411 = vmatmul.mubr.bf16.gmra.mrb[0].mxu0 %v3177
    %v3412 = vpop.f32.mrb[0].mxu0
    %v3413 = vadd.f32 0.0, %v3412
    %v3414 = vpop.f32.mrb[0].mxu0
    %v3415 = vpop.f32.mrb[0].mxu0
    %v3416 = vadd.f32 0.0, %v3415
    %v3417 = vpop.f32.mrb[0].mxu0
    %3418 = vmatprep.mubr.bf16.mxu0 %v3181
    %3419 = vmatmul.mubr.bf16.gmra.mrb[0].mxu0 %v3180
    %v3420 = vpop.f32.mrb[0].mxu0
    %v3421 = vadd.f32 0.0, %v3420
    %v3422 = vpop.f32.mrb[0].mxu0
    %v3423 = vpop.f32.mrb[0].mxu0
    %v3424 = vadd.f32 0.0, %v3423
    %v3425 = vpop.f32.mrb[0].mxu0
    %3426 = vmatprep.mubr.bf16.mxu0 %v3184
    %3427 = vmatmul.mubr.bf16.gmra.mrb[0].mxu0 %v3183
    %v3428 = vpop.f32.mrb[0].mxu0
    %v3429 = vadd.f32 0.0, %v3428
    %v3430 = vpop.f32.mrb[0].mxu0
    %v3431 = vpop.f32.mrb[0].mxu0
    %v3432 = vadd.f32 0.0, %v3431
    %v3433 = vpop.f32.mrb[0].mxu0
    %3434 = vdwg.mxu0
    %3435 = vmatprep.subr.bf16.mxu0 0
    %3436 = vmatpush1.bf16.msra.mxu0 %v3346
    %3437 = vmatprep.subr.bf16.mxu0 0
    %3438 = vmatpush1.bf16.msra.mxu0 %v3347
    %3439 = vmatprep.subr.bf16.mxu0 0
    %3440 = vmatpush1.bf16.msra.mxu0 %v3348
    %3441 = vmatprep.subr.bf16.mxu0 0
    %3442 = vmatpush1.bf16.msra.mxu0 %v3349
    %3443 = vmatprep.subr.bf16.mxu0 0
    %3444 = vmatpush1.bf16.msra.mxu0 %v3350
    %3445 = vmatprep.subr.bf16.mxu0 0
    %3446 = vmatpush1.bf16.msra.mxu0 %v3351
    %3447 = vmatprep.subr.bf16.mxu0 0
    %3448 = vmatpush1.bf16.msra.mxu0 %v3352
    %3449 = vmatprep.subr.bf16.mxu0 0
    %3450 = vmatpush1.bf16.msra.mxu0 %v3353
    %3451 = vmatprep.subr.bf16.mxu0 0
    %3452 = vmatpush1.bf16.msra.mxu0 0
    %3453 = vmatprep.subr.bf16.mxu0 0
    %3454 = vmatpush1.bf16.msra.mxu0 0
    %3455 = vmatprep.subr.bf16.mxu0 0
    %3456 = vmatpush1.bf16.msra.mxu0 0
    %3457 = vmatprep.subr.bf16.mxu0 0
    %3458 = vmatpush1.bf16.msra.mxu0 0
    %3459 = vmatprep.subr.bf16.mxu0 0
    %3460 = vmatpush1.bf16.msra.mxu0 0
    %3461 = vmatprep.subr.bf16.mxu0 0
    %3462 = vmatpush1.bf16.msra.mxu0 0
    %3463 = vmatprep.subr.bf16.mxu0 0
    %3464 = vmatpush1.bf16.msra.mxu0 0
    %3465 = vmatprep.subr.bf16.mxu0 0
    %3466 = vmatpush1.bf16.msra.mxu0 0
    %3467 = vmatprep.mubr.bf16.mxu0 0
    %3468 = vmatmul.mubr.bf16.gmra.mrb[0].mxu0 %v3179
    %v3469 = vpop.f32.mrb[0].mxu0
    %v3470 = vadd.f32 %v3413, %v3469
    %v3471 = vpop.f32.mrb[0].mxu0
    %v3472 = vpop.f32.mrb[0].mxu0
    %v3473 = vadd.f32 %v3416, %v3472
    %v3474 = vpop.f32.mrb[0].mxu0
    %3475 = vmatprep.mubr.bf16.mxu0 0
    %3476 = vmatmul.mubr.bf16.gmra.mrb[0].mxu0 %v3182
    %v3477 = vpop.f32.mrb[0].mxu0
    %v3478 = vadd.f32 %v3421, %v3477
    %v3479 = vpop.f32.mrb[0].mxu0
    %v3480 = vpop.f32.mrb[0].mxu0
    %v3481 = vadd.f32 %v3424, %v3480
    %v3482 = vpop.f32.mrb[0].mxu0
    %3483 = vmatprep.mubr.bf16.mxu0 0
    %3484 = vmatmul.mubr.bf16.gmra.mrb[0].mxu0 %v3185
    %v3485 = vpop.f32.mrb[0].mxu0
    %v3486 = vadd.f32 %v3429, %v3485
    %v3487 = vpop.f32.mrb[0].mxu0
    %v3488 = vpop.f32.mrb[0].mxu0
    %v3489 = vadd.f32 %v3432, %v3488
    %v3490 = vpop.f32.mrb[0].mxu0
    %3491 = vdwg.mxu0
    %v3492 = vadd.f32 %v3470, %v3478
    %v3493 = vadd.f32 %v3473, %v3481
    %v3494 = vadd.f32 %v3492, %v3486
    %v3495 = vadd.f32 %v3493, %v3489
    %v3496 = vmul.f32 %v3494, 0.0021978023
    %v3497 = vmul.f32 %v3495, 0.0021978023
    %3498 = vst [vmem:[#allocation3 + $0x40] sm:$0xff] %v3496
    %3499 = vst [vmem:[#allocation3 + $0x140] sm:$0xff] %v3497
    %v3500 = vld [vmem:[#allocation2 + $0x48] sm:$0xff]
    %v3501 = vld [vmem:[#allocation2 + $0x50] sm:$0xff]
    %v3502 = vld [vmem:[#allocation2 + $0x58] sm:$0xff]
    %v3503 = vld [vmem:[#allocation2 + $0x158] sm:$0xff]
    %v3504 = vld [vmem:[#allocation2 + $0x160] sm:$0xff]
    %v3505 = vld [vmem:[#allocation2 + $0x168] sm:$0xff]
    %v3506 = vld [vmem:[#allocation2 + $0x268] sm:$0xff]
    %v3507 = vld [vmem:[#allocation2 + $0x270] sm:$0xff]
    %v3508 = vld [vmem:[#allocation2 + $0x278] sm:$0xff]
    %v3509 = vld [vmem:[%s924] sm:$0xf]
    %v3510 = vld [vmem:[%s924 + $0x4] sm:$0xf]
    %v3511 = vld [vmem:[%s924 + $0x8] sm:$0xf]
    %v3512 = vld [vmem:[%s924 + $0xc] sm:$0xf]
    %v3513 = vld [vmem:[%s924 + $0x10] sm:$0xf]
    %v3514 = vld [vmem:[%s924 + $0x14] sm:$0xf]
    %v3515 = vld [vmem:[%s924 + $0x18] sm:$0xf]
    %v3516 = vld [vmem:[%s924 + $0x1c] sm:$0xf]
    %v3517 = vld [vmem:[%s924 + $0x20] sm:$0xf]
    %v3518 = vld [vmem:[%s924 + $0x24] sm:$0xf]
    %v3519 = vld [vmem:[%s924 + $0x28] sm:$0xf]
    %v3520 = vld [vmem:[%s924 + $0x2c] sm:$0xf]
    %v3521 = vld [vmem:[%s924 + $0x30] sm:$0xf]
    %v3522 = vld [vmem:[%s924 + $0x34] sm:$0xf]
    %v3523 = vld [vmem:[%s924 + $0x38] sm:$0xf]
    %v3524 = vld [vmem:[%s924 + $0x3c] sm:$0xf]
    %v3525 = vld [vmem:[%s924 + $0x40] sm:$0xf]
    %v3526 = vld [vmem:[%s924 + $0x44] sm:$0xf]
    %v3527 = vld [vmem:[%s924 + $0x48] sm:$0xf]
    %v3528 = vld [vmem:[%s924 + $0x4c] sm:$0xf]
    %v3529 = vld [vmem:[%s924 + $0x50] sm:$0xf]
    %v3530 = vld [vmem:[%s924 + $0x54] sm:$0xf]
    %v3531 = vld [vmem:[%s924 + $0x58] sm:$0xf]
    %v3532 = vld [vmem:[%s924 + $0x5c] sm:$0xf]
    %v3533 = vld [vmem:[%s924 + $0x60] sm:$0xf]
    %v3534 = vld [vmem:[%s924 + $0x64] sm:$0xf]
    %v3535 = vld [vmem:[%s924 + $0x68] sm:$0xf]
    %v3536 = vld [vmem:[%s924 + $0x6c] sm:$0xf]
    %v3537 = vld [vmem:[%s924 + $0x70] sm:$0xf]
    %v3538 = vld [vmem:[%s924 + $0x74] sm:$0xf]
    %v3539 = vld [vmem:[%s924 + $0x78] sm:$0xf]
    %v3540 = vld [vmem:[%s924 + $0x7c] sm:$0xf]
    %v3541 = vld [vmem:[%s924 + $0x80] sm:$0xf]
    %v3542 = vld [vmem:[%s924 + $0x84] sm:$0xf]
    %v3543 = vld [vmem:[%s924 + $0x88] sm:$0xf]
    %v3544 = vld [vmem:[%s924 + $0x8c] sm:$0xf]
    %v3545 = vld [vmem:[%s924 + $0x90] sm:$0xf]
    %v3546 = vld [vmem:[%s924 + $0x94] sm:$0xf]
    %v3547 = vld [vmem:[%s924 + $0x98] sm:$0xf]
    %v3548 = vld [vmem:[%s924 + $0x9c] sm:$0xf]
    %v3549 = vld [vmem:[%s924 + $0xa0] sm:$0xf]
    %v3550 = vld [vmem:[%s924 + $0xa4] sm:$0xf]
    %v3551 = vld [vmem:[%s924 + $0xa8] sm:$0xf]
    %v3552 = vld [vmem:[%s924 + $0xac] sm:$0xf]
    %v3553 = vld [vmem:[%s924 + $0xb0] sm:$0xf]
    %v3554 = vld [vmem:[%s924 + $0xb4] sm:$0xf]
    %v3555 = vld [vmem:[%s924 + $0xb8] sm:$0xf]
    %v3556 = vld [vmem:[%s924 + $0xbc] sm:$0xf]
    %v3605 = vunpack.c.l.b16 %v3509
    %v3606 = vunpack.c.l.b16 %v3510
    %v3607 = vunpack.c.l.b16 %v3511
    %v3608 = vunpack.c.l.b16 %v3512
    %v3609 = vunpack.c.l.b16 %v3513
    %v3610 = vunpack.c.l.b16 %v3514
    %v3611 = vunpack.c.l.b16 %v3515
    %v3612 = vunpack.c.l.b16 %v3516
    %v3613 = vunpack.c.l.b16 %v3517
    %v3614 = vunpack.c.l.b16 %v3518
    %v3615 = vunpack.c.l.b16 %v3519
    %v3616 = vunpack.c.l.b16 %v3520
    %v3617 = vunpack.c.l.b16 %v3521
    %v3618 = vunpack.c.l.b16 %v3522
    %v3619 = vunpack.c.l.b16 %v3523
    %v3620 = vunpack.c.l.b16 %v3524
    %v3621 = vunpack.c.l.b16 %v3525
    %v3622 = vunpack.c.l.b16 %v3526
    %v3623 = vunpack.c.l.b16 %v3527
    %v3624 = vunpack.c.l.b16 %v3528
    %v3625 = vunpack.c.l.b16 %v3529
    %v3626 = vunpack.c.l.b16 %v3530
    %v3627 = vunpack.c.l.b16 %v3531
    %v3628 = vunpack.c.l.b16 %v3532
    %v3629 = vunpack.c.l.b16 %v3533
    %v3630 = vunpack.c.l.b16 %v3534
    %v3631 = vunpack.c.l.b16 %v3535
    %v3632 = vunpack.c.l.b16 %v3536
    %v3633 = vunpack.c.l.b16 %v3537
    %v3634 = vunpack.c.l.b16 %v3538
    %v3635 = vunpack.c.l.b16 %v3539
    %v3636 = vunpack.c.l.b16 %v3540
    %v3637 = vunpack.c.l.b16 %v3541
    %v3638 = vunpack.c.l.b16 %v3542
    %v3639 = vunpack.c.l.b16 %v3543
    %v3640 = vunpack.c.l.b16 %v3544
    %v3641 = vunpack.c.l.b16 %v3545
    %v3642 = vunpack.c.l.b16 %v3546
    %v3643 = vunpack.c.l.b16 %v3547
    %v3644 = vunpack.c.l.b16 %v3548
    %v3645 = vunpack.c.l.b16 %v3549
    %v3646 = vunpack.c.l.b16 %v3550
    %v3647 = vunpack.c.l.b16 %v3551
    %v3648 = vunpack.c.l.b16 %v3552
    %v3649 = vunpack.c.l.b16 %v3553
    %v3650 = vunpack.c.l.b16 %v3554
    %v3651 = vunpack.c.l.b16 %v3555
    %v3652 = vunpack.c.l.b16 %v3556
    %v3653 = vpack.c.b16 %v3606, %v3605
    %v3654 = vpack.c.b16 %v3608, %v3607
    %v3655 = vpack.c.b16 %v3610, %v3609
    %v3656 = vpack.c.b16 %v3612, %v3611
    %v3657 = vpack.c.b16 %v3614, %v3613
    %v3658 = vpack.c.b16 %v3616, %v3615
    %v3659 = vpack.c.b16 %v3618, %v3617
    %v3660 = vpack.c.b16 %v3620, %v3619
    %v3661 = vpack.c.b16 %v3622, %v3621
    %v3662 = vpack.c.b16 %v3624, %v3623
    %v3663 = vpack.c.b16 %v3626, %v3625
    %v3664 = vpack.c.b16 %v3628, %v3627
    %v3665 = vpack.c.b16 %v3630, %v3629
    %v3666 = vpack.c.b16 %v3632, %v3631
    %v3667 = vpack.c.b16 %v3634, %v3633
    %v3668 = vpack.c.b16 %v3636, %v3635
    %v3669 = vpack.c.b16 %v3638, %v3637
    %v3670 = vpack.c.b16 %v3640, %v3639
    %v3671 = vpack.c.b16 %v3642, %v3641
    %v3672 = vpack.c.b16 %v3644, %v3643
    %v3673 = vpack.c.b16 %v3646, %v3645
    %v3674 = vpack.c.b16 %v3648, %v3647
    %v3675 = vpack.c.b16 %v3650, %v3649
    %v3676 = vpack.c.b16 %v3652, %v3651
    %3701 = vmatprep.subr.bf16.mxu0 0
    %3702 = vmatpush1.bf16.msra.mxu0 %v3653
    %3703 = vmatprep.subr.bf16.mxu0 0
    %3704 = vmatpush1.bf16.msra.mxu0 %v3654
    %3705 = vmatprep.subr.bf16.mxu0 0
    %3706 = vmatpush1.bf16.msra.mxu0 %v3655
    %3707 = vmatprep.subr.bf16.mxu0 0
    %3708 = vmatpush1.bf16.msra.mxu0 %v3656
    %3709 = vmatprep.subr.bf16.mxu0 0
    %3710 = vmatpush1.bf16.msra.mxu0 %v3657
    %3711 = vmatprep.subr.bf16.mxu0 0
    %3712 = vmatpush1.bf16.msra.mxu0 %v3658
    %3713 = vmatprep.subr.bf16.mxu0 0
    %3714 = vmatpush1.bf16.msra.mxu0 %v3659
    %3715 = vmatprep.subr.bf16.mxu0 0
    %3716 = vmatpush1.bf16.msra.mxu0 %v3660
    %3717 = vmatprep.subr.bf16.mxu0 0
    %3718 = vmatpush1.bf16.msra.mxu0 %v3661
    %3719 = vmatprep.subr.bf16.mxu0 0
    %3720 = vmatpush1.bf16.msra.mxu0 %v3662
    %3721 = vmatprep.subr.bf16.mxu0 0
    %3722 = vmatpush1.bf16.msra.mxu0 %v3663
    %3723 = vmatprep.subr.bf16.mxu0 0
    %3724 = vmatpush1.bf16.msra.mxu0 %v3664
    %3725 = vmatprep.subr.bf16.mxu0 0
    %3726 = vmatpush1.bf16.msra.mxu0 %v3665
    %3727 = vmatprep.subr.bf16.mxu0 0
    %3728 = vmatpush1.bf16.msra.mxu0 %v3666
    %3729 = vmatprep.subr.bf16.mxu0 0
    %3730 = vmatpush1.bf16.msra.mxu0 %v3667
    %3731 = vmatprep.subr.bf16.mxu0 0
    %3732 = vmatpush1.bf16.msra.mxu0 %v3668
    %3733 = vmatprep.mubr.bf16.mxu0 %v3501
    %3734 = vmatmul.mubr.bf16.gmra.mrb[0].mxu0 %v3500
    %v3735 = vpop.f32.mrb[0].mxu0
    %v3736 = vadd.f32 0.0, %v3735
    %v3737 = vpop.f32.mrb[0].mxu0
    %v3738 = vpop.f32.mrb[0].mxu0
    %v3739 = vadd.f32 0.0, %v3738
    %v3740 = vpop.f32.mrb[0].mxu0
    %3741 = vmatprep.mubr.bf16.mxu0 %v3504
    %3742 = vmatmul.mubr.bf16.gmra.mrb[0].mxu0 %v3503
    %v3743 = vpop.f32.mrb[0].mxu0
    %v3744 = vadd.f32 0.0, %v3743
    %v3745 = vpop.f32.mrb[0].mxu0
    %v3746 = vpop.f32.mrb[0].mxu0
    %v3747 = vadd.f32 0.0, %v3746
    %v3748 = vpop.f32.mrb[0].mxu0
    %3749 = vmatprep.mubr.bf16.mxu0 %v3507
    %3750 = vmatmul.mubr.bf16.gmra.mrb[0].mxu0 %v3506
    %v3751 = vpop.f32.mrb[0].mxu0
    %v3752 = vadd.f32 0.0, %v3751
    %v3753 = vpop.f32.mrb[0].mxu0
    %v3754 = vpop.f32.mrb[0].mxu0
    %v3755 = vadd.f32 0.0, %v3754
    %v3756 = vpop.f32.mrb[0].mxu0
    %3757 = vdwg.mxu0
    %3758 = vmatprep.subr.bf16.mxu0 0
    %3759 = vmatpush1.bf16.msra.mxu0 %v3669
    %3760 = vmatprep.subr.bf16.mxu0 0
    %3761 = vmatpush1.bf16.msra.mxu0 %v3670
    %3762 = vmatprep.subr.bf16.mxu0 0
    %3763 = vmatpush1.bf16.msra.mxu0 %v3671
    %3764 = vmatprep.subr.bf16.mxu0 0
    %3765 = vmatpush1.bf16.msra.mxu0 %v3672
    %3766 = vmatprep.subr.bf16.mxu0 0
    %3767 = vmatpush1.bf16.msra.mxu0 %v3673
    %3768 = vmatprep.subr.bf16.mxu0 0
    %3769 = vmatpush1.bf16.msra.mxu0 %v3674
    %3770 = vmatprep.subr.bf16.mxu0 0
    %3771 = vmatpush1.bf16.msra.mxu0 %v3675
    %3772 = vmatprep.subr.bf16.mxu0 0
    %3773 = vmatpush1.bf16.msra.mxu0 %v3676
    %3774 = vmatprep.subr.bf16.mxu0 0
    %3775 = vmatpush1.bf16.msra.mxu0 0
    %3776 = vmatprep.subr.bf16.mxu0 0
    %3777 = vmatpush1.bf16.msra.mxu0 0
    %3778 = vmatprep.subr.bf16.mxu0 0
    %3779 = vmatpush1.bf16.msra.mxu0 0
    %3780 = vmatprep.subr.bf16.mxu0 0
    %3781 = vmatpush1.bf16.msra.mxu0 0
    %3782 = vmatprep.subr.bf16.mxu0 0
    %3783 = vmatpush1.bf16.msra.mxu0 0
    %3784 = vmatprep.subr.bf16.mxu0 0
    %3785 = vmatpush1.bf16.msra.mxu0 0
    %3786 = vmatprep.subr.bf16.mxu0 0
    %3787 = vmatpush1.bf16.msra.mxu0 0
    %3788 = vmatprep.subr.bf16.mxu0 0
    %3789 = vmatpush1.bf16.msra.mxu0 0
    %3790 = vmatprep.mubr.bf16.mxu0 0
    %3791 = vmatmul.mubr.bf16.gmra.mrb[0].mxu0 %v3502
    %v3792 = vpop.f32.mrb[0].mxu0
    %v3793 = vadd.f32 %v3736, %v3792
    %v3794 = vpop.f32.mrb[0].mxu0
    %v3795 = vpop.f32.mrb[0].mxu0
    %v3796 = vadd.f32 %v3739, %v3795
    %v3797 = vpop.f32.mrb[0].mxu0
    %3798 = vmatprep.mubr.bf16.mxu0 0
    %3799 = vmatmul.mubr.bf16.gmra.mrb[0].mxu0 %v3505
    %v3800 = vpop.f32.mrb[0].mxu0
    %v3801 = vadd.f32 %v3744, %v3800
    %v3802 = vpop.f32.mrb[0].mxu0
    %v3803 = vpop.f32.mrb[0].mxu0
    %v3804 = vadd.f32 %v3747, %v3803
    %v3805 = vpop.f32.mrb[0].mxu0
    %3806 = vmatprep.mubr.bf16.mxu0 0
    %3807 = vmatmul.mubr.bf16.gmra.mrb[0].mxu0 %v3508
    %v3808 = vpop.f32.mrb[0].mxu0
    %v3809 = vadd.f32 %v3752, %v3808
    %v3810 = vpop.f32.mrb[0].mxu0
    %v3811 = vpop.f32.mrb[0].mxu0
    %v3812 = vadd.f32 %v3755, %v3811
    %v3813 = vpop.f32.mrb[0].mxu0
    %3814 = vdwg.mxu0
    %v3815 = vadd.f32 %v3793, %v3801
    %v3816 = vadd.f32 %v3796, %v3804
    %v3817 = vadd.f32 %v3815, %v3809
    %v3818 = vadd.f32 %v3816, %v3812
    %v3819 = vmul.f32 %v3817, 0.0021978023
    %v3820 = vmul.f32 %v3818, 0.0021978023
    %3821 = vst [vmem:[#allocation3 + $0x48] sm:$0xff] %v3819
    %3822 = vst [vmem:[#allocation3 + $0x148] sm:$0xff] %v3820
    %v3823 = vld [vmem:[#allocation2 + $0x50] sm:$0xff]
    %v3824 = vld [vmem:[#allocation2 + $0x58] sm:$0xff]
    %v3825 = vld [vmem:[#allocation2 + $0x60] sm:$0xff]
    %v3826 = vld [vmem:[#allocation2 + $0x160] sm:$0xff]
    %v3827 = vld [vmem:[#allocation2 + $0x168] sm:$0xff]
    %v3828 = vld [vmem:[#allocation2 + $0x170] sm:$0xff]
    %v3829 = vld [vmem:[#allocation2 + $0x270] sm:$0xff]
    %v3830 = vld [vmem:[#allocation2 + $0x278] sm:$0xff]
    %v3831 = vld [vmem:[#allocation2 + $0x280] sm:$0xff]
    %v3832 = vld [vmem:[%s924] sm:$0xf]
    %v3833 = vld [vmem:[%s924 + $0x4] sm:$0xf]
    %v3834 = vld [vmem:[%s924 + $0x8] sm:$0xf]
    %v3835 = vld [vmem:[%s924 + $0xc] sm:$0xf]
    %v3836 = vld [vmem:[%s924 + $0x10] sm:$0xf]
    %v3837 = vld [vmem:[%s924 + $0x14] sm:$0xf]
    %v3838 = vld [vmem:[%s924 + $0x18] sm:$0xf]
    %v3839 = vld [vmem:[%s924 + $0x1c] sm:$0xf]
    %v3840 = vld [vmem:[%s924 + $0x20] sm:$0xf]
    %v3841 = vld [vmem:[%s924 + $0x24] sm:$0xf]
    %v3842 = vld [vmem:[%s924 + $0x28] sm:$0xf]
    %v3843 = vld [vmem:[%s924 + $0x2c] sm:$0xf]
    %v3844 = vld [vmem:[%s924 + $0x30] sm:$0xf]
    %v3845 = vld [vmem:[%s924 + $0x34] sm:$0xf]
    %v3846 = vld [vmem:[%s924 + $0x38] sm:$0xf]
    %v3847 = vld [vmem:[%s924 + $0x3c] sm:$0xf]
    %v3848 = vld [vmem:[%s924 + $0x40] sm:$0xf]
    %v3849 = vld [vmem:[%s924 + $0x44] sm:$0xf]
    %v3850 = vld [vmem:[%s924 + $0x48] sm:$0xf]
    %v3851 = vld [vmem:[%s924 + $0x4c] sm:$0xf]
    %v3852 = vld [vmem:[%s924 + $0x50] sm:$0xf]
    %v3853 = vld [vmem:[%s924 + $0x54] sm:$0xf]
    %v3854 = vld [vmem:[%s924 + $0x58] sm:$0xf]
    %v3855 = vld [vmem:[%s924 + $0x5c] sm:$0xf]
    %v3856 = vld [vmem:[%s924 + $0x60] sm:$0xf]
    %v3857 = vld [vmem:[%s924 + $0x64] sm:$0xf]
    %v3858 = vld [vmem:[%s924 + $0x68] sm:$0xf]
    %v3859 = vld [vmem:[%s924 + $0x6c] sm:$0xf]
    %v3860 = vld [vmem:[%s924 + $0x70] sm:$0xf]
    %v3861 = vld [vmem:[%s924 + $0x74] sm:$0xf]
    %v3862 = vld [vmem:[%s924 + $0x78] sm:$0xf]
    %v3863 = vld [vmem:[%s924 + $0x7c] sm:$0xf]
    %v3864 = vld [vmem:[%s924 + $0x80] sm:$0xf]
    %v3865 = vld [vmem:[%s924 + $0x84] sm:$0xf]
    %v3866 = vld [vmem:[%s924 + $0x88] sm:$0xf]
    %v3867 = vld [vmem:[%s924 + $0x8c] sm:$0xf]
    %v3868 = vld [vmem:[%s924 + $0x90] sm:$0xf]
    %v3869 = vld [vmem:[%s924 + $0x94] sm:$0xf]
    %v3870 = vld [vmem:[%s924 + $0x98] sm:$0xf]
    %v3871 = vld [vmem:[%s924 + $0x9c] sm:$0xf]
    %v3872 = vld [vmem:[%s924 + $0xa0] sm:$0xf]
    %v3873 = vld [vmem:[%s924 + $0xa4] sm:$0xf]
    %v3874 = vld [vmem:[%s924 + $0xa8] sm:$0xf]
    %v3875 = vld [vmem:[%s924 + $0xac] sm:$0xf]
    %v3876 = vld [vmem:[%s924 + $0xb0] sm:$0xf]
    %v3877 = vld [vmem:[%s924 + $0xb4] sm:$0xf]
    %v3878 = vld [vmem:[%s924 + $0xb8] sm:$0xf]
    %v3879 = vld [vmem:[%s924 + $0xbc] sm:$0xf]
    %v3928 = vunpack.c.l.b16 %v3832
    %v3929 = vunpack.c.l.b16 %v3833
    %v3930 = vunpack.c.l.b16 %v3834
    %v3931 = vunpack.c.l.b16 %v3835
    %v3932 = vunpack.c.l.b16 %v3836
    %v3933 = vunpack.c.l.b16 %v3837
    %v3934 = vunpack.c.l.b16 %v3838
    %v3935 = vunpack.c.l.b16 %v3839
    %v3936 = vunpack.c.l.b16 %v3840
    %v3937 = vunpack.c.l.b16 %v3841
    %v3938 = vunpack.c.l.b16 %v3842
    %v3939 = vunpack.c.l.b16 %v3843
    %v3940 = vunpack.c.l.b16 %v3844
    %v3941 = vunpack.c.l.b16 %v3845
    %v3942 = vunpack.c.l.b16 %v3846
    %v3943 = vunpack.c.l.b16 %v3847
    %v3944 = vunpack.c.l.b16 %v3848
    %v3945 = vunpack.c.l.b16 %v3849
    %v3946 = vunpack.c.l.b16 %v3850
    %v3947 = vunpack.c.l.b16 %v3851
    %v3948 = vunpack.c.l.b16 %v3852
    %v3949 = vunpack.c.l.b16 %v3853
    %v3950 = vunpack.c.l.b16 %v3854
    %v3951 = vunpack.c.l.b16 %v3855
    %v3952 = vunpack.c.l.b16 %v3856
    %v3953 = vunpack.c.l.b16 %v3857
    %v3954 = vunpack.c.l.b16 %v3858
    %v3955 = vunpack.c.l.b16 %v3859
    %v3956 = vunpack.c.l.b16 %v3860
    %v3957 = vunpack.c.l.b16 %v3861
    %v3958 = vunpack.c.l.b16 %v3862
    %v3959 = vunpack.c.l.b16 %v3863
    %v3960 = vunpack.c.l.b16 %v3864
    %v3961 = vunpack.c.l.b16 %v3865
    %v3962 = vunpack.c.l.b16 %v3866
    %v3963 = vunpack.c.l.b16 %v3867
    %v3964 = vunpack.c.l.b16 %v3868
    %v3965 = vunpack.c.l.b16 %v3869
    %v3966 = vunpack.c.l.b16 %v3870
    %v3967 = vunpack.c.l.b16 %v3871
    %v3968 = vunpack.c.l.b16 %v3872
    %v3969 = vunpack.c.l.b16 %v3873
    %v3970 = vunpack.c.l.b16 %v3874
    %v3971 = vunpack.c.l.b16 %v3875
    %v3972 = vunpack.c.l.b16 %v3876
    %v3973 = vunpack.c.l.b16 %v3877
    %v3974 = vunpack.c.l.b16 %v3878
    %v3975 = vunpack.c.l.b16 %v3879
    %v3976 = vpack.c.b16 %v3929, %v3928
    %v3977 = vpack.c.b16 %v3931, %v3930
    %v3978 = vpack.c.b16 %v3933, %v3932
    %v3979 = vpack.c.b16 %v3935, %v3934
    %v3980 = vpack.c.b16 %v3937, %v3936
    %v3981 = vpack.c.b16 %v3939, %v3938
    %v3982 = vpack.c.b16 %v3941, %v3940
    %v3983 = vpack.c.b16 %v3943, %v3942
    %v3984 = vpack.c.b16 %v3945, %v3944
    %v3985 = vpack.c.b16 %v3947, %v3946
    %v3986 = vpack.c.b16 %v3949, %v3948
    %v3987 = vpack.c.b16 %v3951, %v3950
    %v3988 = vpack.c.b16 %v3953, %v3952
    %v3989 = vpack.c.b16 %v3955, %v3954
    %v3990 = vpack.c.b16 %v3957, %v3956
    %v3991 = vpack.c.b16 %v3959, %v3958
    %v3992 = vpack.c.b16 %v3961, %v3960
    %v3993 = vpack.c.b16 %v3963, %v3962
    %v3994 = vpack.c.b16 %v3965, %v3964
    %v3995 = vpack.c.b16 %v3967, %v3966
    %v3996 = vpack.c.b16 %v3969, %v3968
    %v3997 = vpack.c.b16 %v3971, %v3970
    %v3998 = vpack.c.b16 %v3973, %v3972
    %v3999 = vpack.c.b16 %v3975, %v3974
    %4024 = vmatprep.subr.bf16.mxu0 0
    %4025 = vmatpush1.bf16.msra.mxu0 %v3976
    %4026 = vmatprep.subr.bf16.mxu0 0
    %4027 = vmatpush1.bf16.msra.mxu0 %v3977
    %4028 = vmatprep.subr.bf16.mxu0 0
    %4029 = vmatpush1.bf16.msra.mxu0 %v3978
    %4030 = vmatprep.subr.bf16.mxu0 0
    %4031 = vmatpush1.bf16.msra.mxu0 %v3979
    %4032 = vmatprep.subr.bf16.mxu0 0
    %4033 = vmatpush1.bf16.msra.mxu0 %v3980
    %4034 = vmatprep.subr.bf16.mxu0 0
    %4035 = vmatpush1.bf16.msra.mxu0 %v3981
    %4036 = vmatprep.subr.bf16.mxu0 0
    %4037 = vmatpush1.bf16.msra.mxu0 %v3982
    %4038 = vmatprep.subr.bf16.mxu0 0
    %4039 = vmatpush1.bf16.msra.mxu0 %v3983
    %4040 = vmatprep.subr.bf16.mxu0 0
    %4041 = vmatpush1.bf16.msra.mxu0 %v3984
    %4042 = vmatprep.subr.bf16.mxu0 0
    %4043 = vmatpush1.bf16.msra.mxu0 %v3985
    %4044 = vmatprep.subr.bf16.mxu0 0
    %4045 = vmatpush1.bf16.msra.mxu0 %v3986
    %4046 = vmatprep.subr.bf16.mxu0 0
    %4047 = vmatpush1.bf16.msra.mxu0 %v3987
    %4048 = vmatprep.subr.bf16.mxu0 0
    %4049 = vmatpush1.bf16.msra.mxu0 %v3988
    %4050 = vmatprep.subr.bf16.mxu0 0
    %4051 = vmatpush1.bf16.msra.mxu0 %v3989
    %4052 = vmatprep.subr.bf16.mxu0 0
    %4053 = vmatpush1.bf16.msra.mxu0 %v3990
    %4054 = vmatprep.subr.bf16.mxu0 0
    %4055 = vmatpush1.bf16.msra.mxu0 %v3991
    %4056 = vmatprep.mubr.bf16.mxu0 %v3824
    %4057 = vmatmul.mubr.bf16.gmra.mrb[0].mxu0 %v3823
    %v4058 = vpop.f32.mrb[0].mxu0
    %v4059 = vadd.f32 0.0, %v4058
    %v4060 = vpop.f32.mrb[0].mxu0
    %v4061 = vpop.f32.mrb[0].mxu0
    %v4062 = vadd.f32 0.0, %v4061
    %v4063 = vpop.f32.mrb[0].mxu0
    %4064 = vmatprep.mubr.bf16.mxu0 %v3827
    %4065 = vmatmul.mubr.bf16.gmra.mrb[0].mxu0 %v3826
    %v4066 = vpop.f32.mrb[0].mxu0
    %v4067 = vadd.f32 0.0, %v4066
    %v4068 = vpop.f32.mrb[0].mxu0
    %v4069 = vpop.f32.mrb[0].mxu0
    %v4070 = vadd.f32 0.0, %v4069
    %v4071 = vpop.f32.mrb[0].mxu0
    %4072 = vmatprep.mubr.bf16.mxu0 %v3830
    %4073 = vmatmul.mubr.bf16.gmra.mrb[0].mxu0 %v3829
    %v4074 = vpop.f32.mrb[0].mxu0
    %v4075 = vadd.f32 0.0, %v4074
    %v4076 = vpop.f32.mrb[0].mxu0
    %v4077 = vpop.f32.mrb[0].mxu0
    %v4078 = vadd.f32 0.0, %v4077
    %v4079 = vpop.f32.mrb[0].mxu0
    %4080 = vdwg.mxu0
    %4081 = vmatprep.subr.bf16.mxu0 0
    %4082 = vmatpush1.bf16.msra.mxu0 %v3992
    %4083 = vmatprep.subr.bf16.mxu0 0
    %4084 = vmatpush1.bf16.msra.mxu0 %v3993
    %4085 = vmatprep.subr.bf16.mxu0 0
    %4086 = vmatpush1.bf16.msra.mxu0 %v3994
    %4087 = vmatprep.subr.bf16.mxu0 0
    %4088 = vmatpush1.bf16.msra.mxu0 %v3995
    %4089 = vmatprep.subr.bf16.mxu0 0
    %4090 = vmatpush1.bf16.msra.mxu0 %v3996
    %4091 = vmatprep.subr.bf16.mxu0 0
    %4092 = vmatpush1.bf16.msra.mxu0 %v3997
    %4093 = vmatprep.subr.bf16.mxu0 0
    %4094 = vmatpush1.bf16.msra.mxu0 %v3998
    %4095 = vmatprep.subr.bf16.mxu0 0
    %4096 = vmatpush1.bf16.msra.mxu0 %v3999
    %4097 = vmatprep.subr.bf16.mxu0 0
    %4098 = vmatpush1.bf16.msra.mxu0 0
    %4099 = vmatprep.subr.bf16.mxu0 0
    %4100 = vmatpush1.bf16.msra.mxu0 0
    %4101 = vmatprep.subr.bf16.mxu0 0
    %4102 = vmatpush1.bf16.msra.mxu0 0
    %4103 = vmatprep.subr.bf16.mxu0 0
    %4104 = vmatpush1.bf16.msra.mxu0 0
    %4105 = vmatprep.subr.bf16.mxu0 0
    %4106 = vmatpush1.bf16.msra.mxu0 0
    %4107 = vmatprep.subr.bf16.mxu0 0
    %4108 = vmatpush1.bf16.msra.mxu0 0
    %4109 = vmatprep.subr.bf16.mxu0 0
    %4110 = vmatpush1.bf16.msra.mxu0 0
    %4111 = vmatprep.subr.bf16.mxu0 0
    %4112 = vmatpush1.bf16.msra.mxu0 0
    %4113 = vmatprep.mubr.bf16.mxu0 0
    %4114 = vmatmul.mubr.bf16.gmra.mrb[0].mxu0 %v3825
    %v4115 = vpop.f32.mrb[0].mxu0
    %v4116 = vadd.f32 %v4059, %v4115
    %v4117 = vpop.f32.mrb[0].mxu0
    %v4118 = vpop.f32.mrb[0].mxu0
    %v4119 = vadd.f32 %v4062, %v4118
    %v4120 = vpop.f32.mrb[0].mxu0
    %4121 = vmatprep.mubr.bf16.mxu0 0
    %4122 = vmatmul.mubr.bf16.gmra.mrb[0].mxu0 %v3828
    %v4123 = vpop.f32.mrb[0].mxu0
    %v4124 = vadd.f32 %v4067, %v4123
    %v4125 = vpop.f32.mrb[0].mxu0
    %v4126 = vpop.f32.mrb[0].mxu0
    %v4127 = vadd.f32 %v4070, %v4126
    %v4128 = vpop.f32.mrb[0].mxu0
    %4129 = vmatprep.mubr.bf16.mxu0 0
    %4130 = vmatmul.mubr.bf16.gmra.mrb[0].mxu0 %v3831
    %v4131 = vpop.f32.mrb[0].mxu0
    %v4132 = vadd.f32 %v4075, %v4131
    %v4133 = vpop.f32.mrb[0].mxu0
    %v4134 = vpop.f32.mrb[0].mxu0
    %v4135 = vadd.f32 %v4078, %v4134
    %v4136 = vpop.f32.mrb[0].mxu0
    %4137 = vdwg.mxu0
    %v4138 = vadd.f32 %v4116, %v4124
    %v4139 = vadd.f32 %v4119, %v4127
    %v4140 = vadd.f32 %v4138, %v4132
    %v4141 = vadd.f32 %v4139, %v4135
    %v4142 = vmul.f32 %v4140, 0.0021978023
    %v4143 = vmul.f32 %v4141, 0.0021978023
    %4144 = vst [vmem:[#allocation3 + $0x50] sm:$0xff] %v4142
    %4145 = vst [vmem:[#allocation3 + $0x150] sm:$0xff] %v4143
    %v4146 = vld [vmem:[#allocation2 + $0x58] sm:$0xff]
    %v4147 = vld [vmem:[#allocation2 + $0x60] sm:$0xff]
    %v4148 = vld [vmem:[#allocation2 + $0x68] sm:$0xff]
    %v4149 = vld [vmem:[#allocation2 + $0x168] sm:$0xff]
    %v4150 = vld [vmem:[#allocation2 + $0x170] sm:$0xff]
    %v4151 = vld [vmem:[#allocation2 + $0x178] sm:$0xff]
    %v4152 = vld [vmem:[#allocation2 + $0x278] sm:$0xff]
    %v4153 = vld [vmem:[#allocation2 + $0x280] sm:$0xff]
    %v4154 = vld [vmem:[#allocation2 + $0x288] sm:$0xff]
    %v4155 = vld [vmem:[%s924] sm:$0xf]
    %v4156 = vld [vmem:[%s924 + $0x4] sm:$0xf]
    %v4157 = vld [vmem:[%s924 + $0x8] sm:$0xf]
    %v4158 = vld [vmem:[%s924 + $0xc] sm:$0xf]
    %v4159 = vld [vmem:[%s924 + $0x10] sm:$0xf]
    %v4160 = vld [vmem:[%s924 + $0x14] sm:$0xf]
    %v4161 = vld [vmem:[%s924 + $0x18] sm:$0xf]
    %v4162 = vld [vmem:[%s924 + $0x1c] sm:$0xf]
    %v4163 = vld [vmem:[%s924 + $0x20] sm:$0xf]
    %v4164 = vld [vmem:[%s924 + $0x24] sm:$0xf]
    %v4165 = vld [vmem:[%s924 + $0x28] sm:$0xf]
    %v4166 = vld [vmem:[%s924 + $0x2c] sm:$0xf]
    %v4167 = vld [vmem:[%s924 + $0x30] sm:$0xf]
    %v4168 = vld [vmem:[%s924 + $0x34] sm:$0xf]
    %v4169 = vld [vmem:[%s924 + $0x38] sm:$0xf]
    %v4170 = vld [vmem:[%s924 + $0x3c] sm:$0xf]
    %v4171 = vld [vmem:[%s924 + $0x40] sm:$0xf]
    %v4172 = vld [vmem:[%s924 + $0x44] sm:$0xf]
    %v4173 = vld [vmem:[%s924 + $0x48] sm:$0xf]
    %v4174 = vld [vmem:[%s924 + $0x4c] sm:$0xf]
    %v4175 = vld [vmem:[%s924 + $0x50] sm:$0xf]
    %v4176 = vld [vmem:[%s924 + $0x54] sm:$0xf]
    %v4177 = vld [vmem:[%s924 + $0x58] sm:$0xf]
    %v4178 = vld [vmem:[%s924 + $0x5c] sm:$0xf]
    %v4179 = vld [vmem:[%s924 + $0x60] sm:$0xf]
    %v4180 = vld [vmem:[%s924 + $0x64] sm:$0xf]
    %v4181 = vld [vmem:[%s924 + $0x68] sm:$0xf]
    %v4182 = vld [vmem:[%s924 + $0x6c] sm:$0xf]
    %v4183 = vld [vmem:[%s924 + $0x70] sm:$0xf]
    %v4184 = vld [vmem:[%s924 + $0x74] sm:$0xf]
    %v4185 = vld [vmem:[%s924 + $0x78] sm:$0xf]
    %v4186 = vld [vmem:[%s924 + $0x7c] sm:$0xf]
    %v4187 = vld [vmem:[%s924 + $0x80] sm:$0xf]
    %v4188 = vld [vmem:[%s924 + $0x84] sm:$0xf]
    %v4189 = vld [vmem:[%s924 + $0x88] sm:$0xf]
    %v4190 = vld [vmem:[%s924 + $0x8c] sm:$0xf]
    %v4191 = vld [vmem:[%s924 + $0x90] sm:$0xf]
    %v4192 = vld [vmem:[%s924 + $0x94] sm:$0xf]
    %v4193 = vld [vmem:[%s924 + $0x98] sm:$0xf]
    %v4194 = vld [vmem:[%s924 + $0x9c] sm:$0xf]
    %v4195 = vld [vmem:[%s924 + $0xa0] sm:$0xf]
    %v4196 = vld [vmem:[%s924 + $0xa4] sm:$0xf]
    %v4197 = vld [vmem:[%s924 + $0xa8] sm:$0xf]
    %v4198 = vld [vmem:[%s924 + $0xac] sm:$0xf]
    %v4199 = vld [vmem:[%s924 + $0xb0] sm:$0xf]
    %v4200 = vld [vmem:[%s924 + $0xb4] sm:$0xf]
    %v4201 = vld [vmem:[%s924 + $0xb8] sm:$0xf]
    %v4202 = vld [vmem:[%s924 + $0xbc] sm:$0xf]
    %v4251 = vunpack.c.l.b16 %v4155
    %v4252 = vunpack.c.l.b16 %v4156
    %v4253 = vunpack.c.l.b16 %v4157
    %v4254 = vunpack.c.l.b16 %v4158
    %v4255 = vunpack.c.l.b16 %v4159
    %v4256 = vunpack.c.l.b16 %v4160
    %v4257 = vunpack.c.l.b16 %v4161
    %v4258 = vunpack.c.l.b16 %v4162
    %v4259 = vunpack.c.l.b16 %v4163
    %v4260 = vunpack.c.l.b16 %v4164
    %v4261 = vunpack.c.l.b16 %v4165
    %v4262 = vunpack.c.l.b16 %v4166
    %v4263 = vunpack.c.l.b16 %v4167
    %v4264 = vunpack.c.l.b16 %v4168
    %v4265 = vunpack.c.l.b16 %v4169
    %v4266 = vunpack.c.l.b16 %v4170
    %v4267 = vunpack.c.l.b16 %v4171
    %v4268 = vunpack.c.l.b16 %v4172
    %v4269 = vunpack.c.l.b16 %v4173
    %v4270 = vunpack.c.l.b16 %v4174
    %v4271 = vunpack.c.l.b16 %v4175
    %v4272 = vunpack.c.l.b16 %v4176
    %v4273 = vunpack.c.l.b16 %v4177
    %v4274 = vunpack.c.l.b16 %v4178
    %v4275 = vunpack.c.l.b16 %v4179
    %v4276 = vunpack.c.l.b16 %v4180
    %v4277 = vunpack.c.l.b16 %v4181
    %v4278 = vunpack.c.l.b16 %v4182
    %v4279 = vunpack.c.l.b16 %v4183
    %v4280 = vunpack.c.l.b16 %v4184
    %v4281 = vunpack.c.l.b16 %v4185
    %v4282 = vunpack.c.l.b16 %v4186
    %v4283 = vunpack.c.l.b16 %v4187
    %v4284 = vunpack.c.l.b16 %v4188
    %v4285 = vunpack.c.l.b16 %v4189
    %v4286 = vunpack.c.l.b16 %v4190
    %v4287 = vunpack.c.l.b16 %v4191
    %v4288 = vunpack.c.l.b16 %v4192
    %v4289 = vunpack.c.l.b16 %v4193
    %v4290 = vunpack.c.l.b16 %v4194
    %v4291 = vunpack.c.l.b16 %v4195
    %v4292 = vunpack.c.l.b16 %v4196
    %v4293 = vunpack.c.l.b16 %v4197
    %v4294 = vunpack.c.l.b16 %v4198
    %v4295 = vunpack.c.l.b16 %v4199
    %v4296 = vunpack.c.l.b16 %v4200
    %v4297 = vunpack.c.l.b16 %v4201
    %v4298 = vunpack.c.l.b16 %v4202
    %v4299 = vpack.c.b16 %v4252, %v4251
    %v4300 = vpack.c.b16 %v4254, %v4253
    %v4301 = vpack.c.b16 %v4256, %v4255
    %v4302 = vpack.c.b16 %v4258, %v4257
    %v4303 = vpack.c.b16 %v4260, %v4259
    %v4304 = vpack.c.b16 %v4262, %v4261
    %v4305 = vpack.c.b16 %v4264, %v4263
    %v4306 = vpack.c.b16 %v4266, %v4265
    %v4307 = vpack.c.b16 %v4268, %v4267
    %v4308 = vpack.c.b16 %v4270, %v4269
    %v4309 = vpack.c.b16 %v4272, %v4271
    %v4310 = vpack.c.b16 %v4274, %v4273
    %v4311 = vpack.c.b16 %v4276, %v4275
    %v4312 = vpack.c.b16 %v4278, %v4277
    %v4313 = vpack.c.b16 %v4280, %v4279
    %v4314 = vpack.c.b16 %v4282, %v4281
    %v4315 = vpack.c.b16 %v4284, %v4283
    %v4316 = vpack.c.b16 %v4286, %v4285
    %v4317 = vpack.c.b16 %v4288, %v4287
    %v4318 = vpack.c.b16 %v4290, %v4289
    %v4319 = vpack.c.b16 %v4292, %v4291
    %v4320 = vpack.c.b16 %v4294, %v4293
    %v4321 = vpack.c.b16 %v4296, %v4295
    %v4322 = vpack.c.b16 %v4298, %v4297
    %4347 = vmatprep.subr.bf16.mxu0 0
    %4348 = vmatpush1.bf16.msra.mxu0 %v4299
    %4349 = vmatprep.subr.bf16.mxu0 0
    %4350 = vmatpush1.bf16.msra.mxu0 %v4300
    %4351 = vmatprep.subr.bf16.mxu0 0
    %4352 = vmatpush1.bf16.msra.mxu0 %v4301
    %4353 = vmatprep.subr.bf16.mxu0 0
    %4354 = vmatpush1.bf16.msra.mxu0 %v4302
    %4355 = vmatprep.subr.bf16.mxu0 0
    %4356 = vmatpush1.bf16.msra.mxu0 %v4303
    %4357 = vmatprep.subr.bf16.mxu0 0
    %4358 = vmatpush1.bf16.msra.mxu0 %v4304
    %4359 = vmatprep.subr.bf16.mxu0 0
    %4360 = vmatpush1.bf16.msra.mxu0 %v4305
    %4361 = vmatprep.subr.bf16.mxu0 0
    %4362 = vmatpush1.bf16.msra.mxu0 %v4306
    %4363 = vmatprep.subr.bf16.mxu0 0
    %4364 = vmatpush1.bf16.msra.mxu0 %v4307
    %4365 = vmatprep.subr.bf16.mxu0 0
    %4366 = vmatpush1.bf16.msra.mxu0 %v4308
    %4367 = vmatprep.subr.bf16.mxu0 0
    %4368 = vmatpush1.bf16.msra.mxu0 %v4309
    %4369 = vmatprep.subr.bf16.mxu0 0
    %4370 = vmatpush1.bf16.msra.mxu0 %v4310
    %4371 = vmatprep.subr.bf16.mxu0 0
    %4372 = vmatpush1.bf16.msra.mxu0 %v4311
    %4373 = vmatprep.subr.bf16.mxu0 0
    %4374 = vmatpush1.bf16.msra.mxu0 %v4312
    %4375 = vmatprep.subr.bf16.mxu0 0
    %4376 = vmatpush1.bf16.msra.mxu0 %v4313
    %4377 = vmatprep.subr.bf16.mxu0 0
    %4378 = vmatpush1.bf16.msra.mxu0 %v4314
    %4379 = vmatprep.mubr.bf16.mxu0 %v4147
    %4380 = vmatmul.mubr.bf16.gmra.mrb[0].mxu0 %v4146
    %v4381 = vpop.f32.mrb[0].mxu0
    %v4382 = vadd.f32 0.0, %v4381
    %v4383 = vpop.f32.mrb[0].mxu0
    %v4384 = vpop.f32.mrb[0].mxu0
    %v4385 = vadd.f32 0.0, %v4384
    %v4386 = vpop.f32.mrb[0].mxu0
    %4387 = vmatprep.mubr.bf16.mxu0 %v4150
    %4388 = vmatmul.mubr.bf16.gmra.mrb[0].mxu0 %v4149
    %v4389 = vpop.f32.mrb[0].mxu0
    %v4390 = vadd.f32 0.0, %v4389
    %v4391 = vpop.f32.mrb[0].mxu0
    %v4392 = vpop.f32.mrb[0].mxu0
    %v4393 = vadd.f32 0.0, %v4392
    %v4394 = vpop.f32.mrb[0].mxu0
    %4395 = vmatprep.mubr.bf16.mxu0 %v4153
    %4396 = vmatmul.mubr.bf16.gmra.mrb[0].mxu0 %v4152
    %v4397 = vpop.f32.mrb[0].mxu0
    %v4398 = vadd.f32 0.0, %v4397
    %v4399 = vpop.f32.mrb[0].mxu0
    %v4400 = vpop.f32.mrb[0].mxu0
    %v4401 = vadd.f32 0.0, %v4400
    %v4402 = vpop.f32.mrb[0].mxu0
    %4403 = vdwg.mxu0
    %4404 = vmatprep.subr.bf16.mxu0 0
    %4405 = vmatpush1.bf16.msra.mxu0 %v4315
    %4406 = vmatprep.subr.bf16.mxu0 0
    %4407 = vmatpush1.bf16.msra.mxu0 %v4316
    %4408 = vmatprep.subr.bf16.mxu0 0
    %4409 = vmatpush1.bf16.msra.mxu0 %v4317
    %4410 = vmatprep.subr.bf16.mxu0 0
    %4411 = vmatpush1.bf16.msra.mxu0 %v4318
    %4412 = vmatprep.subr.bf16.mxu0 0
    %4413 = vmatpush1.bf16.msra.mxu0 %v4319
    %4414 = vmatprep.subr.bf16.mxu0 0
    %4415 = vmatpush1.bf16.msra.mxu0 %v4320
    %4416 = vmatprep.subr.bf16.mxu0 0
    %4417 = vmatpush1.bf16.msra.mxu0 %v4321
    %4418 = vmatprep.subr.bf16.mxu0 0
    %4419 = vmatpush1.bf16.msra.mxu0 %v4322
    %4420 = vmatprep.subr.bf16.mxu0 0
    %4421 = vmatpush1.bf16.msra.mxu0 0
    %4422 = vmatprep.subr.bf16.mxu0 0
    %4423 = vmatpush1.bf16.msra.mxu0 0
    %4424 = vmatprep.subr.bf16.mxu0 0
    %4425 = vmatpush1.bf16.msra.mxu0 0
    %4426 = vmatprep.subr.bf16.mxu0 0
    %4427 = vmatpush1.bf16.msra.mxu0 0
    %4428 = vmatprep.subr.bf16.mxu0 0
    %4429 = vmatpush1.bf16.msra.mxu0 0
    %4430 = vmatprep.subr.bf16.mxu0 0
    %4431 = vmatpush1.bf16.msra.mxu0 0
    %4432 = vmatprep.subr.bf16.mxu0 0
    %4433 = vmatpush1.bf16.msra.mxu0 0
    %4434 = vmatprep.subr.bf16.mxu0 0
    %4435 = vmatpush1.bf16.msra.mxu0 0
    %4436 = vmatprep.mubr.bf16.mxu0 0
    %4437 = vmatmul.mubr.bf16.gmra.mrb[0].mxu0 %v4148
    %v4438 = vpop.f32.mrb[0].mxu0
    %v4439 = vadd.f32 %v4382, %v4438
    %v4440 = vpop.f32.mrb[0].mxu0
    %v4441 = vpop.f32.mrb[0].mxu0
    %v4442 = vadd.f32 %v4385, %v4441
    %v4443 = vpop.f32.mrb[0].mxu0
    %4444 = vmatprep.mubr.bf16.mxu0 0
    %4445 = vmatmul.mubr.bf16.gmra.mrb[0].mxu0 %v4151
    %v4446 = vpop.f32.mrb[0].mxu0
    %v4447 = vadd.f32 %v4390, %v4446
    %v4448 = vpop.f32.mrb[0].mxu0
    %v4449 = vpop.f32.mrb[0].mxu0
    %v4450 = vadd.f32 %v4393, %v4449
    %v4451 = vpop.f32.mrb[0].mxu0
    %4452 = vmatprep.mubr.bf16.mxu0 0
    %4453 = vmatmul.mubr.bf16.gmra.mrb[0].mxu0 %v4154
    %v4454 = vpop.f32.mrb[0].mxu0
    %v4455 = vadd.f32 %v4398, %v4454
    %v4456 = vpop.f32.mrb[0].mxu0
    %v4457 = vpop.f32.mrb[0].mxu0
    %v4458 = vadd.f32 %v4401, %v4457
    %v4459 = vpop.f32.mrb[0].mxu0
    %4460 = vdwg.mxu0
    %v4461 = vadd.f32 %v4439, %v4447
    %v4462 = vadd.f32 %v4442, %v4450
    %v4463 = vadd.f32 %v4461, %v4455
    %v4464 = vadd.f32 %v4462, %v4458
    %v4465 = vmul.f32 %v4463, 0.0021978023
    %v4466 = vmul.f32 %v4464, 0.0021978023
    %4467 = vst [vmem:[#allocation3 + $0x58] sm:$0xff] %v4465
    %4468 = vst [vmem:[#allocation3 + $0x158] sm:$0xff] %v4466
    %v4469 = vld [vmem:[#allocation2 + $0x60] sm:$0xff]
    %v4470 = vld [vmem:[#allocation2 + $0x68] sm:$0xff]
    %v4471 = vld [vmem:[#allocation2 + $0x70] sm:$0xff]
    %v4472 = vld [vmem:[#allocation2 + $0x170] sm:$0xff]
    %v4473 = vld [vmem:[#allocation2 + $0x178] sm:$0xff]
    %v4474 = vld [vmem:[#allocation2 + $0x180] sm:$0xff]
    %v4475 = vld [vmem:[#allocation2 + $0x280] sm:$0xff]
    %v4476 = vld [vmem:[#allocation2 + $0x288] sm:$0xff]
    %v4477 = vld [vmem:[#allocation2 + $0x290] sm:$0xff]
    %v4478 = vld [vmem:[%s924] sm:$0xf]
    %v4479 = vld [vmem:[%s924 + $0x4] sm:$0xf]
    %v4480 = vld [vmem:[%s924 + $0x8] sm:$0xf]
    %v4481 = vld [vmem:[%s924 + $0xc] sm:$0xf]
    %v4482 = vld [vmem:[%s924 + $0x10] sm:$0xf]
    %v4483 = vld [vmem:[%s924 + $0x14] sm:$0xf]
    %v4484 = vld [vmem:[%s924 + $0x18] sm:$0xf]
    %v4485 = vld [vmem:[%s924 + $0x1c] sm:$0xf]
    %v4486 = vld [vmem:[%s924 + $0x20] sm:$0xf]
    %v4487 = vld [vmem:[%s924 + $0x24] sm:$0xf]
    %v4488 = vld [vmem:[%s924 + $0x28] sm:$0xf]
    %v4489 = vld [vmem:[%s924 + $0x2c] sm:$0xf]
    %v4490 = vld [vmem:[%s924 + $0x30] sm:$0xf]
    %v4491 = vld [vmem:[%s924 + $0x34] sm:$0xf]
    %v4492 = vld [vmem:[%s924 + $0x38] sm:$0xf]
    %v4493 = vld [vmem:[%s924 + $0x3c] sm:$0xf]
    %v4494 = vld [vmem:[%s924 + $0x40] sm:$0xf]
    %v4495 = vld [vmem:[%s924 + $0x44] sm:$0xf]
    %v4496 = vld [vmem:[%s924 + $0x48] sm:$0xf]
    %v4497 = vld [vmem:[%s924 + $0x4c] sm:$0xf]
    %v4498 = vld [vmem:[%s924 + $0x50] sm:$0xf]
    %v4499 = vld [vmem:[%s924 + $0x54] sm:$0xf]
    %v4500 = vld [vmem:[%s924 + $0x58] sm:$0xf]
    %v4501 = vld [vmem:[%s924 + $0x5c] sm:$0xf]
    %v4502 = vld [vmem:[%s924 + $0x60] sm:$0xf]
    %v4503 = vld [vmem:[%s924 + $0x64] sm:$0xf]
    %v4504 = vld [vmem:[%s924 + $0x68] sm:$0xf]
    %v4505 = vld [vmem:[%s924 + $0x6c] sm:$0xf]
    %v4506 = vld [vmem:[%s924 + $0x70] sm:$0xf]
    %v4507 = vld [vmem:[%s924 + $0x74] sm:$0xf]
    %v4508 = vld [vmem:[%s924 + $0x78] sm:$0xf]
    %v4509 = vld [vmem:[%s924 + $0x7c] sm:$0xf]
    %v4510 = vld [vmem:[%s924 + $0x80] sm:$0xf]
    %v4511 = vld [vmem:[%s924 + $0x84] sm:$0xf]
    %v4512 = vld [vmem:[%s924 + $0x88] sm:$0xf]
    %v4513 = vld [vmem:[%s924 + $0x8c] sm:$0xf]
    %v4514 = vld [vmem:[%s924 + $0x90] sm:$0xf]
    %v4515 = vld [vmem:[%s924 + $0x94] sm:$0xf]
    %v4516 = vld [vmem:[%s924 + $0x98] sm:$0xf]
    %v4517 = vld [vmem:[%s924 + $0x9c] sm:$0xf]
    %v4518 = vld [vmem:[%s924 + $0xa0] sm:$0xf]
    %v4519 = vld [vmem:[%s924 + $0xa4] sm:$0xf]
    %v4520 = vld [vmem:[%s924 + $0xa8] sm:$0xf]
    %v4521 = vld [vmem:[%s924 + $0xac] sm:$0xf]
    %v4522 = vld [vmem:[%s924 + $0xb0] sm:$0xf]
    %v4523 = vld [vmem:[%s924 + $0xb4] sm:$0xf]
    %v4524 = vld [vmem:[%s924 + $0xb8] sm:$0xf]
    %v4525 = vld [vmem:[%s924 + $0xbc] sm:$0xf]
    %v4574 = vunpack.c.l.b16 %v4478
    %v4575 = vunpack.c.l.b16 %v4479
    %v4576 = vunpack.c.l.b16 %v4480
    %v4577 = vunpack.c.l.b16 %v4481
    %v4578 = vunpack.c.l.b16 %v4482
    %v4579 = vunpack.c.l.b16 %v4483
    %v4580 = vunpack.c.l.b16 %v4484
    %v4581 = vunpack.c.l.b16 %v4485
    %v4582 = vunpack.c.l.b16 %v4486
    %v4583 = vunpack.c.l.b16 %v4487
    %v4584 = vunpack.c.l.b16 %v4488
    %v4585 = vunpack.c.l.b16 %v4489
    %v4586 = vunpack.c.l.b16 %v4490
    %v4587 = vunpack.c.l.b16 %v4491
    %v4588 = vunpack.c.l.b16 %v4492
    %v4589 = vunpack.c.l.b16 %v4493
    %v4590 = vunpack.c.l.b16 %v4494
    %v4591 = vunpack.c.l.b16 %v4495
    %v4592 = vunpack.c.l.b16 %v4496
    %v4593 = vunpack.c.l.b16 %v4497
    %v4594 = vunpack.c.l.b16 %v4498
    %v4595 = vunpack.c.l.b16 %v4499
    %v4596 = vunpack.c.l.b16 %v4500
    %v4597 = vunpack.c.l.b16 %v4501
    %v4598 = vunpack.c.l.b16 %v4502
    %v4599 = vunpack.c.l.b16 %v4503
    %v4600 = vunpack.c.l.b16 %v4504
    %v4601 = vunpack.c.l.b16 %v4505
    %v4602 = vunpack.c.l.b16 %v4506
    %v4603 = vunpack.c.l.b16 %v4507
    %v4604 = vunpack.c.l.b16 %v4508
    %v4605 = vunpack.c.l.b16 %v4509
    %v4606 = vunpack.c.l.b16 %v4510
    %v4607 = vunpack.c.l.b16 %v4511
    %v4608 = vunpack.c.l.b16 %v4512
    %v4609 = vunpack.c.l.b16 %v4513
    %v4610 = vunpack.c.l.b16 %v4514
    %v4611 = vunpack.c.l.b16 %v4515
    %v4612 = vunpack.c.l.b16 %v4516
    %v4613 = vunpack.c.l.b16 %v4517
    %v4614 = vunpack.c.l.b16 %v4518
    %v4615 = vunpack.c.l.b16 %v4519
    %v4616 = vunpack.c.l.b16 %v4520
    %v4617 = vunpack.c.l.b16 %v4521
    %v4618 = vunpack.c.l.b16 %v4522
    %v4619 = vunpack.c.l.b16 %v4523
    %v4620 = vunpack.c.l.b16 %v4524
    %v4621 = vunpack.c.l.b16 %v4525
    %v4622 = vpack.c.b16 %v4575, %v4574
    %v4623 = vpack.c.b16 %v4577, %v4576
    %v4624 = vpack.c.b16 %v4579, %v4578
    %v4625 = vpack.c.b16 %v4581, %v4580
    %v4626 = vpack.c.b16 %v4583, %v4582
    %v4627 = vpack.c.b16 %v4585, %v4584
    %v4628 = vpack.c.b16 %v4587, %v4586
    %v4629 = vpack.c.b16 %v4589, %v4588
    %v4630 = vpack.c.b16 %v4591, %v4590
    %v4631 = vpack.c.b16 %v4593, %v4592
    %v4632 = vpack.c.b16 %v4595, %v4594
    %v4633 = vpack.c.b16 %v4597, %v4596
    %v4634 = vpack.c.b16 %v4599, %v4598
    %v4635 = vpack.c.b16 %v4601, %v4600
    %v4636 = vpack.c.b16 %v4603, %v4602
    %v4637 = vpack.c.b16 %v4605, %v4604
    %v4638 = vpack.c.b16 %v4607, %v4606
    %v4639 = vpack.c.b16 %v4609, %v4608
    %v4640 = vpack.c.b16 %v4611, %v4610
    %v4641 = vpack.c.b16 %v4613, %v4612
    %v4642 = vpack.c.b16 %v4615, %v4614
    %v4643 = vpack.c.b16 %v4617, %v4616
    %v4644 = vpack.c.b16 %v4619, %v4618
    %v4645 = vpack.c.b16 %v4621, %v4620
    %4670 = vmatprep.subr.bf16.mxu0 0
    %4671 = vmatpush1.bf16.msra.mxu0 %v4622
    %4672 = vmatprep.subr.bf16.mxu0 0
    %4673 = vmatpush1.bf16.msra.mxu0 %v4623
    %4674 = vmatprep.subr.bf16.mxu0 0
    %4675 = vmatpush1.bf16.msra.mxu0 %v4624
    %4676 = vmatprep.subr.bf16.mxu0 0
    %4677 = vmatpush1.bf16.msra.mxu0 %v4625
    %4678 = vmatprep.subr.bf16.mxu0 0
    %4679 = vmatpush1.bf16.msra.mxu0 %v4626
    %4680 = vmatprep.subr.bf16.mxu0 0
    %4681 = vmatpush1.bf16.msra.mxu0 %v4627
    %4682 = vmatprep.subr.bf16.mxu0 0
    %4683 = vmatpush1.bf16.msra.mxu0 %v4628
    %4684 = vmatprep.subr.bf16.mxu0 0
    %4685 = vmatpush1.bf16.msra.mxu0 %v4629
    %4686 = vmatprep.subr.bf16.mxu0 0
    %4687 = vmatpush1.bf16.msra.mxu0 %v4630
    %4688 = vmatprep.subr.bf16.mxu0 0
    %4689 = vmatpush1.bf16.msra.mxu0 %v4631
    %4690 = vmatprep.subr.bf16.mxu0 0
    %4691 = vmatpush1.bf16.msra.mxu0 %v4632
    %4692 = vmatprep.subr.bf16.mxu0 0
    %4693 = vmatpush1.bf16.msra.mxu0 %v4633
    %4694 = vmatprep.subr.bf16.mxu0 0
    %4695 = vmatpush1.bf16.msra.mxu0 %v4634
    %4696 = vmatprep.subr.bf16.mxu0 0
    %4697 = vmatpush1.bf16.msra.mxu0 %v4635
    %4698 = vmatprep.subr.bf16.mxu0 0
    %4699 = vmatpush1.bf16.msra.mxu0 %v4636
    %4700 = vmatprep.subr.bf16.mxu0 0
    %4701 = vmatpush1.bf16.msra.mxu0 %v4637
    %4702 = vmatprep.mubr.bf16.mxu0 %v4470
    %4703 = vmatmul.mubr.bf16.gmra.mrb[0].mxu0 %v4469
    %v4704 = vpop.f32.mrb[0].mxu0
    %v4705 = vadd.f32 0.0, %v4704
    %v4706 = vpop.f32.mrb[0].mxu0
    %v4707 = vpop.f32.mrb[0].mxu0
    %v4708 = vadd.f32 0.0, %v4707
    %v4709 = vpop.f32.mrb[0].mxu0
    %4710 = vmatprep.mubr.bf16.mxu0 %v4473
    %4711 = vmatmul.mubr.bf16.gmra.mrb[0].mxu0 %v4472
    %v4712 = vpop.f32.mrb[0].mxu0
    %v4713 = vadd.f32 0.0, %v4712
    %v4714 = vpop.f32.mrb[0].mxu0
    %v4715 = vpop.f32.mrb[0].mxu0
    %v4716 = vadd.f32 0.0, %v4715
    %v4717 = vpop.f32.mrb[0].mxu0
    %4718 = vmatprep.mubr.bf16.mxu0 %v4476
    %4719 = vmatmul.mubr.bf16.gmra.mrb[0].mxu0 %v4475
    %v4720 = vpop.f32.mrb[0].mxu0
    %v4721 = vadd.f32 0.0, %v4720
    %v4722 = vpop.f32.mrb[0].mxu0
    %v4723 = vpop.f32.mrb[0].mxu0
    %v4724 = vadd.f32 0.0, %v4723
    %v4725 = vpop.f32.mrb[0].mxu0
    %4726 = vdwg.mxu0
    %4727 = vmatprep.subr.bf16.mxu0 0
    %4728 = vmatpush1.bf16.msra.mxu0 %v4638
    %4729 = vmatprep.subr.bf16.mxu0 0
    %4730 = vmatpush1.bf16.msra.mxu0 %v4639
    %4731 = vmatprep.subr.bf16.mxu0 0
    %4732 = vmatpush1.bf16.msra.mxu0 %v4640
    %4733 = vmatprep.subr.bf16.mxu0 0
    %4734 = vmatpush1.bf16.msra.mxu0 %v4641
    %4735 = vmatprep.subr.bf16.mxu0 0
    %4736 = vmatpush1.bf16.msra.mxu0 %v4642
    %4737 = vmatprep.subr.bf16.mxu0 0
    %4738 = vmatpush1.bf16.msra.mxu0 %v4643
    %4739 = vmatprep.subr.bf16.mxu0 0
    %4740 = vmatpush1.bf16.msra.mxu0 %v4644
    %4741 = vmatprep.subr.bf16.mxu0 0
    %4742 = vmatpush1.bf16.msra.mxu0 %v4645
    %4743 = vmatprep.subr.bf16.mxu0 0
    %4744 = vmatpush1.bf16.msra.mxu0 0
    %4745 = vmatprep.subr.bf16.mxu0 0
    %4746 = vmatpush1.bf16.msra.mxu0 0
    %4747 = vmatprep.subr.bf16.mxu0 0
    %4748 = vmatpush1.bf16.msra.mxu0 0
    %4749 = vmatprep.subr.bf16.mxu0 0
    %4750 = vmatpush1.bf16.msra.mxu0 0
    %4751 = vmatprep.subr.bf16.mxu0 0
    %4752 = vmatpush1.bf16.msra.mxu0 0
    %4753 = vmatprep.subr.bf16.mxu0 0
    %4754 = vmatpush1.bf16.msra.mxu0 0
    %4755 = vmatprep.subr.bf16.mxu0 0
    %4756 = vmatpush1.bf16.msra.mxu0 0
    %4757 = vmatprep.subr.bf16.mxu0 0
    %4758 = vmatpush1.bf16.msra.mxu0 0
    %4759 = vmatprep.mubr.bf16.mxu0 0
    %4760 = vmatmul.mubr.bf16.gmra.mrb[0].mxu0 %v4471
    %v4761 = vpop.f32.mrb[0].mxu0
    %v4762 = vadd.f32 %v4705, %v4761
    %v4763 = vpop.f32.mrb[0].mxu0
    %v4764 = vpop.f32.mrb[0].mxu0
    %v4765 = vadd.f32 %v4708, %v4764
    %v4766 = vpop.f32.mrb[0].mxu0
    %4767 = vmatprep.mubr.bf16.mxu0 0
    %4768 = vmatmul.mubr.bf16.gmra.mrb[0].mxu0 %v4474
    %v4769 = vpop.f32.mrb[0].mxu0
    %v4770 = vadd.f32 %v4713, %v4769
    %v4771 = vpop.f32.mrb[0].mxu0
    %v4772 = vpop.f32.mrb[0].mxu0
    %v4773 = vadd.f32 %v4716, %v4772
    %v4774 = vpop.f32.mrb[0].mxu0
    %4775 = vmatprep.mubr.bf16.mxu0 0
    %4776 = vmatmul.mubr.bf16.gmra.mrb[0].mxu0 %v4477
    %v4777 = vpop.f32.mrb[0].mxu0
    %v4778 = vadd.f32 %v4721, %v4777
    %v4779 = vpop.f32.mrb[0].mxu0
    %v4780 = vpop.f32.mrb[0].mxu0
    %v4781 = vadd.f32 %v4724, %v4780
    %v4782 = vpop.f32.mrb[0].mxu0
    %4783 = vdwg.mxu0
    %v4784 = vadd.f32 %v4762, %v4770
    %v4785 = vadd.f32 %v4765, %v4773
    %v4786 = vadd.f32 %v4784, %v4778
    %v4787 = vadd.f32 %v4785, %v4781
    %v4788 = vmul.f32 %v4786, 0.0021978023
    %v4789 = vmul.f32 %v4787, 0.0021978023
    %4790 = vst [vmem:[#allocation3 + $0x60] sm:$0xff] %v4788
    %4791 = vst [vmem:[#allocation3 + $0x160] sm:$0xff] %v4789
    %v4792 = vld [vmem:[#allocation2 + $0x68] sm:$0xff]
    %v4793 = vld [vmem:[#allocation2 + $0x70] sm:$0xff]
    %v4794 = vld [vmem:[#allocation2 + $0x78] sm:$0xff]
    %v4795 = vld [vmem:[#allocation2 + $0x178] sm:$0xff]
    %v4796 = vld [vmem:[#allocation2 + $0x180] sm:$0xff]
    %v4797 = vld [vmem:[#allocation2 + $0x188] sm:$0xff]
    %v4798 = vld [vmem:[#allocation2 + $0x288] sm:$0xff]
    %v4799 = vld [vmem:[#allocation2 + $0x290] sm:$0xff]
    %v4800 = vld [vmem:[#allocation2 + $0x298] sm:$0xff]
    %v4801 = vld [vmem:[%s924] sm:$0xf]
    %v4802 = vld [vmem:[%s924 + $0x4] sm:$0xf]
    %v4803 = vld [vmem:[%s924 + $0x8] sm:$0xf]
    %v4804 = vld [vmem:[%s924 + $0xc] sm:$0xf]
    %v4805 = vld [vmem:[%s924 + $0x10] sm:$0xf]
    %v4806 = vld [vmem:[%s924 + $0x14] sm:$0xf]
    %v4807 = vld [vmem:[%s924 + $0x18] sm:$0xf]
    %v4808 = vld [vmem:[%s924 + $0x1c] sm:$0xf]
    %v4809 = vld [vmem:[%s924 + $0x20] sm:$0xf]
    %v4810 = vld [vmem:[%s924 + $0x24] sm:$0xf]
    %v4811 = vld [vmem:[%s924 + $0x28] sm:$0xf]
    %v4812 = vld [vmem:[%s924 + $0x2c] sm:$0xf]
    %v4813 = vld [vmem:[%s924 + $0x30] sm:$0xf]
    %v4814 = vld [vmem:[%s924 + $0x34] sm:$0xf]
    %v4815 = vld [vmem:[%s924 + $0x38] sm:$0xf]
    %v4816 = vld [vmem:[%s924 + $0x3c] sm:$0xf]
    %v4817 = vld [vmem:[%s924 + $0x40] sm:$0xf]
    %v4818 = vld [vmem:[%s924 + $0x44] sm:$0xf]
    %v4819 = vld [vmem:[%s924 + $0x48] sm:$0xf]
    %v4820 = vld [vmem:[%s924 + $0x4c] sm:$0xf]
    %v4821 = vld [vmem:[%s924 + $0x50] sm:$0xf]
    %v4822 = vld [vmem:[%s924 + $0x54] sm:$0xf]
    %v4823 = vld [vmem:[%s924 + $0x58] sm:$0xf]
    %v4824 = vld [vmem:[%s924 + $0x5c] sm:$0xf]
    %v4825 = vld [vmem:[%s924 + $0x60] sm:$0xf]
    %v4826 = vld [vmem:[%s924 + $0x64] sm:$0xf]
    %v4827 = vld [vmem:[%s924 + $0x68] sm:$0xf]
    %v4828 = vld [vmem:[%s924 + $0x6c] sm:$0xf]
    %v4829 = vld [vmem:[%s924 + $0x70] sm:$0xf]
    %v4830 = vld [vmem:[%s924 + $0x74] sm:$0xf]
    %v4831 = vld [vmem:[%s924 + $0x78] sm:$0xf]
    %v4832 = vld [vmem:[%s924 + $0x7c] sm:$0xf]
    %v4833 = vld [vmem:[%s924 + $0x80] sm:$0xf]
    %v4834 = vld [vmem:[%s924 + $0x84] sm:$0xf]
    %v4835 = vld [vmem:[%s924 + $0x88] sm:$0xf]
    %v4836 = vld [vmem:[%s924 + $0x8c] sm:$0xf]
    %v4837 = vld [vmem:[%s924 + $0x90] sm:$0xf]
    %v4838 = vld [vmem:[%s924 + $0x94] sm:$0xf]
    %v4839 = vld [vmem:[%s924 + $0x98] sm:$0xf]
    %v4840 = vld [vmem:[%s924 + $0x9c] sm:$0xf]
    %v4841 = vld [vmem:[%s924 + $0xa0] sm:$0xf]
    %v4842 = vld [vmem:[%s924 + $0xa4] sm:$0xf]
    %v4843 = vld [vmem:[%s924 + $0xa8] sm:$0xf]
    %v4844 = vld [vmem:[%s924 + $0xac] sm:$0xf]
    %v4845 = vld [vmem:[%s924 + $0xb0] sm:$0xf]
    %v4846 = vld [vmem:[%s924 + $0xb4] sm:$0xf]
    %v4847 = vld [vmem:[%s924 + $0xb8] sm:$0xf]
    %v4848 = vld [vmem:[%s924 + $0xbc] sm:$0xf]
    %v4897 = vunpack.c.l.b16 %v4801
    %v4898 = vunpack.c.l.b16 %v4802
    %v4899 = vunpack.c.l.b16 %v4803
    %v4900 = vunpack.c.l.b16 %v4804
    %v4901 = vunpack.c.l.b16 %v4805
    %v4902 = vunpack.c.l.b16 %v4806
    %v4903 = vunpack.c.l.b16 %v4807
    %v4904 = vunpack.c.l.b16 %v4808
    %v4905 = vunpack.c.l.b16 %v4809
    %v4906 = vunpack.c.l.b16 %v4810
    %v4907 = vunpack.c.l.b16 %v4811
    %v4908 = vunpack.c.l.b16 %v4812
    %v4909 = vunpack.c.l.b16 %v4813
    %v4910 = vunpack.c.l.b16 %v4814
    %v4911 = vunpack.c.l.b16 %v4815
    %v4912 = vunpack.c.l.b16 %v4816
    %v4913 = vunpack.c.l.b16 %v4817
    %v4914 = vunpack.c.l.b16 %v4818
    %v4915 = vunpack.c.l.b16 %v4819
    %v4916 = vunpack.c.l.b16 %v4820
    %v4917 = vunpack.c.l.b16 %v4821
    %v4918 = vunpack.c.l.b16 %v4822
    %v4919 = vunpack.c.l.b16 %v4823
    %v4920 = vunpack.c.l.b16 %v4824
    %v4921 = vunpack.c.l.b16 %v4825
    %v4922 = vunpack.c.l.b16 %v4826
    %v4923 = vunpack.c.l.b16 %v4827
    %v4924 = vunpack.c.l.b16 %v4828
    %v4925 = vunpack.c.l.b16 %v4829
    %v4926 = vunpack.c.l.b16 %v4830
    %v4927 = vunpack.c.l.b16 %v4831
    %v4928 = vunpack.c.l.b16 %v4832
    %v4929 = vunpack.c.l.b16 %v4833
    %v4930 = vunpack.c.l.b16 %v4834
    %v4931 = vunpack.c.l.b16 %v4835
    %v4932 = vunpack.c.l.b16 %v4836
    %v4933 = vunpack.c.l.b16 %v4837
    %v4934 = vunpack.c.l.b16 %v4838
    %v4935 = vunpack.c.l.b16 %v4839
    %v4936 = vunpack.c.l.b16 %v4840
    %v4937 = vunpack.c.l.b16 %v4841
    %v4938 = vunpack.c.l.b16 %v4842
    %v4939 = vunpack.c.l.b16 %v4843
    %v4940 = vunpack.c.l.b16 %v4844
    %v4941 = vunpack.c.l.b16 %v4845
    %v4942 = vunpack.c.l.b16 %v4846
    %v4943 = vunpack.c.l.b16 %v4847
    %v4944 = vunpack.c.l.b16 %v4848
    %v4945 = vpack.c.b16 %v4898, %v4897
    %v4946 = vpack.c.b16 %v4900, %v4899
    %v4947 = vpack.c.b16 %v4902, %v4901
    %v4948 = vpack.c.b16 %v4904, %v4903
    %v4949 = vpack.c.b16 %v4906, %v4905
    %v4950 = vpack.c.b16 %v4908, %v4907
    %v4951 = vpack.c.b16 %v4910, %v4909
    %v4952 = vpack.c.b16 %v4912, %v4911
    %v4953 = vpack.c.b16 %v4914, %v4913
    %v4954 = vpack.c.b16 %v4916, %v4915
    %v4955 = vpack.c.b16 %v4918, %v4917
    %v4956 = vpack.c.b16 %v4920, %v4919
    %v4957 = vpack.c.b16 %v4922, %v4921
    %v4958 = vpack.c.b16 %v4924, %v4923
    %v4959 = vpack.c.b16 %v4926, %v4925
    %v4960 = vpack.c.b16 %v4928, %v4927
    %v4961 = vpack.c.b16 %v4930, %v4929
    %v4962 = vpack.c.b16 %v4932, %v4931
    %v4963 = vpack.c.b16 %v4934, %v4933
    %v4964 = vpack.c.b16 %v4936, %v4935
    %v4965 = vpack.c.b16 %v4938, %v4937
    %v4966 = vpack.c.b16 %v4940, %v4939
    %v4967 = vpack.c.b16 %v4942, %v4941
    %v4968 = vpack.c.b16 %v4944, %v4943
    %4993 = vmatprep.subr.bf16.mxu0 0
    %4994 = vmatpush1.bf16.msra.mxu0 %v4945
    %4995 = vmatprep.subr.bf16.mxu0 0
    %4996 = vmatpush1.bf16.msra.mxu0 %v4946
    %4997 = vmatprep.subr.bf16.mxu0 0
    %4998 = vmatpush1.bf16.msra.mxu0 %v4947
    %4999 = vmatprep.subr.bf16.mxu0 0
    %5000 = vmatpush1.bf16.msra.mxu0 %v4948
    %5001 = vmatprep.subr.bf16.mxu0 0
    %5002 = vmatpush1.bf16.msra.mxu0 %v4949
    %5003 = vmatprep.subr.bf16.mxu0 0
    %5004 = vmatpush1.bf16.msra.mxu0 %v4950
    %5005 = vmatprep.subr.bf16.mxu0 0
    %5006 = vmatpush1.bf16.msra.mxu0 %v4951
    %5007 = vmatprep.subr.bf16.mxu0 0
    %5008 = vmatpush1.bf16.msra.mxu0 %v4952
    %5009 = vmatprep.subr.bf16.mxu0 0
    %5010 = vmatpush1.bf16.msra.mxu0 %v4953
    %5011 = vmatprep.subr.bf16.mxu0 0
    %5012 = vmatpush1.bf16.msra.mxu0 %v4954
    %5013 = vmatprep.subr.bf16.mxu0 0
    %5014 = vmatpush1.bf16.msra.mxu0 %v4955
    %5015 = vmatprep.subr.bf16.mxu0 0
    %5016 = vmatpush1.bf16.msra.mxu0 %v4956
    %5017 = vmatprep.subr.bf16.mxu0 0
    %5018 = vmatpush1.bf16.msra.mxu0 %v4957
    %5019 = vmatprep.subr.bf16.mxu0 0
    %5020 = vmatpush1.bf16.msra.mxu0 %v4958
    %5021 = vmatprep.subr.bf16.mxu0 0
    %5022 = vmatpush1.bf16.msra.mxu0 %v4959
    %5023 = vmatprep.subr.bf16.mxu0 0
    %5024 = vmatpush1.bf16.msra.mxu0 %v4960
    %5025 = vmatprep.mubr.bf16.mxu0 %v4793
    %5026 = vmatmul.mubr.bf16.gmra.mrb[0].mxu0 %v4792
    %v5027 = vpop.f32.mrb[0].mxu0
    %v5028 = vadd.f32 0.0, %v5027
    %v5029 = vpop.f32.mrb[0].mxu0
    %v5030 = vpop.f32.mrb[0].mxu0
    %v5031 = vadd.f32 0.0, %v5030
    %v5032 = vpop.f32.mrb[0].mxu0
    %5033 = vmatprep.mubr.bf16.mxu0 %v4796
    %5034 = vmatmul.mubr.bf16.gmra.mrb[0].mxu0 %v4795
    %v5035 = vpop.f32.mrb[0].mxu0
    %v5036 = vadd.f32 0.0, %v5035
    %v5037 = vpop.f32.mrb[0].mxu0
    %v5038 = vpop.f32.mrb[0].mxu0
    %v5039 = vadd.f32 0.0, %v5038
    %v5040 = vpop.f32.mrb[0].mxu0
    %5041 = vmatprep.mubr.bf16.mxu0 %v4799
    %5042 = vmatmul.mubr.bf16.gmra.mrb[0].mxu0 %v4798
    %v5043 = vpop.f32.mrb[0].mxu0
    %v5044 = vadd.f32 0.0, %v5043
    %v5045 = vpop.f32.mrb[0].mxu0
    %v5046 = vpop.f32.mrb[0].mxu0
    %v5047 = vadd.f32 0.0, %v5046
    %v5048 = vpop.f32.mrb[0].mxu0
    %5049 = vdwg.mxu0
    %5050 = vmatprep.subr.bf16.mxu0 0
    %5051 = vmatpush1.bf16.msra.mxu0 %v4961
    %5052 = vmatprep.subr.bf16.mxu0 0
    %5053 = vmatpush1.bf16.msra.mxu0 %v4962
    %5054 = vmatprep.subr.bf16.mxu0 0
    %5055 = vmatpush1.bf16.msra.mxu0 %v4963
    %5056 = vmatprep.subr.bf16.mxu0 0
    %5057 = vmatpush1.bf16.msra.mxu0 %v4964
    %5058 = vmatprep.subr.bf16.mxu0 0
    %5059 = vmatpush1.bf16.msra.mxu0 %v4965
    %5060 = vmatprep.subr.bf16.mxu0 0
    %5061 = vmatpush1.bf16.msra.mxu0 %v4966
    %5062 = vmatprep.subr.bf16.mxu0 0
    %5063 = vmatpush1.bf16.msra.mxu0 %v4967
    %5064 = vmatprep.subr.bf16.mxu0 0
    %5065 = vmatpush1.bf16.msra.mxu0 %v4968
    %5066 = vmatprep.subr.bf16.mxu0 0
    %5067 = vmatpush1.bf16.msra.mxu0 0
    %5068 = vmatprep.subr.bf16.mxu0 0
    %5069 = vmatpush1.bf16.msra.mxu0 0
    %5070 = vmatprep.subr.bf16.mxu0 0
    %5071 = vmatpush1.bf16.msra.mxu0 0
    %5072 = vmatprep.subr.bf16.mxu0 0
    %5073 = vmatpush1.bf16.msra.mxu0 0
    %5074 = vmatprep.subr.bf16.mxu0 0
    %5075 = vmatpush1.bf16.msra.mxu0 0
    %5076 = vmatprep.subr.bf16.mxu0 0
    %5077 = vmatpush1.bf16.msra.mxu0 0
    %5078 = vmatprep.subr.bf16.mxu0 0
    %5079 = vmatpush1.bf16.msra.mxu0 0
    %5080 = vmatprep.subr.bf16.mxu0 0
    %5081 = vmatpush1.bf16.msra.mxu0 0
    %5082 = vmatprep.mubr.bf16.mxu0 0
    %5083 = vmatmul.mubr.bf16.gmra.mrb[0].mxu0 %v4794
    %v5084 = vpop.f32.mrb[0].mxu0
    %v5085 = vadd.f32 %v5028, %v5084
    %v5086 = vpop.f32.mrb[0].mxu0
    %v5087 = vpop.f32.mrb[0].mxu0
    %v5088 = vadd.f32 %v5031, %v5087
    %v5089 = vpop.f32.mrb[0].mxu0
    %5090 = vmatprep.mubr.bf16.mxu0 0
    %5091 = vmatmul.mubr.bf16.gmra.mrb[0].mxu0 %v4797
    %v5092 = vpop.f32.mrb[0].mxu0
    %v5093 = vadd.f32 %v5036, %v5092
    %v5094 = vpop.f32.mrb[0].mxu0
    %v5095 = vpop.f32.mrb[0].mxu0
    %v5096 = vadd.f32 %v5039, %v5095
    %v5097 = vpop.f32.mrb[0].mxu0
    %5098 = vmatprep.mubr.bf16.mxu0 0
    %5099 = vmatmul.mubr.bf16.gmra.mrb[0].mxu0 %v4800
    %v5100 = vpop.f32.mrb[0].mxu0
    %v5101 = vadd.f32 %v5044, %v5100
    %v5102 = vpop.f32.mrb[0].mxu0
    %v5103 = vpop.f32.mrb[0].mxu0
    %v5104 = vadd.f32 %v5047, %v5103
    %v5105 = vpop.f32.mrb[0].mxu0
    %5106 = vdwg.mxu0
    %v5107 = vadd.f32 %v5085, %v5093
    %v5108 = vadd.f32 %v5088, %v5096
    %v5109 = vadd.f32 %v5107, %v5101
    %v5110 = vadd.f32 %v5108, %v5104
    %v5111 = vmul.f32 %v5109, 0.0021978023
    %v5112 = vmul.f32 %v5110, 0.0021978023
    %5113 = vst [vmem:[#allocation3 + $0x68] sm:$0xff] %v5111
    %5114 = vst [vmem:[#allocation3 + $0x168] sm:$0xff] %v5112
    %v5115 = vld [vmem:[#allocation2 + $0x70] sm:$0xff]
    %v5116 = vld [vmem:[#allocation2 + $0x78] sm:$0xff]
    %v5117 = vld [vmem:[#allocation2 + $0x80] sm:$0xff]
    %v5118 = vld [vmem:[#allocation2 + $0x180] sm:$0xff]
    %v5119 = vld [vmem:[#allocation2 + $0x188] sm:$0xff]
    %v5120 = vld [vmem:[#allocation2 + $0x190] sm:$0xff]
    %v5121 = vld [vmem:[#allocation2 + $0x290] sm:$0xff]
    %v5122 = vld [vmem:[#allocation2 + $0x298] sm:$0xff]
    %v5123 = vld [vmem:[#allocation2 + $0x2a0] sm:$0xff]
    %v5124 = vld [vmem:[%s924] sm:$0xf]
    %v5125 = vld [vmem:[%s924 + $0x4] sm:$0xf]
    %v5126 = vld [vmem:[%s924 + $0x8] sm:$0xf]
    %v5127 = vld [vmem:[%s924 + $0xc] sm:$0xf]
    %v5128 = vld [vmem:[%s924 + $0x10] sm:$0xf]
    %v5129 = vld [vmem:[%s924 + $0x14] sm:$0xf]
    %v5130 = vld [vmem:[%s924 + $0x18] sm:$0xf]
    %v5131 = vld [vmem:[%s924 + $0x1c] sm:$0xf]
    %v5132 = vld [vmem:[%s924 + $0x20] sm:$0xf]
    %v5133 = vld [vmem:[%s924 + $0x24] sm:$0xf]
    %v5134 = vld [vmem:[%s924 + $0x28] sm:$0xf]
    %v5135 = vld [vmem:[%s924 + $0x2c] sm:$0xf]
    %v5136 = vld [vmem:[%s924 + $0x30] sm:$0xf]
    %v5137 = vld [vmem:[%s924 + $0x34] sm:$0xf]
    %v5138 = vld [vmem:[%s924 + $0x38] sm:$0xf]
    %v5139 = vld [vmem:[%s924 + $0x3c] sm:$0xf]
    %v5140 = vld [vmem:[%s924 + $0x40] sm:$0xf]
    %v5141 = vld [vmem:[%s924 + $0x44] sm:$0xf]
    %v5142 = vld [vmem:[%s924 + $0x48] sm:$0xf]
    %v5143 = vld [vmem:[%s924 + $0x4c] sm:$0xf]
    %v5144 = vld [vmem:[%s924 + $0x50] sm:$0xf]
    %v5145 = vld [vmem:[%s924 + $0x54] sm:$0xf]
    %v5146 = vld [vmem:[%s924 + $0x58] sm:$0xf]
    %v5147 = vld [vmem:[%s924 + $0x5c] sm:$0xf]
    %v5148 = vld [vmem:[%s924 + $0x60] sm:$0xf]
    %v5149 = vld [vmem:[%s924 + $0x64] sm:$0xf]
    %v5150 = vld [vmem:[%s924 + $0x68] sm:$0xf]
    %v5151 = vld [vmem:[%s924 + $0x6c] sm:$0xf]
    %v5152 = vld [vmem:[%s924 + $0x70] sm:$0xf]
    %v5153 = vld [vmem:[%s924 + $0x74] sm:$0xf]
    %v5154 = vld [vmem:[%s924 + $0x78] sm:$0xf]
    %v5155 = vld [vmem:[%s924 + $0x7c] sm:$0xf]
    %v5156 = vld [vmem:[%s924 + $0x80] sm:$0xf]
    %v5157 = vld [vmem:[%s924 + $0x84] sm:$0xf]
    %v5158 = vld [vmem:[%s924 + $0x88] sm:$0xf]
    %v5159 = vld [vmem:[%s924 + $0x8c] sm:$0xf]
    %v5160 = vld [vmem:[%s924 + $0x90] sm:$0xf]
    %v5161 = vld [vmem:[%s924 + $0x94] sm:$0xf]
    %v5162 = vld [vmem:[%s924 + $0x98] sm:$0xf]
    %v5163 = vld [vmem:[%s924 + $0x9c] sm:$0xf]
    %v5164 = vld [vmem:[%s924 + $0xa0] sm:$0xf]
    %v5165 = vld [vmem:[%s924 + $0xa4] sm:$0xf]
    %v5166 = vld [vmem:[%s924 + $0xa8] sm:$0xf]
    %v5167 = vld [vmem:[%s924 + $0xac] sm:$0xf]
    %v5168 = vld [vmem:[%s924 + $0xb0] sm:$0xf]
    %v5169 = vld [vmem:[%s924 + $0xb4] sm:$0xf]
    %v5170 = vld [vmem:[%s924 + $0xb8] sm:$0xf]
    %v5171 = vld [vmem:[%s924 + $0xbc] sm:$0xf]
    %v5220 = vunpack.c.l.b16 %v5124
    %v5221 = vunpack.c.l.b16 %v5125
    %v5222 = vunpack.c.l.b16 %v5126
    %v5223 = vunpack.c.l.b16 %v5127
    %v5224 = vunpack.c.l.b16 %v5128
    %v5225 = vunpack.c.l.b16 %v5129
    %v5226 = vunpack.c.l.b16 %v5130
    %v5227 = vunpack.c.l.b16 %v5131
    %v5228 = vunpack.c.l.b16 %v5132
    %v5229 = vunpack.c.l.b16 %v5133
    %v5230 = vunpack.c.l.b16 %v5134
    %v5231 = vunpack.c.l.b16 %v5135
    %v5232 = vunpack.c.l.b16 %v5136
    %v5233 = vunpack.c.l.b16 %v5137
    %v5234 = vunpack.c.l.b16 %v5138
    %v5235 = vunpack.c.l.b16 %v5139
    %v5236 = vunpack.c.l.b16 %v5140
    %v5237 = vunpack.c.l.b16 %v5141
    %v5238 = vunpack.c.l.b16 %v5142
    %v5239 = vunpack.c.l.b16 %v5143
    %v5240 = vunpack.c.l.b16 %v5144
    %v5241 = vunpack.c.l.b16 %v5145
    %v5242 = vunpack.c.l.b16 %v5146
    %v5243 = vunpack.c.l.b16 %v5147
    %v5244 = vunpack.c.l.b16 %v5148
    %v5245 = vunpack.c.l.b16 %v5149
    %v5246 = vunpack.c.l.b16 %v5150
    %v5247 = vunpack.c.l.b16 %v5151
    %v5248 = vunpack.c.l.b16 %v5152
    %v5249 = vunpack.c.l.b16 %v5153
    %v5250 = vunpack.c.l.b16 %v5154
    %v5251 = vunpack.c.l.b16 %v5155
    %v5252 = vunpack.c.l.b16 %v5156
    %v5253 = vunpack.c.l.b16 %v5157
    %v5254 = vunpack.c.l.b16 %v5158
    %v5255 = vunpack.c.l.b16 %v5159
    %v5256 = vunpack.c.l.b16 %v5160
    %v5257 = vunpack.c.l.b16 %v5161
    %v5258 = vunpack.c.l.b16 %v5162
    %v5259 = vunpack.c.l.b16 %v5163
    %v5260 = vunpack.c.l.b16 %v5164
    %v5261 = vunpack.c.l.b16 %v5165
    %v5262 = vunpack.c.l.b16 %v5166
    %v5263 = vunpack.c.l.b16 %v5167
    %v5264 = vunpack.c.l.b16 %v5168
    %v5265 = vunpack.c.l.b16 %v5169
    %v5266 = vunpack.c.l.b16 %v5170
    %v5267 = vunpack.c.l.b16 %v5171
    %v5268 = vpack.c.b16 %v5221, %v5220
    %v5269 = vpack.c.b16 %v5223, %v5222
    %v5270 = vpack.c.b16 %v5225, %v5224
    %v5271 = vpack.c.b16 %v5227, %v5226
    %v5272 = vpack.c.b16 %v5229, %v5228
    %v5273 = vpack.c.b16 %v5231, %v5230
    %v5274 = vpack.c.b16 %v5233, %v5232
    %v5275 = vpack.c.b16 %v5235, %v5234
    %v5276 = vpack.c.b16 %v5237, %v5236
    %v5277 = vpack.c.b16 %v5239, %v5238
    %v5278 = vpack.c.b16 %v5241, %v5240
    %v5279 = vpack.c.b16 %v5243, %v5242
    %v5280 = vpack.c.b16 %v5245, %v5244
    %v5281 = vpack.c.b16 %v5247, %v5246
    %v5282 = vpack.c.b16 %v5249, %v5248
    %v5283 = vpack.c.b16 %v5251, %v5250
    %v5284 = vpack.c.b16 %v5253, %v5252
    %v5285 = vpack.c.b16 %v5255, %v5254
    %v5286 = vpack.c.b16 %v5257, %v5256
    %v5287 = vpack.c.b16 %v5259, %v5258
    %v5288 = vpack.c.b16 %v5261, %v5260
    %v5289 = vpack.c.b16 %v5263, %v5262
    %v5290 = vpack.c.b16 %v5265, %v5264
    %v5291 = vpack.c.b16 %v5267, %v5266
    %5316 = vmatprep.subr.bf16.mxu0 0
    %5317 = vmatpush1.bf16.msra.mxu0 %v5268
    %5318 = vmatprep.subr.bf16.mxu0 0
    %5319 = vmatpush1.bf16.msra.mxu0 %v5269
    %5320 = vmatprep.subr.bf16.mxu0 0
    %5321 = vmatpush1.bf16.msra.mxu0 %v5270
    %5322 = vmatprep.subr.bf16.mxu0 0
    %5323 = vmatpush1.bf16.msra.mxu0 %v5271
    %5324 = vmatprep.subr.bf16.mxu0 0
    %5325 = vmatpush1.bf16.msra.mxu0 %v5272
    %5326 = vmatprep.subr.bf16.mxu0 0
    %5327 = vmatpush1.bf16.msra.mxu0 %v5273
    %5328 = vmatprep.subr.bf16.mxu0 0
    %5329 = vmatpush1.bf16.msra.mxu0 %v5274
    %5330 = vmatprep.subr.bf16.mxu0 0
    %5331 = vmatpush1.bf16.msra.mxu0 %v5275
    %5332 = vmatprep.subr.bf16.mxu0 0
    %5333 = vmatpush1.bf16.msra.mxu0 %v5276
    %5334 = vmatprep.subr.bf16.mxu0 0
    %5335 = vmatpush1.bf16.msra.mxu0 %v5277
    %5336 = vmatprep.subr.bf16.mxu0 0
    %5337 = vmatpush1.bf16.msra.mxu0 %v5278
    %5338 = vmatprep.subr.bf16.mxu0 0
    %5339 = vmatpush1.bf16.msra.mxu0 %v5279
    %5340 = vmatprep.subr.bf16.mxu0 0
    %5341 = vmatpush1.bf16.msra.mxu0 %v5280
    %5342 = vmatprep.subr.bf16.mxu0 0
    %5343 = vmatpush1.bf16.msra.mxu0 %v5281
    %5344 = vmatprep.subr.bf16.mxu0 0
    %5345 = vmatpush1.bf16.msra.mxu0 %v5282
    %5346 = vmatprep.subr.bf16.mxu0 0
    %5347 = vmatpush1.bf16.msra.mxu0 %v5283
    %5348 = vmatprep.mubr.bf16.mxu0 %v5116
    %5349 = vmatmul.mubr.bf16.gmra.mrb[0].mxu0 %v5115
    %v5350 = vpop.f32.mrb[0].mxu0
    %v5351 = vadd.f32 0.0, %v5350
    %v5352 = vpop.f32.mrb[0].mxu0
    %v5353 = vpop.f32.mrb[0].mxu0
    %v5354 = vadd.f32 0.0, %v5353
    %v5355 = vpop.f32.mrb[0].mxu0
    %5356 = vmatprep.mubr.bf16.mxu0 %v5119
    %5357 = vmatmul.mubr.bf16.gmra.mrb[0].mxu0 %v5118
    %v5358 = vpop.f32.mrb[0].mxu0
    %v5359 = vadd.f32 0.0, %v5358
    %v5360 = vpop.f32.mrb[0].mxu0
    %v5361 = vpop.f32.mrb[0].mxu0
    %v5362 = vadd.f32 0.0, %v5361
    %v5363 = vpop.f32.mrb[0].mxu0
    %5364 = vmatprep.mubr.bf16.mxu0 %v5122
    %5365 = vmatmul.mubr.bf16.gmra.mrb[0].mxu0 %v5121
    %v5366 = vpop.f32.mrb[0].mxu0
    %v5367 = vadd.f32 0.0, %v5366
    %v5368 = vpop.f32.mrb[0].mxu0
    %v5369 = vpop.f32.mrb[0].mxu0
    %v5370 = vadd.f32 0.0, %v5369
    %v5371 = vpop.f32.mrb[0].mxu0
    %5372 = vdwg.mxu0
    %5373 = vmatprep.subr.bf16.mxu0 0
    %5374 = vmatpush1.bf16.msra.mxu0 %v5284
    %5375 = vmatprep.subr.bf16.mxu0 0
    %5376 = vmatpush1.bf16.msra.mxu0 %v5285
    %5377 = vmatprep.subr.bf16.mxu0 0
    %5378 = vmatpush1.bf16.msra.mxu0 %v5286
    %5379 = vmatprep.subr.bf16.mxu0 0
    %5380 = vmatpush1.bf16.msra.mxu0 %v5287
    %5381 = vmatprep.subr.bf16.mxu0 0
    %5382 = vmatpush1.bf16.msra.mxu0 %v5288
    %5383 = vmatprep.subr.bf16.mxu0 0
    %5384 = vmatpush1.bf16.msra.mxu0 %v5289
    %5385 = vmatprep.subr.bf16.mxu0 0
    %5386 = vmatpush1.bf16.msra.mxu0 %v5290
    %5387 = vmatprep.subr.bf16.mxu0 0
    %5388 = vmatpush1.bf16.msra.mxu0 %v5291
    %5389 = vmatprep.subr.bf16.mxu0 0
    %5390 = vmatpush1.bf16.msra.mxu0 0
    %5391 = vmatprep.subr.bf16.mxu0 0
    %5392 = vmatpush1.bf16.msra.mxu0 0
    %5393 = vmatprep.subr.bf16.mxu0 0
    %5394 = vmatpush1.bf16.msra.mxu0 0
    %5395 = vmatprep.subr.bf16.mxu0 0
    %5396 = vmatpush1.bf16.msra.mxu0 0
    %5397 = vmatprep.subr.bf16.mxu0 0
    %5398 = vmatpush1.bf16.msra.mxu0 0
    %5399 = vmatprep.subr.bf16.mxu0 0
    %5400 = vmatpush1.bf16.msra.mxu0 0
    %5401 = vmatprep.subr.bf16.mxu0 0
    %5402 = vmatpush1.bf16.msra.mxu0 0
    %5403 = vmatprep.subr.bf16.mxu0 0
    %5404 = vmatpush1.bf16.msra.mxu0 0
    %5405 = vmatprep.mubr.bf16.mxu0 0
    %5406 = vmatmul.mubr.bf16.gmra.mrb[0].mxu0 %v5117
    %v5407 = vpop.f32.mrb[0].mxu0
    %v5408 = vadd.f32 %v5351, %v5407
    %v5409 = vpop.f32.mrb[0].mxu0
    %v5410 = vpop.f32.mrb[0].mxu0
    %v5411 = vadd.f32 %v5354, %v5410
    %v5412 = vpop.f32.mrb[0].mxu0
    %5413 = vmatprep.mubr.bf16.mxu0 0
    %5414 = vmatmul.mubr.bf16.gmra.mrb[0].mxu0 %v5120
    %v5415 = vpop.f32.mrb[0].mxu0
    %v5416 = vadd.f32 %v5359, %v5415
    %v5417 = vpop.f32.mrb[0].mxu0
    %v5418 = vpop.f32.mrb[0].mxu0
    %v5419 = vadd.f32 %v5362, %v5418
    %v5420 = vpop.f32.mrb[0].mxu0
    %5421 = vmatprep.mubr.bf16.mxu0 0
    %5422 = vmatmul.mubr.bf16.gmra.mrb[0].mxu0 %v5123
    %v5423 = vpop.f32.mrb[0].mxu0
    %v5424 = vadd.f32 %v5367, %v5423
    %v5425 = vpop.f32.mrb[0].mxu0
    %v5426 = vpop.f32.mrb[0].mxu0
    %v5427 = vadd.f32 %v5370, %v5426
    %v5428 = vpop.f32.mrb[0].mxu0
    %5429 = vdwg.mxu0
    %v5430 = vadd.f32 %v5408, %v5416
    %v5431 = vadd.f32 %v5411, %v5419
    %v5432 = vadd.f32 %v5430, %v5424
    %v5433 = vadd.f32 %v5431, %v5427
    %v5434 = vmul.f32 %v5432, 0.0021978023
    %v5435 = vmul.f32 %v5433, 0.0021978023
    %5436 = vst [vmem:[#allocation3 + $0x70] sm:$0xff] %v5434
    %5437 = vst [vmem:[#allocation3 + $0x170] sm:$0xff] %v5435
    %v5438 = vld [vmem:[#allocation2 + $0x78] sm:$0xff]
    %v5439 = vld [vmem:[#allocation2 + $0x80] sm:$0xff]
    %v5440 = vld [vmem:[#allocation2 + $0x88] sm:$0xff]
    %v5441 = vld [vmem:[#allocation2 + $0x188] sm:$0xff]
    %v5442 = vld [vmem:[#allocation2 + $0x190] sm:$0xff]
    %v5443 = vld [vmem:[#allocation2 + $0x198] sm:$0xff]
    %v5444 = vld [vmem:[#allocation2 + $0x298] sm:$0xff]
    %v5445 = vld [vmem:[#allocation2 + $0x2a0] sm:$0xff]
    %v5446 = vld [vmem:[#allocation2 + $0x2a8] sm:$0xff]
    %v5447 = vld [vmem:[%s924] sm:$0xf]
    %v5448 = vld [vmem:[%s924 + $0x4] sm:$0xf]
    %v5449 = vld [vmem:[%s924 + $0x8] sm:$0xf]
    %v5450 = vld [vmem:[%s924 + $0xc] sm:$0xf]
    %v5451 = vld [vmem:[%s924 + $0x10] sm:$0xf]
    %v5452 = vld [vmem:[%s924 + $0x14] sm:$0xf]
    %v5453 = vld [vmem:[%s924 + $0x18] sm:$0xf]
    %v5454 = vld [vmem:[%s924 + $0x1c] sm:$0xf]
    %v5455 = vld [vmem:[%s924 + $0x20] sm:$0xf]
    %v5456 = vld [vmem:[%s924 + $0x24] sm:$0xf]
    %v5457 = vld [vmem:[%s924 + $0x28] sm:$0xf]
    %v5458 = vld [vmem:[%s924 + $0x2c] sm:$0xf]
    %v5459 = vld [vmem:[%s924 + $0x30] sm:$0xf]
    %v5460 = vld [vmem:[%s924 + $0x34] sm:$0xf]
    %v5461 = vld [vmem:[%s924 + $0x38] sm:$0xf]
    %v5462 = vld [vmem:[%s924 + $0x3c] sm:$0xf]
    %v5463 = vld [vmem:[%s924 + $0x40] sm:$0xf]
    %v5464 = vld [vmem:[%s924 + $0x44] sm:$0xf]
    %v5465 = vld [vmem:[%s924 + $0x48] sm:$0xf]
    %v5466 = vld [vmem:[%s924 + $0x4c] sm:$0xf]
    %v5467 = vld [vmem:[%s924 + $0x50] sm:$0xf]
    %v5468 = vld [vmem:[%s924 + $0x54] sm:$0xf]
    %v5469 = vld [vmem:[%s924 + $0x58] sm:$0xf]
    %v5470 = vld [vmem:[%s924 + $0x5c] sm:$0xf]
    %v5471 = vld [vmem:[%s924 + $0x60] sm:$0xf]
    %v5472 = vld [vmem:[%s924 + $0x64] sm:$0xf]
    %v5473 = vld [vmem:[%s924 + $0x68] sm:$0xf]
    %v5474 = vld [vmem:[%s924 + $0x6c] sm:$0xf]
    %v5475 = vld [vmem:[%s924 + $0x70] sm:$0xf]
    %v5476 = vld [vmem:[%s924 + $0x74] sm:$0xf]
    %v5477 = vld [vmem:[%s924 + $0x78] sm:$0xf]
    %v5478 = vld [vmem:[%s924 + $0x7c] sm:$0xf]
    %v5479 = vld [vmem:[%s924 + $0x80] sm:$0xf]
    %v5480 = vld [vmem:[%s924 + $0x84] sm:$0xf]
    %v5481 = vld [vmem:[%s924 + $0x88] sm:$0xf]
    %v5482 = vld [vmem:[%s924 + $0x8c] sm:$0xf]
    %v5483 = vld [vmem:[%s924 + $0x90] sm:$0xf]
    %v5484 = vld [vmem:[%s924 + $0x94] sm:$0xf]
    %v5485 = vld [vmem:[%s924 + $0x98] sm:$0xf]
    %v5486 = vld [vmem:[%s924 + $0x9c] sm:$0xf]
    %v5487 = vld [vmem:[%s924 + $0xa0] sm:$0xf]
    %v5488 = vld [vmem:[%s924 + $0xa4] sm:$0xf]
    %v5489 = vld [vmem:[%s924 + $0xa8] sm:$0xf]
    %v5490 = vld [vmem:[%s924 + $0xac] sm:$0xf]
    %v5491 = vld [vmem:[%s924 + $0xb0] sm:$0xf]
    %v5492 = vld [vmem:[%s924 + $0xb4] sm:$0xf]
    %v5493 = vld [vmem:[%s924 + $0xb8] sm:$0xf]
    %v5494 = vld [vmem:[%s924 + $0xbc] sm:$0xf]
    %v5543 = vunpack.c.l.b16 %v5447
    %v5544 = vunpack.c.l.b16 %v5448
    %v5545 = vunpack.c.l.b16 %v5449
    %v5546 = vunpack.c.l.b16 %v5450
    %v5547 = vunpack.c.l.b16 %v5451
    %v5548 = vunpack.c.l.b16 %v5452
    %v5549 = vunpack.c.l.b16 %v5453
    %v5550 = vunpack.c.l.b16 %v5454
    %v5551 = vunpack.c.l.b16 %v5455
    %v5552 = vunpack.c.l.b16 %v5456
    %v5553 = vunpack.c.l.b16 %v5457
    %v5554 = vunpack.c.l.b16 %v5458
    %v5555 = vunpack.c.l.b16 %v5459
    %v5556 = vunpack.c.l.b16 %v5460
    %v5557 = vunpack.c.l.b16 %v5461
    %v5558 = vunpack.c.l.b16 %v5462
    %v5559 = vunpack.c.l.b16 %v5463
    %v5560 = vunpack.c.l.b16 %v5464
    %v5561 = vunpack.c.l.b16 %v5465
    %v5562 = vunpack.c.l.b16 %v5466
    %v5563 = vunpack.c.l.b16 %v5467
    %v5564 = vunpack.c.l.b16 %v5468
    %v5565 = vunpack.c.l.b16 %v5469
    %v5566 = vunpack.c.l.b16 %v5470
    %v5567 = vunpack.c.l.b16 %v5471
    %v5568 = vunpack.c.l.b16 %v5472
    %v5569 = vunpack.c.l.b16 %v5473
    %v5570 = vunpack.c.l.b16 %v5474
    %v5571 = vunpack.c.l.b16 %v5475
    %v5572 = vunpack.c.l.b16 %v5476
    %v5573 = vunpack.c.l.b16 %v5477
    %v5574 = vunpack.c.l.b16 %v5478
    %v5575 = vunpack.c.l.b16 %v5479
    %v5576 = vunpack.c.l.b16 %v5480
    %v5577 = vunpack.c.l.b16 %v5481
    %v5578 = vunpack.c.l.b16 %v5482
    %v5579 = vunpack.c.l.b16 %v5483
    %v5580 = vunpack.c.l.b16 %v5484
    %v5581 = vunpack.c.l.b16 %v5485
    %v5582 = vunpack.c.l.b16 %v5486
    %v5583 = vunpack.c.l.b16 %v5487
    %v5584 = vunpack.c.l.b16 %v5488
    %v5585 = vunpack.c.l.b16 %v5489
    %v5586 = vunpack.c.l.b16 %v5490
    %v5587 = vunpack.c.l.b16 %v5491
    %v5588 = vunpack.c.l.b16 %v5492
    %v5589 = vunpack.c.l.b16 %v5493
    %v5590 = vunpack.c.l.b16 %v5494
    %v5591 = vpack.c.b16 %v5544, %v5543
    %v5592 = vpack.c.b16 %v5546, %v5545
    %v5593 = vpack.c.b16 %v5548, %v5547
    %v5594 = vpack.c.b16 %v5550, %v5549
    %v5595 = vpack.c.b16 %v5552, %v5551
    %v5596 = vpack.c.b16 %v5554, %v5553
    %v5597 = vpack.c.b16 %v5556, %v5555
    %v5598 = vpack.c.b16 %v5558, %v5557
    %v5599 = vpack.c.b16 %v5560, %v5559
    %v5600 = vpack.c.b16 %v5562, %v5561
    %v5601 = vpack.c.b16 %v5564, %v5563
    %v5602 = vpack.c.b16 %v5566, %v5565
    %v5603 = vpack.c.b16 %v5568, %v5567
    %v5604 = vpack.c.b16 %v5570, %v5569
    %v5605 = vpack.c.b16 %v5572, %v5571
    %v5606 = vpack.c.b16 %v5574, %v5573
    %v5607 = vpack.c.b16 %v5576, %v5575
    %v5608 = vpack.c.b16 %v5578, %v5577
    %v5609 = vpack.c.b16 %v5580, %v5579
    %v5610 = vpack.c.b16 %v5582, %v5581
    %v5611 = vpack.c.b16 %v5584, %v5583
    %v5612 = vpack.c.b16 %v5586, %v5585
    %v5613 = vpack.c.b16 %v5588, %v5587
    %v5614 = vpack.c.b16 %v5590, %v5589
    %5639 = vmatprep.subr.bf16.mxu0 0
    %5640 = vmatpush1.bf16.msra.mxu0 %v5591
    %5641 = vmatprep.subr.bf16.mxu0 0
    %5642 = vmatpush1.bf16.msra.mxu0 %v5592
    %5643 = vmatprep.subr.bf16.mxu0 0
    %5644 = vmatpush1.bf16.msra.mxu0 %v5593
    %5645 = vmatprep.subr.bf16.mxu0 0
    %5646 = vmatpush1.bf16.msra.mxu0 %v5594
    %5647 = vmatprep.subr.bf16.mxu0 0
    %5648 = vmatpush1.bf16.msra.mxu0 %v5595
    %5649 = vmatprep.subr.bf16.mxu0 0
    %5650 = vmatpush1.bf16.msra.mxu0 %v5596
    %5651 = vmatprep.subr.bf16.mxu0 0
    %5652 = vmatpush1.bf16.msra.mxu0 %v5597
    %5653 = vmatprep.subr.bf16.mxu0 0
    %5654 = vmatpush1.bf16.msra.mxu0 %v5598
    %5655 = vmatprep.subr.bf16.mxu0 0
    %5656 = vmatpush1.bf16.msra.mxu0 %v5599
    %5657 = vmatprep.subr.bf16.mxu0 0
    %5658 = vmatpush1.bf16.msra.mxu0 %v5600
    %5659 = vmatprep.subr.bf16.mxu0 0
    %5660 = vmatpush1.bf16.msra.mxu0 %v5601
    %5661 = vmatprep.subr.bf16.mxu0 0
    %5662 = vmatpush1.bf16.msra.mxu0 %v5602
    %5663 = vmatprep.subr.bf16.mxu0 0
    %5664 = vmatpush1.bf16.msra.mxu0 %v5603
    %5665 = vmatprep.subr.bf16.mxu0 0
    %5666 = vmatpush1.bf16.msra.mxu0 %v5604
    %5667 = vmatprep.subr.bf16.mxu0 0
    %5668 = vmatpush1.bf16.msra.mxu0 %v5605
    %5669 = vmatprep.subr.bf16.mxu0 0
    %5670 = vmatpush1.bf16.msra.mxu0 %v5606
    %5671 = vmatprep.mubr.bf16.mxu0 %v5439
    %5672 = vmatmul.mubr.bf16.gmra.mrb[0].mxu0 %v5438
    %v5673 = vpop.f32.mrb[0].mxu0
    %v5674 = vadd.f32 0.0, %v5673
    %v5675 = vpop.f32.mrb[0].mxu0
    %v5676 = vpop.f32.mrb[0].mxu0
    %v5677 = vadd.f32 0.0, %v5676
    %v5678 = vpop.f32.mrb[0].mxu0
    %5679 = vmatprep.mubr.bf16.mxu0 %v5442
    %5680 = vmatmul.mubr.bf16.gmra.mrb[0].mxu0 %v5441
    %v5681 = vpop.f32.mrb[0].mxu0
    %v5682 = vadd.f32 0.0, %v5681
    %v5683 = vpop.f32.mrb[0].mxu0
    %v5684 = vpop.f32.mrb[0].mxu0
    %v5685 = vadd.f32 0.0, %v5684
    %v5686 = vpop.f32.mrb[0].mxu0
    %5687 = vmatprep.mubr.bf16.mxu0 %v5445
    %5688 = vmatmul.mubr.bf16.gmra.mrb[0].mxu0 %v5444
    %v5689 = vpop.f32.mrb[0].mxu0
    %v5690 = vadd.f32 0.0, %v5689
    %v5691 = vpop.f32.mrb[0].mxu0
    %v5692 = vpop.f32.mrb[0].mxu0
    %v5693 = vadd.f32 0.0, %v5692
    %v5694 = vpop.f32.mrb[0].mxu0
    %5695 = vdwg.mxu0
    %5696 = vmatprep.subr.bf16.mxu0 0
    %5697 = vmatpush1.bf16.msra.mxu0 %v5607
    %5698 = vmatprep.subr.bf16.mxu0 0
    %5699 = vmatpush1.bf16.msra.mxu0 %v5608
    %5700 = vmatprep.subr.bf16.mxu0 0
    %5701 = vmatpush1.bf16.msra.mxu0 %v5609
    %5702 = vmatprep.subr.bf16.mxu0 0
    %5703 = vmatpush1.bf16.msra.mxu0 %v5610
    %5704 = vmatprep.subr.bf16.mxu0 0
    %5705 = vmatpush1.bf16.msra.mxu0 %v5611
    %5706 = vmatprep.subr.bf16.mxu0 0
    %5707 = vmatpush1.bf16.msra.mxu0 %v5612
    %5708 = vmatprep.subr.bf16.mxu0 0
    %5709 = vmatpush1.bf16.msra.mxu0 %v5613
    %5710 = vmatprep.subr.bf16.mxu0 0
    %5711 = vmatpush1.bf16.msra.mxu0 %v5614
    %5712 = vmatprep.subr.bf16.mxu0 0
    %5713 = vmatpush1.bf16.msra.mxu0 0
    %5714 = vmatprep.subr.bf16.mxu0 0
    %5715 = vmatpush1.bf16.msra.mxu0 0
    %5716 = vmatprep.subr.bf16.mxu0 0
    %5717 = vmatpush1.bf16.msra.mxu0 0
    %5718 = vmatprep.subr.bf16.mxu0 0
    %5719 = vmatpush1.bf16.msra.mxu0 0
    %5720 = vmatprep.subr.bf16.mxu0 0
    %5721 = vmatpush1.bf16.msra.mxu0 0
    %5722 = vmatprep.subr.bf16.mxu0 0
    %5723 = vmatpush1.bf16.msra.mxu0 0
    %5724 = vmatprep.subr.bf16.mxu0 0
    %5725 = vmatpush1.bf16.msra.mxu0 0
    %5726 = vmatprep.subr.bf16.mxu0 0
    %5727 = vmatpush1.bf16.msra.mxu0 0
    %5728 = vmatprep.mubr.bf16.mxu0 0
    %5729 = vmatmul.mubr.bf16.gmra.mrb[0].mxu0 %v5440
    %v5730 = vpop.f32.mrb[0].mxu0
    %v5731 = vadd.f32 %v5674, %v5730
    %v5732 = vpop.f32.mrb[0].mxu0
    %v5733 = vpop.f32.mrb[0].mxu0
    %v5734 = vadd.f32 %v5677, %v5733
    %v5735 = vpop.f32.mrb[0].mxu0
    %5736 = vmatprep.mubr.bf16.mxu0 0
    %5737 = vmatmul.mubr.bf16.gmra.mrb[0].mxu0 %v5443
    %v5738 = vpop.f32.mrb[0].mxu0
    %v5739 = vadd.f32 %v5682, %v5738
    %v5740 = vpop.f32.mrb[0].mxu0
    %v5741 = vpop.f32.mrb[0].mxu0
    %v5742 = vadd.f32 %v5685, %v5741
    %v5743 = vpop.f32.mrb[0].mxu0
    %5744 = vmatprep.mubr.bf16.mxu0 0
    %5745 = vmatmul.mubr.bf16.gmra.mrb[0].mxu0 %v5446
    %v5746 = vpop.f32.mrb[0].mxu0
    %v5747 = vadd.f32 %v5690, %v5746
    %v5748 = vpop.f32.mrb[0].mxu0
    %v5749 = vpop.f32.mrb[0].mxu0
    %v5750 = vadd.f32 %v5693, %v5749
    %v5751 = vpop.f32.mrb[0].mxu0
    %5752 = vdwg.mxu0
    %v5753 = vadd.f32 %v5731, %v5739
    %v5754 = vadd.f32 %v5734, %v5742
    %v5755 = vadd.f32 %v5753, %v5747
    %v5756 = vadd.f32 %v5754, %v5750
    %v5757 = vmul.f32 %v5755, 0.0021978023
    %v5758 = vmul.f32 %v5756, 0.0021978023
    %5759 = vst [vmem:[#allocation3 + $0x78] sm:$0xff] %v5757
    %5760 = vst [vmem:[#allocation3 + $0x178] sm:$0xff] %v5758
    %v5761 = vld [vmem:[#allocation2 + $0x80] sm:$0xff]
    %v5762 = vld [vmem:[#allocation2 + $0x88] sm:$0xff]
    %v5763 = vld [vmem:[#allocation2 + $0x90] sm:$0xff]
    %v5764 = vld [vmem:[#allocation2 + $0x190] sm:$0xff]
    %v5765 = vld [vmem:[#allocation2 + $0x198] sm:$0xff]
    %v5766 = vld [vmem:[#allocation2 + $0x1a0] sm:$0xff]
    %v5767 = vld [vmem:[#allocation2 + $0x2a0] sm:$0xff]
    %v5768 = vld [vmem:[#allocation2 + $0x2a8] sm:$0xff]
    %v5769 = vld [vmem:[#allocation2 + $0x2b0] sm:$0xff]
    %v5770 = vld [vmem:[%s924] sm:$0xf]
    %v5771 = vld [vmem:[%s924 + $0x4] sm:$0xf]
    %v5772 = vld [vmem:[%s924 + $0x8] sm:$0xf]
    %v5773 = vld [vmem:[%s924 + $0xc] sm:$0xf]
    %v5774 = vld [vmem:[%s924 + $0x10] sm:$0xf]
    %v5775 = vld [vmem:[%s924 + $0x14] sm:$0xf]
    %v5776 = vld [vmem:[%s924 + $0x18] sm:$0xf]
    %v5777 = vld [vmem:[%s924 + $0x1c] sm:$0xf]
    %v5778 = vld [vmem:[%s924 + $0x20] sm:$0xf]
    %v5779 = vld [vmem:[%s924 + $0x24] sm:$0xf]
    %v5780 = vld [vmem:[%s924 + $0x28] sm:$0xf]
    %v5781 = vld [vmem:[%s924 + $0x2c] sm:$0xf]
    %v5782 = vld [vmem:[%s924 + $0x30] sm:$0xf]
    %v5783 = vld [vmem:[%s924 + $0x34] sm:$0xf]
    %v5784 = vld [vmem:[%s924 + $0x38] sm:$0xf]
    %v5785 = vld [vmem:[%s924 + $0x3c] sm:$0xf]
    %v5786 = vld [vmem:[%s924 + $0x40] sm:$0xf]
    %v5787 = vld [vmem:[%s924 + $0x44] sm:$0xf]
    %v5788 = vld [vmem:[%s924 + $0x48] sm:$0xf]
    %v5789 = vld [vmem:[%s924 + $0x4c] sm:$0xf]
    %v5790 = vld [vmem:[%s924 + $0x50] sm:$0xf]
    %v5791 = vld [vmem:[%s924 + $0x54] sm:$0xf]
    %v5792 = vld [vmem:[%s924 + $0x58] sm:$0xf]
    %v5793 = vld [vmem:[%s924 + $0x5c] sm:$0xf]
    %v5794 = vld [vmem:[%s924 + $0x60] sm:$0xf]
    %v5795 = vld [vmem:[%s924 + $0x64] sm:$0xf]
    %v5796 = vld [vmem:[%s924 + $0x68] sm:$0xf]
    %v5797 = vld [vmem:[%s924 + $0x6c] sm:$0xf]
    %v5798 = vld [vmem:[%s924 + $0x70] sm:$0xf]
    %v5799 = vld [vmem:[%s924 + $0x74] sm:$0xf]
    %v5800 = vld [vmem:[%s924 + $0x78] sm:$0xf]
    %v5801 = vld [vmem:[%s924 + $0x7c] sm:$0xf]
    %v5802 = vld [vmem:[%s924 + $0x80] sm:$0xf]
    %v5803 = vld [vmem:[%s924 + $0x84] sm:$0xf]
    %v5804 = vld [vmem:[%s924 + $0x88] sm:$0xf]
    %v5805 = vld [vmem:[%s924 + $0x8c] sm:$0xf]
    %v5806 = vld [vmem:[%s924 + $0x90] sm:$0xf]
    %v5807 = vld [vmem:[%s924 + $0x94] sm:$0xf]
    %v5808 = vld [vmem:[%s924 + $0x98] sm:$0xf]
    %v5809 = vld [vmem:[%s924 + $0x9c] sm:$0xf]
    %v5810 = vld [vmem:[%s924 + $0xa0] sm:$0xf]
    %v5811 = vld [vmem:[%s924 + $0xa4] sm:$0xf]
    %v5812 = vld [vmem:[%s924 + $0xa8] sm:$0xf]
    %v5813 = vld [vmem:[%s924 + $0xac] sm:$0xf]
    %v5814 = vld [vmem:[%s924 + $0xb0] sm:$0xf]
    %v5815 = vld [vmem:[%s924 + $0xb4] sm:$0xf]
    %v5816 = vld [vmem:[%s924 + $0xb8] sm:$0xf]
    %v5817 = vld [vmem:[%s924 + $0xbc] sm:$0xf]
    %v5866 = vunpack.c.l.b16 %v5770
    %v5867 = vunpack.c.l.b16 %v5771
    %v5868 = vunpack.c.l.b16 %v5772
    %v5869 = vunpack.c.l.b16 %v5773
    %v5870 = vunpack.c.l.b16 %v5774
    %v5871 = vunpack.c.l.b16 %v5775
    %v5872 = vunpack.c.l.b16 %v5776
    %v5873 = vunpack.c.l.b16 %v5777
    %v5874 = vunpack.c.l.b16 %v5778
    %v5875 = vunpack.c.l.b16 %v5779
    %v5876 = vunpack.c.l.b16 %v5780
    %v5877 = vunpack.c.l.b16 %v5781
    %v5878 = vunpack.c.l.b16 %v5782
    %v5879 = vunpack.c.l.b16 %v5783
    %v5880 = vunpack.c.l.b16 %v5784
    %v5881 = vunpack.c.l.b16 %v5785
    %v5882 = vunpack.c.l.b16 %v5786
    %v5883 = vunpack.c.l.b16 %v5787
    %v5884 = vunpack.c.l.b16 %v5788
    %v5885 = vunpack.c.l.b16 %v5789
    %v5886 = vunpack.c.l.b16 %v5790
    %v5887 = vunpack.c.l.b16 %v5791
    %v5888 = vunpack.c.l.b16 %v5792
    %v5889 = vunpack.c.l.b16 %v5793
    %v5890 = vunpack.c.l.b16 %v5794
    %v5891 = vunpack.c.l.b16 %v5795
    %v5892 = vunpack.c.l.b16 %v5796
    %v5893 = vunpack.c.l.b16 %v5797
    %v5894 = vunpack.c.l.b16 %v5798
    %v5895 = vunpack.c.l.b16 %v5799
    %v5896 = vunpack.c.l.b16 %v5800
    %v5897 = vunpack.c.l.b16 %v5801
    %v5898 = vunpack.c.l.b16 %v5802
    %v5899 = vunpack.c.l.b16 %v5803
    %v5900 = vunpack.c.l.b16 %v5804
    %v5901 = vunpack.c.l.b16 %v5805
    %v5902 = vunpack.c.l.b16 %v5806
    %v5903 = vunpack.c.l.b16 %v5807
    %v5904 = vunpack.c.l.b16 %v5808
    %v5905 = vunpack.c.l.b16 %v5809
    %v5906 = vunpack.c.l.b16 %v5810
    %v5907 = vunpack.c.l.b16 %v5811
    %v5908 = vunpack.c.l.b16 %v5812
    %v5909 = vunpack.c.l.b16 %v5813
    %v5910 = vunpack.c.l.b16 %v5814
    %v5911 = vunpack.c.l.b16 %v5815
    %v5912 = vunpack.c.l.b16 %v5816
    %v5913 = vunpack.c.l.b16 %v5817
    %v5914 = vpack.c.b16 %v5867, %v5866
    %v5915 = vpack.c.b16 %v5869, %v5868
    %v5916 = vpack.c.b16 %v5871, %v5870
    %v5917 = vpack.c.b16 %v5873, %v5872
    %v5918 = vpack.c.b16 %v5875, %v5874
    %v5919 = vpack.c.b16 %v5877, %v5876
    %v5920 = vpack.c.b16 %v5879, %v5878
    %v5921 = vpack.c.b16 %v5881, %v5880
    %v5922 = vpack.c.b16 %v5883, %v5882
    %v5923 = vpack.c.b16 %v5885, %v5884
    %v5924 = vpack.c.b16 %v5887, %v5886
    %v5925 = vpack.c.b16 %v5889, %v5888
    %v5926 = vpack.c.b16 %v5891, %v5890
    %v5927 = vpack.c.b16 %v5893, %v5892
    %v5928 = vpack.c.b16 %v5895, %v5894
    %v5929 = vpack.c.b16 %v5897, %v5896
    %v5930 = vpack.c.b16 %v5899, %v5898
    %v5931 = vpack.c.b16 %v5901, %v5900
    %v5932 = vpack.c.b16 %v5903, %v5902
    %v5933 = vpack.c.b16 %v5905, %v5904
    %v5934 = vpack.c.b16 %v5907, %v5906
    %v5935 = vpack.c.b16 %v5909, %v5908
    %v5936 = vpack.c.b16 %v5911, %v5910
    %v5937 = vpack.c.b16 %v5913, %v5912
    %5962 = vmatprep.subr.bf16.mxu0 0
    %5963 = vmatpush1.bf16.msra.mxu0 %v5914
    %5964 = vmatprep.subr.bf16.mxu0 0
    %5965 = vmatpush1.bf16.msra.mxu0 %v5915
    %5966 = vmatprep.subr.bf16.mxu0 0
    %5967 = vmatpush1.bf16.msra.mxu0 %v5916
    %5968 = vmatprep.subr.bf16.mxu0 0
    %5969 = vmatpush1.bf16.msra.mxu0 %v5917
    %5970 = vmatprep.subr.bf16.mxu0 0
    %5971 = vmatpush1.bf16.msra.mxu0 %v5918
    %5972 = vmatprep.subr.bf16.mxu0 0
    %5973 = vmatpush1.bf16.msra.mxu0 %v5919
    %5974 = vmatprep.subr.bf16.mxu0 0
    %5975 = vmatpush1.bf16.msra.mxu0 %v5920
    %5976 = vmatprep.subr.bf16.mxu0 0
    %5977 = vmatpush1.bf16.msra.mxu0 %v5921
    %5978 = vmatprep.subr.bf16.mxu0 0
    %5979 = vmatpush1.bf16.msra.mxu0 %v5922
    %5980 = vmatprep.subr.bf16.mxu0 0
    %5981 = vmatpush1.bf16.msra.mxu0 %v5923
    %5982 = vmatprep.subr.bf16.mxu0 0
    %5983 = vmatpush1.bf16.msra.mxu0 %v5924
    %5984 = vmatprep.subr.bf16.mxu0 0
    %5985 = vmatpush1.bf16.msra.mxu0 %v5925
    %5986 = vmatprep.subr.bf16.mxu0 0
    %5987 = vmatpush1.bf16.msra.mxu0 %v5926
    %5988 = vmatprep.subr.bf16.mxu0 0
    %5989 = vmatpush1.bf16.msra.mxu0 %v5927
    %5990 = vmatprep.subr.bf16.mxu0 0
    %5991 = vmatpush1.bf16.msra.mxu0 %v5928
    %5992 = vmatprep.subr.bf16.mxu0 0
    %5993 = vmatpush1.bf16.msra.mxu0 %v5929
    %5994 = vmatprep.mubr.bf16.mxu0 %v5762
    %5995 = vmatmul.mubr.bf16.gmra.mrb[0].mxu0 %v5761
    %v5996 = vpop.f32.mrb[0].mxu0
    %v5997 = vadd.f32 0.0, %v5996
    %v5998 = vpop.f32.mrb[0].mxu0
    %v5999 = vpop.f32.mrb[0].mxu0
    %v6000 = vadd.f32 0.0, %v5999
    %v6001 = vpop.f32.mrb[0].mxu0
    %6002 = vmatprep.mubr.bf16.mxu0 %v5765
    %6003 = vmatmul.mubr.bf16.gmra.mrb[0].mxu0 %v5764
    %v6004 = vpop.f32.mrb[0].mxu0
    %v6005 = vadd.f32 0.0, %v6004
    %v6006 = vpop.f32.mrb[0].mxu0
    %v6007 = vpop.f32.mrb[0].mxu0
    %v6008 = vadd.f32 0.0, %v6007
    %v6009 = vpop.f32.mrb[0].mxu0
    %6010 = vmatprep.mubr.bf16.mxu0 %v5768
    %6011 = vmatmul.mubr.bf16.gmra.mrb[0].mxu0 %v5767
    %v6012 = vpop.f32.mrb[0].mxu0
    %v6013 = vadd.f32 0.0, %v6012
    %v6014 = vpop.f32.mrb[0].mxu0
    %v6015 = vpop.f32.mrb[0].mxu0
    %v6016 = vadd.f32 0.0, %v6015
    %v6017 = vpop.f32.mrb[0].mxu0
    %6018 = vdwg.mxu0
    %6019 = vmatprep.subr.bf16.mxu0 0
    %6020 = vmatpush1.bf16.msra.mxu0 %v5930
    %6021 = vmatprep.subr.bf16.mxu0 0
    %6022 = vmatpush1.bf16.msra.mxu0 %v5931
    %6023 = vmatprep.subr.bf16.mxu0 0
    %6024 = vmatpush1.bf16.msra.mxu0 %v5932
    %6025 = vmatprep.subr.bf16.mxu0 0
    %6026 = vmatpush1.bf16.msra.mxu0 %v5933
    %6027 = vmatprep.subr.bf16.mxu0 0
    %6028 = vmatpush1.bf16.msra.mxu0 %v5934
    %6029 = vmatprep.subr.bf16.mxu0 0
    %6030 = vmatpush1.bf16.msra.mxu0 %v5935
    %6031 = vmatprep.subr.bf16.mxu0 0
    %6032 = vmatpush1.bf16.msra.mxu0 %v5936
    %6033 = vmatprep.subr.bf16.mxu0 0
    %6034 = vmatpush1.bf16.msra.mxu0 %v5937
    %6035 = vmatprep.subr.bf16.mxu0 0
    %6036 = vmatpush1.bf16.msra.mxu0 0
    %6037 = vmatprep.subr.bf16.mxu0 0
    %6038 = vmatpush1.bf16.msra.mxu0 0
    %6039 = vmatprep.subr.bf16.mxu0 0
    %6040 = vmatpush1.bf16.msra.mxu0 0
    %6041 = vmatprep.subr.bf16.mxu0 0
    %6042 = vmatpush1.bf16.msra.mxu0 0
    %6043 = vmatprep.subr.bf16.mxu0 0
    %6044 = vmatpush1.bf16.msra.mxu0 0
    %6045 = vmatprep.subr.bf16.mxu0 0
    %6046 = vmatpush1.bf16.msra.mxu0 0
    %6047 = vmatprep.subr.bf16.mxu0 0
    %6048 = vmatpush1.bf16.msra.mxu0 0
    %6049 = vmatprep.subr.bf16.mxu0 0
    %6050 = vmatpush1.bf16.msra.mxu0 0
    %6051 = vmatprep.mubr.bf16.mxu0 0
    %6052 = vmatmul.mubr.bf16.gmra.mrb[0].mxu0 %v5763
    %v6053 = vpop.f32.mrb[0].mxu0
    %v6054 = vadd.f32 %v5997, %v6053
    %v6055 = vpop.f32.mrb[0].mxu0
    %v6056 = vpop.f32.mrb[0].mxu0
    %v6057 = vadd.f32 %v6000, %v6056
    %v6058 = vpop.f32.mrb[0].mxu0
    %6059 = vmatprep.mubr.bf16.mxu0 0
    %6060 = vmatmul.mubr.bf16.gmra.mrb[0].mxu0 %v5766
    %v6061 = vpop.f32.mrb[0].mxu0
    %v6062 = vadd.f32 %v6005, %v6061
    %v6063 = vpop.f32.mrb[0].mxu0
    %v6064 = vpop.f32.mrb[0].mxu0
    %v6065 = vadd.f32 %v6008, %v6064
    %v6066 = vpop.f32.mrb[0].mxu0
    %6067 = vmatprep.mubr.bf16.mxu0 0
    %6068 = vmatmul.mubr.bf16.gmra.mrb[0].mxu0 %v5769
    %v6069 = vpop.f32.mrb[0].mxu0
    %v6070 = vadd.f32 %v6013, %v6069
    %v6071 = vpop.f32.mrb[0].mxu0
    %v6072 = vpop.f32.mrb[0].mxu0
    %v6073 = vadd.f32 %v6016, %v6072
    %v6074 = vpop.f32.mrb[0].mxu0
    %6075 = vdwg.mxu0
    %v6076 = vadd.f32 %v6054, %v6062
    %v6077 = vadd.f32 %v6057, %v6065
    %v6078 = vadd.f32 %v6076, %v6070
    %v6079 = vadd.f32 %v6077, %v6073
    %v6080 = vmul.f32 %v6078, 0.0021978023
    %v6081 = vmul.f32 %v6079, 0.0021978023
    %6082 = vst [vmem:[#allocation3 + $0x80] sm:$0xff] %v6080
    %6083 = vst [vmem:[#allocation3 + $0x180] sm:$0xff] %v6081
    %v6084 = vld [vmem:[#allocation2 + $0x88] sm:$0xff]
    %v6085 = vld [vmem:[#allocation2 + $0x90] sm:$0xff]
    %v6086 = vld [vmem:[#allocation2 + $0x98] sm:$0xff]
    %v6087 = vld [vmem:[#allocation2 + $0x198] sm:$0xff]
    %v6088 = vld [vmem:[#allocation2 + $0x1a0] sm:$0xff]
    %v6089 = vld [vmem:[#allocation2 + $0x1a8] sm:$0xff]
    %v6090 = vld [vmem:[#allocation2 + $0x2a8] sm:$0xff]
    %v6091 = vld [vmem:[#allocation2 + $0x2b0] sm:$0xff]
    %v6092 = vld [vmem:[#allocation2 + $0x2b8] sm:$0xff]
    %v6093 = vld [vmem:[%s924] sm:$0xf]
    %v6094 = vld [vmem:[%s924 + $0x4] sm:$0xf]
    %v6095 = vld [vmem:[%s924 + $0x8] sm:$0xf]
    %v6096 = vld [vmem:[%s924 + $0xc] sm:$0xf]
    %v6097 = vld [vmem:[%s924 + $0x10] sm:$0xf]
    %v6098 = vld [vmem:[%s924 + $0x14] sm:$0xf]
    %v6099 = vld [vmem:[%s924 + $0x18] sm:$0xf]
    %v6100 = vld [vmem:[%s924 + $0x1c] sm:$0xf]
    %v6101 = vld [vmem:[%s924 + $0x20] sm:$0xf]
    %v6102 = vld [vmem:[%s924 + $0x24] sm:$0xf]
    %v6103 = vld [vmem:[%s924 + $0x28] sm:$0xf]
    %v6104 = vld [vmem:[%s924 + $0x2c] sm:$0xf]
    %v6105 = vld [vmem:[%s924 + $0x30] sm:$0xf]
    %v6106 = vld [vmem:[%s924 + $0x34] sm:$0xf]
    %v6107 = vld [vmem:[%s924 + $0x38] sm:$0xf]
    %v6108 = vld [vmem:[%s924 + $0x3c] sm:$0xf]
    %v6109 = vld [vmem:[%s924 + $0x40] sm:$0xf]
    %v6110 = vld [vmem:[%s924 + $0x44] sm:$0xf]
    %v6111 = vld [vmem:[%s924 + $0x48] sm:$0xf]
    %v6112 = vld [vmem:[%s924 + $0x4c] sm:$0xf]
    %v6113 = vld [vmem:[%s924 + $0x50] sm:$0xf]
    %v6114 = vld [vmem:[%s924 + $0x54] sm:$0xf]
    %v6115 = vld [vmem:[%s924 + $0x58] sm:$0xf]
    %v6116 = vld [vmem:[%s924 + $0x5c] sm:$0xf]
    %v6117 = vld [vmem:[%s924 + $0x60] sm:$0xf]
    %v6118 = vld [vmem:[%s924 + $0x64] sm:$0xf]
    %v6119 = vld [vmem:[%s924 + $0x68] sm:$0xf]
    %v6120 = vld [vmem:[%s924 + $0x6c] sm:$0xf]
    %v6121 = vld [vmem:[%s924 + $0x70] sm:$0xf]
    %v6122 = vld [vmem:[%s924 + $0x74] sm:$0xf]
    %v6123 = vld [vmem:[%s924 + $0x78] sm:$0xf]
    %v6124 = vld [vmem:[%s924 + $0x7c] sm:$0xf]
    %v6125 = vld [vmem:[%s924 + $0x80] sm:$0xf]
    %v6126 = vld [vmem:[%s924 + $0x84] sm:$0xf]
    %v6127 = vld [vmem:[%s924 + $0x88] sm:$0xf]
    %v6128 = vld [vmem:[%s924 + $0x8c] sm:$0xf]
    %v6129 = vld [vmem:[%s924 + $0x90] sm:$0xf]
    %v6130 = vld [vmem:[%s924 + $0x94] sm:$0xf]
    %v6131 = vld [vmem:[%s924 + $0x98] sm:$0xf]
    %v6132 = vld [vmem:[%s924 + $0x9c] sm:$0xf]
    %v6133 = vld [vmem:[%s924 + $0xa0] sm:$0xf]
    %v6134 = vld [vmem:[%s924 + $0xa4] sm:$0xf]
    %v6135 = vld [vmem:[%s924 + $0xa8] sm:$0xf]
    %v6136 = vld [vmem:[%s924 + $0xac] sm:$0xf]
    %v6137 = vld [vmem:[%s924 + $0xb0] sm:$0xf]
    %v6138 = vld [vmem:[%s924 + $0xb4] sm:$0xf]
    %v6139 = vld [vmem:[%s924 + $0xb8] sm:$0xf]
    %v6140 = vld [vmem:[%s924 + $0xbc] sm:$0xf]
    %v6189 = vunpack.c.l.b16 %v6093
    %v6190 = vunpack.c.l.b16 %v6094
    %v6191 = vunpack.c.l.b16 %v6095
    %v6192 = vunpack.c.l.b16 %v6096
    %v6193 = vunpack.c.l.b16 %v6097
    %v6194 = vunpack.c.l.b16 %v6098
    %v6195 = vunpack.c.l.b16 %v6099
    %v6196 = vunpack.c.l.b16 %v6100
    %v6197 = vunpack.c.l.b16 %v6101
    %v6198 = vunpack.c.l.b16 %v6102
    %v6199 = vunpack.c.l.b16 %v6103
    %v6200 = vunpack.c.l.b16 %v6104
    %v6201 = vunpack.c.l.b16 %v6105
    %v6202 = vunpack.c.l.b16 %v6106
    %v6203 = vunpack.c.l.b16 %v6107
    %v6204 = vunpack.c.l.b16 %v6108
    %v6205 = vunpack.c.l.b16 %v6109
    %v6206 = vunpack.c.l.b16 %v6110
    %v6207 = vunpack.c.l.b16 %v6111
    %v6208 = vunpack.c.l.b16 %v6112
    %v6209 = vunpack.c.l.b16 %v6113
    %v6210 = vunpack.c.l.b16 %v6114
    %v6211 = vunpack.c.l.b16 %v6115
    %v6212 = vunpack.c.l.b16 %v6116
    %v6213 = vunpack.c.l.b16 %v6117
    %v6214 = vunpack.c.l.b16 %v6118
    %v6215 = vunpack.c.l.b16 %v6119
    %v6216 = vunpack.c.l.b16 %v6120
    %v6217 = vunpack.c.l.b16 %v6121
    %v6218 = vunpack.c.l.b16 %v6122
    %v6219 = vunpack.c.l.b16 %v6123
    %v6220 = vunpack.c.l.b16 %v6124
    %v6221 = vunpack.c.l.b16 %v6125
    %v6222 = vunpack.c.l.b16 %v6126
    %v6223 = vunpack.c.l.b16 %v6127
    %v6224 = vunpack.c.l.b16 %v6128
    %v6225 = vunpack.c.l.b16 %v6129
    %v6226 = vunpack.c.l.b16 %v6130
    %v6227 = vunpack.c.l.b16 %v6131
    %v6228 = vunpack.c.l.b16 %v6132
    %v6229 = vunpack.c.l.b16 %v6133
    %v6230 = vunpack.c.l.b16 %v6134
    %v6231 = vunpack.c.l.b16 %v6135
    %v6232 = vunpack.c.l.b16 %v6136
    %v6233 = vunpack.c.l.b16 %v6137
    %v6234 = vunpack.c.l.b16 %v6138
    %v6235 = vunpack.c.l.b16 %v6139
    %v6236 = vunpack.c.l.b16 %v6140
    %v6237 = vpack.c.b16 %v6190, %v6189
    %v6238 = vpack.c.b16 %v6192, %v6191
    %v6239 = vpack.c.b16 %v6194, %v6193
    %v6240 = vpack.c.b16 %v6196, %v6195
    %v6241 = vpack.c.b16 %v6198, %v6197
    %v6242 = vpack.c.b16 %v6200, %v6199
    %v6243 = vpack.c.b16 %v6202, %v6201
    %v6244 = vpack.c.b16 %v6204, %v6203
    %v6245 = vpack.c.b16 %v6206, %v6205
    %v6246 = vpack.c.b16 %v6208, %v6207
    %v6247 = vpack.c.b16 %v6210, %v6209
    %v6248 = vpack.c.b16 %v6212, %v6211
    %v6249 = vpack.c.b16 %v6214, %v6213
    %v6250 = vpack.c.b16 %v6216, %v6215
    %v6251 = vpack.c.b16 %v6218, %v6217
    %v6252 = vpack.c.b16 %v6220, %v6219
    %v6253 = vpack.c.b16 %v6222, %v6221
    %v6254 = vpack.c.b16 %v6224, %v6223
    %v6255 = vpack.c.b16 %v6226, %v6225
    %v6256 = vpack.c.b16 %v6228, %v6227
    %v6257 = vpack.c.b16 %v6230, %v6229
    %v6258 = vpack.c.b16 %v6232, %v6231
    %v6259 = vpack.c.b16 %v6234, %v6233
    %v6260 = vpack.c.b16 %v6236, %v6235
    %6285 = vmatprep.subr.bf16.mxu0 0
    %6286 = vmatpush1.bf16.msra.mxu0 %v6237
    %6287 = vmatprep.subr.bf16.mxu0 0
    %6288 = vmatpush1.bf16.msra.mxu0 %v6238
    %6289 = vmatprep.subr.bf16.mxu0 0
    %6290 = vmatpush1.bf16.msra.mxu0 %v6239
    %6291 = vmatprep.subr.bf16.mxu0 0
    %6292 = vmatpush1.bf16.msra.mxu0 %v6240
    %6293 = vmatprep.subr.bf16.mxu0 0
    %6294 = vmatpush1.bf16.msra.mxu0 %v6241
    %6295 = vmatprep.subr.bf16.mxu0 0
    %6296 = vmatpush1.bf16.msra.mxu0 %v6242
    %6297 = vmatprep.subr.bf16.mxu0 0
    %6298 = vmatpush1.bf16.msra.mxu0 %v6243
    %6299 = vmatprep.subr.bf16.mxu0 0
    %6300 = vmatpush1.bf16.msra.mxu0 %v6244
    %6301 = vmatprep.subr.bf16.mxu0 0
    %6302 = vmatpush1.bf16.msra.mxu0 %v6245
    %6303 = vmatprep.subr.bf16.mxu0 0
    %6304 = vmatpush1.bf16.msra.mxu0 %v6246
    %6305 = vmatprep.subr.bf16.mxu0 0
    %6306 = vmatpush1.bf16.msra.mxu0 %v6247
    %6307 = vmatprep.subr.bf16.mxu0 0
    %6308 = vmatpush1.bf16.msra.mxu0 %v6248
    %6309 = vmatprep.subr.bf16.mxu0 0
    %6310 = vmatpush1.bf16.msra.mxu0 %v6249
    %6311 = vmatprep.subr.bf16.mxu0 0
    %6312 = vmatpush1.bf16.msra.mxu0 %v6250
    %6313 = vmatprep.subr.bf16.mxu0 0
    %6314 = vmatpush1.bf16.msra.mxu0 %v6251
    %6315 = vmatprep.subr.bf16.mxu0 0
    %6316 = vmatpush1.bf16.msra.mxu0 %v6252
    %6317 = vmatprep.mubr.bf16.mxu0 %v6085
    %6318 = vmatmul.mubr.bf16.gmra.mrb[0].mxu0 %v6084
    %v6319 = vpop.f32.mrb[0].mxu0
    %v6320 = vadd.f32 0.0, %v6319
    %v6321 = vpop.f32.mrb[0].mxu0
    %v6322 = vpop.f32.mrb[0].mxu0
    %v6323 = vadd.f32 0.0, %v6322
    %v6324 = vpop.f32.mrb[0].mxu0
    %6325 = vmatprep.mubr.bf16.mxu0 %v6088
    %6326 = vmatmul.mubr.bf16.gmra.mrb[0].mxu0 %v6087
    %v6327 = vpop.f32.mrb[0].mxu0
    %v6328 = vadd.f32 0.0, %v6327
    %v6329 = vpop.f32.mrb[0].mxu0
    %v6330 = vpop.f32.mrb[0].mxu0
    %v6331 = vadd.f32 0.0, %v6330
    %v6332 = vpop.f32.mrb[0].mxu0
    %6333 = vmatprep.mubr.bf16.mxu0 %v6091
    %6334 = vmatmul.mubr.bf16.gmra.mrb[0].mxu0 %v6090
    %v6335 = vpop.f32.mrb[0].mxu0
    %v6336 = vadd.f32 0.0, %v6335
    %v6337 = vpop.f32.mrb[0].mxu0
    %v6338 = vpop.f32.mrb[0].mxu0
    %v6339 = vadd.f32 0.0, %v6338
    %v6340 = vpop.f32.mrb[0].mxu0
    %6341 = vdwg.mxu0
    %6342 = vmatprep.subr.bf16.mxu0 0
    %6343 = vmatpush1.bf16.msra.mxu0 %v6253
    %6344 = vmatprep.subr.bf16.mxu0 0
    %6345 = vmatpush1.bf16.msra.mxu0 %v6254
    %6346 = vmatprep.subr.bf16.mxu0 0
    %6347 = vmatpush1.bf16.msra.mxu0 %v6255
    %6348 = vmatprep.subr.bf16.mxu0 0
    %6349 = vmatpush1.bf16.msra.mxu0 %v6256
    %6350 = vmatprep.subr.bf16.mxu0 0
    %6351 = vmatpush1.bf16.msra.mxu0 %v6257
    %6352 = vmatprep.subr.bf16.mxu0 0
    %6353 = vmatpush1.bf16.msra.mxu0 %v6258
    %6354 = vmatprep.subr.bf16.mxu0 0
    %6355 = vmatpush1.bf16.msra.mxu0 %v6259
    %6356 = vmatprep.subr.bf16.mxu0 0
    %6357 = vmatpush1.bf16.msra.mxu0 %v6260
    %6358 = vmatprep.subr.bf16.mxu0 0
    %6359 = vmatpush1.bf16.msra.mxu0 0
    %6360 = vmatprep.subr.bf16.mxu0 0
    %6361 = vmatpush1.bf16.msra.mxu0 0
    %6362 = vmatprep.subr.bf16.mxu0 0
    %6363 = vmatpush1.bf16.msra.mxu0 0
    %6364 = vmatprep.subr.bf16.mxu0 0
    %6365 = vmatpush1.bf16.msra.mxu0 0
    %6366 = vmatprep.subr.bf16.mxu0 0
    %6367 = vmatpush1.bf16.msra.mxu0 0
    %6368 = vmatprep.subr.bf16.mxu0 0
    %6369 = vmatpush1.bf16.msra.mxu0 0
    %6370 = vmatprep.subr.bf16.mxu0 0
    %6371 = vmatpush1.bf16.msra.mxu0 0
    %6372 = vmatprep.subr.bf16.mxu0 0
    %6373 = vmatpush1.bf16.msra.mxu0 0
    %6374 = vmatprep.mubr.bf16.mxu0 0
    %6375 = vmatmul.mubr.bf16.gmra.mrb[0].mxu0 %v6086
    %v6376 = vpop.f32.mrb[0].mxu0
    %v6377 = vadd.f32 %v6320, %v6376
    %v6378 = vpop.f32.mrb[0].mxu0
    %v6379 = vpop.f32.mrb[0].mxu0
    %v6380 = vadd.f32 %v6323, %v6379
    %v6381 = vpop.f32.mrb[0].mxu0
    %6382 = vmatprep.mubr.bf16.mxu0 0
    %6383 = vmatmul.mubr.bf16.gmra.mrb[0].mxu0 %v6089
    %v6384 = vpop.f32.mrb[0].mxu0
    %v6385 = vadd.f32 %v6328, %v6384
    %v6386 = vpop.f32.mrb[0].mxu0
    %v6387 = vpop.f32.mrb[0].mxu0
    %v6388 = vadd.f32 %v6331, %v6387
    %v6389 = vpop.f32.mrb[0].mxu0
    %6390 = vmatprep.mubr.bf16.mxu0 0
    %6391 = vmatmul.mubr.bf16.gmra.mrb[0].mxu0 %v6092
    %v6392 = vpop.f32.mrb[0].mxu0
    %v6393 = vadd.f32 %v6336, %v6392
    %v6394 = vpop.f32.mrb[0].mxu0
    %v6395 = vpop.f32.mrb[0].mxu0
    %v6396 = vadd.f32 %v6339, %v6395
    %v6397 = vpop.f32.mrb[0].mxu0
    %6398 = vdwg.mxu0
    %v6399 = vadd.f32 %v6377, %v6385
    %v6400 = vadd.f32 %v6380, %v6388
    %v6401 = vadd.f32 %v6399, %v6393
    %v6402 = vadd.f32 %v6400, %v6396
    %v6403 = vmul.f32 %v6401, 0.0021978023
    %v6404 = vmul.f32 %v6402, 0.0021978023
    %6405 = vst [vmem:[#allocation3 + $0x88] sm:$0xff] %v6403
    %6406 = vst [vmem:[#allocation3 + $0x188] sm:$0xff] %v6404
    %v6407 = vld [vmem:[#allocation2 + $0x90] sm:$0xff]
    %v6408 = vld [vmem:[#allocation2 + $0x98] sm:$0xff]
    %v6409 = vld [vmem:[#allocation2 + $0xa0] sm:$0xff]
    %v6410 = vld [vmem:[#allocation2 + $0x1a0] sm:$0xff]
    %v6411 = vld [vmem:[#allocation2 + $0x1a8] sm:$0xff]
    %v6412 = vld [vmem:[#allocation2 + $0x1b0] sm:$0xff]
    %v6413 = vld [vmem:[#allocation2 + $0x2b0] sm:$0xff]
    %v6414 = vld [vmem:[#allocation2 + $0x2b8] sm:$0xff]
    %v6415 = vld [vmem:[#allocation2 + $0x2c0] sm:$0xff]
    %v6416 = vld [vmem:[%s924] sm:$0xf]
    %v6417 = vld [vmem:[%s924 + $0x4] sm:$0xf]
    %v6418 = vld [vmem:[%s924 + $0x8] sm:$0xf]
    %v6419 = vld [vmem:[%s924 + $0xc] sm:$0xf]
    %v6420 = vld [vmem:[%s924 + $0x10] sm:$0xf]
    %v6421 = vld [vmem:[%s924 + $0x14] sm:$0xf]
    %v6422 = vld [vmem:[%s924 + $0x18] sm:$0xf]
    %v6423 = vld [vmem:[%s924 + $0x1c] sm:$0xf]
    %v6424 = vld [vmem:[%s924 + $0x20] sm:$0xf]
    %v6425 = vld [vmem:[%s924 + $0x24] sm:$0xf]
    %v6426 = vld [vmem:[%s924 + $0x28] sm:$0xf]
    %v6427 = vld [vmem:[%s924 + $0x2c] sm:$0xf]
    %v6428 = vld [vmem:[%s924 + $0x30] sm:$0xf]
    %v6429 = vld [vmem:[%s924 + $0x34] sm:$0xf]
    %v6430 = vld [vmem:[%s924 + $0x38] sm:$0xf]
    %v6431 = vld [vmem:[%s924 + $0x3c] sm:$0xf]
    %v6432 = vld [vmem:[%s924 + $0x40] sm:$0xf]
    %v6433 = vld [vmem:[%s924 + $0x44] sm:$0xf]
    %v6434 = vld [vmem:[%s924 + $0x48] sm:$0xf]
    %v6435 = vld [vmem:[%s924 + $0x4c] sm:$0xf]
    %v6436 = vld [vmem:[%s924 + $0x50] sm:$0xf]
    %v6437 = vld [vmem:[%s924 + $0x54] sm:$0xf]
    %v6438 = vld [vmem:[%s924 + $0x58] sm:$0xf]
    %v6439 = vld [vmem:[%s924 + $0x5c] sm:$0xf]
    %v6440 = vld [vmem:[%s924 + $0x60] sm:$0xf]
    %v6441 = vld [vmem:[%s924 + $0x64] sm:$0xf]
    %v6442 = vld [vmem:[%s924 + $0x68] sm:$0xf]
    %v6443 = vld [vmem:[%s924 + $0x6c] sm:$0xf]
    %v6444 = vld [vmem:[%s924 + $0x70] sm:$0xf]
    %v6445 = vld [vmem:[%s924 + $0x74] sm:$0xf]
    %v6446 = vld [vmem:[%s924 + $0x78] sm:$0xf]
    %v6447 = vld [vmem:[%s924 + $0x7c] sm:$0xf]
    %v6448 = vld [vmem:[%s924 + $0x80] sm:$0xf]
    %v6449 = vld [vmem:[%s924 + $0x84] sm:$0xf]
    %v6450 = vld [vmem:[%s924 + $0x88] sm:$0xf]
    %v6451 = vld [vmem:[%s924 + $0x8c] sm:$0xf]
    %v6452 = vld [vmem:[%s924 + $0x90] sm:$0xf]
    %v6453 = vld [vmem:[%s924 + $0x94] sm:$0xf]
    %v6454 = vld [vmem:[%s924 + $0x98] sm:$0xf]
    %v6455 = vld [vmem:[%s924 + $0x9c] sm:$0xf]
    %v6456 = vld [vmem:[%s924 + $0xa0] sm:$0xf]
    %v6457 = vld [vmem:[%s924 + $0xa4] sm:$0xf]
    %v6458 = vld [vmem:[%s924 + $0xa8] sm:$0xf]
    %v6459 = vld [vmem:[%s924 + $0xac] sm:$0xf]
    %v6460 = vld [vmem:[%s924 + $0xb0] sm:$0xf]
    %v6461 = vld [vmem:[%s924 + $0xb4] sm:$0xf]
    %v6462 = vld [vmem:[%s924 + $0xb8] sm:$0xf]
    %v6463 = vld [vmem:[%s924 + $0xbc] sm:$0xf]
    %v6512 = vunpack.c.l.b16 %v6416
    %v6513 = vunpack.c.l.b16 %v6417
    %v6514 = vunpack.c.l.b16 %v6418
    %v6515 = vunpack.c.l.b16 %v6419
    %v6516 = vunpack.c.l.b16 %v6420
    %v6517 = vunpack.c.l.b16 %v6421
    %v6518 = vunpack.c.l.b16 %v6422
    %v6519 = vunpack.c.l.b16 %v6423
    %v6520 = vunpack.c.l.b16 %v6424
    %v6521 = vunpack.c.l.b16 %v6425
    %v6522 = vunpack.c.l.b16 %v6426
    %v6523 = vunpack.c.l.b16 %v6427
    %v6524 = vunpack.c.l.b16 %v6428
    %v6525 = vunpack.c.l.b16 %v6429
    %v6526 = vunpack.c.l.b16 %v6430
    %v6527 = vunpack.c.l.b16 %v6431
    %v6528 = vunpack.c.l.b16 %v6432
    %v6529 = vunpack.c.l.b16 %v6433
    %v6530 = vunpack.c.l.b16 %v6434
    %v6531 = vunpack.c.l.b16 %v6435
    %v6532 = vunpack.c.l.b16 %v6436
    %v6533 = vunpack.c.l.b16 %v6437
    %v6534 = vunpack.c.l.b16 %v6438
    %v6535 = vunpack.c.l.b16 %v6439
    %v6536 = vunpack.c.l.b16 %v6440
    %v6537 = vunpack.c.l.b16 %v6441
    %v6538 = vunpack.c.l.b16 %v6442
    %v6539 = vunpack.c.l.b16 %v6443
    %v6540 = vunpack.c.l.b16 %v6444
    %v6541 = vunpack.c.l.b16 %v6445
    %v6542 = vunpack.c.l.b16 %v6446
    %v6543 = vunpack.c.l.b16 %v6447
    %v6544 = vunpack.c.l.b16 %v6448
    %v6545 = vunpack.c.l.b16 %v6449
    %v6546 = vunpack.c.l.b16 %v6450
    %v6547 = vunpack.c.l.b16 %v6451
    %v6548 = vunpack.c.l.b16 %v6452
    %v6549 = vunpack.c.l.b16 %v6453
    %v6550 = vunpack.c.l.b16 %v6454
    %v6551 = vunpack.c.l.b16 %v6455
    %v6552 = vunpack.c.l.b16 %v6456
    %v6553 = vunpack.c.l.b16 %v6457
    %v6554 = vunpack.c.l.b16 %v6458
    %v6555 = vunpack.c.l.b16 %v6459
    %v6556 = vunpack.c.l.b16 %v6460
    %v6557 = vunpack.c.l.b16 %v6461
    %v6558 = vunpack.c.l.b16 %v6462
    %v6559 = vunpack.c.l.b16 %v6463
    %v6560 = vpack.c.b16 %v6513, %v6512
    %v6561 = vpack.c.b16 %v6515, %v6514
    %v6562 = vpack.c.b16 %v6517, %v6516
    %v6563 = vpack.c.b16 %v6519, %v6518
    %v6564 = vpack.c.b16 %v6521, %v6520
    %v6565 = vpack.c.b16 %v6523, %v6522
    %v6566 = vpack.c.b16 %v6525, %v6524
    %v6567 = vpack.c.b16 %v6527, %v6526
    %v6568 = vpack.c.b16 %v6529, %v6528
    %v6569 = vpack.c.b16 %v6531, %v6530
    %v6570 = vpack.c.b16 %v6533, %v6532
    %v6571 = vpack.c.b16 %v6535, %v6534
    %v6572 = vpack.c.b16 %v6537, %v6536
    %v6573 = vpack.c.b16 %v6539, %v6538
    %v6574 = vpack.c.b16 %v6541, %v6540
    %v6575 = vpack.c.b16 %v6543, %v6542
    %v6576 = vpack.c.b16 %v6545, %v6544
    %v6577 = vpack.c.b16 %v6547, %v6546
    %v6578 = vpack.c.b16 %v6549, %v6548
    %v6579 = vpack.c.b16 %v6551, %v6550
    %v6580 = vpack.c.b16 %v6553, %v6552
    %v6581 = vpack.c.b16 %v6555, %v6554
    %v6582 = vpack.c.b16 %v6557, %v6556
    %v6583 = vpack.c.b16 %v6559, %v6558
    %6608 = vmatprep.subr.bf16.mxu0 0
    %6609 = vmatpush1.bf16.msra.mxu0 %v6560
    %6610 = vmatprep.subr.bf16.mxu0 0
    %6611 = vmatpush1.bf16.msra.mxu0 %v6561
    %6612 = vmatprep.subr.bf16.mxu0 0
    %6613 = vmatpush1.bf16.msra.mxu0 %v6562
    %6614 = vmatprep.subr.bf16.mxu0 0
    %6615 = vmatpush1.bf16.msra.mxu0 %v6563
    %6616 = vmatprep.subr.bf16.mxu0 0
    %6617 = vmatpush1.bf16.msra.mxu0 %v6564
    %6618 = vmatprep.subr.bf16.mxu0 0
    %6619 = vmatpush1.bf16.msra.mxu0 %v6565
    %6620 = vmatprep.subr.bf16.mxu0 0
    %6621 = vmatpush1.bf16.msra.mxu0 %v6566
    %6622 = vmatprep.subr.bf16.mxu0 0
    %6623 = vmatpush1.bf16.msra.mxu0 %v6567
    %6624 = vmatprep.subr.bf16.mxu0 0
    %6625 = vmatpush1.bf16.msra.mxu0 %v6568
    %6626 = vmatprep.subr.bf16.mxu0 0
    %6627 = vmatpush1.bf16.msra.mxu0 %v6569
    %6628 = vmatprep.subr.bf16.mxu0 0
    %6629 = vmatpush1.bf16.msra.mxu0 %v6570
    %6630 = vmatprep.subr.bf16.mxu0 0
    %6631 = vmatpush1.bf16.msra.mxu0 %v6571
    %6632 = vmatprep.subr.bf16.mxu0 0
    %6633 = vmatpush1.bf16.msra.mxu0 %v6572
    %6634 = vmatprep.subr.bf16.mxu0 0
    %6635 = vmatpush1.bf16.msra.mxu0 %v6573
    %6636 = vmatprep.subr.bf16.mxu0 0
    %6637 = vmatpush1.bf16.msra.mxu0 %v6574
    %6638 = vmatprep.subr.bf16.mxu0 0
    %6639 = vmatpush1.bf16.msra.mxu0 %v6575
    %6640 = vmatprep.mubr.bf16.mxu0 %v6408
    %6641 = vmatmul.mubr.bf16.gmra.mrb[0].mxu0 %v6407
    %v6642 = vpop.f32.mrb[0].mxu0
    %v6643 = vadd.f32 0.0, %v6642
    %v6644 = vpop.f32.mrb[0].mxu0
    %v6645 = vpop.f32.mrb[0].mxu0
    %v6646 = vadd.f32 0.0, %v6645
    %v6647 = vpop.f32.mrb[0].mxu0
    %6648 = vmatprep.mubr.bf16.mxu0 %v6411
    %6649 = vmatmul.mubr.bf16.gmra.mrb[0].mxu0 %v6410
    %v6650 = vpop.f32.mrb[0].mxu0
    %v6651 = vadd.f32 0.0, %v6650
    %v6652 = vpop.f32.mrb[0].mxu0
    %v6653 = vpop.f32.mrb[0].mxu0
    %v6654 = vadd.f32 0.0, %v6653
    %v6655 = vpop.f32.mrb[0].mxu0
    %6656 = vmatprep.mubr.bf16.mxu0 %v6414
    %6657 = vmatmul.mubr.bf16.gmra.mrb[0].mxu0 %v6413
    %v6658 = vpop.f32.mrb[0].mxu0
    %v6659 = vadd.f32 0.0, %v6658
    %v6660 = vpop.f32.mrb[0].mxu0
    %v6661 = vpop.f32.mrb[0].mxu0
    %v6662 = vadd.f32 0.0, %v6661
    %v6663 = vpop.f32.mrb[0].mxu0
    %6664 = vdwg.mxu0
    %6665 = vmatprep.subr.bf16.mxu0 0
    %6666 = vmatpush1.bf16.msra.mxu0 %v6576
    %6667 = vmatprep.subr.bf16.mxu0 0
    %6668 = vmatpush1.bf16.msra.mxu0 %v6577
    %6669 = vmatprep.subr.bf16.mxu0 0
    %6670 = vmatpush1.bf16.msra.mxu0 %v6578
    %6671 = vmatprep.subr.bf16.mxu0 0
    %6672 = vmatpush1.bf16.msra.mxu0 %v6579
    %6673 = vmatprep.subr.bf16.mxu0 0
    %6674 = vmatpush1.bf16.msra.mxu0 %v6580
    %6675 = vmatprep.subr.bf16.mxu0 0
    %6676 = vmatpush1.bf16.msra.mxu0 %v6581
    %6677 = vmatprep.subr.bf16.mxu0 0
    %6678 = vmatpush1.bf16.msra.mxu0 %v6582
    %6679 = vmatprep.subr.bf16.mxu0 0
    %6680 = vmatpush1.bf16.msra.mxu0 %v6583
    %6681 = vmatprep.subr.bf16.mxu0 0
    %6682 = vmatpush1.bf16.msra.mxu0 0
    %6683 = vmatprep.subr.bf16.mxu0 0
    %6684 = vmatpush1.bf16.msra.mxu0 0
    %6685 = vmatprep.subr.bf16.mxu0 0
    %6686 = vmatpush1.bf16.msra.mxu0 0
    %6687 = vmatprep.subr.bf16.mxu0 0
    %6688 = vmatpush1.bf16.msra.mxu0 0
    %6689 = vmatprep.subr.bf16.mxu0 0
    %6690 = vmatpush1.bf16.msra.mxu0 0
    %6691 = vmatprep.subr.bf16.mxu0 0
    %6692 = vmatpush1.bf16.msra.mxu0 0
    %6693 = vmatprep.subr.bf16.mxu0 0
    %6694 = vmatpush1.bf16.msra.mxu0 0
    %6695 = vmatprep.subr.bf16.mxu0 0
    %6696 = vmatpush1.bf16.msra.mxu0 0
    %6697 = vmatprep.mubr.bf16.mxu0 0
    %6698 = vmatmul.mubr.bf16.gmra.mrb[0].mxu0 %v6409
    %v6699 = vpop.f32.mrb[0].mxu0
    %v6700 = vadd.f32 %v6643, %v6699
    %v6701 = vpop.f32.mrb[0].mxu0
    %v6702 = vpop.f32.mrb[0].mxu0
    %v6703 = vadd.f32 %v6646, %v6702
    %v6704 = vpop.f32.mrb[0].mxu0
    %6705 = vmatprep.mubr.bf16.mxu0 0
    %6706 = vmatmul.mubr.bf16.gmra.mrb[0].mxu0 %v6412
    %v6707 = vpop.f32.mrb[0].mxu0
    %v6708 = vadd.f32 %v6651, %v6707
    %v6709 = vpop.f32.mrb[0].mxu0
    %v6710 = vpop.f32.mrb[0].mxu0
    %v6711 = vadd.f32 %v6654, %v6710
    %v6712 = vpop.f32.mrb[0].mxu0
    %6713 = vmatprep.mubr.bf16.mxu0 0
    %6714 = vmatmul.mubr.bf16.gmra.mrb[0].mxu0 %v6415
    %v6715 = vpop.f32.mrb[0].mxu0
    %v6716 = vadd.f32 %v6659, %v6715
    %v6717 = vpop.f32.mrb[0].mxu0
    %v6718 = vpop.f32.mrb[0].mxu0
    %v6719 = vadd.f32 %v6662, %v6718
    %v6720 = vpop.f32.mrb[0].mxu0
    %6721 = vdwg.mxu0
    %v6722 = vadd.f32 %v6700, %v6708
    %v6723 = vadd.f32 %v6703, %v6711
    %v6724 = vadd.f32 %v6722, %v6716
    %v6725 = vadd.f32 %v6723, %v6719
    %v6726 = vmul.f32 %v6724, 0.0021978023
    %v6727 = vmul.f32 %v6725, 0.0021978023
    %6728 = vst [vmem:[#allocation3 + $0x90] sm:$0xff] %v6726
    %6729 = vst [vmem:[#allocation3 + $0x190] sm:$0xff] %v6727
    %v6730 = vld [vmem:[#allocation2 + $0x98] sm:$0xff]
    %v6731 = vld [vmem:[#allocation2 + $0xa0] sm:$0xff]
    %v6732 = vld [vmem:[#allocation2 + $0xa8] sm:$0xff]
    %v6733 = vld [vmem:[#allocation2 + $0x1a8] sm:$0xff]
    %v6734 = vld [vmem:[#allocation2 + $0x1b0] sm:$0xff]
    %v6735 = vld [vmem:[#allocation2 + $0x1b8] sm:$0xff]
    %v6736 = vld [vmem:[#allocation2 + $0x2b8] sm:$0xff]
    %v6737 = vld [vmem:[#allocation2 + $0x2c0] sm:$0xff]
    %v6738 = vld [vmem:[#allocation2 + $0x2c8] sm:$0xff]
    %v6739 = vld [vmem:[%s924] sm:$0xf]
    %v6740 = vld [vmem:[%s924 + $0x4] sm:$0xf]
    %v6741 = vld [vmem:[%s924 + $0x8] sm:$0xf]
    %v6742 = vld [vmem:[%s924 + $0xc] sm:$0xf]
    %v6743 = vld [vmem:[%s924 + $0x10] sm:$0xf]
    %v6744 = vld [vmem:[%s924 + $0x14] sm:$0xf]
    %v6745 = vld [vmem:[%s924 + $0x18] sm:$0xf]
    %v6746 = vld [vmem:[%s924 + $0x1c] sm:$0xf]
    %v6747 = vld [vmem:[%s924 + $0x20] sm:$0xf]
    %v6748 = vld [vmem:[%s924 + $0x24] sm:$0xf]
    %v6749 = vld [vmem:[%s924 + $0x28] sm:$0xf]
    %v6750 = vld [vmem:[%s924 + $0x2c] sm:$0xf]
    %v6751 = vld [vmem:[%s924 + $0x30] sm:$0xf]
    %v6752 = vld [vmem:[%s924 + $0x34] sm:$0xf]
    %v6753 = vld [vmem:[%s924 + $0x38] sm:$0xf]
    %v6754 = vld [vmem:[%s924 + $0x3c] sm:$0xf]
    %v6755 = vld [vmem:[%s924 + $0x40] sm:$0xf]
    %v6756 = vld [vmem:[%s924 + $0x44] sm:$0xf]
    %v6757 = vld [vmem:[%s924 + $0x48] sm:$0xf]
    %v6758 = vld [vmem:[%s924 + $0x4c] sm:$0xf]
    %v6759 = vld [vmem:[%s924 + $0x50] sm:$0xf]
    %v6760 = vld [vmem:[%s924 + $0x54] sm:$0xf]
    %v6761 = vld [vmem:[%s924 + $0x58] sm:$0xf]
    %v6762 = vld [vmem:[%s924 + $0x5c] sm:$0xf]
    %v6763 = vld [vmem:[%s924 + $0x60] sm:$0xf]
    %v6764 = vld [vmem:[%s924 + $0x64] sm:$0xf]
    %v6765 = vld [vmem:[%s924 + $0x68] sm:$0xf]
    %v6766 = vld [vmem:[%s924 + $0x6c] sm:$0xf]
    %v6767 = vld [vmem:[%s924 + $0x70] sm:$0xf]
    %v6768 = vld [vmem:[%s924 + $0x74] sm:$0xf]
    %v6769 = vld [vmem:[%s924 + $0x78] sm:$0xf]
    %v6770 = vld [vmem:[%s924 + $0x7c] sm:$0xf]
    %v6771 = vld [vmem:[%s924 + $0x80] sm:$0xf]
    %v6772 = vld [vmem:[%s924 + $0x84] sm:$0xf]
    %v6773 = vld [vmem:[%s924 + $0x88] sm:$0xf]
    %v6774 = vld [vmem:[%s924 + $0x8c] sm:$0xf]
    %v6775 = vld [vmem:[%s924 + $0x90] sm:$0xf]
    %v6776 = vld [vmem:[%s924 + $0x94] sm:$0xf]
    %v6777 = vld [vmem:[%s924 + $0x98] sm:$0xf]
    %v6778 = vld [vmem:[%s924 + $0x9c] sm:$0xf]
    %v6779 = vld [vmem:[%s924 + $0xa0] sm:$0xf]
    %v6780 = vld [vmem:[%s924 + $0xa4] sm:$0xf]
    %v6781 = vld [vmem:[%s924 + $0xa8] sm:$0xf]
    %v6782 = vld [vmem:[%s924 + $0xac] sm:$0xf]
    %v6783 = vld [vmem:[%s924 + $0xb0] sm:$0xf]
    %v6784 = vld [vmem:[%s924 + $0xb4] sm:$0xf]
    %v6785 = vld [vmem:[%s924 + $0xb8] sm:$0xf]
    %v6786 = vld [vmem:[%s924 + $0xbc] sm:$0xf]
    %v6835 = vunpack.c.l.b16 %v6739
    %v6836 = vunpack.c.l.b16 %v6740
    %v6837 = vunpack.c.l.b16 %v6741
    %v6838 = vunpack.c.l.b16 %v6742
    %v6839 = vunpack.c.l.b16 %v6743
    %v6840 = vunpack.c.l.b16 %v6744
    %v6841 = vunpack.c.l.b16 %v6745
    %v6842 = vunpack.c.l.b16 %v6746
    %v6843 = vunpack.c.l.b16 %v6747
    %v6844 = vunpack.c.l.b16 %v6748
    %v6845 = vunpack.c.l.b16 %v6749
    %v6846 = vunpack.c.l.b16 %v6750
    %v6847 = vunpack.c.l.b16 %v6751
    %v6848 = vunpack.c.l.b16 %v6752
    %v6849 = vunpack.c.l.b16 %v6753
    %v6850 = vunpack.c.l.b16 %v6754
    %v6851 = vunpack.c.l.b16 %v6755
    %v6852 = vunpack.c.l.b16 %v6756
    %v6853 = vunpack.c.l.b16 %v6757
    %v6854 = vunpack.c.l.b16 %v6758
    %v6855 = vunpack.c.l.b16 %v6759
    %v6856 = vunpack.c.l.b16 %v6760
    %v6857 = vunpack.c.l.b16 %v6761
    %v6858 = vunpack.c.l.b16 %v6762
    %v6859 = vunpack.c.l.b16 %v6763
    %v6860 = vunpack.c.l.b16 %v6764
    %v6861 = vunpack.c.l.b16 %v6765
    %v6862 = vunpack.c.l.b16 %v6766
    %v6863 = vunpack.c.l.b16 %v6767
    %v6864 = vunpack.c.l.b16 %v6768
    %v6865 = vunpack.c.l.b16 %v6769
    %v6866 = vunpack.c.l.b16 %v6770
    %v6867 = vunpack.c.l.b16 %v6771
    %v6868 = vunpack.c.l.b16 %v6772
    %v6869 = vunpack.c.l.b16 %v6773
    %v6870 = vunpack.c.l.b16 %v6774
    %v6871 = vunpack.c.l.b16 %v6775
    %v6872 = vunpack.c.l.b16 %v6776
    %v6873 = vunpack.c.l.b16 %v6777
    %v6874 = vunpack.c.l.b16 %v6778
    %v6875 = vunpack.c.l.b16 %v6779
    %v6876 = vunpack.c.l.b16 %v6780
    %v6877 = vunpack.c.l.b16 %v6781
    %v6878 = vunpack.c.l.b16 %v6782
    %v6879 = vunpack.c.l.b16 %v6783
    %v6880 = vunpack.c.l.b16 %v6784
    %v6881 = vunpack.c.l.b16 %v6785
    %v6882 = vunpack.c.l.b16 %v6786
    %v6883 = vpack.c.b16 %v6836, %v6835
    %v6884 = vpack.c.b16 %v6838, %v6837
    %v6885 = vpack.c.b16 %v6840, %v6839
    %v6886 = vpack.c.b16 %v6842, %v6841
    %v6887 = vpack.c.b16 %v6844, %v6843
    %v6888 = vpack.c.b16 %v6846, %v6845
    %v6889 = vpack.c.b16 %v6848, %v6847
    %v6890 = vpack.c.b16 %v6850, %v6849
    %v6891 = vpack.c.b16 %v6852, %v6851
    %v6892 = vpack.c.b16 %v6854, %v6853
    %v6893 = vpack.c.b16 %v6856, %v6855
    %v6894 = vpack.c.b16 %v6858, %v6857
    %v6895 = vpack.c.b16 %v6860, %v6859
    %v6896 = vpack.c.b16 %v6862, %v6861
    %v6897 = vpack.c.b16 %v6864, %v6863
    %v6898 = vpack.c.b16 %v6866, %v6865
    %v6899 = vpack.c.b16 %v6868, %v6867
    %v6900 = vpack.c.b16 %v6870, %v6869
    %v6901 = vpack.c.b16 %v6872, %v6871
    %v6902 = vpack.c.b16 %v6874, %v6873
    %v6903 = vpack.c.b16 %v6876, %v6875
    %v6904 = vpack.c.b16 %v6878, %v6877
    %v6905 = vpack.c.b16 %v6880, %v6879
    %v6906 = vpack.c.b16 %v6882, %v6881
    %6931 = vmatprep.subr.bf16.mxu0 0
    %6932 = vmatpush1.bf16.msra.mxu0 %v6883
    %6933 = vmatprep.subr.bf16.mxu0 0
    %6934 = vmatpush1.bf16.msra.mxu0 %v6884
    %6935 = vmatprep.subr.bf16.mxu0 0
    %6936 = vmatpush1.bf16.msra.mxu0 %v6885
    %6937 = vmatprep.subr.bf16.mxu0 0
    %6938 = vmatpush1.bf16.msra.mxu0 %v6886
    %6939 = vmatprep.subr.bf16.mxu0 0
    %6940 = vmatpush1.bf16.msra.mxu0 %v6887
    %6941 = vmatprep.subr.bf16.mxu0 0
    %6942 = vmatpush1.bf16.msra.mxu0 %v6888
    %6943 = vmatprep.subr.bf16.mxu0 0
    %6944 = vmatpush1.bf16.msra.mxu0 %v6889
    %6945 = vmatprep.subr.bf16.mxu0 0
    %6946 = vmatpush1.bf16.msra.mxu0 %v6890
    %6947 = vmatprep.subr.bf16.mxu0 0
    %6948 = vmatpush1.bf16.msra.mxu0 %v6891
    %6949 = vmatprep.subr.bf16.mxu0 0
    %6950 = vmatpush1.bf16.msra.mxu0 %v6892
    %6951 = vmatprep.subr.bf16.mxu0 0
    %6952 = vmatpush1.bf16.msra.mxu0 %v6893
    %6953 = vmatprep.subr.bf16.mxu0 0
    %6954 = vmatpush1.bf16.msra.mxu0 %v6894
    %6955 = vmatprep.subr.bf16.mxu0 0
    %6956 = vmatpush1.bf16.msra.mxu0 %v6895
    %6957 = vmatprep.subr.bf16.mxu0 0
    %6958 = vmatpush1.bf16.msra.mxu0 %v6896
    %6959 = vmatprep.subr.bf16.mxu0 0
    %6960 = vmatpush1.bf16.msra.mxu0 %v6897
    %6961 = vmatprep.subr.bf16.mxu0 0
    %6962 = vmatpush1.bf16.msra.mxu0 %v6898
    %6963 = vmatprep.mubr.bf16.mxu0 %v6731
    %6964 = vmatmul.mubr.bf16.gmra.mrb[0].mxu0 %v6730
    %v6965 = vpop.f32.mrb[0].mxu0
    %v6966 = vadd.f32 0.0, %v6965
    %v6967 = vpop.f32.mrb[0].mxu0
    %v6968 = vpop.f32.mrb[0].mxu0
    %v6969 = vadd.f32 0.0, %v6968
    %v6970 = vpop.f32.mrb[0].mxu0
    %6971 = vmatprep.mubr.bf16.mxu0 %v6734
    %6972 = vmatmul.mubr.bf16.gmra.mrb[0].mxu0 %v6733
    %v6973 = vpop.f32.mrb[0].mxu0
    %v6974 = vadd.f32 0.0, %v6973
    %v6975 = vpop.f32.mrb[0].mxu0
    %v6976 = vpop.f32.mrb[0].mxu0
    %v6977 = vadd.f32 0.0, %v6976
    %v6978 = vpop.f32.mrb[0].mxu0
    %6979 = vmatprep.mubr.bf16.mxu0 %v6737
    %6980 = vmatmul.mubr.bf16.gmra.mrb[0].mxu0 %v6736
    %v6981 = vpop.f32.mrb[0].mxu0
    %v6982 = vadd.f32 0.0, %v6981
    %v6983 = vpop.f32.mrb[0].mxu0
    %v6984 = vpop.f32.mrb[0].mxu0
    %v6985 = vadd.f32 0.0, %v6984
    %v6986 = vpop.f32.mrb[0].mxu0
    %6987 = vdwg.mxu0
    %6988 = vmatprep.subr.bf16.mxu0 0
    %6989 = vmatpush1.bf16.msra.mxu0 %v6899
    %6990 = vmatprep.subr.bf16.mxu0 0
    %6991 = vmatpush1.bf16.msra.mxu0 %v6900
    %6992 = vmatprep.subr.bf16.mxu0 0
    %6993 = vmatpush1.bf16.msra.mxu0 %v6901
    %6994 = vmatprep.subr.bf16.mxu0 0
    %6995 = vmatpush1.bf16.msra.mxu0 %v6902
    %6996 = vmatprep.subr.bf16.mxu0 0
    %6997 = vmatpush1.bf16.msra.mxu0 %v6903
    %6998 = vmatprep.subr.bf16.mxu0 0
    %6999 = vmatpush1.bf16.msra.mxu0 %v6904
    %7000 = vmatprep.subr.bf16.mxu0 0
    %7001 = vmatpush1.bf16.msra.mxu0 %v6905
    %7002 = vmatprep.subr.bf16.mxu0 0
    %7003 = vmatpush1.bf16.msra.mxu0 %v6906
    %7004 = vmatprep.subr.bf16.mxu0 0
    %7005 = vmatpush1.bf16.msra.mxu0 0
    %7006 = vmatprep.subr.bf16.mxu0 0
    %7007 = vmatpush1.bf16.msra.mxu0 0
    %7008 = vmatprep.subr.bf16.mxu0 0
    %7009 = vmatpush1.bf16.msra.mxu0 0
    %7010 = vmatprep.subr.bf16.mxu0 0
    %7011 = vmatpush1.bf16.msra.mxu0 0
    %7012 = vmatprep.subr.bf16.mxu0 0
    %7013 = vmatpush1.bf16.msra.mxu0 0
    %7014 = vmatprep.subr.bf16.mxu0 0
    %7015 = vmatpush1.bf16.msra.mxu0 0
    %7016 = vmatprep.subr.bf16.mxu0 0
    %7017 = vmatpush1.bf16.msra.mxu0 0
    %7018 = vmatprep.subr.bf16.mxu0 0
    %7019 = vmatpush1.bf16.msra.mxu0 0
    %7020 = vmatprep.mubr.bf16.mxu0 0
    %7021 = vmatmul.mubr.bf16.gmra.mrb[0].mxu0 %v6732
    %v7022 = vpop.f32.mrb[0].mxu0
    %v7023 = vadd.f32 %v6966, %v7022
    %v7024 = vpop.f32.mrb[0].mxu0
    %v7025 = vpop.f32.mrb[0].mxu0
    %v7026 = vadd.f32 %v6969, %v7025
    %v7027 = vpop.f32.mrb[0].mxu0
    %7028 = vmatprep.mubr.bf16.mxu0 0
    %7029 = vmatmul.mubr.bf16.gmra.mrb[0].mxu0 %v6735
    %v7030 = vpop.f32.mrb[0].mxu0
    %v7031 = vadd.f32 %v6974, %v7030
    %v7032 = vpop.f32.mrb[0].mxu0
    %v7033 = vpop.f32.mrb[0].mxu0
    %v7034 = vadd.f32 %v6977, %v7033
    %v7035 = vpop.f32.mrb[0].mxu0
    %7036 = vmatprep.mubr.bf16.mxu0 0
    %7037 = vmatmul.mubr.bf16.gmra.mrb[0].mxu0 %v6738
    %v7038 = vpop.f32.mrb[0].mxu0
    %v7039 = vadd.f32 %v6982, %v7038
    %v7040 = vpop.f32.mrb[0].mxu0
    %v7041 = vpop.f32.mrb[0].mxu0
    %v7042 = vadd.f32 %v6985, %v7041
    %v7043 = vpop.f32.mrb[0].mxu0
    %7044 = vdwg.mxu0
    %v7045 = vadd.f32 %v7023, %v7031
    %v7046 = vadd.f32 %v7026, %v7034
    %v7047 = vadd.f32 %v7045, %v7039
    %v7048 = vadd.f32 %v7046, %v7042
    %v7049 = vmul.f32 %v7047, 0.0021978023
    %v7050 = vmul.f32 %v7048, 0.0021978023
    %7051 = vst [vmem:[#allocation3 + $0x98] sm:$0xff] %v7049
    %7052 = vst [vmem:[#allocation3 + $0x198] sm:$0xff] %v7050
    %v7053 = vld [vmem:[#allocation2 + $0xa0] sm:$0xff]
    %v7054 = vld [vmem:[#allocation2 + $0xa8] sm:$0xff]
    %v7055 = vld [vmem:[#allocation2 + $0xb0] sm:$0xff]
    %v7056 = vld [vmem:[#allocation2 + $0x1b0] sm:$0xff]
    %v7057 = vld [vmem:[#allocation2 + $0x1b8] sm:$0xff]
    %v7058 = vld [vmem:[#allocation2 + $0x1c0] sm:$0xff]
    %v7059 = vld [vmem:[#allocation2 + $0x2c0] sm:$0xff]
    %v7060 = vld [vmem:[#allocation2 + $0x2c8] sm:$0xff]
    %v7061 = vld [vmem:[#allocation2 + $0x2d0] sm:$0xff]
    %v7062 = vld [vmem:[%s924] sm:$0xf]
    %v7063 = vld [vmem:[%s924 + $0x4] sm:$0xf]
    %v7064 = vld [vmem:[%s924 + $0x8] sm:$0xf]
    %v7065 = vld [vmem:[%s924 + $0xc] sm:$0xf]
    %v7066 = vld [vmem:[%s924 + $0x10] sm:$0xf]
    %v7067 = vld [vmem:[%s924 + $0x14] sm:$0xf]
    %v7068 = vld [vmem:[%s924 + $0x18] sm:$0xf]
    %v7069 = vld [vmem:[%s924 + $0x1c] sm:$0xf]
    %v7070 = vld [vmem:[%s924 + $0x20] sm:$0xf]
    %v7071 = vld [vmem:[%s924 + $0x24] sm:$0xf]
    %v7072 = vld [vmem:[%s924 + $0x28] sm:$0xf]
    %v7073 = vld [vmem:[%s924 + $0x2c] sm:$0xf]
    %v7074 = vld [vmem:[%s924 + $0x30] sm:$0xf]
    %v7075 = vld [vmem:[%s924 + $0x34] sm:$0xf]
    %v7076 = vld [vmem:[%s924 + $0x38] sm:$0xf]
    %v7077 = vld [vmem:[%s924 + $0x3c] sm:$0xf]
    %v7078 = vld [vmem:[%s924 + $0x40] sm:$0xf]
    %v7079 = vld [vmem:[%s924 + $0x44] sm:$0xf]
    %v7080 = vld [vmem:[%s924 + $0x48] sm:$0xf]
    %v7081 = vld [vmem:[%s924 + $0x4c] sm:$0xf]
    %v7082 = vld [vmem:[%s924 + $0x50] sm:$0xf]
    %v7083 = vld [vmem:[%s924 + $0x54] sm:$0xf]
    %v7084 = vld [vmem:[%s924 + $0x58] sm:$0xf]
    %v7085 = vld [vmem:[%s924 + $0x5c] sm:$0xf]
    %v7086 = vld [vmem:[%s924 + $0x60] sm:$0xf]
    %v7087 = vld [vmem:[%s924 + $0x64] sm:$0xf]
    %v7088 = vld [vmem:[%s924 + $0x68] sm:$0xf]
    %v7089 = vld [vmem:[%s924 + $0x6c] sm:$0xf]
    %v7090 = vld [vmem:[%s924 + $0x70] sm:$0xf]
    %v7091 = vld [vmem:[%s924 + $0x74] sm:$0xf]
    %v7092 = vld [vmem:[%s924 + $0x78] sm:$0xf]
    %v7093 = vld [vmem:[%s924 + $0x7c] sm:$0xf]
    %v7094 = vld [vmem:[%s924 + $0x80] sm:$0xf]
    %v7095 = vld [vmem:[%s924 + $0x84] sm:$0xf]
    %v7096 = vld [vmem:[%s924 + $0x88] sm:$0xf]
    %v7097 = vld [vmem:[%s924 + $0x8c] sm:$0xf]
    %v7098 = vld [vmem:[%s924 + $0x90] sm:$0xf]
    %v7099 = vld [vmem:[%s924 + $0x94] sm:$0xf]
    %v7100 = vld [vmem:[%s924 + $0x98] sm:$0xf]
    %v7101 = vld [vmem:[%s924 + $0x9c] sm:$0xf]
    %v7102 = vld [vmem:[%s924 + $0xa0] sm:$0xf]
    %v7103 = vld [vmem:[%s924 + $0xa4] sm:$0xf]
    %v7104 = vld [vmem:[%s924 + $0xa8] sm:$0xf]
    %v7105 = vld [vmem:[%s924 + $0xac] sm:$0xf]
    %v7106 = vld [vmem:[%s924 + $0xb0] sm:$0xf]
    %v7107 = vld [vmem:[%s924 + $0xb4] sm:$0xf]
    %v7108 = vld [vmem:[%s924 + $0xb8] sm:$0xf]
    %v7109 = vld [vmem:[%s924 + $0xbc] sm:$0xf]
    %v7158 = vunpack.c.l.b16 %v7062
    %v7159 = vunpack.c.l.b16 %v7063
    %v7160 = vunpack.c.l.b16 %v7064
    %v7161 = vunpack.c.l.b16 %v7065
    %v7162 = vunpack.c.l.b16 %v7066
    %v7163 = vunpack.c.l.b16 %v7067
    %v7164 = vunpack.c.l.b16 %v7068
    %v7165 = vunpack.c.l.b16 %v7069
    %v7166 = vunpack.c.l.b16 %v7070
    %v7167 = vunpack.c.l.b16 %v7071
    %v7168 = vunpack.c.l.b16 %v7072
    %v7169 = vunpack.c.l.b16 %v7073
    %v7170 = vunpack.c.l.b16 %v7074
    %v7171 = vunpack.c.l.b16 %v7075
    %v7172 = vunpack.c.l.b16 %v7076
    %v7173 = vunpack.c.l.b16 %v7077
    %v7174 = vunpack.c.l.b16 %v7078
    %v7175 = vunpack.c.l.b16 %v7079
    %v7176 = vunpack.c.l.b16 %v7080
    %v7177 = vunpack.c.l.b16 %v7081
    %v7178 = vunpack.c.l.b16 %v7082
    %v7179 = vunpack.c.l.b16 %v7083
    %v7180 = vunpack.c.l.b16 %v7084
    %v7181 = vunpack.c.l.b16 %v7085
    %v7182 = vunpack.c.l.b16 %v7086
    %v7183 = vunpack.c.l.b16 %v7087
    %v7184 = vunpack.c.l.b16 %v7088
    %v7185 = vunpack.c.l.b16 %v7089
    %v7186 = vunpack.c.l.b16 %v7090
    %v7187 = vunpack.c.l.b16 %v7091
    %v7188 = vunpack.c.l.b16 %v7092
    %v7189 = vunpack.c.l.b16 %v7093
    %v7190 = vunpack.c.l.b16 %v7094
    %v7191 = vunpack.c.l.b16 %v7095
    %v7192 = vunpack.c.l.b16 %v7096
    %v7193 = vunpack.c.l.b16 %v7097
    %v7194 = vunpack.c.l.b16 %v7098
    %v7195 = vunpack.c.l.b16 %v7099
    %v7196 = vunpack.c.l.b16 %v7100
    %v7197 = vunpack.c.l.b16 %v7101
    %v7198 = vunpack.c.l.b16 %v7102
    %v7199 = vunpack.c.l.b16 %v7103
    %v7200 = vunpack.c.l.b16 %v7104
    %v7201 = vunpack.c.l.b16 %v7105
    %v7202 = vunpack.c.l.b16 %v7106
    %v7203 = vunpack.c.l.b16 %v7107
    %v7204 = vunpack.c.l.b16 %v7108
    %v7205 = vunpack.c.l.b16 %v7109
    %v7206 = vpack.c.b16 %v7159, %v7158
    %v7207 = vpack.c.b16 %v7161, %v7160
    %v7208 = vpack.c.b16 %v7163, %v7162
    %v7209 = vpack.c.b16 %v7165, %v7164
    %v7210 = vpack.c.b16 %v7167, %v7166
    %v7211 = vpack.c.b16 %v7169, %v7168
    %v7212 = vpack.c.b16 %v7171, %v7170
    %v7213 = vpack.c.b16 %v7173, %v7172
    %v7214 = vpack.c.b16 %v7175, %v7174
    %v7215 = vpack.c.b16 %v7177, %v7176
    %v7216 = vpack.c.b16 %v7179, %v7178
    %v7217 = vpack.c.b16 %v7181, %v7180
    %v7218 = vpack.c.b16 %v7183, %v7182
    %v7219 = vpack.c.b16 %v7185, %v7184
    %v7220 = vpack.c.b16 %v7187, %v7186
    %v7221 = vpack.c.b16 %v7189, %v7188
    %v7222 = vpack.c.b16 %v7191, %v7190
    %v7223 = vpack.c.b16 %v7193, %v7192
    %v7224 = vpack.c.b16 %v7195, %v7194
    %v7225 = vpack.c.b16 %v7197, %v7196
    %v7226 = vpack.c.b16 %v7199, %v7198
    %v7227 = vpack.c.b16 %v7201, %v7200
    %v7228 = vpack.c.b16 %v7203, %v7202
    %v7229 = vpack.c.b16 %v7205, %v7204
    %7254 = vmatprep.subr.bf16.mxu0 0
    %7255 = vmatpush1.bf16.msra.mxu0 %v7206
    %7256 = vmatprep.subr.bf16.mxu0 0
    %7257 = vmatpush1.bf16.msra.mxu0 %v7207
    %7258 = vmatprep.subr.bf16.mxu0 0
    %7259 = vmatpush1.bf16.msra.mxu0 %v7208
    %7260 = vmatprep.subr.bf16.mxu0 0
    %7261 = vmatpush1.bf16.msra.mxu0 %v7209
    %7262 = vmatprep.subr.bf16.mxu0 0
    %7263 = vmatpush1.bf16.msra.mxu0 %v7210
    %7264 = vmatprep.subr.bf16.mxu0 0
    %7265 = vmatpush1.bf16.msra.mxu0 %v7211
    %7266 = vmatprep.subr.bf16.mxu0 0
    %7267 = vmatpush1.bf16.msra.mxu0 %v7212
    %7268 = vmatprep.subr.bf16.mxu0 0
    %7269 = vmatpush1.bf16.msra.mxu0 %v7213
    %7270 = vmatprep.subr.bf16.mxu0 0
    %7271 = vmatpush1.bf16.msra.mxu0 %v7214
    %7272 = vmatprep.subr.bf16.mxu0 0
    %7273 = vmatpush1.bf16.msra.mxu0 %v7215
    %7274 = vmatprep.subr.bf16.mxu0 0
    %7275 = vmatpush1.bf16.msra.mxu0 %v7216
    %7276 = vmatprep.subr.bf16.mxu0 0
    %7277 = vmatpush1.bf16.msra.mxu0 %v7217
    %7278 = vmatprep.subr.bf16.mxu0 0
    %7279 = vmatpush1.bf16.msra.mxu0 %v7218
    %7280 = vmatprep.subr.bf16.mxu0 0
    %7281 = vmatpush1.bf16.msra.mxu0 %v7219
    %7282 = vmatprep.subr.bf16.mxu0 0
    %7283 = vmatpush1.bf16.msra.mxu0 %v7220
    %7284 = vmatprep.subr.bf16.mxu0 0
    %7285 = vmatpush1.bf16.msra.mxu0 %v7221
    %7286 = vmatprep.mubr.bf16.mxu0 %v7054
    %7287 = vmatmul.mubr.bf16.gmra.mrb[0].mxu0 %v7053
    %v7288 = vpop.f32.mrb[0].mxu0
    %v7289 = vadd.f32 0.0, %v7288
    %v7290 = vpop.f32.mrb[0].mxu0
    %v7291 = vpop.f32.mrb[0].mxu0
    %v7292 = vadd.f32 0.0, %v7291
    %v7293 = vpop.f32.mrb[0].mxu0
    %7294 = vmatprep.mubr.bf16.mxu0 %v7057
    %7295 = vmatmul.mubr.bf16.gmra.mrb[0].mxu0 %v7056
    %v7296 = vpop.f32.mrb[0].mxu0
    %v7297 = vadd.f32 0.0, %v7296
    %v7298 = vpop.f32.mrb[0].mxu0
    %v7299 = vpop.f32.mrb[0].mxu0
    %v7300 = vadd.f32 0.0, %v7299
    %v7301 = vpop.f32.mrb[0].mxu0
    %7302 = vmatprep.mubr.bf16.mxu0 %v7060
    %7303 = vmatmul.mubr.bf16.gmra.mrb[0].mxu0 %v7059
    %v7304 = vpop.f32.mrb[0].mxu0
    %v7305 = vadd.f32 0.0, %v7304
    %v7306 = vpop.f32.mrb[0].mxu0
    %v7307 = vpop.f32.mrb[0].mxu0
    %v7308 = vadd.f32 0.0, %v7307
    %v7309 = vpop.f32.mrb[0].mxu0
    %7310 = vdwg.mxu0
    %7311 = vmatprep.subr.bf16.mxu0 0
    %7312 = vmatpush1.bf16.msra.mxu0 %v7222
    %7313 = vmatprep.subr.bf16.mxu0 0
    %7314 = vmatpush1.bf16.msra.mxu0 %v7223
    %7315 = vmatprep.subr.bf16.mxu0 0
    %7316 = vmatpush1.bf16.msra.mxu0 %v7224
    %7317 = vmatprep.subr.bf16.mxu0 0
    %7318 = vmatpush1.bf16.msra.mxu0 %v7225
    %7319 = vmatprep.subr.bf16.mxu0 0
    %7320 = vmatpush1.bf16.msra.mxu0 %v7226
    %7321 = vmatprep.subr.bf16.mxu0 0
    %7322 = vmatpush1.bf16.msra.mxu0 %v7227
    %7323 = vmatprep.subr.bf16.mxu0 0
    %7324 = vmatpush1.bf16.msra.mxu0 %v7228
    %7325 = vmatprep.subr.bf16.mxu0 0
    %7326 = vmatpush1.bf16.msra.mxu0 %v7229
    %7327 = vmatprep.subr.bf16.mxu0 0
    %7328 = vmatpush1.bf16.msra.mxu0 0
    %7329 = vmatprep.subr.bf16.mxu0 0
    %7330 = vmatpush1.bf16.msra.mxu0 0
    %7331 = vmatprep.subr.bf16.mxu0 0
    %7332 = vmatpush1.bf16.msra.mxu0 0
    %7333 = vmatprep.subr.bf16.mxu0 0
    %7334 = vmatpush1.bf16.msra.mxu0 0
    %7335 = vmatprep.subr.bf16.mxu0 0
    %7336 = vmatpush1.bf16.msra.mxu0 0
    %7337 = vmatprep.subr.bf16.mxu0 0
    %7338 = vmatpush1.bf16.msra.mxu0 0
    %7339 = vmatprep.subr.bf16.mxu0 0
    %7340 = vmatpush1.bf16.msra.mxu0 0
    %7341 = vmatprep.subr.bf16.mxu0 0
    %7342 = vmatpush1.bf16.msra.mxu0 0
    %7343 = vmatprep.mubr.bf16.mxu0 0
    %7344 = vmatmul.mubr.bf16.gmra.mrb[0].mxu0 %v7055
    %v7345 = vpop.f32.mrb[0].mxu0
    %v7346 = vadd.f32 %v7289, %v7345
    %v7347 = vpop.f32.mrb[0].mxu0
    %v7348 = vpop.f32.mrb[0].mxu0
    %v7349 = vadd.f32 %v7292, %v7348
    %v7350 = vpop.f32.mrb[0].mxu0
    %7351 = vmatprep.mubr.bf16.mxu0 0
    %7352 = vmatmul.mubr.bf16.gmra.mrb[0].mxu0 %v7058
    %v7353 = vpop.f32.mrb[0].mxu0
    %v7354 = vadd.f32 %v7297, %v7353
    %v7355 = vpop.f32.mrb[0].mxu0
    %v7356 = vpop.f32.mrb[0].mxu0
    %v7357 = vadd.f32 %v7300, %v7356
    %v7358 = vpop.f32.mrb[0].mxu0
    %7359 = vmatprep.mubr.bf16.mxu0 0
    %7360 = vmatmul.mubr.bf16.gmra.mrb[0].mxu0 %v7061
    %v7361 = vpop.f32.mrb[0].mxu0
    %v7362 = vadd.f32 %v7305, %v7361
    %v7363 = vpop.f32.mrb[0].mxu0
    %v7364 = vpop.f32.mrb[0].mxu0
    %v7365 = vadd.f32 %v7308, %v7364
    %v7366 = vpop.f32.mrb[0].mxu0
    %7367 = vdwg.mxu0
    %v7368 = vadd.f32 %v7346, %v7354
    %v7369 = vadd.f32 %v7349, %v7357
    %v7370 = vadd.f32 %v7368, %v7362
    %v7371 = vadd.f32 %v7369, %v7365
    %v7372 = vmul.f32 %v7370, 0.0021978023
    %v7373 = vmul.f32 %v7371, 0.0021978023
    %7374 = vst [vmem:[#allocation3 + $0xa0] sm:$0xff] %v7372
    %7375 = vst [vmem:[#allocation3 + $0x1a0] sm:$0xff] %v7373
    %v7376 = vld [vmem:[#allocation2 + $0xa8] sm:$0xff]
    %v7377 = vld [vmem:[#allocation2 + $0xb0] sm:$0xff]
    %v7378 = vld [vmem:[#allocation2 + $0xb8] sm:$0xff]
    %v7379 = vld [vmem:[#allocation2 + $0x1b8] sm:$0xff]
    %v7380 = vld [vmem:[#allocation2 + $0x1c0] sm:$0xff]
    %v7381 = vld [vmem:[#allocation2 + $0x1c8] sm:$0xff]
    %v7382 = vld [vmem:[#allocation2 + $0x2c8] sm:$0xff]
    %v7383 = vld [vmem:[#allocation2 + $0x2d0] sm:$0xff]
    %v7384 = vld [vmem:[#allocation2 + $0x2d8] sm:$0xff]
    %v7385 = vld [vmem:[%s924] sm:$0xf]
    %v7386 = vld [vmem:[%s924 + $0x4] sm:$0xf]
    %v7387 = vld [vmem:[%s924 + $0x8] sm:$0xf]
    %v7388 = vld [vmem:[%s924 + $0xc] sm:$0xf]
    %v7389 = vld [vmem:[%s924 + $0x10] sm:$0xf]
    %v7390 = vld [vmem:[%s924 + $0x14] sm:$0xf]
    %v7391 = vld [vmem:[%s924 + $0x18] sm:$0xf]
    %v7392 = vld [vmem:[%s924 + $0x1c] sm:$0xf]
    %v7393 = vld [vmem:[%s924 + $0x20] sm:$0xf]
    %v7394 = vld [vmem:[%s924 + $0x24] sm:$0xf]
    %v7395 = vld [vmem:[%s924 + $0x28] sm:$0xf]
    %v7396 = vld [vmem:[%s924 + $0x2c] sm:$0xf]
    %v7397 = vld [vmem:[%s924 + $0x30] sm:$0xf]
    %v7398 = vld [vmem:[%s924 + $0x34] sm:$0xf]
    %v7399 = vld [vmem:[%s924 + $0x38] sm:$0xf]
    %v7400 = vld [vmem:[%s924 + $0x3c] sm:$0xf]
    %v7401 = vld [vmem:[%s924 + $0x40] sm:$0xf]
    %v7402 = vld [vmem:[%s924 + $0x44] sm:$0xf]
    %v7403 = vld [vmem:[%s924 + $0x48] sm:$0xf]
    %v7404 = vld [vmem:[%s924 + $0x4c] sm:$0xf]
    %v7405 = vld [vmem:[%s924 + $0x50] sm:$0xf]
    %v7406 = vld [vmem:[%s924 + $0x54] sm:$0xf]
    %v7407 = vld [vmem:[%s924 + $0x58] sm:$0xf]
    %v7408 = vld [vmem:[%s924 + $0x5c] sm:$0xf]
    %v7409 = vld [vmem:[%s924 + $0x60] sm:$0xf]
    %v7410 = vld [vmem:[%s924 + $0x64] sm:$0xf]
    %v7411 = vld [vmem:[%s924 + $0x68] sm:$0xf]
    %v7412 = vld [vmem:[%s924 + $0x6c] sm:$0xf]
    %v7413 = vld [vmem:[%s924 + $0x70] sm:$0xf]
    %v7414 = vld [vmem:[%s924 + $0x74] sm:$0xf]
    %v7415 = vld [vmem:[%s924 + $0x78] sm:$0xf]
    %v7416 = vld [vmem:[%s924 + $0x7c] sm:$0xf]
    %v7417 = vld [vmem:[%s924 + $0x80] sm:$0xf]
    %v7418 = vld [vmem:[%s924 + $0x84] sm:$0xf]
    %v7419 = vld [vmem:[%s924 + $0x88] sm:$0xf]
    %v7420 = vld [vmem:[%s924 + $0x8c] sm:$0xf]
    %v7421 = vld [vmem:[%s924 + $0x90] sm:$0xf]
    %v7422 = vld [vmem:[%s924 + $0x94] sm:$0xf]
    %v7423 = vld [vmem:[%s924 + $0x98] sm:$0xf]
    %v7424 = vld [vmem:[%s924 + $0x9c] sm:$0xf]
    %v7425 = vld [vmem:[%s924 + $0xa0] sm:$0xf]
    %v7426 = vld [vmem:[%s924 + $0xa4] sm:$0xf]
    %v7427 = vld [vmem:[%s924 + $0xa8] sm:$0xf]
    %v7428 = vld [vmem:[%s924 + $0xac] sm:$0xf]
    %v7429 = vld [vmem:[%s924 + $0xb0] sm:$0xf]
    %v7430 = vld [vmem:[%s924 + $0xb4] sm:$0xf]
    %v7431 = vld [vmem:[%s924 + $0xb8] sm:$0xf]
    %v7432 = vld [vmem:[%s924 + $0xbc] sm:$0xf]
    %v7481 = vunpack.c.l.b16 %v7385
    %v7482 = vunpack.c.l.b16 %v7386
    %v7483 = vunpack.c.l.b16 %v7387
    %v7484 = vunpack.c.l.b16 %v7388
    %v7485 = vunpack.c.l.b16 %v7389
    %v7486 = vunpack.c.l.b16 %v7390
    %v7487 = vunpack.c.l.b16 %v7391
    %v7488 = vunpack.c.l.b16 %v7392
    %v7489 = vunpack.c.l.b16 %v7393
    %v7490 = vunpack.c.l.b16 %v7394
    %v7491 = vunpack.c.l.b16 %v7395
    %v7492 = vunpack.c.l.b16 %v7396
    %v7493 = vunpack.c.l.b16 %v7397
    %v7494 = vunpack.c.l.b16 %v7398
    %v7495 = vunpack.c.l.b16 %v7399
    %v7496 = vunpack.c.l.b16 %v7400
    %v7497 = vunpack.c.l.b16 %v7401
    %v7498 = vunpack.c.l.b16 %v7402
    %v7499 = vunpack.c.l.b16 %v7403
    %v7500 = vunpack.c.l.b16 %v7404
    %v7501 = vunpack.c.l.b16 %v7405
    %v7502 = vunpack.c.l.b16 %v7406
    %v7503 = vunpack.c.l.b16 %v7407
    %v7504 = vunpack.c.l.b16 %v7408
    %v7505 = vunpack.c.l.b16 %v7409
    %v7506 = vunpack.c.l.b16 %v7410
    %v7507 = vunpack.c.l.b16 %v7411
    %v7508 = vunpack.c.l.b16 %v7412
    %v7509 = vunpack.c.l.b16 %v7413
    %v7510 = vunpack.c.l.b16 %v7414
    %v7511 = vunpack.c.l.b16 %v7415
    %v7512 = vunpack.c.l.b16 %v7416
    %v7513 = vunpack.c.l.b16 %v7417
    %v7514 = vunpack.c.l.b16 %v7418
    %v7515 = vunpack.c.l.b16 %v7419
    %v7516 = vunpack.c.l.b16 %v7420
    %v7517 = vunpack.c.l.b16 %v7421
    %v7518 = vunpack.c.l.b16 %v7422
    %v7519 = vunpack.c.l.b16 %v7423
    %v7520 = vunpack.c.l.b16 %v7424
    %v7521 = vunpack.c.l.b16 %v7425
    %v7522 = vunpack.c.l.b16 %v7426
    %v7523 = vunpack.c.l.b16 %v7427
    %v7524 = vunpack.c.l.b16 %v7428
    %v7525 = vunpack.c.l.b16 %v7429
    %v7526 = vunpack.c.l.b16 %v7430
    %v7527 = vunpack.c.l.b16 %v7431
    %v7528 = vunpack.c.l.b16 %v7432
    %v7529 = vpack.c.b16 %v7482, %v7481
    %v7530 = vpack.c.b16 %v7484, %v7483
    %v7531 = vpack.c.b16 %v7486, %v7485
    %v7532 = vpack.c.b16 %v7488, %v7487
    %v7533 = vpack.c.b16 %v7490, %v7489
    %v7534 = vpack.c.b16 %v7492, %v7491
    %v7535 = vpack.c.b16 %v7494, %v7493
    %v7536 = vpack.c.b16 %v7496, %v7495
    %v7537 = vpack.c.b16 %v7498, %v7497
    %v7538 = vpack.c.b16 %v7500, %v7499
    %v7539 = vpack.c.b16 %v7502, %v7501
    %v7540 = vpack.c.b16 %v7504, %v7503
    %v7541 = vpack.c.b16 %v7506, %v7505
    %v7542 = vpack.c.b16 %v7508, %v7507
    %v7543 = vpack.c.b16 %v7510, %v7509
    %v7544 = vpack.c.b16 %v7512, %v7511
    %v7545 = vpack.c.b16 %v7514, %v7513
    %v7546 = vpack.c.b16 %v7516, %v7515
    %v7547 = vpack.c.b16 %v7518, %v7517
    %v7548 = vpack.c.b16 %v7520, %v7519
    %v7549 = vpack.c.b16 %v7522, %v7521
    %v7550 = vpack.c.b16 %v7524, %v7523
    %v7551 = vpack.c.b16 %v7526, %v7525
    %v7552 = vpack.c.b16 %v7528, %v7527
    %7577 = vmatprep.subr.bf16.mxu0 0
    %7578 = vmatpush1.bf16.msra.mxu0 %v7529
    %7579 = vmatprep.subr.bf16.mxu0 0
    %7580 = vmatpush1.bf16.msra.mxu0 %v7530
    %7581 = vmatprep.subr.bf16.mxu0 0
    %7582 = vmatpush1.bf16.msra.mxu0 %v7531
    %7583 = vmatprep.subr.bf16.mxu0 0
    %7584 = vmatpush1.bf16.msra.mxu0 %v7532
    %7585 = vmatprep.subr.bf16.mxu0 0
    %7586 = vmatpush1.bf16.msra.mxu0 %v7533
    %7587 = vmatprep.subr.bf16.mxu0 0
    %7588 = vmatpush1.bf16.msra.mxu0 %v7534
    %7589 = vmatprep.subr.bf16.mxu0 0
    %7590 = vmatpush1.bf16.msra.mxu0 %v7535
    %7591 = vmatprep.subr.bf16.mxu0 0
    %7592 = vmatpush1.bf16.msra.mxu0 %v7536
    %7593 = vmatprep.subr.bf16.mxu0 0
    %7594 = vmatpush1.bf16.msra.mxu0 %v7537
    %7595 = vmatprep.subr.bf16.mxu0 0
    %7596 = vmatpush1.bf16.msra.mxu0 %v7538
    %7597 = vmatprep.subr.bf16.mxu0 0
    %7598 = vmatpush1.bf16.msra.mxu0 %v7539
    %7599 = vmatprep.subr.bf16.mxu0 0
    %7600 = vmatpush1.bf16.msra.mxu0 %v7540
    %7601 = vmatprep.subr.bf16.mxu0 0
    %7602 = vmatpush1.bf16.msra.mxu0 %v7541
    %7603 = vmatprep.subr.bf16.mxu0 0
    %7604 = vmatpush1.bf16.msra.mxu0 %v7542
    %7605 = vmatprep.subr.bf16.mxu0 0
    %7606 = vmatpush1.bf16.msra.mxu0 %v7543
    %7607 = vmatprep.subr.bf16.mxu0 0
    %7608 = vmatpush1.bf16.msra.mxu0 %v7544
    %7609 = vmatprep.mubr.bf16.mxu0 %v7377
    %7610 = vmatmul.mubr.bf16.gmra.mrb[0].mxu0 %v7376
    %v7611 = vpop.f32.mrb[0].mxu0
    %v7612 = vadd.f32 0.0, %v7611
    %v7613 = vpop.f32.mrb[0].mxu0
    %v7614 = vpop.f32.mrb[0].mxu0
    %v7615 = vadd.f32 0.0, %v7614
    %v7616 = vpop.f32.mrb[0].mxu0
    %7617 = vmatprep.mubr.bf16.mxu0 %v7380
    %7618 = vmatmul.mubr.bf16.gmra.mrb[0].mxu0 %v7379
    %v7619 = vpop.f32.mrb[0].mxu0
    %v7620 = vadd.f32 0.0, %v7619
    %v7621 = vpop.f32.mrb[0].mxu0
    %v7622 = vpop.f32.mrb[0].mxu0
    %v7623 = vadd.f32 0.0, %v7622
    %v7624 = vpop.f32.mrb[0].mxu0
    %7625 = vmatprep.mubr.bf16.mxu0 %v7383
    %7626 = vmatmul.mubr.bf16.gmra.mrb[0].mxu0 %v7382
    %v7627 = vpop.f32.mrb[0].mxu0
    %v7628 = vadd.f32 0.0, %v7627
    %v7629 = vpop.f32.mrb[0].mxu0
    %v7630 = vpop.f32.mrb[0].mxu0
    %v7631 = vadd.f32 0.0, %v7630
    %v7632 = vpop.f32.mrb[0].mxu0
    %7633 = vdwg.mxu0
    %7634 = vmatprep.subr.bf16.mxu0 0
    %7635 = vmatpush1.bf16.msra.mxu0 %v7545
    %7636 = vmatprep.subr.bf16.mxu0 0
    %7637 = vmatpush1.bf16.msra.mxu0 %v7546
    %7638 = vmatprep.subr.bf16.mxu0 0
    %7639 = vmatpush1.bf16.msra.mxu0 %v7547
    %7640 = vmatprep.subr.bf16.mxu0 0
    %7641 = vmatpush1.bf16.msra.mxu0 %v7548
    %7642 = vmatprep.subr.bf16.mxu0 0
    %7643 = vmatpush1.bf16.msra.mxu0 %v7549
    %7644 = vmatprep.subr.bf16.mxu0 0
    %7645 = vmatpush1.bf16.msra.mxu0 %v7550
    %7646 = vmatprep.subr.bf16.mxu0 0
    %7647 = vmatpush1.bf16.msra.mxu0 %v7551
    %7648 = vmatprep.subr.bf16.mxu0 0
    %7649 = vmatpush1.bf16.msra.mxu0 %v7552
    %7650 = vmatprep.subr.bf16.mxu0 0
    %7651 = vmatpush1.bf16.msra.mxu0 0
    %7652 = vmatprep.subr.bf16.mxu0 0
    %7653 = vmatpush1.bf16.msra.mxu0 0
    %7654 = vmatprep.subr.bf16.mxu0 0
    %7655 = vmatpush1.bf16.msra.mxu0 0
    %7656 = vmatprep.subr.bf16.mxu0 0
    %7657 = vmatpush1.bf16.msra.mxu0 0
    %7658 = vmatprep.subr.bf16.mxu0 0
    %7659 = vmatpush1.bf16.msra.mxu0 0
    %7660 = vmatprep.subr.bf16.mxu0 0
    %7661 = vmatpush1.bf16.msra.mxu0 0
    %7662 = vmatprep.subr.bf16.mxu0 0
    %7663 = vmatpush1.bf16.msra.mxu0 0
    %7664 = vmatprep.subr.bf16.mxu0 0
    %7665 = vmatpush1.bf16.msra.mxu0 0
    %7666 = vmatprep.mubr.bf16.mxu0 0
    %7667 = vmatmul.mubr.bf16.gmra.mrb[0].mxu0 %v7378
    %v7668 = vpop.f32.mrb[0].mxu0
    %v7669 = vadd.f32 %v7612, %v7668
    %v7670 = vpop.f32.mrb[0].mxu0
    %v7671 = vpop.f32.mrb[0].mxu0
    %v7672 = vadd.f32 %v7615, %v7671
    %v7673 = vpop.f32.mrb[0].mxu0
    %7674 = vmatprep.mubr.bf16.mxu0 0
    %7675 = vmatmul.mubr.bf16.gmra.mrb[0].mxu0 %v7381
    %v7676 = vpop.f32.mrb[0].mxu0
    %v7677 = vadd.f32 %v7620, %v7676
    %v7678 = vpop.f32.mrb[0].mxu0
    %v7679 = vpop.f32.mrb[0].mxu0
    %v7680 = vadd.f32 %v7623, %v7679
    %v7681 = vpop.f32.mrb[0].mxu0
    %7682 = vmatprep.mubr.bf16.mxu0 0
    %7683 = vmatmul.mubr.bf16.gmra.mrb[0].mxu0 %v7384
    %v7684 = vpop.f32.mrb[0].mxu0
    %v7685 = vadd.f32 %v7628, %v7684
    %v7686 = vpop.f32.mrb[0].mxu0
    %v7687 = vpop.f32.mrb[0].mxu0
    %v7688 = vadd.f32 %v7631, %v7687
    %v7689 = vpop.f32.mrb[0].mxu0
    %7690 = vdwg.mxu0
    %v7691 = vadd.f32 %v7669, %v7677
    %v7692 = vadd.f32 %v7672, %v7680
    %v7693 = vadd.f32 %v7691, %v7685
    %v7694 = vadd.f32 %v7692, %v7688
    %v7695 = vmul.f32 %v7693, 0.0021978023
    %v7696 = vmul.f32 %v7694, 0.0021978023
    %7697 = vst [vmem:[#allocation3 + $0xa8] sm:$0xff] %v7695
    %7698 = vst [vmem:[#allocation3 + $0x1a8] sm:$0xff] %v7696
    %v7699 = vld [vmem:[#allocation2 + $0xb0] sm:$0xff]
    %v7700 = vld [vmem:[#allocation2 + $0xb8] sm:$0xff]
    %v7701 = vld [vmem:[#allocation2 + $0xc0] sm:$0xff]
    %v7702 = vld [vmem:[#allocation2 + $0x1c0] sm:$0xff]
    %v7703 = vld [vmem:[#allocation2 + $0x1c8] sm:$0xff]
    %v7704 = vld [vmem:[#allocation2 + $0x1d0] sm:$0xff]
    %v7705 = vld [vmem:[#allocation2 + $0x2d0] sm:$0xff]
    %v7706 = vld [vmem:[#allocation2 + $0x2d8] sm:$0xff]
    %v7707 = vld [vmem:[#allocation2 + $0x2e0] sm:$0xff]
    %v7708 = vld [vmem:[%s924] sm:$0xf]
    %v7709 = vld [vmem:[%s924 + $0x4] sm:$0xf]
    %v7710 = vld [vmem:[%s924 + $0x8] sm:$0xf]
    %v7711 = vld [vmem:[%s924 + $0xc] sm:$0xf]
    %v7712 = vld [vmem:[%s924 + $0x10] sm:$0xf]
    %v7713 = vld [vmem:[%s924 + $0x14] sm:$0xf]
    %v7714 = vld [vmem:[%s924 + $0x18] sm:$0xf]
    %v7715 = vld [vmem:[%s924 + $0x1c] sm:$0xf]
    %v7716 = vld [vmem:[%s924 + $0x20] sm:$0xf]
    %v7717 = vld [vmem:[%s924 + $0x24] sm:$0xf]
    %v7718 = vld [vmem:[%s924 + $0x28] sm:$0xf]
    %v7719 = vld [vmem:[%s924 + $0x2c] sm:$0xf]
    %v7720 = vld [vmem:[%s924 + $0x30] sm:$0xf]
    %v7721 = vld [vmem:[%s924 + $0x34] sm:$0xf]
    %v7722 = vld [vmem:[%s924 + $0x38] sm:$0xf]
    %v7723 = vld [vmem:[%s924 + $0x3c] sm:$0xf]
    %v7724 = vld [vmem:[%s924 + $0x40] sm:$0xf]
    %v7725 = vld [vmem:[%s924 + $0x44] sm:$0xf]
    %v7726 = vld [vmem:[%s924 + $0x48] sm:$0xf]
    %v7727 = vld [vmem:[%s924 + $0x4c] sm:$0xf]
    %v7728 = vld [vmem:[%s924 + $0x50] sm:$0xf]
    %v7729 = vld [vmem:[%s924 + $0x54] sm:$0xf]
    %v7730 = vld [vmem:[%s924 + $0x58] sm:$0xf]
    %v7731 = vld [vmem:[%s924 + $0x5c] sm:$0xf]
    %v7732 = vld [vmem:[%s924 + $0x60] sm:$0xf]
    %v7733 = vld [vmem:[%s924 + $0x64] sm:$0xf]
    %v7734 = vld [vmem:[%s924 + $0x68] sm:$0xf]
    %v7735 = vld [vmem:[%s924 + $0x6c] sm:$0xf]
    %v7736 = vld [vmem:[%s924 + $0x70] sm:$0xf]
    %v7737 = vld [vmem:[%s924 + $0x74] sm:$0xf]
    %v7738 = vld [vmem:[%s924 + $0x78] sm:$0xf]
    %v7739 = vld [vmem:[%s924 + $0x7c] sm:$0xf]
    %v7740 = vld [vmem:[%s924 + $0x80] sm:$0xf]
    %v7741 = vld [vmem:[%s924 + $0x84] sm:$0xf]
    %v7742 = vld [vmem:[%s924 + $0x88] sm:$0xf]
    %v7743 = vld [vmem:[%s924 + $0x8c] sm:$0xf]
    %v7744 = vld [vmem:[%s924 + $0x90] sm:$0xf]
    %v7745 = vld [vmem:[%s924 + $0x94] sm:$0xf]
    %v7746 = vld [vmem:[%s924 + $0x98] sm:$0xf]
    %v7747 = vld [vmem:[%s924 + $0x9c] sm:$0xf]
    %v7748 = vld [vmem:[%s924 + $0xa0] sm:$0xf]
    %v7749 = vld [vmem:[%s924 + $0xa4] sm:$0xf]
    %v7750 = vld [vmem:[%s924 + $0xa8] sm:$0xf]
    %v7751 = vld [vmem:[%s924 + $0xac] sm:$0xf]
    %v7752 = vld [vmem:[%s924 + $0xb0] sm:$0xf]
    %v7753 = vld [vmem:[%s924 + $0xb4] sm:$0xf]
    %v7754 = vld [vmem:[%s924 + $0xb8] sm:$0xf]
    %v7755 = vld [vmem:[%s924 + $0xbc] sm:$0xf]
    %v7804 = vunpack.c.l.b16 %v7708
    %v7805 = vunpack.c.l.b16 %v7709
    %v7806 = vunpack.c.l.b16 %v7710
    %v7807 = vunpack.c.l.b16 %v7711
    %v7808 = vunpack.c.l.b16 %v7712
    %v7809 = vunpack.c.l.b16 %v7713
    %v7810 = vunpack.c.l.b16 %v7714
    %v7811 = vunpack.c.l.b16 %v7715
    %v7812 = vunpack.c.l.b16 %v7716
    %v7813 = vunpack.c.l.b16 %v7717
    %v7814 = vunpack.c.l.b16 %v7718
    %v7815 = vunpack.c.l.b16 %v7719
    %v7816 = vunpack.c.l.b16 %v7720
    %v7817 = vunpack.c.l.b16 %v7721
    %v7818 = vunpack.c.l.b16 %v7722
    %v7819 = vunpack.c.l.b16 %v7723
    %v7820 = vunpack.c.l.b16 %v7724
    %v7821 = vunpack.c.l.b16 %v7725
    %v7822 = vunpack.c.l.b16 %v7726
    %v7823 = vunpack.c.l.b16 %v7727
    %v7824 = vunpack.c.l.b16 %v7728
    %v7825 = vunpack.c.l.b16 %v7729
    %v7826 = vunpack.c.l.b16 %v7730
    %v7827 = vunpack.c.l.b16 %v7731
    %v7828 = vunpack.c.l.b16 %v7732
    %v7829 = vunpack.c.l.b16 %v7733
    %v7830 = vunpack.c.l.b16 %v7734
    %v7831 = vunpack.c.l.b16 %v7735
    %v7832 = vunpack.c.l.b16 %v7736
    %v7833 = vunpack.c.l.b16 %v7737
    %v7834 = vunpack.c.l.b16 %v7738
    %v7835 = vunpack.c.l.b16 %v7739
    %v7836 = vunpack.c.l.b16 %v7740
    %v7837 = vunpack.c.l.b16 %v7741
    %v7838 = vunpack.c.l.b16 %v7742
    %v7839 = vunpack.c.l.b16 %v7743
    %v7840 = vunpack.c.l.b16 %v7744
    %v7841 = vunpack.c.l.b16 %v7745
    %v7842 = vunpack.c.l.b16 %v7746
    %v7843 = vunpack.c.l.b16 %v7747
    %v7844 = vunpack.c.l.b16 %v7748
    %v7845 = vunpack.c.l.b16 %v7749
    %v7846 = vunpack.c.l.b16 %v7750
    %v7847 = vunpack.c.l.b16 %v7751
    %v7848 = vunpack.c.l.b16 %v7752
    %v7849 = vunpack.c.l.b16 %v7753
    %v7850 = vunpack.c.l.b16 %v7754
    %v7851 = vunpack.c.l.b16 %v7755
    %v7852 = vpack.c.b16 %v7805, %v7804
    %v7853 = vpack.c.b16 %v7807, %v7806
    %v7854 = vpack.c.b16 %v7809, %v7808
    %v7855 = vpack.c.b16 %v7811, %v7810
    %v7856 = vpack.c.b16 %v7813, %v7812
    %v7857 = vpack.c.b16 %v7815, %v7814
    %v7858 = vpack.c.b16 %v7817, %v7816
    %v7859 = vpack.c.b16 %v7819, %v7818
    %v7860 = vpack.c.b16 %v7821, %v7820
    %v7861 = vpack.c.b16 %v7823, %v7822
    %v7862 = vpack.c.b16 %v7825, %v7824
    %v7863 = vpack.c.b16 %v7827, %v7826
    %v7864 = vpack.c.b16 %v7829, %v7828
    %v7865 = vpack.c.b16 %v7831, %v7830
    %v7866 = vpack.c.b16 %v7833, %v7832
    %v7867 = vpack.c.b16 %v7835, %v7834
    %v7868 = vpack.c.b16 %v7837, %v7836
    %v7869 = vpack.c.b16 %v7839, %v7838
    %v7870 = vpack.c.b16 %v7841, %v7840
    %v7871 = vpack.c.b16 %v7843, %v7842
    %v7872 = vpack.c.b16 %v7845, %v7844
    %v7873 = vpack.c.b16 %v7847, %v7846
    %v7874 = vpack.c.b16 %v7849, %v7848
    %v7875 = vpack.c.b16 %v7851, %v7850
    %7900 = vmatprep.subr.bf16.mxu0 0
    %7901 = vmatpush1.bf16.msra.mxu0 %v7852
    %7902 = vmatprep.subr.bf16.mxu0 0
    %7903 = vmatpush1.bf16.msra.mxu0 %v7853
    %7904 = vmatprep.subr.bf16.mxu0 0
    %7905 = vmatpush1.bf16.msra.mxu0 %v7854
    %7906 = vmatprep.subr.bf16.mxu0 0
    %7907 = vmatpush1.bf16.msra.mxu0 %v7855
    %7908 = vmatprep.subr.bf16.mxu0 0
    %7909 = vmatpush1.bf16.msra.mxu0 %v7856
    %7910 = vmatprep.subr.bf16.mxu0 0
    %7911 = vmatpush1.bf16.msra.mxu0 %v7857
    %7912 = vmatprep.subr.bf16.mxu0 0
    %7913 = vmatpush1.bf16.msra.mxu0 %v7858
    %7914 = vmatprep.subr.bf16.mxu0 0
    %7915 = vmatpush1.bf16.msra.mxu0 %v7859
    %7916 = vmatprep.subr.bf16.mxu0 0
    %7917 = vmatpush1.bf16.msra.mxu0 %v7860
    %7918 = vmatprep.subr.bf16.mxu0 0
    %7919 = vmatpush1.bf16.msra.mxu0 %v7861
    %7920 = vmatprep.subr.bf16.mxu0 0
    %7921 = vmatpush1.bf16.msra.mxu0 %v7862
    %7922 = vmatprep.subr.bf16.mxu0 0
    %7923 = vmatpush1.bf16.msra.mxu0 %v7863
    %7924 = vmatprep.subr.bf16.mxu0 0
    %7925 = vmatpush1.bf16.msra.mxu0 %v7864
    %7926 = vmatprep.subr.bf16.mxu0 0
    %7927 = vmatpush1.bf16.msra.mxu0 %v7865
    %7928 = vmatprep.subr.bf16.mxu0 0
    %7929 = vmatpush1.bf16.msra.mxu0 %v7866
    %7930 = vmatprep.subr.bf16.mxu0 0
    %7931 = vmatpush1.bf16.msra.mxu0 %v7867
    %7932 = vmatprep.mubr.bf16.mxu0 %v7700
    %7933 = vmatmul.mubr.bf16.gmra.mrb[0].mxu0 %v7699
    %v7934 = vpop.f32.mrb[0].mxu0
    %v7935 = vadd.f32 0.0, %v7934
    %v7936 = vpop.f32.mrb[0].mxu0
    %v7937 = vpop.f32.mrb[0].mxu0
    %v7938 = vadd.f32 0.0, %v7937
    %v7939 = vpop.f32.mrb[0].mxu0
    %7940 = vmatprep.mubr.bf16.mxu0 %v7703
    %7941 = vmatmul.mubr.bf16.gmra.mrb[0].mxu0 %v7702
    %v7942 = vpop.f32.mrb[0].mxu0
    %v7943 = vadd.f32 0.0, %v7942
    %v7944 = vpop.f32.mrb[0].mxu0
    %v7945 = vpop.f32.mrb[0].mxu0
    %v7946 = vadd.f32 0.0, %v7945
    %v7947 = vpop.f32.mrb[0].mxu0
    %7948 = vmatprep.mubr.bf16.mxu0 %v7706
    %7949 = vmatmul.mubr.bf16.gmra.mrb[0].mxu0 %v7705
    %v7950 = vpop.f32.mrb[0].mxu0
    %v7951 = vadd.f32 0.0, %v7950
    %v7952 = vpop.f32.mrb[0].mxu0
    %v7953 = vpop.f32.mrb[0].mxu0
    %v7954 = vadd.f32 0.0, %v7953
    %v7955 = vpop.f32.mrb[0].mxu0
    %7956 = vdwg.mxu0
    %7957 = vmatprep.subr.bf16.mxu0 0
    %7958 = vmatpush1.bf16.msra.mxu0 %v7868
    %7959 = vmatprep.subr.bf16.mxu0 0
    %7960 = vmatpush1.bf16.msra.mxu0 %v7869
    %7961 = vmatprep.subr.bf16.mxu0 0
    %7962 = vmatpush1.bf16.msra.mxu0 %v7870
    %7963 = vmatprep.subr.bf16.mxu0 0
    %7964 = vmatpush1.bf16.msra.mxu0 %v7871
    %7965 = vmatprep.subr.bf16.mxu0 0
    %7966 = vmatpush1.bf16.msra.mxu0 %v7872
    %7967 = vmatprep.subr.bf16.mxu0 0
    %7968 = vmatpush1.bf16.msra.mxu0 %v7873
    %7969 = vmatprep.subr.bf16.mxu0 0
    %7970 = vmatpush1.bf16.msra.mxu0 %v7874
    %7971 = vmatprep.subr.bf16.mxu0 0
    %7972 = vmatpush1.bf16.msra.mxu0 %v7875
    %7973 = vmatprep.subr.bf16.mxu0 0
    %7974 = vmatpush1.bf16.msra.mxu0 0
    %7975 = vmatprep.subr.bf16.mxu0 0
    %7976 = vmatpush1.bf16.msra.mxu0 0
    %7977 = vmatprep.subr.bf16.mxu0 0
    %7978 = vmatpush1.bf16.msra.mxu0 0
    %7979 = vmatprep.subr.bf16.mxu0 0
    %7980 = vmatpush1.bf16.msra.mxu0 0
    %7981 = vmatprep.subr.bf16.mxu0 0
    %7982 = vmatpush1.bf16.msra.mxu0 0
    %7983 = vmatprep.subr.bf16.mxu0 0
    %7984 = vmatpush1.bf16.msra.mxu0 0
    %7985 = vmatprep.subr.bf16.mxu0 0
    %7986 = vmatpush1.bf16.msra.mxu0 0
    %7987 = vmatprep.subr.bf16.mxu0 0
    %7988 = vmatpush1.bf16.msra.mxu0 0
    %7989 = vmatprep.mubr.bf16.mxu0 0
    %7990 = vmatmul.mubr.bf16.gmra.mrb[0].mxu0 %v7701
    %v7991 = vpop.f32.mrb[0].mxu0
    %v7992 = vadd.f32 %v7935, %v7991
    %v7993 = vpop.f32.mrb[0].mxu0
    %v7994 = vpop.f32.mrb[0].mxu0
    %v7995 = vadd.f32 %v7938, %v7994
    %v7996 = vpop.f32.mrb[0].mxu0
    %7997 = vmatprep.mubr.bf16.mxu0 0
    %7998 = vmatmul.mubr.bf16.gmra.mrb[0].mxu0 %v7704
    %v7999 = vpop.f32.mrb[0].mxu0
    %v8000 = vadd.f32 %v7943, %v7999
    %v8001 = vpop.f32.mrb[0].mxu0
    %v8002 = vpop.f32.mrb[0].mxu0
    %v8003 = vadd.f32 %v7946, %v8002
    %v8004 = vpop.f32.mrb[0].mxu0
    %8005 = vmatprep.mubr.bf16.mxu0 0
    %8006 = vmatmul.mubr.bf16.gmra.mrb[0].mxu0 %v7707
    %v8007 = vpop.f32.mrb[0].mxu0
    %v8008 = vadd.f32 %v7951, %v8007
    %v8009 = vpop.f32.mrb[0].mxu0
    %v8010 = vpop.f32.mrb[0].mxu0
    %v8011 = vadd.f32 %v7954, %v8010
    %v8012 = vpop.f32.mrb[0].mxu0
    %8013 = vdwg.mxu0
    %v8014 = vadd.f32 %v7992, %v8000
    %v8015 = vadd.f32 %v7995, %v8003
    %v8016 = vadd.f32 %v8014, %v8008
    %v8017 = vadd.f32 %v8015, %v8011
    %v8018 = vmul.f32 %v8016, 0.0021978023
    %v8019 = vmul.f32 %v8017, 0.0021978023
    %8020 = vst [vmem:[#allocation3 + $0xb0] sm:$0xff] %v8018
    %8021 = vst [vmem:[#allocation3 + $0x1b0] sm:$0xff] %v8019
    %v8022 = vld [vmem:[#allocation2 + $0xb8] sm:$0xff]
    %v8023 = vld [vmem:[#allocation2 + $0xc0] sm:$0xff]
    %v8024 = vld [vmem:[#allocation2 + $0xc8] sm:$0xff]
    %v8025 = vld [vmem:[#allocation2 + $0x1c8] sm:$0xff]
    %v8026 = vld [vmem:[#allocation2 + $0x1d0] sm:$0xff]
    %v8027 = vld [vmem:[#allocation2 + $0x1d8] sm:$0xff]
    %v8028 = vld [vmem:[#allocation2 + $0x2d8] sm:$0xff]
    %v8029 = vld [vmem:[#allocation2 + $0x2e0] sm:$0xff]
    %v8030 = vld [vmem:[#allocation2 + $0x2e8] sm:$0xff]
    %v8031 = vld [vmem:[%s924] sm:$0xf]
    %v8032 = vld [vmem:[%s924 + $0x4] sm:$0xf]
    %v8033 = vld [vmem:[%s924 + $0x8] sm:$0xf]
    %v8034 = vld [vmem:[%s924 + $0xc] sm:$0xf]
    %v8035 = vld [vmem:[%s924 + $0x10] sm:$0xf]
    %v8036 = vld [vmem:[%s924 + $0x14] sm:$0xf]
    %v8037 = vld [vmem:[%s924 + $0x18] sm:$0xf]
    %v8038 = vld [vmem:[%s924 + $0x1c] sm:$0xf]
    %v8039 = vld [vmem:[%s924 + $0x20] sm:$0xf]
    %v8040 = vld [vmem:[%s924 + $0x24] sm:$0xf]
    %v8041 = vld [vmem:[%s924 + $0x28] sm:$0xf]
    %v8042 = vld [vmem:[%s924 + $0x2c] sm:$0xf]
    %v8043 = vld [vmem:[%s924 + $0x30] sm:$0xf]
    %v8044 = vld [vmem:[%s924 + $0x34] sm:$0xf]
    %v8045 = vld [vmem:[%s924 + $0x38] sm:$0xf]
    %v8046 = vld [vmem:[%s924 + $0x3c] sm:$0xf]
    %v8047 = vld [vmem:[%s924 + $0x40] sm:$0xf]
    %v8048 = vld [vmem:[%s924 + $0x44] sm:$0xf]
    %v8049 = vld [vmem:[%s924 + $0x48] sm:$0xf]
    %v8050 = vld [vmem:[%s924 + $0x4c] sm:$0xf]
    %v8051 = vld [vmem:[%s924 + $0x50] sm:$0xf]
    %v8052 = vld [vmem:[%s924 + $0x54] sm:$0xf]
    %v8053 = vld [vmem:[%s924 + $0x58] sm:$0xf]
    %v8054 = vld [vmem:[%s924 + $0x5c] sm:$0xf]
    %v8055 = vld [vmem:[%s924 + $0x60] sm:$0xf]
    %v8056 = vld [vmem:[%s924 + $0x64] sm:$0xf]
    %v8057 = vld [vmem:[%s924 + $0x68] sm:$0xf]
    %v8058 = vld [vmem:[%s924 + $0x6c] sm:$0xf]
    %v8059 = vld [vmem:[%s924 + $0x70] sm:$0xf]
    %v8060 = vld [vmem:[%s924 + $0x74] sm:$0xf]
    %v8061 = vld [vmem:[%s924 + $0x78] sm:$0xf]
    %v8062 = vld [vmem:[%s924 + $0x7c] sm:$0xf]
    %v8063 = vld [vmem:[%s924 + $0x80] sm:$0xf]
    %v8064 = vld [vmem:[%s924 + $0x84] sm:$0xf]
    %v8065 = vld [vmem:[%s924 + $0x88] sm:$0xf]
    %v8066 = vld [vmem:[%s924 + $0x8c] sm:$0xf]
    %v8067 = vld [vmem:[%s924 + $0x90] sm:$0xf]
    %v8068 = vld [vmem:[%s924 + $0x94] sm:$0xf]
    %v8069 = vld [vmem:[%s924 + $0x98] sm:$0xf]
    %v8070 = vld [vmem:[%s924 + $0x9c] sm:$0xf]
    %v8071 = vld [vmem:[%s924 + $0xa0] sm:$0xf]
    %v8072 = vld [vmem:[%s924 + $0xa4] sm:$0xf]
    %v8073 = vld [vmem:[%s924 + $0xa8] sm:$0xf]
    %v8074 = vld [vmem:[%s924 + $0xac] sm:$0xf]
    %v8075 = vld [vmem:[%s924 + $0xb0] sm:$0xf]
    %v8076 = vld [vmem:[%s924 + $0xb4] sm:$0xf]
    %v8077 = vld [vmem:[%s924 + $0xb8] sm:$0xf]
    %v8078 = vld [vmem:[%s924 + $0xbc] sm:$0xf]
    %v8127 = vunpack.c.l.b16 %v8031
    %v8128 = vunpack.c.l.b16 %v8032
    %v8129 = vunpack.c.l.b16 %v8033
    %v8130 = vunpack.c.l.b16 %v8034
    %v8131 = vunpack.c.l.b16 %v8035
    %v8132 = vunpack.c.l.b16 %v8036
    %v8133 = vunpack.c.l.b16 %v8037
    %v8134 = vunpack.c.l.b16 %v8038
    %v8135 = vunpack.c.l.b16 %v8039
    %v8136 = vunpack.c.l.b16 %v8040
    %v8137 = vunpack.c.l.b16 %v8041
    %v8138 = vunpack.c.l.b16 %v8042
    %v8139 = vunpack.c.l.b16 %v8043
    %v8140 = vunpack.c.l.b16 %v8044
    %v8141 = vunpack.c.l.b16 %v8045
    %v8142 = vunpack.c.l.b16 %v8046
    %v8143 = vunpack.c.l.b16 %v8047
    %v8144 = vunpack.c.l.b16 %v8048
    %v8145 = vunpack.c.l.b16 %v8049
    %v8146 = vunpack.c.l.b16 %v8050
    %v8147 = vunpack.c.l.b16 %v8051
    %v8148 = vunpack.c.l.b16 %v8052
    %v8149 = vunpack.c.l.b16 %v8053
    %v8150 = vunpack.c.l.b16 %v8054
    %v8151 = vunpack.c.l.b16 %v8055
    %v8152 = vunpack.c.l.b16 %v8056
    %v8153 = vunpack.c.l.b16 %v8057
    %v8154 = vunpack.c.l.b16 %v8058
    %v8155 = vunpack.c.l.b16 %v8059
    %v8156 = vunpack.c.l.b16 %v8060
    %v8157 = vunpack.c.l.b16 %v8061
    %v8158 = vunpack.c.l.b16 %v8062
    %v8159 = vunpack.c.l.b16 %v8063
    %v8160 = vunpack.c.l.b16 %v8064
    %v8161 = vunpack.c.l.b16 %v8065
    %v8162 = vunpack.c.l.b16 %v8066
    %v8163 = vunpack.c.l.b16 %v8067
    %v8164 = vunpack.c.l.b16 %v8068
    %v8165 = vunpack.c.l.b16 %v8069
    %v8166 = vunpack.c.l.b16 %v8070
    %v8167 = vunpack.c.l.b16 %v8071
    %v8168 = vunpack.c.l.b16 %v8072
    %v8169 = vunpack.c.l.b16 %v8073
    %v8170 = vunpack.c.l.b16 %v8074
    %v8171 = vunpack.c.l.b16 %v8075
    %v8172 = vunpack.c.l.b16 %v8076
    %v8173 = vunpack.c.l.b16 %v8077
    %v8174 = vunpack.c.l.b16 %v8078
    %v8175 = vpack.c.b16 %v8128, %v8127
    %v8176 = vpack.c.b16 %v8130, %v8129
    %v8177 = vpack.c.b16 %v8132, %v8131
    %v8178 = vpack.c.b16 %v8134, %v8133
    %v8179 = vpack.c.b16 %v8136, %v8135
    %v8180 = vpack.c.b16 %v8138, %v8137
    %v8181 = vpack.c.b16 %v8140, %v8139
    %v8182 = vpack.c.b16 %v8142, %v8141
    %v8183 = vpack.c.b16 %v8144, %v8143
    %v8184 = vpack.c.b16 %v8146, %v8145
    %v8185 = vpack.c.b16 %v8148, %v8147
    %v8186 = vpack.c.b16 %v8150, %v8149
    %v8187 = vpack.c.b16 %v8152, %v8151
    %v8188 = vpack.c.b16 %v8154, %v8153
    %v8189 = vpack.c.b16 %v8156, %v8155
    %v8190 = vpack.c.b16 %v8158, %v8157
    %v8191 = vpack.c.b16 %v8160, %v8159
    %v8192 = vpack.c.b16 %v8162, %v8161
    %v8193 = vpack.c.b16 %v8164, %v8163
    %v8194 = vpack.c.b16 %v8166, %v8165
    %v8195 = vpack.c.b16 %v8168, %v8167
    %v8196 = vpack.c.b16 %v8170, %v8169
    %v8197 = vpack.c.b16 %v8172, %v8171
    %v8198 = vpack.c.b16 %v8174, %v8173
    %8223 = vmatprep.subr.bf16.mxu0 0
    %8224 = vmatpush1.bf16.msra.mxu0 %v8175
    %8225 = vmatprep.subr.bf16.mxu0 0
    %8226 = vmatpush1.bf16.msra.mxu0 %v8176
    %8227 = vmatprep.subr.bf16.mxu0 0
    %8228 = vmatpush1.bf16.msra.mxu0 %v8177
    %8229 = vmatprep.subr.bf16.mxu0 0
    %8230 = vmatpush1.bf16.msra.mxu0 %v8178
    %8231 = vmatprep.subr.bf16.mxu0 0
    %8232 = vmatpush1.bf16.msra.mxu0 %v8179
    %8233 = vmatprep.subr.bf16.mxu0 0
    %8234 = vmatpush1.bf16.msra.mxu0 %v8180
    %8235 = vmatprep.subr.bf16.mxu0 0
    %8236 = vmatpush1.bf16.msra.mxu0 %v8181
    %8237 = vmatprep.subr.bf16.mxu0 0
    %8238 = vmatpush1.bf16.msra.mxu0 %v8182
    %8239 = vmatprep.subr.bf16.mxu0 0
    %8240 = vmatpush1.bf16.msra.mxu0 %v8183
    %8241 = vmatprep.subr.bf16.mxu0 0
    %8242 = vmatpush1.bf16.msra.mxu0 %v8184
    %8243 = vmatprep.subr.bf16.mxu0 0
    %8244 = vmatpush1.bf16.msra.mxu0 %v8185
    %8245 = vmatprep.subr.bf16.mxu0 0
    %8246 = vmatpush1.bf16.msra.mxu0 %v8186
    %8247 = vmatprep.subr.bf16.mxu0 0
    %8248 = vmatpush1.bf16.msra.mxu0 %v8187
    %8249 = vmatprep.subr.bf16.mxu0 0
    %8250 = vmatpush1.bf16.msra.mxu0 %v8188
    %8251 = vmatprep.subr.bf16.mxu0 0
    %8252 = vmatpush1.bf16.msra.mxu0 %v8189
    %8253 = vmatprep.subr.bf16.mxu0 0
    %8254 = vmatpush1.bf16.msra.mxu0 %v8190
    %8255 = vmatprep.mubr.bf16.mxu0 %v8023
    %8256 = vmatmul.mubr.bf16.gmra.mrb[0].mxu0 %v8022
    %v8257 = vpop.f32.mrb[0].mxu0
    %v8258 = vadd.f32 0.0, %v8257
    %v8259 = vpop.f32.mrb[0].mxu0
    %v8260 = vpop.f32.mrb[0].mxu0
    %v8261 = vadd.f32 0.0, %v8260
    %v8262 = vpop.f32.mrb[0].mxu0
    %8263 = vmatprep.mubr.bf16.mxu0 %v8026
    %8264 = vmatmul.mubr.bf16.gmra.mrb[0].mxu0 %v8025
    %v8265 = vpop.f32.mrb[0].mxu0
    %v8266 = vadd.f32 0.0, %v8265
    %v8267 = vpop.f32.mrb[0].mxu0
    %v8268 = vpop.f32.mrb[0].mxu0
    %v8269 = vadd.f32 0.0, %v8268
    %v8270 = vpop.f32.mrb[0].mxu0
    %8271 = vmatprep.mubr.bf16.mxu0 %v8029
    %8272 = vmatmul.mubr.bf16.gmra.mrb[0].mxu0 %v8028
    %v8273 = vpop.f32.mrb[0].mxu0
    %v8274 = vadd.f32 0.0, %v8273
    %v8275 = vpop.f32.mrb[0].mxu0
    %v8276 = vpop.f32.mrb[0].mxu0
    %v8277 = vadd.f32 0.0, %v8276
    %v8278 = vpop.f32.mrb[0].mxu0
    %8279 = vdwg.mxu0
    %8280 = vmatprep.subr.bf16.mxu0 0
    %8281 = vmatpush1.bf16.msra.mxu0 %v8191
    %8282 = vmatprep.subr.bf16.mxu0 0
    %8283 = vmatpush1.bf16.msra.mxu0 %v8192
    %8284 = vmatprep.subr.bf16.mxu0 0
    %8285 = vmatpush1.bf16.msra.mxu0 %v8193
    %8286 = vmatprep.subr.bf16.mxu0 0
    %8287 = vmatpush1.bf16.msra.mxu0 %v8194
    %8288 = vmatprep.subr.bf16.mxu0 0
    %8289 = vmatpush1.bf16.msra.mxu0 %v8195
    %8290 = vmatprep.subr.bf16.mxu0 0
    %8291 = vmatpush1.bf16.msra.mxu0 %v8196
    %8292 = vmatprep.subr.bf16.mxu0 0
    %8293 = vmatpush1.bf16.msra.mxu0 %v8197
    %8294 = vmatprep.subr.bf16.mxu0 0
    %8295 = vmatpush1.bf16.msra.mxu0 %v8198
    %8296 = vmatprep.subr.bf16.mxu0 0
    %8297 = vmatpush1.bf16.msra.mxu0 0
    %8298 = vmatprep.subr.bf16.mxu0 0
    %8299 = vmatpush1.bf16.msra.mxu0 0
    %8300 = vmatprep.subr.bf16.mxu0 0
    %8301 = vmatpush1.bf16.msra.mxu0 0
    %8302 = vmatprep.subr.bf16.mxu0 0
    %8303 = vmatpush1.bf16.msra.mxu0 0
    %8304 = vmatprep.subr.bf16.mxu0 0
    %8305 = vmatpush1.bf16.msra.mxu0 0
    %8306 = vmatprep.subr.bf16.mxu0 0
    %8307 = vmatpush1.bf16.msra.mxu0 0
    %8308 = vmatprep.subr.bf16.mxu0 0
    %8309 = vmatpush1.bf16.msra.mxu0 0
    %8310 = vmatprep.subr.bf16.mxu0 0
    %8311 = vmatpush1.bf16.msra.mxu0 0
    %8312 = vmatprep.mubr.bf16.mxu0 0
    %8313 = vmatmul.mubr.bf16.gmra.mrb[0].mxu0 %v8024
    %v8314 = vpop.f32.mrb[0].mxu0
    %v8315 = vadd.f32 %v8258, %v8314
    %v8316 = vpop.f32.mrb[0].mxu0
    %v8317 = vpop.f32.mrb[0].mxu0
    %v8318 = vadd.f32 %v8261, %v8317
    %v8319 = vpop.f32.mrb[0].mxu0
    %8320 = vmatprep.mubr.bf16.mxu0 0
    %8321 = vmatmul.mubr.bf16.gmra.mrb[0].mxu0 %v8027
    %v8322 = vpop.f32.mrb[0].mxu0
    %v8323 = vadd.f32 %v8266, %v8322
    %v8324 = vpop.f32.mrb[0].mxu0
    %v8325 = vpop.f32.mrb[0].mxu0
    %v8326 = vadd.f32 %v8269, %v8325
    %v8327 = vpop.f32.mrb[0].mxu0
    %8328 = vmatprep.mubr.bf16.mxu0 0
    %8329 = vmatmul.mubr.bf16.gmra.mrb[0].mxu0 %v8030
    %v8330 = vpop.f32.mrb[0].mxu0
    %v8331 = vadd.f32 %v8274, %v8330
    %v8332 = vpop.f32.mrb[0].mxu0
    %v8333 = vpop.f32.mrb[0].mxu0
    %v8334 = vadd.f32 %v8277, %v8333
    %v8335 = vpop.f32.mrb[0].mxu0
    %8336 = vdwg.mxu0
    %v8337 = vadd.f32 %v8315, %v8323
    %v8338 = vadd.f32 %v8318, %v8326
    %v8339 = vadd.f32 %v8337, %v8331
    %v8340 = vadd.f32 %v8338, %v8334
    %v8341 = vmul.f32 %v8339, 0.0021978023
    %v8342 = vmul.f32 %v8340, 0.0021978023
    %8343 = vst [vmem:[#allocation3 + $0xb8] sm:$0xff] %v8341
    %8344 = vst [vmem:[#allocation3 + $0x1b8] sm:$0xff] %v8342
    %v8345 = vld [vmem:[#allocation2 + $0xc0] sm:$0xff]
    %v8346 = vld [vmem:[#allocation2 + $0xc8] sm:$0xff]
    %v8347 = vld [vmem:[#allocation2 + $0xd0] sm:$0xff]
    %v8348 = vld [vmem:[#allocation2 + $0x1d0] sm:$0xff]
    %v8349 = vld [vmem:[#allocation2 + $0x1d8] sm:$0xff]
    %v8350 = vld [vmem:[#allocation2 + $0x1e0] sm:$0xff]
    %v8351 = vld [vmem:[#allocation2 + $0x2e0] sm:$0xff]
    %v8352 = vld [vmem:[#allocation2 + $0x2e8] sm:$0xff]
    %v8353 = vld [vmem:[#allocation2 + $0x2f0] sm:$0xff]
    %v8354 = vld [vmem:[%s924] sm:$0xf]
    %v8355 = vld [vmem:[%s924 + $0x4] sm:$0xf]
    %v8356 = vld [vmem:[%s924 + $0x8] sm:$0xf]
    %v8357 = vld [vmem:[%s924 + $0xc] sm:$0xf]
    %v8358 = vld [vmem:[%s924 + $0x10] sm:$0xf]
    %v8359 = vld [vmem:[%s924 + $0x14] sm:$0xf]
    %v8360 = vld [vmem:[%s924 + $0x18] sm:$0xf]
    %v8361 = vld [vmem:[%s924 + $0x1c] sm:$0xf]
    %v8362 = vld [vmem:[%s924 + $0x20] sm:$0xf]
    %v8363 = vld [vmem:[%s924 + $0x24] sm:$0xf]
    %v8364 = vld [vmem:[%s924 + $0x28] sm:$0xf]
    %v8365 = vld [vmem:[%s924 + $0x2c] sm:$0xf]
    %v8366 = vld [vmem:[%s924 + $0x30] sm:$0xf]
    %v8367 = vld [vmem:[%s924 + $0x34] sm:$0xf]
    %v8368 = vld [vmem:[%s924 + $0x38] sm:$0xf]
    %v8369 = vld [vmem:[%s924 + $0x3c] sm:$0xf]
    %v8370 = vld [vmem:[%s924 + $0x40] sm:$0xf]
    %v8371 = vld [vmem:[%s924 + $0x44] sm:$0xf]
    %v8372 = vld [vmem:[%s924 + $0x48] sm:$0xf]
    %v8373 = vld [vmem:[%s924 + $0x4c] sm:$0xf]
    %v8374 = vld [vmem:[%s924 + $0x50] sm:$0xf]
    %v8375 = vld [vmem:[%s924 + $0x54] sm:$0xf]
    %v8376 = vld [vmem:[%s924 + $0x58] sm:$0xf]
    %v8377 = vld [vmem:[%s924 + $0x5c] sm:$0xf]
    %v8378 = vld [vmem:[%s924 + $0x60] sm:$0xf]
    %v8379 = vld [vmem:[%s924 + $0x64] sm:$0xf]
    %v8380 = vld [vmem:[%s924 + $0x68] sm:$0xf]
    %v8381 = vld [vmem:[%s924 + $0x6c] sm:$0xf]
    %v8382 = vld [vmem:[%s924 + $0x70] sm:$0xf]
    %v8383 = vld [vmem:[%s924 + $0x74] sm:$0xf]
    %v8384 = vld [vmem:[%s924 + $0x78] sm:$0xf]
    %v8385 = vld [vmem:[%s924 + $0x7c] sm:$0xf]
    %v8386 = vld [vmem:[%s924 + $0x80] sm:$0xf]
    %v8387 = vld [vmem:[%s924 + $0x84] sm:$0xf]
    %v8388 = vld [vmem:[%s924 + $0x88] sm:$0xf]
    %v8389 = vld [vmem:[%s924 + $0x8c] sm:$0xf]
    %v8390 = vld [vmem:[%s924 + $0x90] sm:$0xf]
    %v8391 = vld [vmem:[%s924 + $0x94] sm:$0xf]
    %v8392 = vld [vmem:[%s924 + $0x98] sm:$0xf]
    %v8393 = vld [vmem:[%s924 + $0x9c] sm:$0xf]
    %v8394 = vld [vmem:[%s924 + $0xa0] sm:$0xf]
    %v8395 = vld [vmem:[%s924 + $0xa4] sm:$0xf]
    %v8396 = vld [vmem:[%s924 + $0xa8] sm:$0xf]
    %v8397 = vld [vmem:[%s924 + $0xac] sm:$0xf]
    %v8398 = vld [vmem:[%s924 + $0xb0] sm:$0xf]
    %v8399 = vld [vmem:[%s924 + $0xb4] sm:$0xf]
    %v8400 = vld [vmem:[%s924 + $0xb8] sm:$0xf]
    %v8401 = vld [vmem:[%s924 + $0xbc] sm:$0xf]
    %v8450 = vunpack.c.l.b16 %v8354
    %v8451 = vunpack.c.l.b16 %v8355
    %v8452 = vunpack.c.l.b16 %v8356
    %v8453 = vunpack.c.l.b16 %v8357
    %v8454 = vunpack.c.l.b16 %v8358
    %v8455 = vunpack.c.l.b16 %v8359
    %v8456 = vunpack.c.l.b16 %v8360
    %v8457 = vunpack.c.l.b16 %v8361
    %v8458 = vunpack.c.l.b16 %v8362
    %v8459 = vunpack.c.l.b16 %v8363
    %v8460 = vunpack.c.l.b16 %v8364
    %v8461 = vunpack.c.l.b16 %v8365
    %v8462 = vunpack.c.l.b16 %v8366
    %v8463 = vunpack.c.l.b16 %v8367
    %v8464 = vunpack.c.l.b16 %v8368
    %v8465 = vunpack.c.l.b16 %v8369
    %v8466 = vunpack.c.l.b16 %v8370
    %v8467 = vunpack.c.l.b16 %v8371
    %v8468 = vunpack.c.l.b16 %v8372
    %v8469 = vunpack.c.l.b16 %v8373
    %v8470 = vunpack.c.l.b16 %v8374
    %v8471 = vunpack.c.l.b16 %v8375
    %v8472 = vunpack.c.l.b16 %v8376
    %v8473 = vunpack.c.l.b16 %v8377
    %v8474 = vunpack.c.l.b16 %v8378
    %v8475 = vunpack.c.l.b16 %v8379
    %v8476 = vunpack.c.l.b16 %v8380
    %v8477 = vunpack.c.l.b16 %v8381
    %v8478 = vunpack.c.l.b16 %v8382
    %v8479 = vunpack.c.l.b16 %v8383
    %v8480 = vunpack.c.l.b16 %v8384
    %v8481 = vunpack.c.l.b16 %v8385
    %v8482 = vunpack.c.l.b16 %v8386
    %v8483 = vunpack.c.l.b16 %v8387
    %v8484 = vunpack.c.l.b16 %v8388
    %v8485 = vunpack.c.l.b16 %v8389
    %v8486 = vunpack.c.l.b16 %v8390
    %v8487 = vunpack.c.l.b16 %v8391
    %v8488 = vunpack.c.l.b16 %v8392
    %v8489 = vunpack.c.l.b16 %v8393
    %v8490 = vunpack.c.l.b16 %v8394
    %v8491 = vunpack.c.l.b16 %v8395
    %v8492 = vunpack.c.l.b16 %v8396
    %v8493 = vunpack.c.l.b16 %v8397
    %v8494 = vunpack.c.l.b16 %v8398
    %v8495 = vunpack.c.l.b16 %v8399
    %v8496 = vunpack.c.l.b16 %v8400
    %v8497 = vunpack.c.l.b16 %v8401
    %v8498 = vpack.c.b16 %v8451, %v8450
    %v8499 = vpack.c.b16 %v8453, %v8452
    %v8500 = vpack.c.b16 %v8455, %v8454
    %v8501 = vpack.c.b16 %v8457, %v8456
    %v8502 = vpack.c.b16 %v8459, %v8458
    %v8503 = vpack.c.b16 %v8461, %v8460
    %v8504 = vpack.c.b16 %v8463, %v8462
    %v8505 = vpack.c.b16 %v8465, %v8464
    %v8506 = vpack.c.b16 %v8467, %v8466
    %v8507 = vpack.c.b16 %v8469, %v8468
    %v8508 = vpack.c.b16 %v8471, %v8470
    %v8509 = vpack.c.b16 %v8473, %v8472
    %v8510 = vpack.c.b16 %v8475, %v8474
    %v8511 = vpack.c.b16 %v8477, %v8476
    %v8512 = vpack.c.b16 %v8479, %v8478
    %v8513 = vpack.c.b16 %v8481, %v8480
    %v8514 = vpack.c.b16 %v8483, %v8482
    %v8515 = vpack.c.b16 %v8485, %v8484
    %v8516 = vpack.c.b16 %v8487, %v8486
    %v8517 = vpack.c.b16 %v8489, %v8488
    %v8518 = vpack.c.b16 %v8491, %v8490
    %v8519 = vpack.c.b16 %v8493, %v8492
    %v8520 = vpack.c.b16 %v8495, %v8494
    %v8521 = vpack.c.b16 %v8497, %v8496
    %8546 = vmatprep.subr.bf16.mxu0 0
    %8547 = vmatpush1.bf16.msra.mxu0 %v8498
    %8548 = vmatprep.subr.bf16.mxu0 0
    %8549 = vmatpush1.bf16.msra.mxu0 %v8499
    %8550 = vmatprep.subr.bf16.mxu0 0
    %8551 = vmatpush1.bf16.msra.mxu0 %v8500
    %8552 = vmatprep.subr.bf16.mxu0 0
    %8553 = vmatpush1.bf16.msra.mxu0 %v8501
    %8554 = vmatprep.subr.bf16.mxu0 0
    %8555 = vmatpush1.bf16.msra.mxu0 %v8502
    %8556 = vmatprep.subr.bf16.mxu0 0
    %8557 = vmatpush1.bf16.msra.mxu0 %v8503
    %8558 = vmatprep.subr.bf16.mxu0 0
    %8559 = vmatpush1.bf16.msra.mxu0 %v8504
    %8560 = vmatprep.subr.bf16.mxu0 0
    %8561 = vmatpush1.bf16.msra.mxu0 %v8505
    %8562 = vmatprep.subr.bf16.mxu0 0
    %8563 = vmatpush1.bf16.msra.mxu0 %v8506
    %8564 = vmatprep.subr.bf16.mxu0 0
    %8565 = vmatpush1.bf16.msra.mxu0 %v8507
    %8566 = vmatprep.subr.bf16.mxu0 0
    %8567 = vmatpush1.bf16.msra.mxu0 %v8508
    %8568 = vmatprep.subr.bf16.mxu0 0
    %8569 = vmatpush1.bf16.msra.mxu0 %v8509
    %8570 = vmatprep.subr.bf16.mxu0 0
    %8571 = vmatpush1.bf16.msra.mxu0 %v8510
    %8572 = vmatprep.subr.bf16.mxu0 0
    %8573 = vmatpush1.bf16.msra.mxu0 %v8511
    %8574 = vmatprep.subr.bf16.mxu0 0
    %8575 = vmatpush1.bf16.msra.mxu0 %v8512
    %8576 = vmatprep.subr.bf16.mxu0 0
    %8577 = vmatpush1.bf16.msra.mxu0 %v8513
    %8578 = vmatprep.mubr.bf16.mxu0 %v8346
    %8579 = vmatmul.mubr.bf16.gmra.mrb[0].mxu0 %v8345
    %v8580 = vpop.f32.mrb[0].mxu0
    %v8581 = vadd.f32 0.0, %v8580
    %v8582 = vpop.f32.mrb[0].mxu0
    %v8583 = vpop.f32.mrb[0].mxu0
    %v8584 = vadd.f32 0.0, %v8583
    %v8585 = vpop.f32.mrb[0].mxu0
    %8586 = vmatprep.mubr.bf16.mxu0 %v8349
    %8587 = vmatmul.mubr.bf16.gmra.mrb[0].mxu0 %v8348
    %v8588 = vpop.f32.mrb[0].mxu0
    %v8589 = vadd.f32 0.0, %v8588
    %v8590 = vpop.f32.mrb[0].mxu0
    %v8591 = vpop.f32.mrb[0].mxu0
    %v8592 = vadd.f32 0.0, %v8591
    %v8593 = vpop.f32.mrb[0].mxu0
    %8594 = vmatprep.mubr.bf16.mxu0 %v8352
    %8595 = vmatmul.mubr.bf16.gmra.mrb[0].mxu0 %v8351
    %v8596 = vpop.f32.mrb[0].mxu0
    %v8597 = vadd.f32 0.0, %v8596
    %v8598 = vpop.f32.mrb[0].mxu0
    %v8599 = vpop.f32.mrb[0].mxu0
    %v8600 = vadd.f32 0.0, %v8599
    %v8601 = vpop.f32.mrb[0].mxu0
    %8602 = vdwg.mxu0
    %8603 = vmatprep.subr.bf16.mxu0 0
    %8604 = vmatpush1.bf16.msra.mxu0 %v8514
    %8605 = vmatprep.subr.bf16.mxu0 0
    %8606 = vmatpush1.bf16.msra.mxu0 %v8515
    %8607 = vmatprep.subr.bf16.mxu0 0
    %8608 = vmatpush1.bf16.msra.mxu0 %v8516
    %8609 = vmatprep.subr.bf16.mxu0 0
    %8610 = vmatpush1.bf16.msra.mxu0 %v8517
    %8611 = vmatprep.subr.bf16.mxu0 0
    %8612 = vmatpush1.bf16.msra.mxu0 %v8518
    %8613 = vmatprep.subr.bf16.mxu0 0
    %8614 = vmatpush1.bf16.msra.mxu0 %v8519
    %8615 = vmatprep.subr.bf16.mxu0 0
    %8616 = vmatpush1.bf16.msra.mxu0 %v8520
    %8617 = vmatprep.subr.bf16.mxu0 0
    %8618 = vmatpush1.bf16.msra.mxu0 %v8521
    %8619 = vmatprep.subr.bf16.mxu0 0
    %8620 = vmatpush1.bf16.msra.mxu0 0
    %8621 = vmatprep.subr.bf16.mxu0 0
    %8622 = vmatpush1.bf16.msra.mxu0 0
    %8623 = vmatprep.subr.bf16.mxu0 0
    %8624 = vmatpush1.bf16.msra.mxu0 0
    %8625 = vmatprep.subr.bf16.mxu0 0
    %8626 = vmatpush1.bf16.msra.mxu0 0
    %8627 = vmatprep.subr.bf16.mxu0 0
    %8628 = vmatpush1.bf16.msra.mxu0 0
    %8629 = vmatprep.subr.bf16.mxu0 0
    %8630 = vmatpush1.bf16.msra.mxu0 0
    %8631 = vmatprep.subr.bf16.mxu0 0
    %8632 = vmatpush1.bf16.msra.mxu0 0
    %8633 = vmatprep.subr.bf16.mxu0 0
    %8634 = vmatpush1.bf16.msra.mxu0 0
    %8635 = vmatprep.mubr.bf16.mxu0 0
    %8636 = vmatmul.mubr.bf16.gmra.mrb[0].mxu0 %v8347
    %v8637 = vpop.f32.mrb[0].mxu0
    %v8638 = vadd.f32 %v8581, %v8637
    %v8639 = vpop.f32.mrb[0].mxu0
    %v8640 = vpop.f32.mrb[0].mxu0
    %v8641 = vadd.f32 %v8584, %v8640
    %v8642 = vpop.f32.mrb[0].mxu0
    %8643 = vmatprep.mubr.bf16.mxu0 0
    %8644 = vmatmul.mubr.bf16.gmra.mrb[0].mxu0 %v8350
    %v8645 = vpop.f32.mrb[0].mxu0
    %v8646 = vadd.f32 %v8589, %v8645
    %v8647 = vpop.f32.mrb[0].mxu0
    %v8648 = vpop.f32.mrb[0].mxu0
    %v8649 = vadd.f32 %v8592, %v8648
    %v8650 = vpop.f32.mrb[0].mxu0
    %8651 = vmatprep.mubr.bf16.mxu0 0
    %8652 = vmatmul.mubr.bf16.gmra.mrb[0].mxu0 %v8353
    %v8653 = vpop.f32.mrb[0].mxu0
    %v8654 = vadd.f32 %v8597, %v8653
    %v8655 = vpop.f32.mrb[0].mxu0
    %v8656 = vpop.f32.mrb[0].mxu0
    %v8657 = vadd.f32 %v8600, %v8656
    %v8658 = vpop.f32.mrb[0].mxu0
    %8659 = vdwg.mxu0
    %v8660 = vadd.f32 %v8638, %v8646
    %v8661 = vadd.f32 %v8641, %v8649
    %v8662 = vadd.f32 %v8660, %v8654
    %v8663 = vadd.f32 %v8661, %v8657
    %v8664 = vmul.f32 %v8662, 0.0021978023
    %v8665 = vmul.f32 %v8663, 0.0021978023
    %8666 = vst [vmem:[#allocation3 + $0xc0] sm:$0xff] %v8664
    %8667 = vst [vmem:[#allocation3 + $0x1c0] sm:$0xff] %v8665
    %v8668 = vld [vmem:[#allocation2 + $0xc8] sm:$0xff]
    %v8669 = vld [vmem:[#allocation2 + $0xd0] sm:$0xff]
    %v8670 = vld [vmem:[#allocation2 + $0xd8] sm:$0xff]
    %v8671 = vld [vmem:[#allocation2 + $0x1d8] sm:$0xff]
    %v8672 = vld [vmem:[#allocation2 + $0x1e0] sm:$0xff]
    %v8673 = vld [vmem:[#allocation2 + $0x1e8] sm:$0xff]
    %v8674 = vld [vmem:[#allocation2 + $0x2e8] sm:$0xff]
    %v8675 = vld [vmem:[#allocation2 + $0x2f0] sm:$0xff]
    %v8676 = vld [vmem:[#allocation2 + $0x2f8] sm:$0xff]
    %v8677 = vld [vmem:[%s924] sm:$0xf]
    %v8678 = vld [vmem:[%s924 + $0x4] sm:$0xf]
    %v8679 = vld [vmem:[%s924 + $0x8] sm:$0xf]
    %v8680 = vld [vmem:[%s924 + $0xc] sm:$0xf]
    %v8681 = vld [vmem:[%s924 + $0x10] sm:$0xf]
    %v8682 = vld [vmem:[%s924 + $0x14] sm:$0xf]
    %v8683 = vld [vmem:[%s924 + $0x18] sm:$0xf]
    %v8684 = vld [vmem:[%s924 + $0x1c] sm:$0xf]
    %v8685 = vld [vmem:[%s924 + $0x20] sm:$0xf]
    %v8686 = vld [vmem:[%s924 + $0x24] sm:$0xf]
    %v8687 = vld [vmem:[%s924 + $0x28] sm:$0xf]
    %v8688 = vld [vmem:[%s924 + $0x2c] sm:$0xf]
    %v8689 = vld [vmem:[%s924 + $0x30] sm:$0xf]
    %v8690 = vld [vmem:[%s924 + $0x34] sm:$0xf]
    %v8691 = vld [vmem:[%s924 + $0x38] sm:$0xf]
    %v8692 = vld [vmem:[%s924 + $0x3c] sm:$0xf]
    %v8693 = vld [vmem:[%s924 + $0x40] sm:$0xf]
    %v8694 = vld [vmem:[%s924 + $0x44] sm:$0xf]
    %v8695 = vld [vmem:[%s924 + $0x48] sm:$0xf]
    %v8696 = vld [vmem:[%s924 + $0x4c] sm:$0xf]
    %v8697 = vld [vmem:[%s924 + $0x50] sm:$0xf]
    %v8698 = vld [vmem:[%s924 + $0x54] sm:$0xf]
    %v8699 = vld [vmem:[%s924 + $0x58] sm:$0xf]
    %v8700 = vld [vmem:[%s924 + $0x5c] sm:$0xf]
    %v8701 = vld [vmem:[%s924 + $0x60] sm:$0xf]
    %v8702 = vld [vmem:[%s924 + $0x64] sm:$0xf]
    %v8703 = vld [vmem:[%s924 + $0x68] sm:$0xf]
    %v8704 = vld [vmem:[%s924 + $0x6c] sm:$0xf]
    %v8705 = vld [vmem:[%s924 + $0x70] sm:$0xf]
    %v8706 = vld [vmem:[%s924 + $0x74] sm:$0xf]
    %v8707 = vld [vmem:[%s924 + $0x78] sm:$0xf]
    %v8708 = vld [vmem:[%s924 + $0x7c] sm:$0xf]
    %v8709 = vld [vmem:[%s924 + $0x80] sm:$0xf]
    %v8710 = vld [vmem:[%s924 + $0x84] sm:$0xf]
    %v8711 = vld [vmem:[%s924 + $0x88] sm:$0xf]
    %v8712 = vld [vmem:[%s924 + $0x8c] sm:$0xf]
    %v8713 = vld [vmem:[%s924 + $0x90] sm:$0xf]
    %v8714 = vld [vmem:[%s924 + $0x94] sm:$0xf]
    %v8715 = vld [vmem:[%s924 + $0x98] sm:$0xf]
    %v8716 = vld [vmem:[%s924 + $0x9c] sm:$0xf]
    %v8717 = vld [vmem:[%s924 + $0xa0] sm:$0xf]
    %v8718 = vld [vmem:[%s924 + $0xa4] sm:$0xf]
    %v8719 = vld [vmem:[%s924 + $0xa8] sm:$0xf]
    %v8720 = vld [vmem:[%s924 + $0xac] sm:$0xf]
    %v8721 = vld [vmem:[%s924 + $0xb0] sm:$0xf]
    %v8722 = vld [vmem:[%s924 + $0xb4] sm:$0xf]
    %v8723 = vld [vmem:[%s924 + $0xb8] sm:$0xf]
    %v8724 = vld [vmem:[%s924 + $0xbc] sm:$0xf]
    %v8773 = vunpack.c.l.b16 %v8677
    %v8774 = vunpack.c.l.b16 %v8678
    %v8775 = vunpack.c.l.b16 %v8679
    %v8776 = vunpack.c.l.b16 %v8680
    %v8777 = vunpack.c.l.b16 %v8681
    %v8778 = vunpack.c.l.b16 %v8682
    %v8779 = vunpack.c.l.b16 %v8683
    %v8780 = vunpack.c.l.b16 %v8684
    %v8781 = vunpack.c.l.b16 %v8685
    %v8782 = vunpack.c.l.b16 %v8686
    %v8783 = vunpack.c.l.b16 %v8687
    %v8784 = vunpack.c.l.b16 %v8688
    %v8785 = vunpack.c.l.b16 %v8689
    %v8786 = vunpack.c.l.b16 %v8690
    %v8787 = vunpack.c.l.b16 %v8691
    %v8788 = vunpack.c.l.b16 %v8692
    %v8789 = vunpack.c.l.b16 %v8693
    %v8790 = vunpack.c.l.b16 %v8694
    %v8791 = vunpack.c.l.b16 %v8695
    %v8792 = vunpack.c.l.b16 %v8696
    %v8793 = vunpack.c.l.b16 %v8697
    %v8794 = vunpack.c.l.b16 %v8698
    %v8795 = vunpack.c.l.b16 %v8699
    %v8796 = vunpack.c.l.b16 %v8700
    %v8797 = vunpack.c.l.b16 %v8701
    %v8798 = vunpack.c.l.b16 %v8702
    %v8799 = vunpack.c.l.b16 %v8703
    %v8800 = vunpack.c.l.b16 %v8704
    %v8801 = vunpack.c.l.b16 %v8705
    %v8802 = vunpack.c.l.b16 %v8706
    %v8803 = vunpack.c.l.b16 %v8707
    %v8804 = vunpack.c.l.b16 %v8708
    %v8805 = vunpack.c.l.b16 %v8709
    %v8806 = vunpack.c.l.b16 %v8710
    %v8807 = vunpack.c.l.b16 %v8711
    %v8808 = vunpack.c.l.b16 %v8712
    %v8809 = vunpack.c.l.b16 %v8713
    %v8810 = vunpack.c.l.b16 %v8714
    %v8811 = vunpack.c.l.b16 %v8715
    %v8812 = vunpack.c.l.b16 %v8716
    %v8813 = vunpack.c.l.b16 %v8717
    %v8814 = vunpack.c.l.b16 %v8718
    %v8815 = vunpack.c.l.b16 %v8719
    %v8816 = vunpack.c.l.b16 %v8720
    %v8817 = vunpack.c.l.b16 %v8721
    %v8818 = vunpack.c.l.b16 %v8722
    %v8819 = vunpack.c.l.b16 %v8723
    %v8820 = vunpack.c.l.b16 %v8724
    %v8821 = vpack.c.b16 %v8774, %v8773
    %v8822 = vpack.c.b16 %v8776, %v8775
    %v8823 = vpack.c.b16 %v8778, %v8777
    %v8824 = vpack.c.b16 %v8780, %v8779
    %v8825 = vpack.c.b16 %v8782, %v8781
    %v8826 = vpack.c.b16 %v8784, %v8783
    %v8827 = vpack.c.b16 %v8786, %v8785
    %v8828 = vpack.c.b16 %v8788, %v8787
    %v8829 = vpack.c.b16 %v8790, %v8789
    %v8830 = vpack.c.b16 %v8792, %v8791
    %v8831 = vpack.c.b16 %v8794, %v8793
    %v8832 = vpack.c.b16 %v8796, %v8795
    %v8833 = vpack.c.b16 %v8798, %v8797
    %v8834 = vpack.c.b16 %v8800, %v8799
    %v8835 = vpack.c.b16 %v8802, %v8801
    %v8836 = vpack.c.b16 %v8804, %v8803
    %v8837 = vpack.c.b16 %v8806, %v8805
    %v8838 = vpack.c.b16 %v8808, %v8807
    %v8839 = vpack.c.b16 %v8810, %v8809
    %v8840 = vpack.c.b16 %v8812, %v8811
    %v8841 = vpack.c.b16 %v8814, %v8813
    %v8842 = vpack.c.b16 %v8816, %v8815
    %v8843 = vpack.c.b16 %v8818, %v8817
    %v8844 = vpack.c.b16 %v8820, %v8819
    %8869 = vmatprep.subr.bf16.mxu0 0
    %8870 = vmatpush1.bf16.msra.mxu0 %v8821
    %8871 = vmatprep.subr.bf16.mxu0 0
    %8872 = vmatpush1.bf16.msra.mxu0 %v8822
    %8873 = vmatprep.subr.bf16.mxu0 0
    %8874 = vmatpush1.bf16.msra.mxu0 %v8823
    %8875 = vmatprep.subr.bf16.mxu0 0
    %8876 = vmatpush1.bf16.msra.mxu0 %v8824
    %8877 = vmatprep.subr.bf16.mxu0 0
    %8878 = vmatpush1.bf16.msra.mxu0 %v8825
    %8879 = vmatprep.subr.bf16.mxu0 0
    %8880 = vmatpush1.bf16.msra.mxu0 %v8826
    %8881 = vmatprep.subr.bf16.mxu0 0
    %8882 = vmatpush1.bf16.msra.mxu0 %v8827
    %8883 = vmatprep.subr.bf16.mxu0 0
    %8884 = vmatpush1.bf16.msra.mxu0 %v8828
    %8885 = vmatprep.subr.bf16.mxu0 0
    %8886 = vmatpush1.bf16.msra.mxu0 %v8829
    %8887 = vmatprep.subr.bf16.mxu0 0
    %8888 = vmatpush1.bf16.msra.mxu0 %v8830
    %8889 = vmatprep.subr.bf16.mxu0 0
    %8890 = vmatpush1.bf16.msra.mxu0 %v8831
    %8891 = vmatprep.subr.bf16.mxu0 0
    %8892 = vmatpush1.bf16.msra.mxu0 %v8832
    %8893 = vmatprep.subr.bf16.mxu0 0
    %8894 = vmatpush1.bf16.msra.mxu0 %v8833
    %8895 = vmatprep.subr.bf16.mxu0 0
    %8896 = vmatpush1.bf16.msra.mxu0 %v8834
    %8897 = vmatprep.subr.bf16.mxu0 0
    %8898 = vmatpush1.bf16.msra.mxu0 %v8835
    %8899 = vmatprep.subr.bf16.mxu0 0
    %8900 = vmatpush1.bf16.msra.mxu0 %v8836
    %8901 = vmatprep.mubr.bf16.mxu0 %v8669
    %8902 = vmatmul.mubr.bf16.gmra.mrb[0].mxu0 %v8668
    %v8903 = vpop.f32.mrb[0].mxu0
    %v8904 = vadd.f32 0.0, %v8903
    %v8905 = vpop.f32.mrb[0].mxu0
    %v8906 = vpop.f32.mrb[0].mxu0
    %v8907 = vadd.f32 0.0, %v8906
    %v8908 = vpop.f32.mrb[0].mxu0
    %8909 = vmatprep.mubr.bf16.mxu0 %v8672
    %8910 = vmatmul.mubr.bf16.gmra.mrb[0].mxu0 %v8671
    %v8911 = vpop.f32.mrb[0].mxu0
    %v8912 = vadd.f32 0.0, %v8911
    %v8913 = vpop.f32.mrb[0].mxu0
    %v8914 = vpop.f32.mrb[0].mxu0
    %v8915 = vadd.f32 0.0, %v8914
    %v8916 = vpop.f32.mrb[0].mxu0
    %8917 = vmatprep.mubr.bf16.mxu0 %v8675
    %8918 = vmatmul.mubr.bf16.gmra.mrb[0].mxu0 %v8674
    %v8919 = vpop.f32.mrb[0].mxu0
    %v8920 = vadd.f32 0.0, %v8919
    %v8921 = vpop.f32.mrb[0].mxu0
    %v8922 = vpop.f32.mrb[0].mxu0
    %v8923 = vadd.f32 0.0, %v8922
    %v8924 = vpop.f32.mrb[0].mxu0
    %8925 = vdwg.mxu0
    %8926 = vmatprep.subr.bf16.mxu0 0
    %8927 = vmatpush1.bf16.msra.mxu0 %v8837
    %8928 = vmatprep.subr.bf16.mxu0 0
    %8929 = vmatpush1.bf16.msra.mxu0 %v8838
    %8930 = vmatprep.subr.bf16.mxu0 0
    %8931 = vmatpush1.bf16.msra.mxu0 %v8839
    %8932 = vmatprep.subr.bf16.mxu0 0
    %8933 = vmatpush1.bf16.msra.mxu0 %v8840
    %8934 = vmatprep.subr.bf16.mxu0 0
    %8935 = vmatpush1.bf16.msra.mxu0 %v8841
    %8936 = vmatprep.subr.bf16.mxu0 0
    %8937 = vmatpush1.bf16.msra.mxu0 %v8842
    %8938 = vmatprep.subr.bf16.mxu0 0
    %8939 = vmatpush1.bf16.msra.mxu0 %v8843
    %8940 = vmatprep.subr.bf16.mxu0 0
    %8941 = vmatpush1.bf16.msra.mxu0 %v8844
    %8942 = vmatprep.subr.bf16.mxu0 0
    %8943 = vmatpush1.bf16.msra.mxu0 0
    %8944 = vmatprep.subr.bf16.mxu0 0
    %8945 = vmatpush1.bf16.msra.mxu0 0
    %8946 = vmatprep.subr.bf16.mxu0 0
    %8947 = vmatpush1.bf16.msra.mxu0 0
    %8948 = vmatprep.subr.bf16.mxu0 0
    %8949 = vmatpush1.bf16.msra.mxu0 0
    %8950 = vmatprep.subr.bf16.mxu0 0
    %8951 = vmatpush1.bf16.msra.mxu0 0
    %8952 = vmatprep.subr.bf16.mxu0 0
    %8953 = vmatpush1.bf16.msra.mxu0 0
    %8954 = vmatprep.subr.bf16.mxu0 0
    %8955 = vmatpush1.bf16.msra.mxu0 0
    %8956 = vmatprep.subr.bf16.mxu0 0
    %8957 = vmatpush1.bf16.msra.mxu0 0
    %8958 = vmatprep.mubr.bf16.mxu0 0
    %8959 = vmatmul.mubr.bf16.gmra.mrb[0].mxu0 %v8670
    %v8960 = vpop.f32.mrb[0].mxu0
    %v8961 = vadd.f32 %v8904, %v8960
    %v8962 = vpop.f32.mrb[0].mxu0
    %v8963 = vpop.f32.mrb[0].mxu0
    %v8964 = vadd.f32 %v8907, %v8963
    %v8965 = vpop.f32.mrb[0].mxu0
    %8966 = vmatprep.mubr.bf16.mxu0 0
    %8967 = vmatmul.mubr.bf16.gmra.mrb[0].mxu0 %v8673
    %v8968 = vpop.f32.mrb[0].mxu0
    %v8969 = vadd.f32 %v8912, %v8968
    %v8970 = vpop.f32.mrb[0].mxu0
    %v8971 = vpop.f32.mrb[0].mxu0
    %v8972 = vadd.f32 %v8915, %v8971
    %v8973 = vpop.f32.mrb[0].mxu0
    %8974 = vmatprep.mubr.bf16.mxu0 0
    %8975 = vmatmul.mubr.bf16.gmra.mrb[0].mxu0 %v8676
    %v8976 = vpop.f32.mrb[0].mxu0
    %v8977 = vadd.f32 %v8920, %v8976
    %v8978 = vpop.f32.mrb[0].mxu0
    %v8979 = vpop.f32.mrb[0].mxu0
    %v8980 = vadd.f32 %v8923, %v8979
    %v8981 = vpop.f32.mrb[0].mxu0
    %8982 = vdwg.mxu0
    %v8983 = vadd.f32 %v8961, %v8969
    %v8984 = vadd.f32 %v8964, %v8972
    %v8985 = vadd.f32 %v8983, %v8977
    %v8986 = vadd.f32 %v8984, %v8980
    %v8987 = vmul.f32 %v8985, 0.0021978023
    %v8988 = vmul.f32 %v8986, 0.0021978023
    %8989 = vst [vmem:[#allocation3 + $0xc8] sm:$0xff] %v8987
    %8990 = vst [vmem:[#allocation3 + $0x1c8] sm:$0xff] %v8988
    %v8991 = vld [vmem:[#allocation2 + $0xd0] sm:$0xff]
    %v8992 = vld [vmem:[#allocation2 + $0xd8] sm:$0xff]
    %v8993 = vld [vmem:[#allocation2 + $0xe0] sm:$0xff]
    %v8994 = vld [vmem:[#allocation2 + $0x1e0] sm:$0xff]
    %v8995 = vld [vmem:[#allocation2 + $0x1e8] sm:$0xff]
    %v8996 = vld [vmem:[#allocation2 + $0x1f0] sm:$0xff]
    %v8997 = vld [vmem:[#allocation2 + $0x2f0] sm:$0xff]
    %v8998 = vld [vmem:[#allocation2 + $0x2f8] sm:$0xff]
    %v8999 = vld [vmem:[#allocation2 + $0x300] sm:$0xff]
    %v9000 = vld [vmem:[%s924] sm:$0xf]
    %v9001 = vld [vmem:[%s924 + $0x4] sm:$0xf]
    %v9002 = vld [vmem:[%s924 + $0x8] sm:$0xf]
    %v9003 = vld [vmem:[%s924 + $0xc] sm:$0xf]
    %v9004 = vld [vmem:[%s924 + $0x10] sm:$0xf]
    %v9005 = vld [vmem:[%s924 + $0x14] sm:$0xf]
    %v9006 = vld [vmem:[%s924 + $0x18] sm:$0xf]
    %v9007 = vld [vmem:[%s924 + $0x1c] sm:$0xf]
    %v9008 = vld [vmem:[%s924 + $0x20] sm:$0xf]
    %v9009 = vld [vmem:[%s924 + $0x24] sm:$0xf]
    %v9010 = vld [vmem:[%s924 + $0x28] sm:$0xf]
    %v9011 = vld [vmem:[%s924 + $0x2c] sm:$0xf]
    %v9012 = vld [vmem:[%s924 + $0x30] sm:$0xf]
    %v9013 = vld [vmem:[%s924 + $0x34] sm:$0xf]
    %v9014 = vld [vmem:[%s924 + $0x38] sm:$0xf]
    %v9015 = vld [vmem:[%s924 + $0x3c] sm:$0xf]
    %v9016 = vld [vmem:[%s924 + $0x40] sm:$0xf]
    %v9017 = vld [vmem:[%s924 + $0x44] sm:$0xf]
    %v9018 = vld [vmem:[%s924 + $0x48] sm:$0xf]
    %v9019 = vld [vmem:[%s924 + $0x4c] sm:$0xf]
    %v9020 = vld [vmem:[%s924 + $0x50] sm:$0xf]
    %v9021 = vld [vmem:[%s924 + $0x54] sm:$0xf]
    %v9022 = vld [vmem:[%s924 + $0x58] sm:$0xf]
    %v9023 = vld [vmem:[%s924 + $0x5c] sm:$0xf]
    %v9024 = vld [vmem:[%s924 + $0x60] sm:$0xf]
    %v9025 = vld [vmem:[%s924 + $0x64] sm:$0xf]
    %v9026 = vld [vmem:[%s924 + $0x68] sm:$0xf]
    %v9027 = vld [vmem:[%s924 + $0x6c] sm:$0xf]
    %v9028 = vld [vmem:[%s924 + $0x70] sm:$0xf]
    %v9029 = vld [vmem:[%s924 + $0x74] sm:$0xf]
    %v9030 = vld [vmem:[%s924 + $0x78] sm:$0xf]
    %v9031 = vld [vmem:[%s924 + $0x7c] sm:$0xf]
    %v9032 = vld [vmem:[%s924 + $0x80] sm:$0xf]
    %v9033 = vld [vmem:[%s924 + $0x84] sm:$0xf]
    %v9034 = vld [vmem:[%s924 + $0x88] sm:$0xf]
    %v9035 = vld [vmem:[%s924 + $0x8c] sm:$0xf]
    %v9036 = vld [vmem:[%s924 + $0x90] sm:$0xf]
    %v9037 = vld [vmem:[%s924 + $0x94] sm:$0xf]
    %v9038 = vld [vmem:[%s924 + $0x98] sm:$0xf]
    %v9039 = vld [vmem:[%s924 + $0x9c] sm:$0xf]
    %v9040 = vld [vmem:[%s924 + $0xa0] sm:$0xf]
    %v9041 = vld [vmem:[%s924 + $0xa4] sm:$0xf]
    %v9042 = vld [vmem:[%s924 + $0xa8] sm:$0xf]
    %v9043 = vld [vmem:[%s924 + $0xac] sm:$0xf]
    %v9044 = vld [vmem:[%s924 + $0xb0] sm:$0xf]
    %v9045 = vld [vmem:[%s924 + $0xb4] sm:$0xf]
    %v9046 = vld [vmem:[%s924 + $0xb8] sm:$0xf]
    %v9047 = vld [vmem:[%s924 + $0xbc] sm:$0xf]
    %v9096 = vunpack.c.l.b16 %v9000
    %v9097 = vunpack.c.l.b16 %v9001
    %v9098 = vunpack.c.l.b16 %v9002
    %v9099 = vunpack.c.l.b16 %v9003
    %v9100 = vunpack.c.l.b16 %v9004
    %v9101 = vunpack.c.l.b16 %v9005
    %v9102 = vunpack.c.l.b16 %v9006
    %v9103 = vunpack.c.l.b16 %v9007
    %v9104 = vunpack.c.l.b16 %v9008
    %v9105 = vunpack.c.l.b16 %v9009
    %v9106 = vunpack.c.l.b16 %v9010
    %v9107 = vunpack.c.l.b16 %v9011
    %v9108 = vunpack.c.l.b16 %v9012
    %v9109 = vunpack.c.l.b16 %v9013
    %v9110 = vunpack.c.l.b16 %v9014
    %v9111 = vunpack.c.l.b16 %v9015
    %v9112 = vunpack.c.l.b16 %v9016
    %v9113 = vunpack.c.l.b16 %v9017
    %v9114 = vunpack.c.l.b16 %v9018
    %v9115 = vunpack.c.l.b16 %v9019
    %v9116 = vunpack.c.l.b16 %v9020
    %v9117 = vunpack.c.l.b16 %v9021
    %v9118 = vunpack.c.l.b16 %v9022
    %v9119 = vunpack.c.l.b16 %v9023
    %v9120 = vunpack.c.l.b16 %v9024
    %v9121 = vunpack.c.l.b16 %v9025
    %v9122 = vunpack.c.l.b16 %v9026
    %v9123 = vunpack.c.l.b16 %v9027
    %v9124 = vunpack.c.l.b16 %v9028
    %v9125 = vunpack.c.l.b16 %v9029
    %v9126 = vunpack.c.l.b16 %v9030
    %v9127 = vunpack.c.l.b16 %v9031
    %v9128 = vunpack.c.l.b16 %v9032
    %v9129 = vunpack.c.l.b16 %v9033
    %v9130 = vunpack.c.l.b16 %v9034
    %v9131 = vunpack.c.l.b16 %v9035
    %v9132 = vunpack.c.l.b16 %v9036
    %v9133 = vunpack.c.l.b16 %v9037
    %v9134 = vunpack.c.l.b16 %v9038
    %v9135 = vunpack.c.l.b16 %v9039
    %v9136 = vunpack.c.l.b16 %v9040
    %v9137 = vunpack.c.l.b16 %v9041
    %v9138 = vunpack.c.l.b16 %v9042
    %v9139 = vunpack.c.l.b16 %v9043
    %v9140 = vunpack.c.l.b16 %v9044
    %v9141 = vunpack.c.l.b16 %v9045
    %v9142 = vunpack.c.l.b16 %v9046
    %v9143 = vunpack.c.l.b16 %v9047
    %v9144 = vpack.c.b16 %v9097, %v9096
    %v9145 = vpack.c.b16 %v9099, %v9098
    %v9146 = vpack.c.b16 %v9101, %v9100
    %v9147 = vpack.c.b16 %v9103, %v9102
    %v9148 = vpack.c.b16 %v9105, %v9104
    %v9149 = vpack.c.b16 %v9107, %v9106
    %v9150 = vpack.c.b16 %v9109, %v9108
    %v9151 = vpack.c.b16 %v9111, %v9110
    %v9152 = vpack.c.b16 %v9113, %v9112
    %v9153 = vpack.c.b16 %v9115, %v9114
    %v9154 = vpack.c.b16 %v9117, %v9116
    %v9155 = vpack.c.b16 %v9119, %v9118
    %v9156 = vpack.c.b16 %v9121, %v9120
    %v9157 = vpack.c.b16 %v9123, %v9122
    %v9158 = vpack.c.b16 %v9125, %v9124
    %v9159 = vpack.c.b16 %v9127, %v9126
    %v9160 = vpack.c.b16 %v9129, %v9128
    %v9161 = vpack.c.b16 %v9131, %v9130
    %v9162 = vpack.c.b16 %v9133, %v9132
    %v9163 = vpack.c.b16 %v9135, %v9134
    %v9164 = vpack.c.b16 %v9137, %v9136
    %v9165 = vpack.c.b16 %v9139, %v9138
    %v9166 = vpack.c.b16 %v9141, %v9140
    %v9167 = vpack.c.b16 %v9143, %v9142
    %9192 = vmatprep.subr.bf16.mxu0 0
    %9193 = vmatpush1.bf16.msra.mxu0 %v9144
    %9194 = vmatprep.subr.bf16.mxu0 0
    %9195 = vmatpush1.bf16.msra.mxu0 %v9145
    %9196 = vmatprep.subr.bf16.mxu0 0
    %9197 = vmatpush1.bf16.msra.mxu0 %v9146
    %9198 = vmatprep.subr.bf16.mxu0 0
    %9199 = vmatpush1.bf16.msra.mxu0 %v9147
    %9200 = vmatprep.subr.bf16.mxu0 0
    %9201 = vmatpush1.bf16.msra.mxu0 %v9148
    %9202 = vmatprep.subr.bf16.mxu0 0
    %9203 = vmatpush1.bf16.msra.mxu0 %v9149
    %9204 = vmatprep.subr.bf16.mxu0 0
    %9205 = vmatpush1.bf16.msra.mxu0 %v9150
    %9206 = vmatprep.subr.bf16.mxu0 0
    %9207 = vmatpush1.bf16.msra.mxu0 %v9151
    %9208 = vmatprep.subr.bf16.mxu0 0
    %9209 = vmatpush1.bf16.msra.mxu0 %v9152
    %9210 = vmatprep.subr.bf16.mxu0 0
    %9211 = vmatpush1.bf16.msra.mxu0 %v9153
    %9212 = vmatprep.subr.bf16.mxu0 0
    %9213 = vmatpush1.bf16.msra.mxu0 %v9154
    %9214 = vmatprep.subr.bf16.mxu0 0
    %9215 = vmatpush1.bf16.msra.mxu0 %v9155
    %9216 = vmatprep.subr.bf16.mxu0 0
    %9217 = vmatpush1.bf16.msra.mxu0 %v9156
    %9218 = vmatprep.subr.bf16.mxu0 0
    %9219 = vmatpush1.bf16.msra.mxu0 %v9157
    %9220 = vmatprep.subr.bf16.mxu0 0
    %9221 = vmatpush1.bf16.msra.mxu0 %v9158
    %9222 = vmatprep.subr.bf16.mxu0 0
    %9223 = vmatpush1.bf16.msra.mxu0 %v9159
    %9224 = vmatprep.mubr.bf16.mxu0 %v8992
    %9225 = vmatmul.mubr.bf16.gmra.mrb[0].mxu0 %v8991
    %v9226 = vpop.f32.mrb[0].mxu0
    %v9227 = vadd.f32 0.0, %v9226
    %v9228 = vpop.f32.mrb[0].mxu0
    %v9229 = vpop.f32.mrb[0].mxu0
    %v9230 = vadd.f32 0.0, %v9229
    %v9231 = vpop.f32.mrb[0].mxu0
    %9232 = vmatprep.mubr.bf16.mxu0 %v8995
    %9233 = vmatmul.mubr.bf16.gmra.mrb[0].mxu0 %v8994
    %v9234 = vpop.f32.mrb[0].mxu0
    %v9235 = vadd.f32 0.0, %v9234
    %v9236 = vpop.f32.mrb[0].mxu0
    %v9237 = vpop.f32.mrb[0].mxu0
    %v9238 = vadd.f32 0.0, %v9237
    %v9239 = vpop.f32.mrb[0].mxu0
    %9240 = vmatprep.mubr.bf16.mxu0 %v8998
    %9241 = vmatmul.mubr.bf16.gmra.mrb[0].mxu0 %v8997
    %v9242 = vpop.f32.mrb[0].mxu0
    %v9243 = vadd.f32 0.0, %v9242
    %v9244 = vpop.f32.mrb[0].mxu0
    %v9245 = vpop.f32.mrb[0].mxu0
    %v9246 = vadd.f32 0.0, %v9245
    %v9247 = vpop.f32.mrb[0].mxu0
    %9248 = vdwg.mxu0
    %9249 = vmatprep.subr.bf16.mxu0 0
    %9250 = vmatpush1.bf16.msra.mxu0 %v9160
    %9251 = vmatprep.subr.bf16.mxu0 0
    %9252 = vmatpush1.bf16.msra.mxu0 %v9161
    %9253 = vmatprep.subr.bf16.mxu0 0
    %9254 = vmatpush1.bf16.msra.mxu0 %v9162
    %9255 = vmatprep.subr.bf16.mxu0 0
    %9256 = vmatpush1.bf16.msra.mxu0 %v9163
    %9257 = vmatprep.subr.bf16.mxu0 0
    %9258 = vmatpush1.bf16.msra.mxu0 %v9164
    %9259 = vmatprep.subr.bf16.mxu0 0
    %9260 = vmatpush1.bf16.msra.mxu0 %v9165
    %9261 = vmatprep.subr.bf16.mxu0 0
    %9262 = vmatpush1.bf16.msra.mxu0 %v9166
    %9263 = vmatprep.subr.bf16.mxu0 0
    %9264 = vmatpush1.bf16.msra.mxu0 %v9167
    %9265 = vmatprep.subr.bf16.mxu0 0
    %9266 = vmatpush1.bf16.msra.mxu0 0
    %9267 = vmatprep.subr.bf16.mxu0 0
    %9268 = vmatpush1.bf16.msra.mxu0 0
    %9269 = vmatprep.subr.bf16.mxu0 0
    %9270 = vmatpush1.bf16.msra.mxu0 0
    %9271 = vmatprep.subr.bf16.mxu0 0
    %9272 = vmatpush1.bf16.msra.mxu0 0
    %9273 = vmatprep.subr.bf16.mxu0 0
    %9274 = vmatpush1.bf16.msra.mxu0 0
    %9275 = vmatprep.subr.bf16.mxu0 0
    %9276 = vmatpush1.bf16.msra.mxu0 0
    %9277 = vmatprep.subr.bf16.mxu0 0
    %9278 = vmatpush1.bf16.msra.mxu0 0
    %9279 = vmatprep.subr.bf16.mxu0 0
    %9280 = vmatpush1.bf16.msra.mxu0 0
    %9281 = vmatprep.mubr.bf16.mxu0 0
    %9282 = vmatmul.mubr.bf16.gmra.mrb[0].mxu0 %v8993
    %v9283 = vpop.f32.mrb[0].mxu0
    %v9284 = vadd.f32 %v9227, %v9283
    %v9285 = vpop.f32.mrb[0].mxu0
    %v9286 = vpop.f32.mrb[0].mxu0
    %v9287 = vadd.f32 %v9230, %v9286
    %v9288 = vpop.f32.mrb[0].mxu0
    %9289 = vmatprep.mubr.bf16.mxu0 0
    %9290 = vmatmul.mubr.bf16.gmra.mrb[0].mxu0 %v8996
    %v9291 = vpop.f32.mrb[0].mxu0
    %v9292 = vadd.f32 %v9235, %v9291
    %v9293 = vpop.f32.mrb[0].mxu0
    %v9294 = vpop.f32.mrb[0].mxu0
    %v9295 = vadd.f32 %v9238, %v9294
    %v9296 = vpop.f32.mrb[0].mxu0
    %9297 = vmatprep.mubr.bf16.mxu0 0
    %9298 = vmatmul.mubr.bf16.gmra.mrb[0].mxu0 %v8999
    %v9299 = vpop.f32.mrb[0].mxu0
    %v9300 = vadd.f32 %v9243, %v9299
    %v9301 = vpop.f32.mrb[0].mxu0
    %v9302 = vpop.f32.mrb[0].mxu0
    %v9303 = vadd.f32 %v9246, %v9302
    %v9304 = vpop.f32.mrb[0].mxu0
    %9305 = vdwg.mxu0
    %v9306 = vadd.f32 %v9284, %v9292
    %v9307 = vadd.f32 %v9287, %v9295
    %v9308 = vadd.f32 %v9306, %v9300
    %v9309 = vadd.f32 %v9307, %v9303
    %v9310 = vmul.f32 %v9308, 0.0021978023
    %v9311 = vmul.f32 %v9309, 0.0021978023
    %9312 = vst [vmem:[#allocation3 + $0xd0] sm:$0xff] %v9310
    %9313 = vst [vmem:[#allocation3 + $0x1d0] sm:$0xff] %v9311
    %v9314 = vld [vmem:[#allocation2 + $0xd8] sm:$0xff]
    %v9315 = vld [vmem:[#allocation2 + $0xe0] sm:$0xff]
    %v9316 = vld [vmem:[#allocation2 + $0xe8] sm:$0xff]
    %v9317 = vld [vmem:[#allocation2 + $0x1e8] sm:$0xff]
    %v9318 = vld [vmem:[#allocation2 + $0x1f0] sm:$0xff]
    %v9319 = vld [vmem:[#allocation2 + $0x1f8] sm:$0xff]
    %v9320 = vld [vmem:[#allocation2 + $0x2f8] sm:$0xff]
    %v9321 = vld [vmem:[#allocation2 + $0x300] sm:$0xff]
    %v9322 = vld [vmem:[#allocation2 + $0x308] sm:$0xff]
    %v9323 = vld [vmem:[%s924] sm:$0xf]
    %v9324 = vld [vmem:[%s924 + $0x4] sm:$0xf]
    %v9325 = vld [vmem:[%s924 + $0x8] sm:$0xf]
    %v9326 = vld [vmem:[%s924 + $0xc] sm:$0xf]
    %v9327 = vld [vmem:[%s924 + $0x10] sm:$0xf]
    %v9328 = vld [vmem:[%s924 + $0x14] sm:$0xf]
    %v9329 = vld [vmem:[%s924 + $0x18] sm:$0xf]
    %v9330 = vld [vmem:[%s924 + $0x1c] sm:$0xf]
    %v9331 = vld [vmem:[%s924 + $0x20] sm:$0xf]
    %v9332 = vld [vmem:[%s924 + $0x24] sm:$0xf]
    %v9333 = vld [vmem:[%s924 + $0x28] sm:$0xf]
    %v9334 = vld [vmem:[%s924 + $0x2c] sm:$0xf]
    %v9335 = vld [vmem:[%s924 + $0x30] sm:$0xf]
    %v9336 = vld [vmem:[%s924 + $0x34] sm:$0xf]
    %v9337 = vld [vmem:[%s924 + $0x38] sm:$0xf]
    %v9338 = vld [vmem:[%s924 + $0x3c] sm:$0xf]
    %v9339 = vld [vmem:[%s924 + $0x40] sm:$0xf]
    %v9340 = vld [vmem:[%s924 + $0x44] sm:$0xf]
    %v9341 = vld [vmem:[%s924 + $0x48] sm:$0xf]
    %v9342 = vld [vmem:[%s924 + $0x4c] sm:$0xf]
    %v9343 = vld [vmem:[%s924 + $0x50] sm:$0xf]
    %v9344 = vld [vmem:[%s924 + $0x54] sm:$0xf]
    %v9345 = vld [vmem:[%s924 + $0x58] sm:$0xf]
    %v9346 = vld [vmem:[%s924 + $0x5c] sm:$0xf]
    %v9347 = vld [vmem:[%s924 + $0x60] sm:$0xf]
    %v9348 = vld [vmem:[%s924 + $0x64] sm:$0xf]
    %v9349 = vld [vmem:[%s924 + $0x68] sm:$0xf]
    %v9350 = vld [vmem:[%s924 + $0x6c] sm:$0xf]
    %v9351 = vld [vmem:[%s924 + $0x70] sm:$0xf]
    %v9352 = vld [vmem:[%s924 + $0x74] sm:$0xf]
    %v9353 = vld [vmem:[%s924 + $0x78] sm:$0xf]
    %v9354 = vld [vmem:[%s924 + $0x7c] sm:$0xf]
    %v9355 = vld [vmem:[%s924 + $0x80] sm:$0xf]
    %v9356 = vld [vmem:[%s924 + $0x84] sm:$0xf]
    %v9357 = vld [vmem:[%s924 + $0x88] sm:$0xf]
    %v9358 = vld [vmem:[%s924 + $0x8c] sm:$0xf]
    %v9359 = vld [vmem:[%s924 + $0x90] sm:$0xf]
    %v9360 = vld [vmem:[%s924 + $0x94] sm:$0xf]
    %v9361 = vld [vmem:[%s924 + $0x98] sm:$0xf]
    %v9362 = vld [vmem:[%s924 + $0x9c] sm:$0xf]
    %v9363 = vld [vmem:[%s924 + $0xa0] sm:$0xf]
    %v9364 = vld [vmem:[%s924 + $0xa4] sm:$0xf]
    %v9365 = vld [vmem:[%s924 + $0xa8] sm:$0xf]
    %v9366 = vld [vmem:[%s924 + $0xac] sm:$0xf]
    %v9367 = vld [vmem:[%s924 + $0xb0] sm:$0xf]
    %v9368 = vld [vmem:[%s924 + $0xb4] sm:$0xf]
    %v9369 = vld [vmem:[%s924 + $0xb8] sm:$0xf]
    %v9370 = vld [vmem:[%s924 + $0xbc] sm:$0xf]
    %v9419 = vunpack.c.l.b16 %v9323
    %v9420 = vunpack.c.l.b16 %v9324
    %v9421 = vunpack.c.l.b16 %v9325
    %v9422 = vunpack.c.l.b16 %v9326
    %v9423 = vunpack.c.l.b16 %v9327
    %v9424 = vunpack.c.l.b16 %v9328
    %v9425 = vunpack.c.l.b16 %v9329
    %v9426 = vunpack.c.l.b16 %v9330
    %v9427 = vunpack.c.l.b16 %v9331
    %v9428 = vunpack.c.l.b16 %v9332
    %v9429 = vunpack.c.l.b16 %v9333
    %v9430 = vunpack.c.l.b16 %v9334
    %v9431 = vunpack.c.l.b16 %v9335
    %v9432 = vunpack.c.l.b16 %v9336
    %v9433 = vunpack.c.l.b16 %v9337
    %v9434 = vunpack.c.l.b16 %v9338
    %v9435 = vunpack.c.l.b16 %v9339
    %v9436 = vunpack.c.l.b16 %v9340
    %v9437 = vunpack.c.l.b16 %v9341
    %v9438 = vunpack.c.l.b16 %v9342
    %v9439 = vunpack.c.l.b16 %v9343
    %v9440 = vunpack.c.l.b16 %v9344
    %v9441 = vunpack.c.l.b16 %v9345
    %v9442 = vunpack.c.l.b16 %v9346
    %v9443 = vunpack.c.l.b16 %v9347
    %v9444 = vunpack.c.l.b16 %v9348
    %v9445 = vunpack.c.l.b16 %v9349
    %v9446 = vunpack.c.l.b16 %v9350
    %v9447 = vunpack.c.l.b16 %v9351
    %v9448 = vunpack.c.l.b16 %v9352
    %v9449 = vunpack.c.l.b16 %v9353
    %v9450 = vunpack.c.l.b16 %v9354
    %v9451 = vunpack.c.l.b16 %v9355
    %v9452 = vunpack.c.l.b16 %v9356
    %v9453 = vunpack.c.l.b16 %v9357
    %v9454 = vunpack.c.l.b16 %v9358
    %v9455 = vunpack.c.l.b16 %v9359
    %v9456 = vunpack.c.l.b16 %v9360
    %v9457 = vunpack.c.l.b16 %v9361
    %v9458 = vunpack.c.l.b16 %v9362
    %v9459 = vunpack.c.l.b16 %v9363
    %v9460 = vunpack.c.l.b16 %v9364
    %v9461 = vunpack.c.l.b16 %v9365
    %v9462 = vunpack.c.l.b16 %v9366
    %v9463 = vunpack.c.l.b16 %v9367
    %v9464 = vunpack.c.l.b16 %v9368
    %v9465 = vunpack.c.l.b16 %v9369
    %v9466 = vunpack.c.l.b16 %v9370
    %v9467 = vpack.c.b16 %v9420, %v9419
    %v9468 = vpack.c.b16 %v9422, %v9421
    %v9469 = vpack.c.b16 %v9424, %v9423
    %v9470 = vpack.c.b16 %v9426, %v9425
    %v9471 = vpack.c.b16 %v9428, %v9427
    %v9472 = vpack.c.b16 %v9430, %v9429
    %v9473 = vpack.c.b16 %v9432, %v9431
    %v9474 = vpack.c.b16 %v9434, %v9433
    %v9475 = vpack.c.b16 %v9436, %v9435
    %v9476 = vpack.c.b16 %v9438, %v9437
    %v9477 = vpack.c.b16 %v9440, %v9439
    %v9478 = vpack.c.b16 %v9442, %v9441
    %v9479 = vpack.c.b16 %v9444, %v9443
    %v9480 = vpack.c.b16 %v9446, %v9445
    %v9481 = vpack.c.b16 %v9448, %v9447
    %v9482 = vpack.c.b16 %v9450, %v9449
    %v9483 = vpack.c.b16 %v9452, %v9451
    %v9484 = vpack.c.b16 %v9454, %v9453
    %v9485 = vpack.c.b16 %v9456, %v9455
    %v9486 = vpack.c.b16 %v9458, %v9457
    %v9487 = vpack.c.b16 %v9460, %v9459
    %v9488 = vpack.c.b16 %v9462, %v9461
    %v9489 = vpack.c.b16 %v9464, %v9463
    %v9490 = vpack.c.b16 %v9466, %v9465
    %9515 = vmatprep.subr.bf16.mxu0 0
    %9516 = vmatpush1.bf16.msra.mxu0 %v9467
    %9517 = vmatprep.subr.bf16.mxu0 0
    %9518 = vmatpush1.bf16.msra.mxu0 %v9468
    %9519 = vmatprep.subr.bf16.mxu0 0
    %9520 = vmatpush1.bf16.msra.mxu0 %v9469
    %9521 = vmatprep.subr.bf16.mxu0 0
    %9522 = vmatpush1.bf16.msra.mxu0 %v9470
    %9523 = vmatprep.subr.bf16.mxu0 0
    %9524 = vmatpush1.bf16.msra.mxu0 %v9471
    %9525 = vmatprep.subr.bf16.mxu0 0
    %9526 = vmatpush1.bf16.msra.mxu0 %v9472
    %9527 = vmatprep.subr.bf16.mxu0 0
    %9528 = vmatpush1.bf16.msra.mxu0 %v9473
    %9529 = vmatprep.subr.bf16.mxu0 0
    %9530 = vmatpush1.bf16.msra.mxu0 %v9474
    %9531 = vmatprep.subr.bf16.mxu0 0
    %9532 = vmatpush1.bf16.msra.mxu0 %v9475
    %9533 = vmatprep.subr.bf16.mxu0 0
    %9534 = vmatpush1.bf16.msra.mxu0 %v9476
    %9535 = vmatprep.subr.bf16.mxu0 0
    %9536 = vmatpush1.bf16.msra.mxu0 %v9477
    %9537 = vmatprep.subr.bf16.mxu0 0
    %9538 = vmatpush1.bf16.msra.mxu0 %v9478
    %9539 = vmatprep.subr.bf16.mxu0 0
    %9540 = vmatpush1.bf16.msra.mxu0 %v9479
    %9541 = vmatprep.subr.bf16.mxu0 0
    %9542 = vmatpush1.bf16.msra.mxu0 %v9480
    %9543 = vmatprep.subr.bf16.mxu0 0
    %9544 = vmatpush1.bf16.msra.mxu0 %v9481
    %9545 = vmatprep.subr.bf16.mxu0 0
    %9546 = vmatpush1.bf16.msra.mxu0 %v9482
    %9547 = vmatprep.mubr.bf16.mxu0 %v9315
    %9548 = vmatmul.mubr.bf16.gmra.mrb[0].mxu0 %v9314
    %v9549 = vpop.f32.mrb[0].mxu0
    %v9550 = vadd.f32 0.0, %v9549
    %v9551 = vpop.f32.mrb[0].mxu0
    %v9552 = vpop.f32.mrb[0].mxu0
    %v9553 = vadd.f32 0.0, %v9552
    %v9554 = vpop.f32.mrb[0].mxu0
    %9555 = vmatprep.mubr.bf16.mxu0 %v9318
    %9556 = vmatmul.mubr.bf16.gmra.mrb[0].mxu0 %v9317
    %v9557 = vpop.f32.mrb[0].mxu0
    %v9558 = vadd.f32 0.0, %v9557
    %v9559 = vpop.f32.mrb[0].mxu0
    %v9560 = vpop.f32.mrb[0].mxu0
    %v9561 = vadd.f32 0.0, %v9560
    %v9562 = vpop.f32.mrb[0].mxu0
    %9563 = vmatprep.mubr.bf16.mxu0 %v9321
    %9564 = vmatmul.mubr.bf16.gmra.mrb[0].mxu0 %v9320
    %v9565 = vpop.f32.mrb[0].mxu0
    %v9566 = vadd.f32 0.0, %v9565
    %v9567 = vpop.f32.mrb[0].mxu0
    %v9568 = vpop.f32.mrb[0].mxu0
    %v9569 = vadd.f32 0.0, %v9568
    %v9570 = vpop.f32.mrb[0].mxu0
    %9571 = vdwg.mxu0
    %9572 = vmatprep.subr.bf16.mxu0 0
    %9573 = vmatpush1.bf16.msra.mxu0 %v9483
    %9574 = vmatprep.subr.bf16.mxu0 0
    %9575 = vmatpush1.bf16.msra.mxu0 %v9484
    %9576 = vmatprep.subr.bf16.mxu0 0
    %9577 = vmatpush1.bf16.msra.mxu0 %v9485
    %9578 = vmatprep.subr.bf16.mxu0 0
    %9579 = vmatpush1.bf16.msra.mxu0 %v9486
    %9580 = vmatprep.subr.bf16.mxu0 0
    %9581 = vmatpush1.bf16.msra.mxu0 %v9487
    %9582 = vmatprep.subr.bf16.mxu0 0
    %9583 = vmatpush1.bf16.msra.mxu0 %v9488
    %9584 = vmatprep.subr.bf16.mxu0 0
    %9585 = vmatpush1.bf16.msra.mxu0 %v9489
    %9586 = vmatprep.subr.bf16.mxu0 0
    %9587 = vmatpush1.bf16.msra.mxu0 %v9490
    %9588 = vmatprep.subr.bf16.mxu0 0
    %9589 = vmatpush1.bf16.msra.mxu0 0
    %9590 = vmatprep.subr.bf16.mxu0 0
    %9591 = vmatpush1.bf16.msra.mxu0 0
    %9592 = vmatprep.subr.bf16.mxu0 0
    %9593 = vmatpush1.bf16.msra.mxu0 0
    %9594 = vmatprep.subr.bf16.mxu0 0
    %9595 = vmatpush1.bf16.msra.mxu0 0
    %9596 = vmatprep.subr.bf16.mxu0 0
    %9597 = vmatpush1.bf16.msra.mxu0 0
    %9598 = vmatprep.subr.bf16.mxu0 0
    %9599 = vmatpush1.bf16.msra.mxu0 0
    %9600 = vmatprep.subr.bf16.mxu0 0
    %9601 = vmatpush1.bf16.msra.mxu0 0
    %9602 = vmatprep.subr.bf16.mxu0 0
    %9603 = vmatpush1.bf16.msra.mxu0 0
    %9604 = vmatprep.mubr.bf16.mxu0 0
    %9605 = vmatmul.mubr.bf16.gmra.mrb[0].mxu0 %v9316
    %v9606 = vpop.f32.mrb[0].mxu0
    %v9607 = vadd.f32 %v9550, %v9606
    %v9608 = vpop.f32.mrb[0].mxu0
    %v9609 = vpop.f32.mrb[0].mxu0
    %v9610 = vadd.f32 %v9553, %v9609
    %v9611 = vpop.f32.mrb[0].mxu0
    %9612 = vmatprep.mubr.bf16.mxu0 0
    %9613 = vmatmul.mubr.bf16.gmra.mrb[0].mxu0 %v9319
    %v9614 = vpop.f32.mrb[0].mxu0
    %v9615 = vadd.f32 %v9558, %v9614
    %v9616 = vpop.f32.mrb[0].mxu0
    %v9617 = vpop.f32.mrb[0].mxu0
    %v9618 = vadd.f32 %v9561, %v9617
    %v9619 = vpop.f32.mrb[0].mxu0
    %9620 = vmatprep.mubr.bf16.mxu0 0
    %9621 = vmatmul.mubr.bf16.gmra.mrb[0].mxu0 %v9322
    %v9622 = vpop.f32.mrb[0].mxu0
    %v9623 = vadd.f32 %v9566, %v9622
    %v9624 = vpop.f32.mrb[0].mxu0
    %v9625 = vpop.f32.mrb[0].mxu0
    %v9626 = vadd.f32 %v9569, %v9625
    %v9627 = vpop.f32.mrb[0].mxu0
    %9628 = vdwg.mxu0
    %v9629 = vadd.f32 %v9607, %v9615
    %v9630 = vadd.f32 %v9610, %v9618
    %v9631 = vadd.f32 %v9629, %v9623
    %v9632 = vadd.f32 %v9630, %v9626
    %v9633 = vmul.f32 %v9631, 0.0021978023
    %v9634 = vmul.f32 %v9632, 0.0021978023
    %9635 = vst [vmem:[#allocation3 + $0xd8] sm:$0xff] %v9633
    %9636 = vst [vmem:[#allocation3 + $0x1d8] sm:$0xff] %v9634
    %v9637 = vld [vmem:[#allocation2 + $0xe0] sm:$0xff]
    %v9638 = vld [vmem:[#allocation2 + $0xe8] sm:$0xff]
    %v9639 = vld [vmem:[#allocation2 + $0xf0] sm:$0xff]
    %v9640 = vld [vmem:[#allocation2 + $0x1f0] sm:$0xff]
    %v9641 = vld [vmem:[#allocation2 + $0x1f8] sm:$0xff]
    %v9642 = vld [vmem:[#allocation2 + $0x200] sm:$0xff]
    %v9643 = vld [vmem:[#allocation2 + $0x300] sm:$0xff]
    %v9644 = vld [vmem:[#allocation2 + $0x308] sm:$0xff]
    %v9645 = vld [vmem:[#allocation2 + $0x310] sm:$0xff]
    %v9646 = vld [vmem:[%s924] sm:$0xf]
    %v9647 = vld [vmem:[%s924 + $0x4] sm:$0xf]
    %v9648 = vld [vmem:[%s924 + $0x8] sm:$0xf]
    %v9649 = vld [vmem:[%s924 + $0xc] sm:$0xf]
    %v9650 = vld [vmem:[%s924 + $0x10] sm:$0xf]
    %v9651 = vld [vmem:[%s924 + $0x14] sm:$0xf]
    %v9652 = vld [vmem:[%s924 + $0x18] sm:$0xf]
    %v9653 = vld [vmem:[%s924 + $0x1c] sm:$0xf]
    %v9654 = vld [vmem:[%s924 + $0x20] sm:$0xf]
    %v9655 = vld [vmem:[%s924 + $0x24] sm:$0xf]
    %v9656 = vld [vmem:[%s924 + $0x28] sm:$0xf]
    %v9657 = vld [vmem:[%s924 + $0x2c] sm:$0xf]
    %v9658 = vld [vmem:[%s924 + $0x30] sm:$0xf]
    %v9659 = vld [vmem:[%s924 + $0x34] sm:$0xf]
    %v9660 = vld [vmem:[%s924 + $0x38] sm:$0xf]
    %v9661 = vld [vmem:[%s924 + $0x3c] sm:$0xf]
    %v9662 = vld [vmem:[%s924 + $0x40] sm:$0xf]
    %v9663 = vld [vmem:[%s924 + $0x44] sm:$0xf]
    %v9664 = vld [vmem:[%s924 + $0x48] sm:$0xf]
    %v9665 = vld [vmem:[%s924 + $0x4c] sm:$0xf]
    %v9666 = vld [vmem:[%s924 + $0x50] sm:$0xf]
    %v9667 = vld [vmem:[%s924 + $0x54] sm:$0xf]
    %v9668 = vld [vmem:[%s924 + $0x58] sm:$0xf]
    %v9669 = vld [vmem:[%s924 + $0x5c] sm:$0xf]
    %v9670 = vld [vmem:[%s924 + $0x60] sm:$0xf]
    %v9671 = vld [vmem:[%s924 + $0x64] sm:$0xf]
    %v9672 = vld [vmem:[%s924 + $0x68] sm:$0xf]
    %v9673 = vld [vmem:[%s924 + $0x6c] sm:$0xf]
    %v9674 = vld [vmem:[%s924 + $0x70] sm:$0xf]
    %v9675 = vld [vmem:[%s924 + $0x74] sm:$0xf]
    %v9676 = vld [vmem:[%s924 + $0x78] sm:$0xf]
    %v9677 = vld [vmem:[%s924 + $0x7c] sm:$0xf]
    %v9678 = vld [vmem:[%s924 + $0x80] sm:$0xf]
    %v9679 = vld [vmem:[%s924 + $0x84] sm:$0xf]
    %v9680 = vld [vmem:[%s924 + $0x88] sm:$0xf]
    %v9681 = vld [vmem:[%s924 + $0x8c] sm:$0xf]
    %v9682 = vld [vmem:[%s924 + $0x90] sm:$0xf]
    %v9683 = vld [vmem:[%s924 + $0x94] sm:$0xf]
    %v9684 = vld [vmem:[%s924 + $0x98] sm:$0xf]
    %v9685 = vld [vmem:[%s924 + $0x9c] sm:$0xf]
    %v9686 = vld [vmem:[%s924 + $0xa0] sm:$0xf]
    %v9687 = vld [vmem:[%s924 + $0xa4] sm:$0xf]
    %v9688 = vld [vmem:[%s924 + $0xa8] sm:$0xf]
    %v9689 = vld [vmem:[%s924 + $0xac] sm:$0xf]
    %v9690 = vld [vmem:[%s924 + $0xb0] sm:$0xf]
    %v9691 = vld [vmem:[%s924 + $0xb4] sm:$0xf]
    %v9692 = vld [vmem:[%s924 + $0xb8] sm:$0xf]
    %v9693 = vld [vmem:[%s924 + $0xbc] sm:$0xf]
    %v9742 = vunpack.c.l.b16 %v9646
    %v9743 = vunpack.c.l.b16 %v9647
    %v9744 = vunpack.c.l.b16 %v9648
    %v9745 = vunpack.c.l.b16 %v9649
    %v9746 = vunpack.c.l.b16 %v9650
    %v9747 = vunpack.c.l.b16 %v9651
    %v9748 = vunpack.c.l.b16 %v9652
    %v9749 = vunpack.c.l.b16 %v9653
    %v9750 = vunpack.c.l.b16 %v9654
    %v9751 = vunpack.c.l.b16 %v9655
    %v9752 = vunpack.c.l.b16 %v9656
    %v9753 = vunpack.c.l.b16 %v9657
    %v9754 = vunpack.c.l.b16 %v9658
    %v9755 = vunpack.c.l.b16 %v9659
    %v9756 = vunpack.c.l.b16 %v9660
    %v9757 = vunpack.c.l.b16 %v9661
    %v9758 = vunpack.c.l.b16 %v9662
    %v9759 = vunpack.c.l.b16 %v9663
    %v9760 = vunpack.c.l.b16 %v9664
    %v9761 = vunpack.c.l.b16 %v9665
    %v9762 = vunpack.c.l.b16 %v9666
    %v9763 = vunpack.c.l.b16 %v9667
    %v9764 = vunpack.c.l.b16 %v9668
    %v9765 = vunpack.c.l.b16 %v9669
    %v9766 = vunpack.c.l.b16 %v9670
    %v9767 = vunpack.c.l.b16 %v9671
    %v9768 = vunpack.c.l.b16 %v9672
    %v9769 = vunpack.c.l.b16 %v9673
    %v9770 = vunpack.c.l.b16 %v9674
    %v9771 = vunpack.c.l.b16 %v9675
    %v9772 = vunpack.c.l.b16 %v9676
    %v9773 = vunpack.c.l.b16 %v9677
    %v9774 = vunpack.c.l.b16 %v9678
    %v9775 = vunpack.c.l.b16 %v9679
    %v9776 = vunpack.c.l.b16 %v9680
    %v9777 = vunpack.c.l.b16 %v9681
    %v9778 = vunpack.c.l.b16 %v9682
    %v9779 = vunpack.c.l.b16 %v9683
    %v9780 = vunpack.c.l.b16 %v9684
    %v9781 = vunpack.c.l.b16 %v9685
    %v9782 = vunpack.c.l.b16 %v9686
    %v9783 = vunpack.c.l.b16 %v9687
    %v9784 = vunpack.c.l.b16 %v9688
    %v9785 = vunpack.c.l.b16 %v9689
    %v9786 = vunpack.c.l.b16 %v9690
    %v9787 = vunpack.c.l.b16 %v9691
    %v9788 = vunpack.c.l.b16 %v9692
    %v9789 = vunpack.c.l.b16 %v9693
    %v9790 = vpack.c.b16 %v9743, %v9742
    %v9791 = vpack.c.b16 %v9745, %v9744
    %v9792 = vpack.c.b16 %v9747, %v9746
    %v9793 = vpack.c.b16 %v9749, %v9748
    %v9794 = vpack.c.b16 %v9751, %v9750
    %v9795 = vpack.c.b16 %v9753, %v9752
    %v9796 = vpack.c.b16 %v9755, %v9754
    %v9797 = vpack.c.b16 %v9757, %v9756
    %v9798 = vpack.c.b16 %v9759, %v9758
    %v9799 = vpack.c.b16 %v9761, %v9760
    %v9800 = vpack.c.b16 %v9763, %v9762
    %v9801 = vpack.c.b16 %v9765, %v9764
    %v9802 = vpack.c.b16 %v9767, %v9766
    %v9803 = vpack.c.b16 %v9769, %v9768
    %v9804 = vpack.c.b16 %v9771, %v9770
    %v9805 = vpack.c.b16 %v9773, %v9772
    %v9806 = vpack.c.b16 %v9775, %v9774
    %v9807 = vpack.c.b16 %v9777, %v9776
    %v9808 = vpack.c.b16 %v9779, %v9778
    %v9809 = vpack.c.b16 %v9781, %v9780
    %v9810 = vpack.c.b16 %v9783, %v9782
    %v9811 = vpack.c.b16 %v9785, %v9784
    %v9812 = vpack.c.b16 %v9787, %v9786
    %v9813 = vpack.c.b16 %v9789, %v9788
    %9838 = vmatprep.subr.bf16.mxu0 0
    %9839 = vmatpush1.bf16.msra.mxu0 %v9790
    %9840 = vmatprep.subr.bf16.mxu0 0
    %9841 = vmatpush1.bf16.msra.mxu0 %v9791
    %9842 = vmatprep.subr.bf16.mxu0 0
    %9843 = vmatpush1.bf16.msra.mxu0 %v9792
    %9844 = vmatprep.subr.bf16.mxu0 0
    %9845 = vmatpush1.bf16.msra.mxu0 %v9793
    %9846 = vmatprep.subr.bf16.mxu0 0
    %9847 = vmatpush1.bf16.msra.mxu0 %v9794
    %9848 = vmatprep.subr.bf16.mxu0 0
    %9849 = vmatpush1.bf16.msra.mxu0 %v9795
    %9850 = vmatprep.subr.bf16.mxu0 0
    %9851 = vmatpush1.bf16.msra.mxu0 %v9796
    %9852 = vmatprep.subr.bf16.mxu0 0
    %9853 = vmatpush1.bf16.msra.mxu0 %v9797
    %9854 = vmatprep.subr.bf16.mxu0 0
    %9855 = vmatpush1.bf16.msra.mxu0 %v9798
    %9856 = vmatprep.subr.bf16.mxu0 0
    %9857 = vmatpush1.bf16.msra.mxu0 %v9799
    %9858 = vmatprep.subr.bf16.mxu0 0
    %9859 = vmatpush1.bf16.msra.mxu0 %v9800
    %9860 = vmatprep.subr.bf16.mxu0 0
    %9861 = vmatpush1.bf16.msra.mxu0 %v9801
    %9862 = vmatprep.subr.bf16.mxu0 0
    %9863 = vmatpush1.bf16.msra.mxu0 %v9802
    %9864 = vmatprep.subr.bf16.mxu0 0
    %9865 = vmatpush1.bf16.msra.mxu0 %v9803
    %9866 = vmatprep.subr.bf16.mxu0 0
    %9867 = vmatpush1.bf16.msra.mxu0 %v9804
    %9868 = vmatprep.subr.bf16.mxu0 0
    %9869 = vmatpush1.bf16.msra.mxu0 %v9805
    %9870 = vmatprep.mubr.bf16.mxu0 %v9638
    %9871 = vmatmul.mubr.bf16.gmra.mrb[0].mxu0 %v9637
    %v9872 = vpop.f32.mrb[0].mxu0
    %v9873 = vadd.f32 0.0, %v9872
    %v9874 = vpop.f32.mrb[0].mxu0
    %v9875 = vpop.f32.mrb[0].mxu0
    %v9876 = vadd.f32 0.0, %v9875
    %v9877 = vpop.f32.mrb[0].mxu0
    %9878 = vmatprep.mubr.bf16.mxu0 %v9641
    %9879 = vmatmul.mubr.bf16.gmra.mrb[0].mxu0 %v9640
    %v9880 = vpop.f32.mrb[0].mxu0
    %v9881 = vadd.f32 0.0, %v9880
    %v9882 = vpop.f32.mrb[0].mxu0
    %v9883 = vpop.f32.mrb[0].mxu0
    %v9884 = vadd.f32 0.0, %v9883
    %v9885 = vpop.f32.mrb[0].mxu0
    %9886 = vmatprep.mubr.bf16.mxu0 %v9644
    %9887 = vmatmul.mubr.bf16.gmra.mrb[0].mxu0 %v9643
    %v9888 = vpop.f32.mrb[0].mxu0
    %v9889 = vadd.f32 0.0, %v9888
    %v9890 = vpop.f32.mrb[0].mxu0
    %v9891 = vpop.f32.mrb[0].mxu0
    %v9892 = vadd.f32 0.0, %v9891
    %v9893 = vpop.f32.mrb[0].mxu0
    %9894 = vdwg.mxu0
    %9895 = vmatprep.subr.bf16.mxu0 0
    %9896 = vmatpush1.bf16.msra.mxu0 %v9806
    %9897 = vmatprep.subr.bf16.mxu0 0
    %9898 = vmatpush1.bf16.msra.mxu0 %v9807
    %9899 = vmatprep.subr.bf16.mxu0 0
    %9900 = vmatpush1.bf16.msra.mxu0 %v9808
    %9901 = vmatprep.subr.bf16.mxu0 0
    %9902 = vmatpush1.bf16.msra.mxu0 %v9809
    %9903 = vmatprep.subr.bf16.mxu0 0
    %9904 = vmatpush1.bf16.msra.mxu0 %v9810
    %9905 = vmatprep.subr.bf16.mxu0 0
    %9906 = vmatpush1.bf16.msra.mxu0 %v9811
    %9907 = vmatprep.subr.bf16.mxu0 0
    %9908 = vmatpush1.bf16.msra.mxu0 %v9812
    %9909 = vmatprep.subr.bf16.mxu0 0
    %9910 = vmatpush1.bf16.msra.mxu0 %v9813
    %9911 = vmatprep.subr.bf16.mxu0 0
    %9912 = vmatpush1.bf16.msra.mxu0 0
    %9913 = vmatprep.subr.bf16.mxu0 0
    %9914 = vmatpush1.bf16.msra.mxu0 0
    %9915 = vmatprep.subr.bf16.mxu0 0
    %9916 = vmatpush1.bf16.msra.mxu0 0
    %9917 = vmatprep.subr.bf16.mxu0 0
    %9918 = vmatpush1.bf16.msra.mxu0 0
    %9919 = vmatprep.subr.bf16.mxu0 0
    %9920 = vmatpush1.bf16.msra.mxu0 0
    %9921 = vmatprep.subr.bf16.mxu0 0
    %9922 = vmatpush1.bf16.msra.mxu0 0
    %9923 = vmatprep.subr.bf16.mxu0 0
    %9924 = vmatpush1.bf16.msra.mxu0 0
    %9925 = vmatprep.subr.bf16.mxu0 0
    %9926 = vmatpush1.bf16.msra.mxu0 0
    %9927 = vmatprep.mubr.bf16.mxu0 0
    %9928 = vmatmul.mubr.bf16.gmra.mrb[0].mxu0 %v9639
    %v9929 = vpop.f32.mrb[0].mxu0
    %v9930 = vadd.f32 %v9873, %v9929
    %v9931 = vpop.f32.mrb[0].mxu0
    %v9932 = vpop.f32.mrb[0].mxu0
    %v9933 = vadd.f32 %v9876, %v9932
    %v9934 = vpop.f32.mrb[0].mxu0
    %9935 = vmatprep.mubr.bf16.mxu0 0
    %9936 = vmatmul.mubr.bf16.gmra.mrb[0].mxu0 %v9642
    %v9937 = vpop.f32.mrb[0].mxu0
    %v9938 = vadd.f32 %v9881, %v9937
    %v9939 = vpop.f32.mrb[0].mxu0
    %v9940 = vpop.f32.mrb[0].mxu0
    %v9941 = vadd.f32 %v9884, %v9940
    %v9942 = vpop.f32.mrb[0].mxu0
    %9943 = vmatprep.mubr.bf16.mxu0 0
    %9944 = vmatmul.mubr.bf16.gmra.mrb[0].mxu0 %v9645
    %v9945 = vpop.f32.mrb[0].mxu0
    %v9946 = vadd.f32 %v9889, %v9945
    %v9947 = vpop.f32.mrb[0].mxu0
    %v9948 = vpop.f32.mrb[0].mxu0
    %v9949 = vadd.f32 %v9892, %v9948
    %v9950 = vpop.f32.mrb[0].mxu0
    %9951 = vdwg.mxu0
    %v9952 = vadd.f32 %v9930, %v9938
    %v9953 = vadd.f32 %v9933, %v9941
    %v9954 = vadd.f32 %v9952, %v9946
    %v9955 = vadd.f32 %v9953, %v9949
    %v9956 = vmul.f32 %v9954, 0.0021978023
    %v9957 = vmul.f32 %v9955, 0.0021978023
    %9958 = vst [vmem:[#allocation3 + $0xe0] sm:$0xff] %v9956
    %9959 = vst [vmem:[#allocation3 + $0x1e0] sm:$0xff] %v9957
    %v9960 = vld [vmem:[#allocation2 + $0xe8] sm:$0xff]
    %v9961 = vld [vmem:[#allocation2 + $0xf0] sm:$0xff]
    %v9962 = vld [vmem:[#allocation2 + $0xf8] sm:$0xff]
    %v9963 = vld [vmem:[#allocation2 + $0x1f8] sm:$0xff]
    %v9964 = vld [vmem:[#allocation2 + $0x200] sm:$0xff]
    %v9965 = vld [vmem:[#allocation2 + $0x208] sm:$0xff]
    %v9966 = vld [vmem:[#allocation2 + $0x308] sm:$0xff]
    %v9967 = vld [vmem:[#allocation2 + $0x310] sm:$0xff]
    %v9968 = vld [vmem:[#allocation2 + $0x318] sm:$0xff]
    %v9969 = vld [vmem:[%s924] sm:$0xf]
    %v9970 = vld [vmem:[%s924 + $0x4] sm:$0xf]
    %v9971 = vld [vmem:[%s924 + $0x8] sm:$0xf]
    %v9972 = vld [vmem:[%s924 + $0xc] sm:$0xf]
    %v9973 = vld [vmem:[%s924 + $0x10] sm:$0xf]
    %v9974 = vld [vmem:[%s924 + $0x14] sm:$0xf]
    %v9975 = vld [vmem:[%s924 + $0x18] sm:$0xf]
    %v9976 = vld [vmem:[%s924 + $0x1c] sm:$0xf]
    %v9977 = vld [vmem:[%s924 + $0x20] sm:$0xf]
    %v9978 = vld [vmem:[%s924 + $0x24] sm:$0xf]
    %v9979 = vld [vmem:[%s924 + $0x28] sm:$0xf]
    %v9980 = vld [vmem:[%s924 + $0x2c] sm:$0xf]
    %v9981 = vld [vmem:[%s924 + $0x30] sm:$0xf]
    %v9982 = vld [vmem:[%s924 + $0x34] sm:$0xf]
    %v9983 = vld [vmem:[%s924 + $0x38] sm:$0xf]
    %v9984 = vld [vmem:[%s924 + $0x3c] sm:$0xf]
    %v9985 = vld [vmem:[%s924 + $0x40] sm:$0xf]
    %v9986 = vld [vmem:[%s924 + $0x44] sm:$0xf]
    %v9987 = vld [vmem:[%s924 + $0x48] sm:$0xf]
    %v9988 = vld [vmem:[%s924 + $0x4c] sm:$0xf]
    %v9989 = vld [vmem:[%s924 + $0x50] sm:$0xf]
    %v9990 = vld [vmem:[%s924 + $0x54] sm:$0xf]
    %v9991 = vld [vmem:[%s924 + $0x58] sm:$0xf]
    %v9992 = vld [vmem:[%s924 + $0x5c] sm:$0xf]
    %v9993 = vld [vmem:[%s924 + $0x60] sm:$0xf]
    %v9994 = vld [vmem:[%s924 + $0x64] sm:$0xf]
    %v9995 = vld [vmem:[%s924 + $0x68] sm:$0xf]
    %v9996 = vld [vmem:[%s924 + $0x6c] sm:$0xf]
    %v9997 = vld [vmem:[%s924 + $0x70] sm:$0xf]
    %v9998 = vld [vmem:[%s924 + $0x74] sm:$0xf]
    %v9999 = vld [vmem:[%s924 + $0x78] sm:$0xf]
    %v10000 = vld [vmem:[%s924 + $0x7c] sm:$0xf]
    %v10001 = vld [vmem:[%s924 + $0x80] sm:$0xf]
    %v10002 = vld [vmem:[%s924 + $0x84] sm:$0xf]
    %v10003 = vld [vmem:[%s924 + $0x88] sm:$0xf]
    %v10004 = vld [vmem:[%s924 + $0x8c] sm:$0xf]
    %v10005 = vld [vmem:[%s924 + $0x90] sm:$0xf]
    %v10006 = vld [vmem:[%s924 + $0x94] sm:$0xf]
    %v10007 = vld [vmem:[%s924 + $0x98] sm:$0xf]
    %v10008 = vld [vmem:[%s924 + $0x9c] sm:$0xf]
    %v10009 = vld [vmem:[%s924 + $0xa0] sm:$0xf]
    %v10010 = vld [vmem:[%s924 + $0xa4] sm:$0xf]
    %v10011 = vld [vmem:[%s924 + $0xa8] sm:$0xf]
    %v10012 = vld [vmem:[%s924 + $0xac] sm:$0xf]
    %v10013 = vld [vmem:[%s924 + $0xb0] sm:$0xf]
    %v10014 = vld [vmem:[%s924 + $0xb4] sm:$0xf]
    %v10015 = vld [vmem:[%s924 + $0xb8] sm:$0xf]
    %v10016 = vld [vmem:[%s924 + $0xbc] sm:$0xf]
    %v10065 = vunpack.c.l.b16 %v9969
    %v10066 = vunpack.c.l.b16 %v9970
    %v10067 = vunpack.c.l.b16 %v9971
    %v10068 = vunpack.c.l.b16 %v9972
    %v10069 = vunpack.c.l.b16 %v9973
    %v10070 = vunpack.c.l.b16 %v9974
    %v10071 = vunpack.c.l.b16 %v9975
    %v10072 = vunpack.c.l.b16 %v9976
    %v10073 = vunpack.c.l.b16 %v9977
    %v10074 = vunpack.c.l.b16 %v9978
    %v10075 = vunpack.c.l.b16 %v9979
    %v10076 = vunpack.c.l.b16 %v9980
    %v10077 = vunpack.c.l.b16 %v9981
    %v10078 = vunpack.c.l.b16 %v9982
    %v10079 = vunpack.c.l.b16 %v9983
    %v10080 = vunpack.c.l.b16 %v9984
    %v10081 = vunpack.c.l.b16 %v9985
    %v10082 = vunpack.c.l.b16 %v9986
    %v10083 = vunpack.c.l.b16 %v9987
    %v10084 = vunpack.c.l.b16 %v9988
    %v10085 = vunpack.c.l.b16 %v9989
    %v10086 = vunpack.c.l.b16 %v9990
    %v10087 = vunpack.c.l.b16 %v9991
    %v10088 = vunpack.c.l.b16 %v9992
    %v10089 = vunpack.c.l.b16 %v9993
    %v10090 = vunpack.c.l.b16 %v9994
    %v10091 = vunpack.c.l.b16 %v9995
    %v10092 = vunpack.c.l.b16 %v9996
    %v10093 = vunpack.c.l.b16 %v9997
    %v10094 = vunpack.c.l.b16 %v9998
    %v10095 = vunpack.c.l.b16 %v9999
    %v10096 = vunpack.c.l.b16 %v10000
    %v10097 = vunpack.c.l.b16 %v10001
    %v10098 = vunpack.c.l.b16 %v10002
    %v10099 = vunpack.c.l.b16 %v10003
    %v10100 = vunpack.c.l.b16 %v10004
    %v10101 = vunpack.c.l.b16 %v10005
    %v10102 = vunpack.c.l.b16 %v10006
    %v10103 = vunpack.c.l.b16 %v10007
    %v10104 = vunpack.c.l.b16 %v10008
    %v10105 = vunpack.c.l.b16 %v10009
    %v10106 = vunpack.c.l.b16 %v10010
    %v10107 = vunpack.c.l.b16 %v10011
    %v10108 = vunpack.c.l.b16 %v10012
    %v10109 = vunpack.c.l.b16 %v10013
    %v10110 = vunpack.c.l.b16 %v10014
    %v10111 = vunpack.c.l.b16 %v10015
    %v10112 = vunpack.c.l.b16 %v10016
    %v10113 = vpack.c.b16 %v10066, %v10065
    %v10114 = vpack.c.b16 %v10068, %v10067
    %v10115 = vpack.c.b16 %v10070, %v10069
    %v10116 = vpack.c.b16 %v10072, %v10071
    %v10117 = vpack.c.b16 %v10074, %v10073
    %v10118 = vpack.c.b16 %v10076, %v10075
    %v10119 = vpack.c.b16 %v10078, %v10077
    %v10120 = vpack.c.b16 %v10080, %v10079
    %v10121 = vpack.c.b16 %v10082, %v10081
    %v10122 = vpack.c.b16 %v10084, %v10083
    %v10123 = vpack.c.b16 %v10086, %v10085
    %v10124 = vpack.c.b16 %v10088, %v10087
    %v10125 = vpack.c.b16 %v10090, %v10089
    %v10126 = vpack.c.b16 %v10092, %v10091
    %v10127 = vpack.c.b16 %v10094, %v10093
    %v10128 = vpack.c.b16 %v10096, %v10095
    %v10129 = vpack.c.b16 %v10098, %v10097
    %v10130 = vpack.c.b16 %v10100, %v10099
    %v10131 = vpack.c.b16 %v10102, %v10101
    %v10132 = vpack.c.b16 %v10104, %v10103
    %v10133 = vpack.c.b16 %v10106, %v10105
    %v10134 = vpack.c.b16 %v10108, %v10107
    %v10135 = vpack.c.b16 %v10110, %v10109
    %v10136 = vpack.c.b16 %v10112, %v10111
    %10161 = vmatprep.subr.bf16.mxu0 0
    %10162 = vmatpush1.bf16.msra.mxu0 %v10113
    %10163 = vmatprep.subr.bf16.mxu0 0
    %10164 = vmatpush1.bf16.msra.mxu0 %v10114
    %10165 = vmatprep.subr.bf16.mxu0 0
    %10166 = vmatpush1.bf16.msra.mxu0 %v10115
    %10167 = vmatprep.subr.bf16.mxu0 0
    %10168 = vmatpush1.bf16.msra.mxu0 %v10116
    %10169 = vmatprep.subr.bf16.mxu0 0
    %10170 = vmatpush1.bf16.msra.mxu0 %v10117
    %10171 = vmatprep.subr.bf16.mxu0 0
    %10172 = vmatpush1.bf16.msra.mxu0 %v10118
    %10173 = vmatprep.subr.bf16.mxu0 0
    %10174 = vmatpush1.bf16.msra.mxu0 %v10119
    %10175 = vmatprep.subr.bf16.mxu0 0
    %10176 = vmatpush1.bf16.msra.mxu0 %v10120
    %10177 = vmatprep.subr.bf16.mxu0 0
    %10178 = vmatpush1.bf16.msra.mxu0 %v10121
    %10179 = vmatprep.subr.bf16.mxu0 0
    %10180 = vmatpush1.bf16.msra.mxu0 %v10122
    %10181 = vmatprep.subr.bf16.mxu0 0
    %10182 = vmatpush1.bf16.msra.mxu0 %v10123
    %10183 = vmatprep.subr.bf16.mxu0 0
    %10184 = vmatpush1.bf16.msra.mxu0 %v10124
    %10185 = vmatprep.subr.bf16.mxu0 0
    %10186 = vmatpush1.bf16.msra.mxu0 %v10125
    %10187 = vmatprep.subr.bf16.mxu0 0
    %10188 = vmatpush1.bf16.msra.mxu0 %v10126
    %10189 = vmatprep.subr.bf16.mxu0 0
    %10190 = vmatpush1.bf16.msra.mxu0 %v10127
    %10191 = vmatprep.subr.bf16.mxu0 0
    %10192 = vmatpush1.bf16.msra.mxu0 %v10128
    %10193 = vmatprep.mubr.bf16.mxu0 %v9961
    %10194 = vmatmul.mubr.bf16.gmra.mrb[0].mxu0 %v9960
    %v10195 = vpop.f32.mrb[0].mxu0
    %v10196 = vadd.f32 0.0, %v10195
    %v10197 = vpop.f32.mrb[0].mxu0
    %v10198 = vpop.f32.mrb[0].mxu0
    %v10199 = vadd.f32 0.0, %v10198
    %v10200 = vpop.f32.mrb[0].mxu0
    %10201 = vmatprep.mubr.bf16.mxu0 %v9964
    %10202 = vmatmul.mubr.bf16.gmra.mrb[0].mxu0 %v9963
    %v10203 = vpop.f32.mrb[0].mxu0
    %v10204 = vadd.f32 0.0, %v10203
    %v10205 = vpop.f32.mrb[0].mxu0
    %v10206 = vpop.f32.mrb[0].mxu0
    %v10207 = vadd.f32 0.0, %v10206
    %v10208 = vpop.f32.mrb[0].mxu0
    %10209 = vmatprep.mubr.bf16.mxu0 %v9967
    %10210 = vmatmul.mubr.bf16.gmra.mrb[0].mxu0 %v9966
    %v10211 = vpop.f32.mrb[0].mxu0
    %v10212 = vadd.f32 0.0, %v10211
    %v10213 = vpop.f32.mrb[0].mxu0
    %v10214 = vpop.f32.mrb[0].mxu0
    %v10215 = vadd.f32 0.0, %v10214
    %v10216 = vpop.f32.mrb[0].mxu0
    %10217 = vdwg.mxu0
    %10218 = vmatprep.subr.bf16.mxu0 0
    %10219 = vmatpush1.bf16.msra.mxu0 %v10129
    %10220 = vmatprep.subr.bf16.mxu0 0
    %10221 = vmatpush1.bf16.msra.mxu0 %v10130
    %10222 = vmatprep.subr.bf16.mxu0 0
    %10223 = vmatpush1.bf16.msra.mxu0 %v10131
    %10224 = vmatprep.subr.bf16.mxu0 0
    %10225 = vmatpush1.bf16.msra.mxu0 %v10132
    %10226 = vmatprep.subr.bf16.mxu0 0
    %10227 = vmatpush1.bf16.msra.mxu0 %v10133
    %10228 = vmatprep.subr.bf16.mxu0 0
    %10229 = vmatpush1.bf16.msra.mxu0 %v10134
    %10230 = vmatprep.subr.bf16.mxu0 0
    %10231 = vmatpush1.bf16.msra.mxu0 %v10135
    %10232 = vmatprep.subr.bf16.mxu0 0
    %10233 = vmatpush1.bf16.msra.mxu0 %v10136
    %10234 = vmatprep.subr.bf16.mxu0 0
    %10235 = vmatpush1.bf16.msra.mxu0 0
    %10236 = vmatprep.subr.bf16.mxu0 0
    %10237 = vmatpush1.bf16.msra.mxu0 0
    %10238 = vmatprep.subr.bf16.mxu0 0
    %10239 = vmatpush1.bf16.msra.mxu0 0
    %10240 = vmatprep.subr.bf16.mxu0 0
    %10241 = vmatpush1.bf16.msra.mxu0 0
    %10242 = vmatprep.subr.bf16.mxu0 0
    %10243 = vmatpush1.bf16.msra.mxu0 0
    %10244 = vmatprep.subr.bf16.mxu0 0
    %10245 = vmatpush1.bf16.msra.mxu0 0
    %10246 = vmatprep.subr.bf16.mxu0 0
    %10247 = vmatpush1.bf16.msra.mxu0 0
    %10248 = vmatprep.subr.bf16.mxu0 0
    %10249 = vmatpush1.bf16.msra.mxu0 0
    %10250 = vmatprep.mubr.bf16.mxu0 0
    %10251 = vmatmul.mubr.bf16.gmra.mrb[0].mxu0 %v9962
    %v10252 = vpop.f32.mrb[0].mxu0
    %v10253 = vadd.f32 %v10196, %v10252
    %v10254 = vpop.f32.mrb[0].mxu0
    %v10255 = vpop.f32.mrb[0].mxu0
    %v10256 = vadd.f32 %v10199, %v10255
    %v10257 = vpop.f32.mrb[0].mxu0
    %10258 = vmatprep.mubr.bf16.mxu0 0
    %10259 = vmatmul.mubr.bf16.gmra.mrb[0].mxu0 %v9965
    %v10260 = vpop.f32.mrb[0].mxu0
    %v10261 = vadd.f32 %v10204, %v10260
    %v10262 = vpop.f32.mrb[0].mxu0
    %v10263 = vpop.f32.mrb[0].mxu0
    %v10264 = vadd.f32 %v10207, %v10263
    %v10265 = vpop.f32.mrb[0].mxu0
    %10266 = vmatprep.mubr.bf16.mxu0 0
    %10267 = vmatmul.mubr.bf16.gmra.mrb[0].mxu0 %v9968
    %v10268 = vpop.f32.mrb[0].mxu0
    %v10269 = vadd.f32 %v10212, %v10268
    %v10270 = vpop.f32.mrb[0].mxu0
    %v10271 = vpop.f32.mrb[0].mxu0
    %v10272 = vadd.f32 %v10215, %v10271
    %v10273 = vpop.f32.mrb[0].mxu0
    %10274 = vdwg.mxu0
    %v10275 = vadd.f32 %v10253, %v10261
    %v10276 = vadd.f32 %v10256, %v10264
    %v10277 = vadd.f32 %v10275, %v10269
    %v10278 = vadd.f32 %v10276, %v10272
    %v10279 = vmul.f32 %v10277, 0.0021978023
    %v10280 = vmul.f32 %v10278, 0.0021978023
    %10281 = vst [vmem:[#allocation3 + $0xe8] sm:$0xff] %v10279
    %10282 = vst [vmem:[#allocation3 + $0x1e8] sm:$0xff] %v10280
    %v10283 = vld [vmem:[#allocation2 + $0xf0] sm:$0xff]
    %v10284 = vld [vmem:[#allocation2 + $0xf8] sm:$0xff]
    %v10285 = vld [vmem:[#allocation2 + $0x100] sm:$0xff]
    %v10286 = vld [vmem:[#allocation2 + $0x200] sm:$0xff]
    %v10287 = vld [vmem:[#allocation2 + $0x208] sm:$0xff]
    %v10288 = vld [vmem:[#allocation2 + $0x210] sm:$0xff]
    %v10289 = vld [vmem:[#allocation2 + $0x310] sm:$0xff]
    %v10290 = vld [vmem:[#allocation2 + $0x318] sm:$0xff]
    %v10291 = vld [vmem:[#allocation2 + $0x320] sm:$0xff]
    %v10292 = vld [vmem:[%s924] sm:$0xf]
    %v10293 = vld [vmem:[%s924 + $0x4] sm:$0xf]
    %v10294 = vld [vmem:[%s924 + $0x8] sm:$0xf]
    %v10295 = vld [vmem:[%s924 + $0xc] sm:$0xf]
    %v10296 = vld [vmem:[%s924 + $0x10] sm:$0xf]
    %v10297 = vld [vmem:[%s924 + $0x14] sm:$0xf]
    %v10298 = vld [vmem:[%s924 + $0x18] sm:$0xf]
    %v10299 = vld [vmem:[%s924 + $0x1c] sm:$0xf]
    %v10300 = vld [vmem:[%s924 + $0x20] sm:$0xf]
    %v10301 = vld [vmem:[%s924 + $0x24] sm:$0xf]
    %v10302 = vld [vmem:[%s924 + $0x28] sm:$0xf]
    %v10303 = vld [vmem:[%s924 + $0x2c] sm:$0xf]
    %v10304 = vld [vmem:[%s924 + $0x30] sm:$0xf]
    %v10305 = vld [vmem:[%s924 + $0x34] sm:$0xf]
    %v10306 = vld [vmem:[%s924 + $0x38] sm:$0xf]
    %v10307 = vld [vmem:[%s924 + $0x3c] sm:$0xf]
    %v10308 = vld [vmem:[%s924 + $0x40] sm:$0xf]
    %v10309 = vld [vmem:[%s924 + $0x44] sm:$0xf]
    %v10310 = vld [vmem:[%s924 + $0x48] sm:$0xf]
    %v10311 = vld [vmem:[%s924 + $0x4c] sm:$0xf]
    %v10312 = vld [vmem:[%s924 + $0x50] sm:$0xf]
    %v10313 = vld [vmem:[%s924 + $0x54] sm:$0xf]
    %v10314 = vld [vmem:[%s924 + $0x58] sm:$0xf]
    %v10315 = vld [vmem:[%s924 + $0x5c] sm:$0xf]
    %v10316 = vld [vmem:[%s924 + $0x60] sm:$0xf]
    %v10317 = vld [vmem:[%s924 + $0x64] sm:$0xf]
    %v10318 = vld [vmem:[%s924 + $0x68] sm:$0xf]
    %v10319 = vld [vmem:[%s924 + $0x6c] sm:$0xf]
    %v10320 = vld [vmem:[%s924 + $0x70] sm:$0xf]
    %v10321 = vld [vmem:[%s924 + $0x74] sm:$0xf]
    %v10322 = vld [vmem:[%s924 + $0x78] sm:$0xf]
    %v10323 = vld [vmem:[%s924 + $0x7c] sm:$0xf]
    %v10324 = vld [vmem:[%s924 + $0x80] sm:$0xf]
    %v10325 = vld [vmem:[%s924 + $0x84] sm:$0xf]
    %v10326 = vld [vmem:[%s924 + $0x88] sm:$0xf]
    %v10327 = vld [vmem:[%s924 + $0x8c] sm:$0xf]
    %v10328 = vld [vmem:[%s924 + $0x90] sm:$0xf]
    %v10329 = vld [vmem:[%s924 + $0x94] sm:$0xf]
    %v10330 = vld [vmem:[%s924 + $0x98] sm:$0xf]
    %v10331 = vld [vmem:[%s924 + $0x9c] sm:$0xf]
    %v10332 = vld [vmem:[%s924 + $0xa0] sm:$0xf]
    %v10333 = vld [vmem:[%s924 + $0xa4] sm:$0xf]
    %v10334 = vld [vmem:[%s924 + $0xa8] sm:$0xf]
    %v10335 = vld [vmem:[%s924 + $0xac] sm:$0xf]
    %v10336 = vld [vmem:[%s924 + $0xb0] sm:$0xf]
    %v10337 = vld [vmem:[%s924 + $0xb4] sm:$0xf]
    %v10338 = vld [vmem:[%s924 + $0xb8] sm:$0xf]
    %v10339 = vld [vmem:[%s924 + $0xbc] sm:$0xf]
    %v10388 = vunpack.c.l.b16 %v10292
    %v10389 = vunpack.c.l.b16 %v10293
    %v10390 = vunpack.c.l.b16 %v10294
    %v10391 = vunpack.c.l.b16 %v10295
    %v10392 = vunpack.c.l.b16 %v10296
    %v10393 = vunpack.c.l.b16 %v10297
    %v10394 = vunpack.c.l.b16 %v10298
    %v10395 = vunpack.c.l.b16 %v10299
    %v10396 = vunpack.c.l.b16 %v10300
    %v10397 = vunpack.c.l.b16 %v10301
    %v10398 = vunpack.c.l.b16 %v10302
    %v10399 = vunpack.c.l.b16 %v10303
    %v10400 = vunpack.c.l.b16 %v10304
    %v10401 = vunpack.c.l.b16 %v10305
    %v10402 = vunpack.c.l.b16 %v10306
    %v10403 = vunpack.c.l.b16 %v10307
    %v10404 = vunpack.c.l.b16 %v10308
    %v10405 = vunpack.c.l.b16 %v10309
    %v10406 = vunpack.c.l.b16 %v10310
    %v10407 = vunpack.c.l.b16 %v10311
    %v10408 = vunpack.c.l.b16 %v10312
    %v10409 = vunpack.c.l.b16 %v10313
    %v10410 = vunpack.c.l.b16 %v10314
    %v10411 = vunpack.c.l.b16 %v10315
    %v10412 = vunpack.c.l.b16 %v10316
    %v10413 = vunpack.c.l.b16 %v10317
    %v10414 = vunpack.c.l.b16 %v10318
    %v10415 = vunpack.c.l.b16 %v10319
    %v10416 = vunpack.c.l.b16 %v10320
    %v10417 = vunpack.c.l.b16 %v10321
    %v10418 = vunpack.c.l.b16 %v10322
    %v10419 = vunpack.c.l.b16 %v10323
    %v10420 = vunpack.c.l.b16 %v10324
    %v10421 = vunpack.c.l.b16 %v10325
    %v10422 = vunpack.c.l.b16 %v10326
    %v10423 = vunpack.c.l.b16 %v10327
    %v10424 = vunpack.c.l.b16 %v10328
    %v10425 = vunpack.c.l.b16 %v10329
    %v10426 = vunpack.c.l.b16 %v10330
    %v10427 = vunpack.c.l.b16 %v10331
    %v10428 = vunpack.c.l.b16 %v10332
    %v10429 = vunpack.c.l.b16 %v10333
    %v10430 = vunpack.c.l.b16 %v10334
    %v10431 = vunpack.c.l.b16 %v10335
    %v10432 = vunpack.c.l.b16 %v10336
    %v10433 = vunpack.c.l.b16 %v10337
    %v10434 = vunpack.c.l.b16 %v10338
    %v10435 = vunpack.c.l.b16 %v10339
    %v10436 = vpack.c.b16 %v10389, %v10388
    %v10437 = vpack.c.b16 %v10391, %v10390
    %v10438 = vpack.c.b16 %v10393, %v10392
    %v10439 = vpack.c.b16 %v10395, %v10394
    %v10440 = vpack.c.b16 %v10397, %v10396
    %v10441 = vpack.c.b16 %v10399, %v10398
    %v10442 = vpack.c.b16 %v10401, %v10400
    %v10443 = vpack.c.b16 %v10403, %v10402
    %v10444 = vpack.c.b16 %v10405, %v10404
    %v10445 = vpack.c.b16 %v10407, %v10406
    %v10446 = vpack.c.b16 %v10409, %v10408
    %v10447 = vpack.c.b16 %v10411, %v10410
    %v10448 = vpack.c.b16 %v10413, %v10412
    %v10449 = vpack.c.b16 %v10415, %v10414
    %v10450 = vpack.c.b16 %v10417, %v10416
    %v10451 = vpack.c.b16 %v10419, %v10418
    %v10452 = vpack.c.b16 %v10421, %v10420
    %v10453 = vpack.c.b16 %v10423, %v10422
    %v10454 = vpack.c.b16 %v10425, %v10424
    %v10455 = vpack.c.b16 %v10427, %v10426
    %v10456 = vpack.c.b16 %v10429, %v10428
    %v10457 = vpack.c.b16 %v10431, %v10430
    %v10458 = vpack.c.b16 %v10433, %v10432
    %v10459 = vpack.c.b16 %v10435, %v10434
    %10484 = vmatprep.subr.bf16.mxu0 0
    %10485 = vmatpush1.bf16.msra.mxu0 %v10436
    %10486 = vmatprep.subr.bf16.mxu0 0
    %10487 = vmatpush1.bf16.msra.mxu0 %v10437
    %10488 = vmatprep.subr.bf16.mxu0 0
    %10489 = vmatpush1.bf16.msra.mxu0 %v10438
    %10490 = vmatprep.subr.bf16.mxu0 0
    %10491 = vmatpush1.bf16.msra.mxu0 %v10439
    %10492 = vmatprep.subr.bf16.mxu0 0
    %10493 = vmatpush1.bf16.msra.mxu0 %v10440
    %10494 = vmatprep.subr.bf16.mxu0 0
    %10495 = vmatpush1.bf16.msra.mxu0 %v10441
    %10496 = vmatprep.subr.bf16.mxu0 0
    %10497 = vmatpush1.bf16.msra.mxu0 %v10442
    %10498 = vmatprep.subr.bf16.mxu0 0
    %10499 = vmatpush1.bf16.msra.mxu0 %v10443
    %10500 = vmatprep.subr.bf16.mxu0 0
    %10501 = vmatpush1.bf16.msra.mxu0 %v10444
    %10502 = vmatprep.subr.bf16.mxu0 0
    %10503 = vmatpush1.bf16.msra.mxu0 %v10445
    %10504 = vmatprep.subr.bf16.mxu0 0
    %10505 = vmatpush1.bf16.msra.mxu0 %v10446
    %10506 = vmatprep.subr.bf16.mxu0 0
    %10507 = vmatpush1.bf16.msra.mxu0 %v10447
    %10508 = vmatprep.subr.bf16.mxu0 0
    %10509 = vmatpush1.bf16.msra.mxu0 %v10448
    %10510 = vmatprep.subr.bf16.mxu0 0
    %10511 = vmatpush1.bf16.msra.mxu0 %v10449
    %10512 = vmatprep.subr.bf16.mxu0 0
    %10513 = vmatpush1.bf16.msra.mxu0 %v10450
    %10514 = vmatprep.subr.bf16.mxu0 0
    %10515 = vmatpush1.bf16.msra.mxu0 %v10451
    %10516 = vmatprep.mubr.bf16.mxu0 %v10284
    %10517 = vmatmul.mubr.bf16.gmra.mrb[0].mxu0 %v10283
    %v10518 = vpop.f32.mrb[0].mxu0
    %v10519 = vadd.f32 0.0, %v10518
    %v10520 = vpop.f32.mrb[0].mxu0
    %v10521 = vpop.f32.mrb[0].mxu0
    %v10522 = vadd.f32 0.0, %v10521
    %v10523 = vpop.f32.mrb[0].mxu0
    %10524 = vmatprep.mubr.bf16.mxu0 %v10287
    %10525 = vmatmul.mubr.bf16.gmra.mrb[0].mxu0 %v10286
    %v10526 = vpop.f32.mrb[0].mxu0
    %v10527 = vadd.f32 0.0, %v10526
    %v10528 = vpop.f32.mrb[0].mxu0
    %v10529 = vpop.f32.mrb[0].mxu0
    %v10530 = vadd.f32 0.0, %v10529
    %v10531 = vpop.f32.mrb[0].mxu0
    %10532 = vmatprep.mubr.bf16.mxu0 %v10290
    %10533 = vmatmul.mubr.bf16.gmra.mrb[0].mxu0 %v10289
    %v10534 = vpop.f32.mrb[0].mxu0
    %v10535 = vadd.f32 0.0, %v10534
    %v10536 = vpop.f32.mrb[0].mxu0
    %v10537 = vpop.f32.mrb[0].mxu0
    %v10538 = vadd.f32 0.0, %v10537
    %v10539 = vpop.f32.mrb[0].mxu0
    %10540 = vdwg.mxu0
    %10541 = vmatprep.subr.bf16.mxu0 0
    %10542 = vmatpush1.bf16.msra.mxu0 %v10452
    %10543 = vmatprep.subr.bf16.mxu0 0
    %10544 = vmatpush1.bf16.msra.mxu0 %v10453
    %10545 = vmatprep.subr.bf16.mxu0 0
    %10546 = vmatpush1.bf16.msra.mxu0 %v10454
    %10547 = vmatprep.subr.bf16.mxu0 0
    %10548 = vmatpush1.bf16.msra.mxu0 %v10455
    %10549 = vmatprep.subr.bf16.mxu0 0
    %10550 = vmatpush1.bf16.msra.mxu0 %v10456
    %10551 = vmatprep.subr.bf16.mxu0 0
    %10552 = vmatpush1.bf16.msra.mxu0 %v10457
    %10553 = vmatprep.subr.bf16.mxu0 0
    %10554 = vmatpush1.bf16.msra.mxu0 %v10458
    %10555 = vmatprep.subr.bf16.mxu0 0
    %10556 = vmatpush1.bf16.msra.mxu0 %v10459
    %10557 = vmatprep.subr.bf16.mxu0 0
    %10558 = vmatpush1.bf16.msra.mxu0 0
    %10559 = vmatprep.subr.bf16.mxu0 0
    %10560 = vmatpush1.bf16.msra.mxu0 0
    %10561 = vmatprep.subr.bf16.mxu0 0
    %10562 = vmatpush1.bf16.msra.mxu0 0
    %10563 = vmatprep.subr.bf16.mxu0 0
    %10564 = vmatpush1.bf16.msra.mxu0 0
    %10565 = vmatprep.subr.bf16.mxu0 0
    %10566 = vmatpush1.bf16.msra.mxu0 0
    %10567 = vmatprep.subr.bf16.mxu0 0
    %10568 = vmatpush1.bf16.msra.mxu0 0
    %10569 = vmatprep.subr.bf16.mxu0 0
    %10570 = vmatpush1.bf16.msra.mxu0 0
    %10571 = vmatprep.subr.bf16.mxu0 0
    %10572 = vmatpush1.bf16.msra.mxu0 0
    %10573 = vmatprep.mubr.bf16.mxu0 0
    %10574 = vmatmul.mubr.bf16.gmra.mrb[0].mxu0 %v10285
    %v10575 = vpop.f32.mrb[0].mxu0
    %v10576 = vadd.f32 %v10519, %v10575
    %v10577 = vpop.f32.mrb[0].mxu0
    %v10578 = vpop.f32.mrb[0].mxu0
    %v10579 = vadd.f32 %v10522, %v10578
    %v10580 = vpop.f32.mrb[0].mxu0
    %10581 = vmatprep.mubr.bf16.mxu0 0
    %10582 = vmatmul.mubr.bf16.gmra.mrb[0].mxu0 %v10288
    %v10583 = vpop.f32.mrb[0].mxu0
    %v10584 = vadd.f32 %v10527, %v10583
    %v10585 = vpop.f32.mrb[0].mxu0
    %v10586 = vpop.f32.mrb[0].mxu0
    %v10587 = vadd.f32 %v10530, %v10586
    %v10588 = vpop.f32.mrb[0].mxu0
    %10589 = vmatprep.mubr.bf16.mxu0 0
    %10590 = vmatmul.mubr.bf16.gmra.mrb[0].mxu0 %v10291
    %v10591 = vpop.f32.mrb[0].mxu0
    %v10592 = vadd.f32 %v10535, %v10591
    %v10593 = vpop.f32.mrb[0].mxu0
    %v10594 = vpop.f32.mrb[0].mxu0
    %v10595 = vadd.f32 %v10538, %v10594
    %v10596 = vpop.f32.mrb[0].mxu0
    %10597 = vdwg.mxu0
    %v10598 = vadd.f32 %v10576, %v10584
    %v10599 = vadd.f32 %v10579, %v10587
    %v10600 = vadd.f32 %v10598, %v10592
    %v10601 = vadd.f32 %v10599, %v10595
    %v10602 = vmul.f32 %v10600, 0.0021978023
    %v10603 = vmul.f32 %v10601, 0.0021978023
    %10604 = vst [vmem:[#allocation3 + $0xf0] sm:$0xff] %v10602
    %10605 = vst [vmem:[#allocation3 + $0x1f0] sm:$0xff] %v10603
    %v10606 = vld [vmem:[#allocation2 + $0xf8] sm:$0xff]
    %v10607 = vld [vmem:[#allocation2 + $0x100] sm:$0xff]
    %v10608 = vld [vmem:[#allocation2 + $0x108] sm:$0xff]
    %v10609 = vld [vmem:[#allocation2 + $0x208] sm:$0xff]
    %v10610 = vld [vmem:[#allocation2 + $0x210] sm:$0xff]
    %v10611 = vld [vmem:[#allocation2 + $0x218] sm:$0xff]
    %v10612 = vld [vmem:[#allocation2 + $0x318] sm:$0xff]
    %v10613 = vld [vmem:[#allocation2 + $0x320] sm:$0xff]
    %v10614 = vld [vmem:[#allocation2 + $0x328] sm:$0xff]
    %s10615 = scalar_lea.vmem [#allocation7], 384
    %v10616 = vld [vmem:[%s10615] sm:$0xf]
    %v10617 = vld [vmem:[%s10615 + $0x4] sm:$0xf]
    %v10618 = vld [vmem:[%s10615 + $0x8] sm:$0xf]
    %v10619 = vld [vmem:[%s10615 + $0xc] sm:$0xf]
    %v10620 = vld [vmem:[%s10615 + $0x10] sm:$0xf]
    %v10621 = vld [vmem:[%s10615 + $0x14] sm:$0xf]
    %v10622 = vld [vmem:[%s10615 + $0x18] sm:$0xf]
    %v10623 = vld [vmem:[%s10615 + $0x1c] sm:$0xf]
    %v10624 = vld [vmem:[%s10615 + $0x20] sm:$0xf]
    %v10625 = vld [vmem:[%s10615 + $0x24] sm:$0xf]
    %v10626 = vld [vmem:[%s10615 + $0x28] sm:$0xf]
    %v10627 = vld [vmem:[%s10615 + $0x2c] sm:$0xf]
    %v10628 = vld [vmem:[%s10615 + $0x30] sm:$0xf]
    %v10629 = vld [vmem:[%s10615 + $0x34] sm:$0xf]
    %v10630 = vld [vmem:[%s10615 + $0x38] sm:$0xf]
    %v10631 = vld [vmem:[%s10615 + $0x3c] sm:$0xf]
    %v10632 = vld [vmem:[%s10615 + $0x40] sm:$0xf]
    %v10633 = vld [vmem:[%s10615 + $0x44] sm:$0xf]
    %v10634 = vld [vmem:[%s10615 + $0x48] sm:$0xf]
    %v10635 = vld [vmem:[%s10615 + $0x4c] sm:$0xf]
    %v10636 = vld [vmem:[%s10615 + $0x50] sm:$0xf]
    %v10637 = vld [vmem:[%s10615 + $0x54] sm:$0xf]
    %v10638 = vld [vmem:[%s10615 + $0x58] sm:$0xf]
    %v10639 = vld [vmem:[%s10615 + $0x5c] sm:$0xf]
    %v10640 = vld [vmem:[%s10615 + $0x60] sm:$0xf]
    %v10641 = vld [vmem:[%s10615 + $0x64] sm:$0xf]
    %v10642 = vld [vmem:[%s10615 + $0x68] sm:$0xf]
    %v10643 = vld [vmem:[%s10615 + $0x6c] sm:$0xf]
    %v10644 = vld [vmem:[%s10615 + $0x70] sm:$0xf]
    %v10645 = vld [vmem:[%s10615 + $0x74] sm:$0xf]
    %v10646 = vld [vmem:[%s10615 + $0x78] sm:$0xf]
    %v10647 = vld [vmem:[%s10615 + $0x7c] sm:$0xf]
    %v10648 = vld [vmem:[%s10615 + $0x80] sm:$0xf]
    %v10649 = vld [vmem:[%s10615 + $0x84] sm:$0xf]
    %v10650 = vld [vmem:[%s10615 + $0x88] sm:$0xf]
    %v10651 = vld [vmem:[%s10615 + $0x8c] sm:$0xf]
    %v10652 = vld [vmem:[%s10615 + $0x90] sm:$0xf]
    %v10653 = vld [vmem:[%s10615 + $0x94] sm:$0xf]
    %v10654 = vld [vmem:[%s10615 + $0x98] sm:$0xf]
    %v10655 = vld [vmem:[%s10615 + $0x9c] sm:$0xf]
    %v10656 = vld [vmem:[%s10615 + $0xa0] sm:$0xf]
    %v10657 = vld [vmem:[%s10615 + $0xa4] sm:$0xf]
    %v10658 = vld [vmem:[%s10615 + $0xa8] sm:$0xf]
    %v10659 = vld [vmem:[%s10615 + $0xac] sm:$0xf]
    %v10660 = vld [vmem:[%s10615 + $0xb0] sm:$0xf]
    %v10661 = vld [vmem:[%s10615 + $0xb4] sm:$0xf]
    %v10662 = vld [vmem:[%s10615 + $0xb8] sm:$0xf]
    %v10663 = vld [vmem:[%s10615 + $0xbc] sm:$0xf]
    %v10712 = vunpack.c.l.b16 %v10616
    %v10713 = vunpack.c.l.b16 %v10617
    %v10714 = vunpack.c.l.b16 %v10618
    %v10715 = vunpack.c.l.b16 %v10619
    %v10716 = vunpack.c.l.b16 %v10620
    %v10717 = vunpack.c.l.b16 %v10621
    %v10718 = vunpack.c.l.b16 %v10622
    %v10719 = vunpack.c.l.b16 %v10623
    %v10720 = vunpack.c.l.b16 %v10624
    %v10721 = vunpack.c.l.b16 %v10625
    %v10722 = vunpack.c.l.b16 %v10626
    %v10723 = vunpack.c.l.b16 %v10627
    %v10724 = vunpack.c.l.b16 %v10628
    %v10725 = vunpack.c.l.b16 %v10629
    %v10726 = vunpack.c.l.b16 %v10630
    %v10727 = vunpack.c.l.b16 %v10631
    %v10728 = vunpack.c.l.b16 %v10632
    %v10729 = vunpack.c.l.b16 %v10633
    %v10730 = vunpack.c.l.b16 %v10634
    %v10731 = vunpack.c.l.b16 %v10635
    %v10732 = vunpack.c.l.b16 %v10636
    %v10733 = vunpack.c.l.b16 %v10637
    %v10734 = vunpack.c.l.b16 %v10638
    %v10735 = vunpack.c.l.b16 %v10639
    %v10736 = vunpack.c.l.b16 %v10640
    %v10737 = vunpack.c.l.b16 %v10641
    %v10738 = vunpack.c.l.b16 %v10642
    %v10739 = vunpack.c.l.b16 %v10643
    %v10740 = vunpack.c.l.b16 %v10644
    %v10741 = vunpack.c.l.b16 %v10645
    %v10742 = vunpack.c.l.b16 %v10646
    %v10743 = vunpack.c.l.b16 %v10647
    %v10744 = vunpack.c.l.b16 %v10648
    %v10745 = vunpack.c.l.b16 %v10649
    %v10746 = vunpack.c.l.b16 %v10650
    %v10747 = vunpack.c.l.b16 %v10651
    %v10748 = vunpack.c.l.b16 %v10652
    %v10749 = vunpack.c.l.b16 %v10653
    %v10750 = vunpack.c.l.b16 %v10654
    %v10751 = vunpack.c.l.b16 %v10655
    %v10752 = vunpack.c.l.b16 %v10656
    %v10753 = vunpack.c.l.b16 %v10657
    %v10754 = vunpack.c.l.b16 %v10658
    %v10755 = vunpack.c.l.b16 %v10659
    %v10756 = vunpack.c.l.b16 %v10660
    %v10757 = vunpack.c.l.b16 %v10661
    %v10758 = vunpack.c.l.b16 %v10662
    %v10759 = vunpack.c.l.b16 %v10663
    %v10760 = vpack.c.b16 %v10713, %v10712
    %v10761 = vpack.c.b16 %v10715, %v10714
    %v10762 = vpack.c.b16 %v10717, %v10716
    %v10763 = vpack.c.b16 %v10719, %v10718
    %v10764 = vpack.c.b16 %v10721, %v10720
    %v10765 = vpack.c.b16 %v10723, %v10722
    %v10766 = vpack.c.b16 %v10725, %v10724
    %v10767 = vpack.c.b16 %v10727, %v10726
    %v10768 = vpack.c.b16 %v10729, %v10728
    %v10769 = vpack.c.b16 %v10731, %v10730
    %v10770 = vpack.c.b16 %v10733, %v10732
    %v10771 = vpack.c.b16 %v10735, %v10734
    %v10772 = vpack.c.b16 %v10737, %v10736
    %v10773 = vpack.c.b16 %v10739, %v10738
    %v10774 = vpack.c.b16 %v10741, %v10740
    %v10775 = vpack.c.b16 %v10743, %v10742
    %v10776 = vpack.c.b16 %v10745, %v10744
    %v10777 = vpack.c.b16 %v10747, %v10746
    %v10778 = vpack.c.b16 %v10749, %v10748
    %v10779 = vpack.c.b16 %v10751, %v10750
    %v10780 = vpack.c.b16 %v10753, %v10752
    %v10781 = vpack.c.b16 %v10755, %v10754
    %v10782 = vpack.c.b16 %v10757, %v10756
    %v10783 = vpack.c.b16 %v10759, %v10758
    %10808 = vmatprep.subr.bf16.mxu0 0
    %10809 = vmatpush1.bf16.msra.mxu0 %v10760
    %10810 = vmatprep.subr.bf16.mxu0 0
    %10811 = vmatpush1.bf16.msra.mxu0 %v10761
    %10812 = vmatprep.subr.bf16.mxu0 0
    %10813 = vmatpush1.bf16.msra.mxu0 %v10762
    %10814 = vmatprep.subr.bf16.mxu0 0
    %10815 = vmatpush1.bf16.msra.mxu0 %v10763
    %10816 = vmatprep.subr.bf16.mxu0 0
    %10817 = vmatpush1.bf16.msra.mxu0 %v10764
    %10818 = vmatprep.subr.bf16.mxu0 0
    %10819 = vmatpush1.bf16.msra.mxu0 %v10765
    %10820 = vmatprep.subr.bf16.mxu0 0
    %10821 = vmatpush1.bf16.msra.mxu0 %v10766
    %10822 = vmatprep.subr.bf16.mxu0 0
    %10823 = vmatpush1.bf16.msra.mxu0 %v10767
    %10824 = vmatprep.subr.bf16.mxu0 0
    %10825 = vmatpush1.bf16.msra.mxu0 %v10768
    %10826 = vmatprep.subr.bf16.mxu0 0
    %10827 = vmatpush1.bf16.msra.mxu0 %v10769
    %10828 = vmatprep.subr.bf16.mxu0 0
    %10829 = vmatpush1.bf16.msra.mxu0 %v10770
    %10830 = vmatprep.subr.bf16.mxu0 0
    %10831 = vmatpush1.bf16.msra.mxu0 %v10771
    %10832 = vmatprep.subr.bf16.mxu0 0
    %10833 = vmatpush1.bf16.msra.mxu0 %v10772
    %10834 = vmatprep.subr.bf16.mxu0 0
    %10835 = vmatpush1.bf16.msra.mxu0 %v10773
    %10836 = vmatprep.subr.bf16.mxu0 0
    %10837 = vmatpush1.bf16.msra.mxu0 %v10774
    %10838 = vmatprep.subr.bf16.mxu0 0
    %10839 = vmatpush1.bf16.msra.mxu0 %v10775
    %10840 = vmatprep.mubr.bf16.mxu0 %v10607
    %10841 = vmatmul.mubr.bf16.gmra.mrb[0].mxu0 %v10606
    %v10842 = vpop.f32.mrb[0].mxu0
    %v10843 = vadd.f32 0.0, %v10842
    %v10844 = vpop.f32.mrb[0].mxu0
    %v10845 = vpop.f32.mrb[0].mxu0
    %v10846 = vadd.f32 0.0, %v10845
    %v10847 = vpop.f32.mrb[0].mxu0
    %10848 = vmatprep.mubr.bf16.mxu0 %v10610
    %10849 = vmatmul.mubr.bf16.gmra.mrb[0].mxu0 %v10609
    %v10850 = vpop.f32.mrb[0].mxu0
    %v10851 = vadd.f32 0.0, %v10850
    %v10852 = vpop.f32.mrb[0].mxu0
    %v10853 = vpop.f32.mrb[0].mxu0
    %v10854 = vadd.f32 0.0, %v10853
    %v10855 = vpop.f32.mrb[0].mxu0
    %10856 = vmatprep.mubr.bf16.mxu0 %v10613
    %10857 = vmatmul.mubr.bf16.gmra.mrb[0].mxu0 %v10612
    %v10858 = vpop.f32.mrb[0].mxu0
    %v10859 = vadd.f32 0.0, %v10858
    %v10860 = vpop.f32.mrb[0].mxu0
    %v10861 = vpop.f32.mrb[0].mxu0
    %v10862 = vadd.f32 0.0, %v10861
    %v10863 = vpop.f32.mrb[0].mxu0
    %10864 = vdwg.mxu0
    %10865 = vmatprep.subr.bf16.mxu0 0
    %10866 = vmatpush1.bf16.msra.mxu0 %v10776
    %10867 = vmatprep.subr.bf16.mxu0 0
    %10868 = vmatpush1.bf16.msra.mxu0 %v10777
    %10869 = vmatprep.subr.bf16.mxu0 0
    %10870 = vmatpush1.bf16.msra.mxu0 %v10778
    %10871 = vmatprep.subr.bf16.mxu0 0
    %10872 = vmatpush1.bf16.msra.mxu0 %v10779
    %10873 = vmatprep.subr.bf16.mxu0 0
    %10874 = vmatpush1.bf16.msra.mxu0 %v10780
    %10875 = vmatprep.subr.bf16.mxu0 0
    %10876 = vmatpush1.bf16.msra.mxu0 %v10781
    %10877 = vmatprep.subr.bf16.mxu0 0
    %10878 = vmatpush1.bf16.msra.mxu0 %v10782
    %10879 = vmatprep.subr.bf16.mxu0 0
    %10880 = vmatpush1.bf16.msra.mxu0 %v10783
    %10881 = vmatprep.subr.bf16.mxu0 0
    %10882 = vmatpush1.bf16.msra.mxu0 0
    %10883 = vmatprep.subr.bf16.mxu0 0
    %10884 = vmatpush1.bf16.msra.mxu0 0
    %10885 = vmatprep.subr.bf16.mxu0 0
    %10886 = vmatpush1.bf16.msra.mxu0 0
    %10887 = vmatprep.subr.bf16.mxu0 0
    %10888 = vmatpush1.bf16.msra.mxu0 0
    %10889 = vmatprep.subr.bf16.mxu0 0
    %10890 = vmatpush1.bf16.msra.mxu0 0
    %10891 = vmatprep.subr.bf16.mxu0 0
    %10892 = vmatpush1.bf16.msra.mxu0 0
    %10893 = vmatprep.subr.bf16.mxu0 0
    %10894 = vmatpush1.bf16.msra.mxu0 0
    %10895 = vmatprep.subr.bf16.mxu0 0
    %10896 = vmatpush1.bf16.msra.mxu0 0
    %10897 = vmatprep.mubr.bf16.mxu0 0
    %10898 = vmatmul.mubr.bf16.gmra.mrb[0].mxu0 %v10608
    %v10899 = vpop.f32.mrb[0].mxu0
    %v10900 = vadd.f32 %v10843, %v10899
    %v10901 = vpop.f32.mrb[0].mxu0
    %v10902 = vpop.f32.mrb[0].mxu0
    %v10903 = vadd.f32 %v10846, %v10902
    %v10904 = vpop.f32.mrb[0].mxu0
    %10905 = vmatprep.mubr.bf16.mxu0 0
    %10906 = vmatmul.mubr.bf16.gmra.mrb[0].mxu0 %v10611
    %v10907 = vpop.f32.mrb[0].mxu0
    %v10908 = vadd.f32 %v10851, %v10907
    %v10909 = vpop.f32.mrb[0].mxu0
    %v10910 = vpop.f32.mrb[0].mxu0
    %v10911 = vadd.f32 %v10854, %v10910
    %v10912 = vpop.f32.mrb[0].mxu0
    %10913 = vmatprep.mubr.bf16.mxu0 0
    %10914 = vmatmul.mubr.bf16.gmra.mrb[0].mxu0 %v10614
    %v10915 = vpop.f32.mrb[0].mxu0
    %v10916 = vadd.f32 %v10859, %v10915
    %v10917 = vpop.f32.mrb[0].mxu0
    %v10918 = vpop.f32.mrb[0].mxu0
    %v10919 = vadd.f32 %v10862, %v10918
    %v10920 = vpop.f32.mrb[0].mxu0
    %10921 = vdwg.mxu0
    %v10922 = vadd.f32 %v10900, %v10908
    %v10923 = vadd.f32 %v10903, %v10911
    %v10924 = vadd.f32 %v10922, %v10916
    %v10925 = vadd.f32 %v10923, %v10919
    %v10926 = vmul.f32 %v10924, 0.0021978023
    %v10927 = vmul.f32 %v10925, 0.0021978023
    %10928 = vst [vmem:[#allocation3 + $0xf8] sm:$0xff] %v10926
    %10929 = vst [vmem:[#allocation3 + $0x1f8] sm:$0xff] %v10927
    %v10930 = vld [vmem:[#allocation3] sm:$0xff]
    %v10931 = vld [vmem:[#allocation3 + $0x8] sm:$0xff]
    %v10932 = vld [vmem:[#allocation3 + $0x10] sm:$0xff]
    %v10933 = vld [vmem:[#allocation3 + $0x18] sm:$0xff]
    %v10934 = vld [vmem:[#allocation3 + $0x20] sm:$0xff]
    %v10935 = vld [vmem:[#allocation3 + $0x28] sm:$0xff]
    %v10936 = vld [vmem:[#allocation3 + $0x30] sm:$0xff]
    %v10937 = vld [vmem:[#allocation3 + $0x38] sm:$0xff]
    %v10938 = vld [vmem:[#allocation3 + $0x40] sm:$0xff]
    %v10939 = vld [vmem:[#allocation3 + $0x48] sm:$0xff]
    %v10940 = vld [vmem:[#allocation3 + $0x50] sm:$0xff]
    %v10941 = vld [vmem:[#allocation3 + $0x58] sm:$0xff]
    %v10942 = vld [vmem:[#allocation3 + $0x60] sm:$0xff]
    %v10943 = vld [vmem:[#allocation3 + $0x68] sm:$0xff]
    %v10944 = vld [vmem:[#allocation3 + $0x70] sm:$0xff]
    %v10945 = vld [vmem:[#allocation3 + $0x78] sm:$0xff]
    %v10946 = vld [vmem:[#allocation3 + $0x80] sm:$0xff]
    %v10947 = vld [vmem:[#allocation3 + $0x88] sm:$0xff]
    %v10948 = vld [vmem:[#allocation3 + $0x90] sm:$0xff]
    %v10949 = vld [vmem:[#allocation3 + $0x98] sm:$0xff]
    %v10950 = vld [vmem:[#allocation3 + $0xa0] sm:$0xff]
    %v10951 = vld [vmem:[#allocation3 + $0xa8] sm:$0xff]
    %v10952 = vld [vmem:[#allocation3 + $0xb0] sm:$0xff]
    %v10953 = vld [vmem:[#allocation3 + $0xb8] sm:$0xff]
    %v10954 = vld [vmem:[#allocation3 + $0xc0] sm:$0xff]
    %v10955 = vld [vmem:[#allocation3 + $0xc8] sm:$0xff]
    %v10956 = vld [vmem:[#allocation3 + $0xd0] sm:$0xff]
    %v10957 = vld [vmem:[#allocation3 + $0xd8] sm:$0xff]
    %v10958 = vld [vmem:[#allocation3 + $0xe0] sm:$0xff]
    %v10959 = vld [vmem:[#allocation3 + $0xe8] sm:$0xff]
    %v10960 = vld [vmem:[#allocation3 + $0xf0] sm:$0xff]
    %v10961 = vld [vmem:[#allocation3 + $0xf8] sm:$0xff]
    %v10962 = vld [vmem:[#allocation3 + $0x100] sm:$0xff]
    %v10963 = vld [vmem:[#allocation3 + $0x108] sm:$0xff]
    %v10964 = vld [vmem:[#allocation3 + $0x110] sm:$0xff]
    %v10965 = vld [vmem:[#allocation3 + $0x118] sm:$0xff]
    %v10966 = vld [vmem:[#allocation3 + $0x120] sm:$0xff]
    %v10967 = vld [vmem:[#allocation3 + $0x128] sm:$0xff]
    %v10968 = vld [vmem:[#allocation3 + $0x130] sm:$0xff]
    %v10969 = vld [vmem:[#allocation3 + $0x138] sm:$0xff]
    %v10970 = vld [vmem:[#allocation3 + $0x140] sm:$0xff]
    %v10971 = vld [vmem:[#allocation3 + $0x148] sm:$0xff]
    %v10972 = vld [vmem:[#allocation3 + $0x150] sm:$0xff]
    %v10973 = vld [vmem:[#allocation3 + $0x158] sm:$0xff]
    %v10974 = vld [vmem:[#allocation3 + $0x160] sm:$0xff]
    %v10975 = vld [vmem:[#allocation3 + $0x168] sm:$0xff]
    %v10976 = vld [vmem:[#allocation3 + $0x170] sm:$0xff]
    %v10977 = vld [vmem:[#allocation3 + $0x178] sm:$0xff]
    %v10978 = vld [vmem:[#allocation3 + $0x180] sm:$0xff]
    %v10979 = vld [vmem:[#allocation3 + $0x188] sm:$0xff]
    %v10980 = vld [vmem:[#allocation3 + $0x190] sm:$0xff]
    %v10981 = vld [vmem:[#allocation3 + $0x198] sm:$0xff]
    %v10982 = vld [vmem:[#allocation3 + $0x1a0] sm:$0xff]
    %v10983 = vld [vmem:[#allocation3 + $0x1a8] sm:$0xff]
    %v10984 = vld [vmem:[#allocation3 + $0x1b0] sm:$0xff]
    %v10985 = vld [vmem:[#allocation3 + $0x1b8] sm:$0xff]
    %v10986 = vld [vmem:[#allocation3 + $0x1c0] sm:$0xff]
    %v10987 = vld [vmem:[#allocation3 + $0x1c8] sm:$0xff]
    %v10988 = vld [vmem:[#allocation3 + $0x1d0] sm:$0xff]
    %v10989 = vld [vmem:[#allocation3 + $0x1d8] sm:$0xff]
    %v10990 = vld [vmem:[#allocation3 + $0x1e0] sm:$0xff]
    %v10991 = vld [vmem:[#allocation3 + $0x1e8] sm:$0xff]
    %v10992 = vld [vmem:[#allocation3 + $0x1f0] sm:$0xff]
    %v10993 = vld [vmem:[#allocation3 + $0x1f8] sm:$0xff]
    %v10994 = vlaneseq
    %v10995 = vand.u32 %v10994, 127
    %v10996 = vadd.s32 %v10995, 128
    %v10997 = vadd.s32 %v10995, 256
    %v10998 = vadd.s32 %v10995, 384
    %v10999 = vadd.s32 %v10995, 512
    %v11000 = vadd.s32 %v10995, 640
    %v11001 = vadd.s32 %v10995, 768
    %v11002 = vadd.s32 %v10995, 896
    %v11003 = vadd.s32 %v10995, 1024
    %v11004 = vadd.s32 %v10995, 1152
    %v11005 = vadd.s32 %v10995, 1280
    %v11006 = vadd.s32 %v10995, 1408
    %v11007 = vadd.s32 %v10995, 1536
    %v11008 = vadd.s32 %v10995, 1664
    %v11009 = vadd.s32 %v10995, 1792
    %v11010 = vadd.s32 %v10995, 1920
    %v11011 = vadd.s32 %v10995, 2048
    %v11012 = vadd.s32 %v10995, 2176
    %v11013 = vadd.s32 %v10995, 2304
    %v11014 = vadd.s32 %v10995, 2432
    %v11015 = vadd.s32 %v10995, 2560
    %v11016 = vadd.s32 %v10995, 2688
    %v11017 = vadd.s32 %v10995, 2816
    %v11018 = vadd.s32 %v10995, 2944
    %v11019 = vadd.s32 %v10995, 3072
    %v11020 = vadd.s32 %v10995, 3200
    %v11021 = vadd.s32 %v10995, 3328
    %v11022 = vadd.s32 %v10995, 3456
    %v11023 = vadd.s32 %v10995, 3584
    %v11024 = vadd.s32 %v10995, 3712
    %v11025 = vadd.s32 %v10995, 3840
    %v11026 = vadd.s32 %v10995, 3968
    %vm11027 = vcmp.lt.s32.totalorder %v10995, 4000
    %vm11028 = vcmp.lt.s32.totalorder %v10996, 4000
    %vm11029 = vcmp.lt.s32.totalorder %v10997, 4000
    %vm11030 = vcmp.lt.s32.totalorder %v10998, 4000
    %vm11031 = vcmp.lt.s32.totalorder %v10999, 4000
    %vm11032 = vcmp.lt.s32.totalorder %v11000, 4000
    %vm11033 = vcmp.lt.s32.totalorder %v11001, 4000
    %vm11034 = vcmp.lt.s32.totalorder %v11002, 4000
    %vm11035 = vcmp.lt.s32.totalorder %v11003, 4000
    %vm11036 = vcmp.lt.s32.totalorder %v11004, 4000
    %vm11037 = vcmp.lt.s32.totalorder %v11005, 4000
    %vm11038 = vcmp.lt.s32.totalorder %v11006, 4000
    %vm11039 = vcmp.lt.s32.totalorder %v11007, 4000
    %vm11040 = vcmp.lt.s32.totalorder %v11008, 4000
    %vm11041 = vcmp.lt.s32.totalorder %v11009, 4000
    %vm11042 = vcmp.lt.s32.totalorder %v11010, 4000
    %vm11043 = vcmp.lt.s32.totalorder %v11011, 4000
    %vm11044 = vcmp.lt.s32.totalorder %v11012, 4000
    %vm11045 = vcmp.lt.s32.totalorder %v11013, 4000
    %vm11046 = vcmp.lt.s32.totalorder %v11014, 4000
    %vm11047 = vcmp.lt.s32.totalorder %v11015, 4000
    %vm11048 = vcmp.lt.s32.totalorder %v11016, 4000
    %vm11049 = vcmp.lt.s32.totalorder %v11017, 4000
    %vm11050 = vcmp.lt.s32.totalorder %v11018, 4000
    %vm11051 = vcmp.lt.s32.totalorder %v11019, 4000
    %vm11052 = vcmp.lt.s32.totalorder %v11020, 4000
    %vm11053 = vcmp.lt.s32.totalorder %v11021, 4000
    %vm11054 = vcmp.lt.s32.totalorder %v11022, 4000
    %vm11055 = vcmp.lt.s32.totalorder %v11023, 4000
    %vm11056 = vcmp.lt.s32.totalorder %v11024, 4000
    %vm11057 = vcmp.lt.s32.totalorder %v11025, 4000
    %vm11058 = vcmp.lt.s32.totalorder %v11026, 4000
    %v11059 = vsel %vm11027, 1, 0
    %v11060 = vsel %vm11028, 1, 0
    %v11061 = vsel %vm11029, 1, 0
    %v11062 = vsel %vm11030, 1, 0
    %v11063 = vsel %vm11031, 1, 0
    %v11064 = vsel %vm11032, 1, 0
    %v11065 = vsel %vm11033, 1, 0
    %v11066 = vsel %vm11034, 1, 0
    %v11067 = vsel %vm11035, 1, 0
    %v11068 = vsel %vm11036, 1, 0
    %v11069 = vsel %vm11037, 1, 0
    %v11070 = vsel %vm11038, 1, 0
    %v11071 = vsel %vm11039, 1, 0
    %v11072 = vsel %vm11040, 1, 0
    %v11073 = vsel %vm11041, 1, 0
    %v11074 = vsel %vm11042, 1, 0
    %v11075 = vsel %vm11043, 1, 0
    %v11076 = vsel %vm11044, 1, 0
    %v11077 = vsel %vm11045, 1, 0
    %v11078 = vsel %vm11046, 1, 0
    %v11079 = vsel %vm11047, 1, 0
    %v11080 = vsel %vm11048, 1, 0
    %v11081 = vsel %vm11049, 1, 0
    %v11082 = vsel %vm11050, 1, 0
    %v11083 = vsel %vm11051, 1, 0
    %v11084 = vsel %vm11052, 1, 0
    %v11085 = vsel %vm11053, 1, 0
    %v11086 = vsel %vm11054, 1, 0
    %v11087 = vsel %vm11055, 1, 0
    %v11088 = vsel %vm11056, 1, 0
    %v11089 = vsel %vm11057, 1, 0
    %v11090 = vsel %vm11058, 1, 0
    %v11091 = vcvt.s32.f32 %v11059
    %v11092 = vcvt.s32.f32 %v11060
    %v11093 = vcvt.s32.f32 %v11061
    %v11094 = vcvt.s32.f32 %v11062
    %v11095 = vcvt.s32.f32 %v11063
    %v11096 = vcvt.s32.f32 %v11064
    %v11097 = vcvt.s32.f32 %v11065
    %v11098 = vcvt.s32.f32 %v11066
    %v11099 = vcvt.s32.f32 %v11067
    %v11100 = vcvt.s32.f32 %v11068
    %v11101 = vcvt.s32.f32 %v11069
    %v11102 = vcvt.s32.f32 %v11070
    %v11103 = vcvt.s32.f32 %v11071
    %v11104 = vcvt.s32.f32 %v11072
    %v11105 = vcvt.s32.f32 %v11073
    %v11106 = vcvt.s32.f32 %v11074
    %v11107 = vcvt.s32.f32 %v11075
    %v11108 = vcvt.s32.f32 %v11076
    %v11109 = vcvt.s32.f32 %v11077
    %v11110 = vcvt.s32.f32 %v11078
    %v11111 = vcvt.s32.f32 %v11079
    %v11112 = vcvt.s32.f32 %v11080
    %v11113 = vcvt.s32.f32 %v11081
    %v11114 = vcvt.s32.f32 %v11082
    %v11115 = vcvt.s32.f32 %v11083
    %v11116 = vcvt.s32.f32 %v11084
    %v11117 = vcvt.s32.f32 %v11085
    %v11118 = vcvt.s32.f32 %v11086
    %v11119 = vcvt.s32.f32 %v11087
    %v11120 = vcvt.s32.f32 %v11088
    %v11121 = vcvt.s32.f32 %v11089
    %v11122 = vcvt.s32.f32 %v11090
    %v11123 = vadd.f32 %v10930, %v10931
    %v11124 = vadd.f32 %v11123, %v10932
    %v11125 = vadd.f32 %v11124, %v10933
    %v11126 = vadd.f32 %v11125, %v10934
    %v11127 = vadd.f32 %v11126, %v10935
    %v11128 = vadd.f32 %v11127, %v10936
    %v11129 = vadd.f32 %v11128, %v10937
    %v11130 = vadd.f32 %v11129, %v10938
    %v11131 = vadd.f32 %v11130, %v10939
    %v11132 = vadd.f32 %v11131, %v10940
    %v11133 = vadd.f32 %v11132, %v10941
    %v11134 = vadd.f32 %v11133, %v10942
    %v11135 = vadd.f32 %v11134, %v10943
    %v11136 = vadd.f32 %v11135, %v10944
    %v11137 = vadd.f32 %v11136, %v10945
    %v11138 = vadd.f32 %v11137, %v10946
    %v11139 = vadd.f32 %v11138, %v10947
    %v11140 = vadd.f32 %v11139, %v10948
    %v11141 = vadd.f32 %v11140, %v10949
    %v11142 = vadd.f32 %v11141, %v10950
    %v11143 = vadd.f32 %v11142, %v10951
    %v11144 = vadd.f32 %v11143, %v10952
    %v11145 = vadd.f32 %v11144, %v10953
    %v11146 = vadd.f32 %v11145, %v10954
    %v11147 = vadd.f32 %v11146, %v10955
    %v11148 = vadd.f32 %v11147, %v10956
    %v11149 = vadd.f32 %v11148, %v10957
    %v11150 = vadd.f32 %v11149, %v10958
    %v11151 = vadd.f32 %v11150, %v10959
    %v11152 = vadd.f32 %v11151, %v10960
    %v11153 = vadd.f32 %v11152, %v10961
    %11154 = vadd.xlane.f32.xlu0 %v11153
    %v11155 = vpop.xlane.xlu0 %11154
    %v11156 = vadd.f32 %v10962, %v10963
    %v11157 = vadd.f32 %v11156, %v10964
    %v11158 = vadd.f32 %v11157, %v10965
    %v11159 = vadd.f32 %v11158, %v10966
    %v11160 = vadd.f32 %v11159, %v10967
    %v11161 = vadd.f32 %v11160, %v10968
    %v11162 = vadd.f32 %v11161, %v10969
    %v11163 = vadd.f32 %v11162, %v10970
    %v11164 = vadd.f32 %v11163, %v10971
    %v11165 = vadd.f32 %v11164, %v10972
    %v11166 = vadd.f32 %v11165, %v10973
    %v11167 = vadd.f32 %v11166, %v10974
    %v11168 = vadd.f32 %v11167, %v10975
    %v11169 = vadd.f32 %v11168, %v10976
    %v11170 = vadd.f32 %v11169, %v10977
    %v11171 = vadd.f32 %v11170, %v10978
    %v11172 = vadd.f32 %v11171, %v10979
    %v11173 = vadd.f32 %v11172, %v10980
    %v11174 = vadd.f32 %v11173, %v10981
    %v11175 = vadd.f32 %v11174, %v10982
    %v11176 = vadd.f32 %v11175, %v10983
    %v11177 = vadd.f32 %v11176, %v10984
    %v11178 = vadd.f32 %v11177, %v10985
    %v11179 = vadd.f32 %v11178, %v10986
    %v11180 = vadd.f32 %v11179, %v10987
    %v11181 = vadd.f32 %v11180, %v10988
    %v11182 = vadd.f32 %v11181, %v10989
    %v11183 = vadd.f32 %v11182, %v10990
    %v11184 = vadd.f32 %v11183, %v10991
    %v11185 = vadd.f32 %v11184, %v10992
    %v11186 = vadd.f32 %v11185, %v10993
    %11187 = vadd.xlane.f32.xlu0 %v11186
    %v11188 = vpop.xlane.xlu0 %11187
    %v11189 = vmul.f32 %v11155, 0.00025
    %v11190 = vmul.f32 %v11188, 0.00025
    %v11191 = vsub.f32 %v10930, %v11189
    %v11192 = vsub.f32 %v10931, %v11189
    %v11193 = vsub.f32 %v10932, %v11189
    %v11194 = vsub.f32 %v10933, %v11189
    %v11195 = vsub.f32 %v10934, %v11189
    %v11196 = vsub.f32 %v10935, %v11189
    %v11197 = vsub.f32 %v10936, %v11189
    %v11198 = vsub.f32 %v10937, %v11189
    %v11199 = vsub.f32 %v10938, %v11189
    %v11200 = vsub.f32 %v10939, %v11189
    %v11201 = vsub.f32 %v10940, %v11189
    %v11202 = vsub.f32 %v10941, %v11189
    %v11203 = vsub.f32 %v10942, %v11189
    %v11204 = vsub.f32 %v10943, %v11189
    %v11205 = vsub.f32 %v10944, %v11189
    %v11206 = vsub.f32 %v10945, %v11189
    %v11207 = vsub.f32 %v10946, %v11189
    %v11208 = vsub.f32 %v10947, %v11189
    %v11209 = vsub.f32 %v10948, %v11189
    %v11210 = vsub.f32 %v10949, %v11189
    %v11211 = vsub.f32 %v10950, %v11189
    %v11212 = vsub.f32 %v10951, %v11189
    %v11213 = vsub.f32 %v10952, %v11189
    %v11214 = vsub.f32 %v10953, %v11189
    %v11215 = vsub.f32 %v10954, %v11189
    %v11216 = vsub.f32 %v10955, %v11189
    %v11217 = vsub.f32 %v10956, %v11189
    %v11218 = vsub.f32 %v10957, %v11189
    %v11219 = vsub.f32 %v10958, %v11189
    %v11220 = vsub.f32 %v10959, %v11189
    %v11221 = vsub.f32 %v10960, %v11189
    %v11222 = vsub.f32 %v10961, %v11189
    %v11223 = vsub.f32 %v10962, %v11190
    %v11224 = vsub.f32 %v10963, %v11190
    %v11225 = vsub.f32 %v10964, %v11190
    %v11226 = vsub.f32 %v10965, %v11190
    %v11227 = vsub.f32 %v10966, %v11190
    %v11228 = vsub.f32 %v10967, %v11190
    %v11229 = vsub.f32 %v10968, %v11190
    %v11230 = vsub.f32 %v10969, %v11190
    %v11231 = vsub.f32 %v10970, %v11190
    %v11232 = vsub.f32 %v10971, %v11190
    %v11233 = vsub.f32 %v10972, %v11190
    %v11234 = vsub.f32 %v10973, %v11190
    %v11235 = vsub.f32 %v10974, %v11190
    %v11236 = vsub.f32 %v10975, %v11190
    %v11237 = vsub.f32 %v10976, %v11190
    %v11238 = vsub.f32 %v10977, %v11190
    %v11239 = vsub.f32 %v10978, %v11190
    %v11240 = vsub.f32 %v10979, %v11190
    %v11241 = vsub.f32 %v10980, %v11190
    %v11242 = vsub.f32 %v10981, %v11190
    %v11243 = vsub.f32 %v10982, %v11190
    %v11244 = vsub.f32 %v10983, %v11190
    %v11245 = vsub.f32 %v10984, %v11190
    %v11246 = vsub.f32 %v10985, %v11190
    %v11247 = vsub.f32 %v10986, %v11190
    %v11248 = vsub.f32 %v10987, %v11190
    %v11249 = vsub.f32 %v10988, %v11190
    %v11250 = vsub.f32 %v10989, %v11190
    %v11251 = vsub.f32 %v10990, %v11190
    %v11252 = vsub.f32 %v10991, %v11190
    %v11253 = vsub.f32 %v10992, %v11190
    %v11254 = vsub.f32 %v10993, %v11190
    %v11255 = vmul.f32 %v11191, %v11091
    %v11256 = vmul.f32 %v11192, %v11092
    %v11257 = vmul.f32 %v11193, %v11093
    %v11258 = vmul.f32 %v11194, %v11094
    %v11259 = vmul.f32 %v11195, %v11095
    %v11260 = vmul.f32 %v11196, %v11096
    %v11261 = vmul.f32 %v11197, %v11097
    %v11262 = vmul.f32 %v11198, %v11098
    %v11263 = vmul.f32 %v11199, %v11099
    %v11264 = vmul.f32 %v11200, %v11100
    %v11265 = vmul.f32 %v11201, %v11101
    %v11266 = vmul.f32 %v11202, %v11102
    %v11267 = vmul.f32 %v11203, %v11103
    %v11268 = vmul.f32 %v11204, %v11104
    %v11269 = vmul.f32 %v11205, %v11105
    %v11270 = vmul.f32 %v11206, %v11106
    %v11271 = vmul.f32 %v11207, %v11107
    %v11272 = vmul.f32 %v11208, %v11108
    %v11273 = vmul.f32 %v11209, %v11109
    %v11274 = vmul.f32 %v11210, %v11110
    %v11275 = vmul.f32 %v11211, %v11111
    %v11276 = vmul.f32 %v11212, %v11112
    %v11277 = vmul.f32 %v11213, %v11113
    %v11278 = vmul.f32 %v11214, %v11114
    %v11279 = vmul.f32 %v11215, %v11115
    %v11280 = vmul.f32 %v11216, %v11116
    %v11281 = vmul.f32 %v11217, %v11117
    %v11282 = vmul.f32 %v11218, %v11118
    %v11283 = vmul.f32 %v11219, %v11119
    %v11284 = vmul.f32 %v11220, %v11120
    %v11285 = vmul.f32 %v11221, %v11121
    %v11286 = vmul.f32 %v11222, %v11122
    %v11287 = vmul.f32 %v11223, %v11091
    %v11288 = vmul.f32 %v11224, %v11092
    %v11289 = vmul.f32 %v11225, %v11093
    %v11290 = vmul.f32 %v11226, %v11094
    %v11291 = vmul.f32 %v11227, %v11095
    %v11292 = vmul.f32 %v11228, %v11096
    %v11293 = vmul.f32 %v11229, %v11097
    %v11294 = vmul.f32 %v11230, %v11098
    %v11295 = vmul.f32 %v11231, %v11099
    %v11296 = vmul.f32 %v11232, %v11100
    %v11297 = vmul.f32 %v11233, %v11101
    %v11298 = vmul.f32 %v11234, %v11102
    %v11299 = vmul.f32 %v11235, %v11103
    %v11300 = vmul.f32 %v11236, %v11104
    %v11301 = vmul.f32 %v11237, %v11105
    %v11302 = vmul.f32 %v11238, %v11106
    %v11303 = vmul.f32 %v11239, %v11107
    %v11304 = vmul.f32 %v11240, %v11108
    %v11305 = vmul.f32 %v11241, %v11109
    %v11306 = vmul.f32 %v11242, %v11110
    %v11307 = vmul.f32 %v11243, %v11111
    %v11308 = vmul.f32 %v11244, %v11112
    %v11309 = vmul.f32 %v11245, %v11113
    %v11310 = vmul.f32 %v11246, %v11114
    %v11311 = vmul.f32 %v11247, %v11115
    %v11312 = vmul.f32 %v11248, %v11116
    %v11313 = vmul.f32 %v11249, %v11117
    %v11314 = vmul.f32 %v11250, %v11118
    %v11315 = vmul.f32 %v11251, %v11119
    %v11316 = vmul.f32 %v11252, %v11120
    %v11317 = vmul.f32 %v11253, %v11121
    %v11318 = vmul.f32 %v11254, %v11122
    %v11319 = vmul.f32 %v11255, %v11255
    %v11320 = vmul.f32 %v11256, %v11256
    %v11321 = vmul.f32 %v11257, %v11257
    %v11322 = vmul.f32 %v11258, %v11258
    %v11323 = vmul.f32 %v11259, %v11259
    %v11324 = vmul.f32 %v11260, %v11260
    %v11325 = vmul.f32 %v11261, %v11261
    %v11326 = vmul.f32 %v11262, %v11262
    %v11327 = vmul.f32 %v11263, %v11263
    %v11328 = vmul.f32 %v11264, %v11264
    %v11329 = vmul.f32 %v11265, %v11265
    %v11330 = vmul.f32 %v11266, %v11266
    %v11331 = vmul.f32 %v11267, %v11267
    %v11332 = vmul.f32 %v11268, %v11268
    %v11333 = vmul.f32 %v11269, %v11269
    %v11334 = vmul.f32 %v11270, %v11270
    %v11335 = vmul.f32 %v11271, %v11271
    %v11336 = vmul.f32 %v11272, %v11272
    %v11337 = vmul.f32 %v11273, %v11273
    %v11338 = vmul.f32 %v11274, %v11274
    %v11339 = vmul.f32 %v11275, %v11275
    %v11340 = vmul.f32 %v11276, %v11276
    %v11341 = vmul.f32 %v11277, %v11277
    %v11342 = vmul.f32 %v11278, %v11278
    %v11343 = vmul.f32 %v11279, %v11279
    %v11344 = vmul.f32 %v11280, %v11280
    %v11345 = vmul.f32 %v11281, %v11281
    %v11346 = vmul.f32 %v11282, %v11282
    %v11347 = vmul.f32 %v11283, %v11283
    %v11348 = vmul.f32 %v11284, %v11284
    %v11349 = vmul.f32 %v11285, %v11285
    %v11350 = vmul.f32 %v11286, %v11286
    %v11351 = vmul.f32 %v11287, %v11287
    %v11352 = vmul.f32 %v11288, %v11288
    %v11353 = vmul.f32 %v11289, %v11289
    %v11354 = vmul.f32 %v11290, %v11290
    %v11355 = vmul.f32 %v11291, %v11291
    %v11356 = vmul.f32 %v11292, %v11292
    %v11357 = vmul.f32 %v11293, %v11293
    %v11358 = vmul.f32 %v11294, %v11294
    %v11359 = vmul.f32 %v11295, %v11295
    %v11360 = vmul.f32 %v11296, %v11296
    %v11361 = vmul.f32 %v11297, %v11297
    %v11362 = vmul.f32 %v11298, %v11298
    %v11363 = vmul.f32 %v11299, %v11299
    %v11364 = vmul.f32 %v11300, %v11300
    %v11365 = vmul.f32 %v11301, %v11301
    %v11366 = vmul.f32 %v11302, %v11302
    %v11367 = vmul.f32 %v11303, %v11303
    %v11368 = vmul.f32 %v11304, %v11304
    %v11369 = vmul.f32 %v11305, %v11305
    %v11370 = vmul.f32 %v11306, %v11306
    %v11371 = vmul.f32 %v11307, %v11307
    %v11372 = vmul.f32 %v11308, %v11308
    %v11373 = vmul.f32 %v11309, %v11309
    %v11374 = vmul.f32 %v11310, %v11310
    %v11375 = vmul.f32 %v11311, %v11311
    %v11376 = vmul.f32 %v11312, %v11312
    %v11377 = vmul.f32 %v11313, %v11313
    %v11378 = vmul.f32 %v11314, %v11314
    %v11379 = vmul.f32 %v11315, %v11315
    %v11380 = vmul.f32 %v11316, %v11316
    %v11381 = vmul.f32 %v11317, %v11317
    %v11382 = vmul.f32 %v11318, %v11318
    %v11383 = vadd.f32 %v11319, %v11320
    %v11384 = vadd.f32 %v11383, %v11321
    %v11385 = vadd.f32 %v11384, %v11322
    %v11386 = vadd.f32 %v11385, %v11323
    %v11387 = vadd.f32 %v11386, %v11324
    %v11388 = vadd.f32 %v11387, %v11325
    %v11389 = vadd.f32 %v11388, %v11326
    %v11390 = vadd.f32 %v11389, %v11327
    %v11391 = vadd.f32 %v11390, %v11328
    %v11392 = vadd.f32 %v11391, %v11329
    %v11393 = vadd.f32 %v11392, %v11330
    %v11394 = vadd.f32 %v11393, %v11331
    %v11395 = vadd.f32 %v11394, %v11332
    %v11396 = vadd.f32 %v11395, %v11333
    %v11397 = vadd.f32 %v11396, %v11334
    %v11398 = vadd.f32 %v11397, %v11335
    %v11399 = vadd.f32 %v11398, %v11336
    %v11400 = vadd.f32 %v11399, %v11337
    %v11401 = vadd.f32 %v11400, %v11338
    %v11402 = vadd.f32 %v11401, %v11339
    %v11403 = vadd.f32 %v11402, %v11340
    %v11404 = vadd.f32 %v11403, %v11341
    %v11405 = vadd.f32 %v11404, %v11342
    %v11406 = vadd.f32 %v11405, %v11343
    %v11407 = vadd.f32 %v11406, %v11344
    %v11408 = vadd.f32 %v11407, %v11345
    %v11409 = vadd.f32 %v11408, %v11346
    %v11410 = vadd.f32 %v11409, %v11347
    %v11411 = vadd.f32 %v11410, %v11348
    %v11412 = vadd.f32 %v11411, %v11349
    %v11413 = vadd.f32 %v11412, %v11350
    %11414 = vadd.xlane.f32.xlu0 %v11413
    %v11415 = vpop.xlane.xlu0 %11414
    %v11416 = vadd.f32 %v11351, %v11352
    %v11417 = vadd.f32 %v11416, %v11353
    %v11418 = vadd.f32 %v11417, %v11354
    %v11419 = vadd.f32 %v11418, %v11355
    %v11420 = vadd.f32 %v11419, %v11356
    %v11421 = vadd.f32 %v11420, %v11357
    %v11422 = vadd.f32 %v11421, %v11358
    %v11423 = vadd.f32 %v11422, %v11359
    %v11424 = vadd.f32 %v11423, %v11360
    %v11425 = vadd.f32 %v11424, %v11361
    %v11426 = vadd.f32 %v11425, %v11362
    %v11427 = vadd.f32 %v11426, %v11363
    %v11428 = vadd.f32 %v11427, %v11364
    %v11429 = vadd.f32 %v11428, %v11365
    %v11430 = vadd.f32 %v11429, %v11366
    %v11431 = vadd.f32 %v11430, %v11367
    %v11432 = vadd.f32 %v11431, %v11368
    %v11433 = vadd.f32 %v11432, %v11369
    %v11434 = vadd.f32 %v11433, %v11370
    %v11435 = vadd.f32 %v11434, %v11371
    %v11436 = vadd.f32 %v11435, %v11372
    %v11437 = vadd.f32 %v11436, %v11373
    %v11438 = vadd.f32 %v11437, %v11374
    %v11439 = vadd.f32 %v11438, %v11375
    %v11440 = vadd.f32 %v11439, %v11376
    %v11441 = vadd.f32 %v11440, %v11377
    %v11442 = vadd.f32 %v11441, %v11378
    %v11443 = vadd.f32 %v11442, %v11379
    %v11444 = vadd.f32 %v11443, %v11380
    %v11445 = vadd.f32 %v11444, %v11381
    %v11446 = vadd.f32 %v11445, %v11382
    %11447 = vadd.xlane.f32.xlu0 %v11446
    %v11448 = vpop.xlane.xlu0 %11447
    %v11449 = vmul.f32 %v11415, 0.00025
    %v11450 = vmul.f32 %v11448, 0.00025
    %v11451 = vadd.f32 %v11449, 1e-05
    %v11452 = vadd.f32 %v11450, 1e-05
    %v11453 = vrsqrt.pop %v11451
    %v11454 = vrsqrt.pop %v11452
    %v11455 = vmul.f32 %v11255, %v11453
    %v11456 = vmul.f32 %v11256, %v11453
    %v11457 = vmul.f32 %v11257, %v11453
    %v11458 = vmul.f32 %v11258, %v11453
    %v11459 = vmul.f32 %v11259, %v11453
    %v11460 = vmul.f32 %v11260, %v11453
    %v11461 = vmul.f32 %v11261, %v11453
    %v11462 = vmul.f32 %v11262, %v11453
    %v11463 = vmul.f32 %v11263, %v11453
    %v11464 = vmul.f32 %v11264, %v11453
    %v11465 = vmul.f32 %v11265, %v11453
    %v11466 = vmul.f32 %v11266, %v11453
    %v11467 = vmul.f32 %v11267, %v11453
    %v11468 = vmul.f32 %v11268, %v11453
    %v11469 = vmul.f32 %v11269, %v11453
    %v11470 = vmul.f32 %v11270, %v11453
    %v11471 = vmul.f32 %v11271, %v11453
    %v11472 = vmul.f32 %v11272, %v11453
    %v11473 = vmul.f32 %v11273, %v11453
    %v11474 = vmul.f32 %v11274, %v11453
    %v11475 = vmul.f32 %v11275, %v11453
    %v11476 = vmul.f32 %v11276, %v11453
    %v11477 = vmul.f32 %v11277, %v11453
    %v11478 = vmul.f32 %v11278, %v11453
    %v11479 = vmul.f32 %v11279, %v11453
    %v11480 = vmul.f32 %v11280, %v11453
    %v11481 = vmul.f32 %v11281, %v11453
    %v11482 = vmul.f32 %v11282, %v11453
    %v11483 = vmul.f32 %v11283, %v11453
    %v11484 = vmul.f32 %v11284, %v11453
    %v11485 = vmul.f32 %v11285, %v11453
    %v11486 = vmul.f32 %v11286, %v11453
    %v11487 = vmul.f32 %v11287, %v11454
    %v11488 = vmul.f32 %v11288, %v11454
    %v11489 = vmul.f32 %v11289, %v11454
    %v11490 = vmul.f32 %v11290, %v11454
    %v11491 = vmul.f32 %v11291, %v11454
    %v11492 = vmul.f32 %v11292, %v11454
    %v11493 = vmul.f32 %v11293, %v11454
    %v11494 = vmul.f32 %v11294, %v11454
    %v11495 = vmul.f32 %v11295, %v11454
    %v11496 = vmul.f32 %v11296, %v11454
    %v11497 = vmul.f32 %v11297, %v11454
    %v11498 = vmul.f32 %v11298, %v11454
    %v11499 = vmul.f32 %v11299, %v11454
    %v11500 = vmul.f32 %v11300, %v11454
    %v11501 = vmul.f32 %v11301, %v11454
    %v11502 = vmul.f32 %v11302, %v11454
    %v11503 = vmul.f32 %v11303, %v11454
    %v11504 = vmul.f32 %v11304, %v11454
    %v11505 = vmul.f32 %v11305, %v11454
    %v11506 = vmul.f32 %v11306, %v11454
    %v11507 = vmul.f32 %v11307, %v11454
    %v11508 = vmul.f32 %v11308, %v11454
    %v11509 = vmul.f32 %v11309, %v11454
    %v11510 = vmul.f32 %v11310, %v11454
    %v11511 = vmul.f32 %v11311, %v11454
    %v11512 = vmul.f32 %v11312, %v11454
    %v11513 = vmul.f32 %v11313, %v11454
    %v11514 = vmul.f32 %v11314, %v11454
    %v11515 = vmul.f32 %v11315, %v11454
    %v11516 = vmul.f32 %v11316, %v11454
    %v11517 = vmul.f32 %v11317, %v11454
    %v11518 = vmul.f32 %v11318, %v11454
    %v11519 = vld [vmem:[#allocation9] sm:$0xff]
    %v11520 = vld [vmem:[#allocation9 + $0x8] sm:$0xff]
    %v11521 = vld [vmem:[#allocation9 + $0x10] sm:$0xff]
    %v11522 = vld [vmem:[#allocation9 + $0x18] sm:$0xff]
    %v11527 = vlaneseq
    %v11528 = vshrl.u32 %v11527, 7
    %v11529 = vsub.s32 0, %v11528
    %v11530 = vrot.slane %v11519, %v11529
    %v11531 = vlaneseq
    %v11532 = vshrl.u32 %v11531, 7
    %v11533 = vsub.s32 1, %v11532
    %v11534 = vrot.slane %v11519, %v11533
    %v11535 = vlaneseq
    %v11536 = vshrl.u32 %v11535, 7
    %v11537 = vsub.s32 2, %v11536
    %v11538 = vrot.slane %v11519, %v11537
    %v11539 = vlaneseq
    %v11540 = vshrl.u32 %v11539, 7
    %v11541 = vsub.s32 3, %v11540
    %v11542 = vrot.slane %v11519, %v11541
    %v11543 = vlaneseq
    %v11544 = vshrl.u32 %v11543, 7
    %v11545 = vsub.s32 4, %v11544
    %v11546 = vrot.slane %v11519, %v11545
    %v11547 = vlaneseq
    %v11548 = vshrl.u32 %v11547, 7
    %v11549 = vsub.s32 5, %v11548
    %v11550 = vrot.slane %v11519, %v11549
    %v11551 = vlaneseq
    %v11552 = vshrl.u32 %v11551, 7
    %v11553 = vsub.s32 6, %v11552
    %v11554 = vrot.slane %v11519, %v11553
    %v11555 = vlaneseq
    %v11556 = vshrl.u32 %v11555, 7
    %v11557 = vsub.s32 7, %v11556
    %v11558 = vrot.slane %v11519, %v11557
    %v11559 = vlaneseq
    %v11560 = vshrl.u32 %v11559, 7
    %v11561 = vsub.s32 0, %v11560
    %v11562 = vrot.slane %v11520, %v11561
    %v11563 = vlaneseq
    %v11564 = vshrl.u32 %v11563, 7
    %v11565 = vsub.s32 1, %v11564
    %v11566 = vrot.slane %v11520, %v11565
    %v11567 = vlaneseq
    %v11568 = vshrl.u32 %v11567, 7
    %v11569 = vsub.s32 2, %v11568
    %v11570 = vrot.slane %v11520, %v11569
    %v11571 = vlaneseq
    %v11572 = vshrl.u32 %v11571, 7
    %v11573 = vsub.s32 3, %v11572
    %v11574 = vrot.slane %v11520, %v11573
    %v11575 = vlaneseq
    %v11576 = vshrl.u32 %v11575, 7
    %v11577 = vsub.s32 4, %v11576
    %v11578 = vrot.slane %v11520, %v11577
    %v11579 = vlaneseq
    %v11580 = vshrl.u32 %v11579, 7
    %v11581 = vsub.s32 5, %v11580
    %v11582 = vrot.slane %v11520, %v11581
    %v11583 = vlaneseq
    %v11584 = vshrl.u32 %v11583, 7
    %v11585 = vsub.s32 6, %v11584
    %v11586 = vrot.slane %v11520, %v11585
    %v11587 = vlaneseq
    %v11588 = vshrl.u32 %v11587, 7
    %v11589 = vsub.s32 7, %v11588
    %v11590 = vrot.slane %v11520, %v11589
    %v11591 = vlaneseq
    %v11592 = vshrl.u32 %v11591, 7
    %v11593 = vsub.s32 0, %v11592
    %v11594 = vrot.slane %v11521, %v11593
    %v11595 = vlaneseq
    %v11596 = vshrl.u32 %v11595, 7
    %v11597 = vsub.s32 1, %v11596
    %v11598 = vrot.slane %v11521, %v11597
    %v11599 = vlaneseq
    %v11600 = vshrl.u32 %v11599, 7
    %v11601 = vsub.s32 2, %v11600
    %v11602 = vrot.slane %v11521, %v11601
    %v11603 = vlaneseq
    %v11604 = vshrl.u32 %v11603, 7
    %v11605 = vsub.s32 3, %v11604
    %v11606 = vrot.slane %v11521, %v11605
    %v11607 = vlaneseq
    %v11608 = vshrl.u32 %v11607, 7
    %v11609 = vsub.s32 4, %v11608
    %v11610 = vrot.slane %v11521, %v11609
    %v11611 = vlaneseq
    %v11612 = vshrl.u32 %v11611, 7
    %v11613 = vsub.s32 5, %v11612
    %v11614 = vrot.slane %v11521, %v11613
    %v11615 = vlaneseq
    %v11616 = vshrl.u32 %v11615, 7
    %v11617 = vsub.s32 6, %v11616
    %v11618 = vrot.slane %v11521, %v11617
    %v11619 = vlaneseq
    %v11620 = vshrl.u32 %v11619, 7
    %v11621 = vsub.s32 7, %v11620
    %v11622 = vrot.slane %v11521, %v11621
    %v11623 = vlaneseq
    %v11624 = vshrl.u32 %v11623, 7
    %v11625 = vsub.s32 0, %v11624
    %v11626 = vrot.slane %v11522, %v11625
    %v11627 = vlaneseq
    %v11628 = vshrl.u32 %v11627, 7
    %v11629 = vsub.s32 1, %v11628
    %v11630 = vrot.slane %v11522, %v11629
    %v11631 = vlaneseq
    %v11632 = vshrl.u32 %v11631, 7
    %v11633 = vsub.s32 2, %v11632
    %v11634 = vrot.slane %v11522, %v11633
    %v11635 = vlaneseq
    %v11636 = vshrl.u32 %v11635, 7
    %v11637 = vsub.s32 3, %v11636
    %v11638 = vrot.slane %v11522, %v11637
    %v11639 = vlaneseq
    %v11640 = vshrl.u32 %v11639, 7
    %v11641 = vsub.s32 4, %v11640
    %v11642 = vrot.slane %v11522, %v11641
    %v11643 = vlaneseq
    %v11644 = vshrl.u32 %v11643, 7
    %v11645 = vsub.s32 5, %v11644
    %v11646 = vrot.slane %v11522, %v11645
    %v11647 = vlaneseq
    %v11648 = vshrl.u32 %v11647, 7
    %v11649 = vsub.s32 6, %v11648
    %v11650 = vrot.slane %v11522, %v11649
    %v11651 = vlaneseq
    %v11652 = vshrl.u32 %v11651, 7
    %v11653 = vsub.s32 7, %v11652
    %v11654 = vrot.slane %v11522, %v11653
    %v11687 = vmul.f32 %v11455, %v11530
    %v11688 = vmul.f32 %v11456, %v11534
    %v11689 = vmul.f32 %v11457, %v11538
    %v11690 = vmul.f32 %v11458, %v11542
    %v11691 = vmul.f32 %v11459, %v11546
    %v11692 = vmul.f32 %v11460, %v11550
    %v11693 = vmul.f32 %v11461, %v11554
    %v11694 = vmul.f32 %v11462, %v11558
    %v11695 = vmul.f32 %v11463, %v11562
    %v11696 = vmul.f32 %v11464, %v11566
    %v11697 = vmul.f32 %v11465, %v11570
    %v11698 = vmul.f32 %v11466, %v11574
    %v11699 = vmul.f32 %v11467, %v11578
    %v11700 = vmul.f32 %v11468, %v11582
    %v11701 = vmul.f32 %v11469, %v11586
    %v11702 = vmul.f32 %v11470, %v11590
    %v11703 = vmul.f32 %v11471, %v11594
    %v11704 = vmul.f32 %v11472, %v11598
    %v11705 = vmul.f32 %v11473, %v11602
    %v11706 = vmul.f32 %v11474, %v11606
    %v11707 = vmul.f32 %v11475, %v11610
    %v11708 = vmul.f32 %v11476, %v11614
    %v11709 = vmul.f32 %v11477, %v11618
    %v11710 = vmul.f32 %v11478, %v11622
    %v11711 = vmul.f32 %v11479, %v11626
    %v11712 = vmul.f32 %v11480, %v11630
    %v11713 = vmul.f32 %v11481, %v11634
    %v11714 = vmul.f32 %v11482, %v11638
    %v11715 = vmul.f32 %v11483, %v11642
    %v11716 = vmul.f32 %v11484, %v11646
    %v11717 = vmul.f32 %v11485, %v11650
    %v11718 = vmul.f32 %v11486, %v11654
    %v11719 = vmul.f32 %v11487, %v11530
    %v11720 = vmul.f32 %v11488, %v11534
    %v11721 = vmul.f32 %v11489, %v11538
    %v11722 = vmul.f32 %v11490, %v11542
    %v11723 = vmul.f32 %v11491, %v11546
    %v11724 = vmul.f32 %v11492, %v11550
    %v11725 = vmul.f32 %v11493, %v11554
    %v11726 = vmul.f32 %v11494, %v11558
    %v11727 = vmul.f32 %v11495, %v11562
    %v11728 = vmul.f32 %v11496, %v11566
    %v11729 = vmul.f32 %v11497, %v11570
    %v11730 = vmul.f32 %v11498, %v11574
    %v11731 = vmul.f32 %v11499, %v11578
    %v11732 = vmul.f32 %v11500, %v11582
    %v11733 = vmul.f32 %v11501, %v11586
    %v11734 = vmul.f32 %v11502, %v11590
    %v11735 = vmul.f32 %v11503, %v11594
    %v11736 = vmul.f32 %v11504, %v11598
    %v11737 = vmul.f32 %v11505, %v11602
    %v11738 = vmul.f32 %v11506, %v11606
    %v11739 = vmul.f32 %v11507, %v11610
    %v11740 = vmul.f32 %v11508, %v11614
    %v11741 = vmul.f32 %v11509, %v11618
    %v11742 = vmul.f32 %v11510, %v11622
    %v11743 = vmul.f32 %v11511, %v11626
    %v11744 = vmul.f32 %v11512, %v11630
    %v11745 = vmul.f32 %v11513, %v11634
    %v11746 = vmul.f32 %v11514, %v11638
    %v11747 = vmul.f32 %v11515, %v11642
    %v11748 = vmul.f32 %v11516, %v11646
    %v11749 = vmul.f32 %v11517, %v11650
    %v11750 = vmul.f32 %v11518, %v11654
    %v11751 = vld [vmem:[#allocation10] sm:$0xff]
    %v11752 = vld [vmem:[#allocation10 + $0x8] sm:$0xff]
    %v11753 = vld [vmem:[#allocation10 + $0x10] sm:$0xff]
    %v11754 = vld [vmem:[#allocation10 + $0x18] sm:$0xff]
    %v11759 = vlaneseq
    %v11760 = vshrl.u32 %v11759, 7
    %v11761 = vsub.s32 0, %v11760
    %v11762 = vrot.slane %v11751, %v11761
    %v11763 = vlaneseq
    %v11764 = vshrl.u32 %v11763, 7
    %v11765 = vsub.s32 1, %v11764
    %v11766 = vrot.slane %v11751, %v11765
    %v11767 = vlaneseq
    %v11768 = vshrl.u32 %v11767, 7
    %v11769 = vsub.s32 2, %v11768
    %v11770 = vrot.slane %v11751, %v11769
    %v11771 = vlaneseq
    %v11772 = vshrl.u32 %v11771, 7
    %v11773 = vsub.s32 3, %v11772
    %v11774 = vrot.slane %v11751, %v11773
    %v11775 = vlaneseq
    %v11776 = vshrl.u32 %v11775, 7
    %v11777 = vsub.s32 4, %v11776
    %v11778 = vrot.slane %v11751, %v11777
    %v11779 = vlaneseq
    %v11780 = vshrl.u32 %v11779, 7
    %v11781 = vsub.s32 5, %v11780
    %v11782 = vrot.slane %v11751, %v11781
    %v11783 = vlaneseq
    %v11784 = vshrl.u32 %v11783, 7
    %v11785 = vsub.s32 6, %v11784
    %v11786 = vrot.slane %v11751, %v11785
    %v11787 = vlaneseq
    %v11788 = vshrl.u32 %v11787, 7
    %v11789 = vsub.s32 7, %v11788
    %v11790 = vrot.slane %v11751, %v11789
    %v11791 = vlaneseq
    %v11792 = vshrl.u32 %v11791, 7
    %v11793 = vsub.s32 0, %v11792
    %v11794 = vrot.slane %v11752, %v11793
    %v11795 = vlaneseq
    %v11796 = vshrl.u32 %v11795, 7
    %v11797 = vsub.s32 1, %v11796
    %v11798 = vrot.slane %v11752, %v11797
    %v11799 = vlaneseq
    %v11800 = vshrl.u32 %v11799, 7
    %v11801 = vsub.s32 2, %v11800
    %v11802 = vrot.slane %v11752, %v11801
    %v11803 = vlaneseq
    %v11804 = vshrl.u32 %v11803, 7
    %v11805 = vsub.s32 3, %v11804
    %v11806 = vrot.slane %v11752, %v11805
    %v11807 = vlaneseq
    %v11808 = vshrl.u32 %v11807, 7
    %v11809 = vsub.s32 4, %v11808
    %v11810 = vrot.slane %v11752, %v11809
    %v11811 = vlaneseq
    %v11812 = vshrl.u32 %v11811, 7
    %v11813 = vsub.s32 5, %v11812
    %v11814 = vrot.slane %v11752, %v11813
    %v11815 = vlaneseq
    %v11816 = vshrl.u32 %v11815, 7
    %v11817 = vsub.s32 6, %v11816
    %v11818 = vrot.slane %v11752, %v11817
    %v11819 = vlaneseq
    %v11820 = vshrl.u32 %v11819, 7
    %v11821 = vsub.s32 7, %v11820
    %v11822 = vrot.slane %v11752, %v11821
    %v11823 = vlaneseq
    %v11824 = vshrl.u32 %v11823, 7
    %v11825 = vsub.s32 0, %v11824
    %v11826 = vrot.slane %v11753, %v11825
    %v11827 = vlaneseq
    %v11828 = vshrl.u32 %v11827, 7
    %v11829 = vsub.s32 1, %v11828
    %v11830 = vrot.slane %v11753, %v11829
    %v11831 = vlaneseq
    %v11832 = vshrl.u32 %v11831, 7
    %v11833 = vsub.s32 2, %v11832
    %v11834 = vrot.slane %v11753, %v11833
    %v11835 = vlaneseq
    %v11836 = vshrl.u32 %v11835, 7
    %v11837 = vsub.s32 3, %v11836
    %v11838 = vrot.slane %v11753, %v11837
    %v11839 = vlaneseq
    %v11840 = vshrl.u32 %v11839, 7
    %v11841 = vsub.s32 4, %v11840
    %v11842 = vrot.slane %v11753, %v11841
    %v11843 = vlaneseq
    %v11844 = vshrl.u32 %v11843, 7
    %v11845 = vsub.s32 5, %v11844
    %v11846 = vrot.slane %v11753, %v11845
    %v11847 = vlaneseq
    %v11848 = vshrl.u32 %v11847, 7
    %v11849 = vsub.s32 6, %v11848
    %v11850 = vrot.slane %v11753, %v11849
    %v11851 = vlaneseq
    %v11852 = vshrl.u32 %v11851, 7
    %v11853 = vsub.s32 7, %v11852
    %v11854 = vrot.slane %v11753, %v11853
    %v11855 = vlaneseq
    %v11856 = vshrl.u32 %v11855, 7
    %v11857 = vsub.s32 0, %v11856
    %v11858 = vrot.slane %v11754, %v11857
    %v11859 = vlaneseq
    %v11860 = vshrl.u32 %v11859, 7
    %v11861 = vsub.s32 1, %v11860
    %v11862 = vrot.slane %v11754, %v11861
    %v11863 = vlaneseq
    %v11864 = vshrl.u32 %v11863, 7
    %v11865 = vsub.s32 2, %v11864
    %v11866 = vrot.slane %v11754, %v11865
    %v11867 = vlaneseq
    %v11868 = vshrl.u32 %v11867, 7
    %v11869 = vsub.s32 3, %v11868
    %v11870 = vrot.slane %v11754, %v11869
    %v11871 = vlaneseq
    %v11872 = vshrl.u32 %v11871, 7
    %v11873 = vsub.s32 4, %v11872
    %v11874 = vrot.slane %v11754, %v11873
    %v11875 = vlaneseq
    %v11876 = vshrl.u32 %v11875, 7
    %v11877 = vsub.s32 5, %v11876
    %v11878 = vrot.slane %v11754, %v11877
    %v11879 = vlaneseq
    %v11880 = vshrl.u32 %v11879, 7
    %v11881 = vsub.s32 6, %v11880
    %v11882 = vrot.slane %v11754, %v11881
    %v11883 = vlaneseq
    %v11884 = vshrl.u32 %v11883, 7
    %v11885 = vsub.s32 7, %v11884
    %v11886 = vrot.slane %v11754, %v11885
    %v11919 = vadd.f32 %v11687, %v11762
    %v11920 = vadd.f32 %v11688, %v11766
    %v11921 = vadd.f32 %v11689, %v11770
    %v11922 = vadd.f32 %v11690, %v11774
    %v11923 = vadd.f32 %v11691, %v11778
    %v11924 = vadd.f32 %v11692, %v11782
    %v11925 = vadd.f32 %v11693, %v11786
    %v11926 = vadd.f32 %v11694, %v11790
    %v11927 = vadd.f32 %v11695, %v11794
    %v11928 = vadd.f32 %v11696, %v11798
    %v11929 = vadd.f32 %v11697, %v11802
    %v11930 = vadd.f32 %v11698, %v11806
    %v11931 = vadd.f32 %v11699, %v11810
    %v11932 = vadd.f32 %v11700, %v11814
    %v11933 = vadd.f32 %v11701, %v11818
    %v11934 = vadd.f32 %v11702, %v11822
    %v11935 = vadd.f32 %v11703, %v11826
    %v11936 = vadd.f32 %v11704, %v11830
    %v11937 = vadd.f32 %v11705, %v11834
    %v11938 = vadd.f32 %v11706, %v11838
    %v11939 = vadd.f32 %v11707, %v11842
    %v11940 = vadd.f32 %v11708, %v11846
    %v11941 = vadd.f32 %v11709, %v11850
    %v11942 = vadd.f32 %v11710, %v11854
    %v11943 = vadd.f32 %v11711, %v11858
    %v11944 = vadd.f32 %v11712, %v11862
    %v11945 = vadd.f32 %v11713, %v11866
    %v11946 = vadd.f32 %v11714, %v11870
    %v11947 = vadd.f32 %v11715, %v11874
    %v11948 = vadd.f32 %v11716, %v11878
    %v11949 = vadd.f32 %v11717, %v11882
    %v11950 = vadd.f32 %v11718, %v11886
    %v11951 = vadd.f32 %v11719, %v11762
    %v11952 = vadd.f32 %v11720, %v11766
    %v11953 = vadd.f32 %v11721, %v11770
    %v11954 = vadd.f32 %v11722, %v11774
    %v11955 = vadd.f32 %v11723, %v11778
    %v11956 = vadd.f32 %v11724, %v11782
    %v11957 = vadd.f32 %v11725, %v11786
    %v11958 = vadd.f32 %v11726, %v11790
    %v11959 = vadd.f32 %v11727, %v11794
    %v11960 = vadd.f32 %v11728, %v11798
    %v11961 = vadd.f32 %v11729, %v11802
    %v11962 = vadd.f32 %v11730, %v11806
    %v11963 = vadd.f32 %v11731, %v11810
    %v11964 = vadd.f32 %v11732, %v11814
    %v11965 = vadd.f32 %v11733, %v11818
    %v11966 = vadd.f32 %v11734, %v11822
    %v11967 = vadd.f32 %v11735, %v11826
    %v11968 = vadd.f32 %v11736, %v11830
    %v11969 = vadd.f32 %v11737, %v11834
    %v11970 = vadd.f32 %v11738, %v11838
    %v11971 = vadd.f32 %v11739, %v11842
    %v11972 = vadd.f32 %v11740, %v11846
    %v11973 = vadd.f32 %v11741, %v11850
    %v11974 = vadd.f32 %v11742, %v11854
    %v11975 = vadd.f32 %v11743, %v11858
    %v11976 = vadd.f32 %v11744, %v11862
    %v11977 = vadd.f32 %v11745, %v11866
    %v11978 = vadd.f32 %v11746, %v11870
    %v11979 = vadd.f32 %v11747, %v11874
    %v11980 = vadd.f32 %v11748, %v11878
    %v11981 = vadd.f32 %v11749, %v11882
    %v11982 = vadd.f32 %v11750, %v11886
    %11983 = vst [vmem:[#allocation12] sm:$0xff] %v11919
    %11984 = vst [vmem:[#allocation12 + $0x8] sm:$0xff] %v11920
    %11985 = vst [vmem:[#allocation12 + $0x10] sm:$0xff] %v11921
    %11986 = vst [vmem:[#allocation12 + $0x18] sm:$0xff] %v11922
    %11987 = vst [vmem:[#allocation12 + $0x20] sm:$0xff] %v11923
    %11988 = vst [vmem:[#allocation12 + $0x28] sm:$0xff] %v11924
    %11989 = vst [vmem:[#allocation12 + $0x30] sm:$0xff] %v11925
    %11990 = vst [vmem:[#allocation12 + $0x38] sm:$0xff] %v11926
    %11991 = vst [vmem:[#allocation12 + $0x40] sm:$0xff] %v11927
    %11992 = vst [vmem:[#allocation12 + $0x48] sm:$0xff] %v11928
    %11993 = vst [vmem:[#allocation12 + $0x50] sm:$0xff] %v11929
    %11994 = vst [vmem:[#allocation12 + $0x58] sm:$0xff] %v11930
    %11995 = vst [vmem:[#allocation12 + $0x60] sm:$0xff] %v11931
    %11996 = vst [vmem:[#allocation12 + $0x68] sm:$0xff] %v11932
    %11997 = vst [vmem:[#allocation12 + $0x70] sm:$0xff] %v11933
    %11998 = vst [vmem:[#allocation12 + $0x78] sm:$0xff] %v11934
    %11999 = vst [vmem:[#allocation12 + $0x80] sm:$0xff] %v11935
    %12000 = vst [vmem:[#allocation12 + $0x88] sm:$0xff] %v11936
    %12001 = vst [vmem:[#allocation12 + $0x90] sm:$0xff] %v11937
    %12002 = vst [vmem:[#allocation12 + $0x98] sm:$0xff] %v11938
    %12003 = vst [vmem:[#allocation12 + $0xa0] sm:$0xff] %v11939
    %12004 = vst [vmem:[#allocation12 + $0xa8] sm:$0xff] %v11940
    %12005 = vst [vmem:[#allocation12 + $0xb0] sm:$0xff] %v11941
    %12006 = vst [vmem:[#allocation12 + $0xb8] sm:$0xff] %v11942
    %12007 = vst [vmem:[#allocation12 + $0xc0] sm:$0xff] %v11943
    %12008 = vst [vmem:[#allocation12 + $0xc8] sm:$0xff] %v11944
    %12009 = vst [vmem:[#allocation12 + $0xd0] sm:$0xff] %v11945
    %12010 = vst [vmem:[#allocation12 + $0xd8] sm:$0xff] %v11946
    %12011 = vst [vmem:[#allocation12 + $0xe0] sm:$0xff] %v11947
    %12012 = vst [vmem:[#allocation12 + $0xe8] sm:$0xff] %v11948
    %12013 = vst [vmem:[#allocation12 + $0xf0] sm:$0xff] %v11949
    %12014 = vst.msk [vmem:[#allocation12 + $0xf8] sm:$0xff] %vm526, %v11950
    %12015 = vst [vmem:[#allocation12 + $0x100] sm:$0xff] %v11951
    %12016 = vst [vmem:[#allocation12 + $0x108] sm:$0xff] %v11952
    %12017 = vst [vmem:[#allocation12 + $0x110] sm:$0xff] %v11953
    %12018 = vst [vmem:[#allocation12 + $0x118] sm:$0xff] %v11954
    %12019 = vst [vmem:[#allocation12 + $0x120] sm:$0xff] %v11955
    %12020 = vst [vmem:[#allocation12 + $0x128] sm:$0xff] %v11956
    %12021 = vst [vmem:[#allocation12 + $0x130] sm:$0xff] %v11957
    %12022 = vst [vmem:[#allocation12 + $0x138] sm:$0xff] %v11958
    %12023 = vst [vmem:[#allocation12 + $0x140] sm:$0xff] %v11959
    %12024 = vst [vmem:[#allocation12 + $0x148] sm:$0xff] %v11960
    %12025 = vst [vmem:[#allocation12 + $0x150] sm:$0xff] %v11961
    %12026 = vst [vmem:[#allocation12 + $0x158] sm:$0xff] %v11962
    %12027 = vst [vmem:[#allocation12 + $0x160] sm:$0xff] %v11963
    %12028 = vst [vmem:[#allocation12 + $0x168] sm:$0xff] %v11964
    %12029 = vst [vmem:[#allocation12 + $0x170] sm:$0xff] %v11965
    %12030 = vst [vmem:[#allocation12 + $0x178] sm:$0xff] %v11966
    %12031 = vst [vmem:[#allocation12 + $0x180] sm:$0xff] %v11967
    %12032 = vst [vmem:[#allocation12 + $0x188] sm:$0xff] %v11968
    %12033 = vst [vmem:[#allocation12 + $0x190] sm:$0xff] %v11969
    %12034 = vst [vmem:[#allocation12 + $0x198] sm:$0xff] %v11970
    %12035 = vst [vmem:[#allocation12 + $0x1a0] sm:$0xff] %v11971
    %12036 = vst [vmem:[#allocation12 + $0x1a8] sm:$0xff] %v11972
    %12037 = vst [vmem:[#allocation12 + $0x1b0] sm:$0xff] %v11973
    %12038 = vst [vmem:[#allocation12 + $0x1b8] sm:$0xff] %v11974
    %12039 = vst [vmem:[#allocation12 + $0x1c0] sm:$0xff] %v11975
    %12040 = vst [vmem:[#allocation12 + $0x1c8] sm:$0xff] %v11976
    %12041 = vst [vmem:[#allocation12 + $0x1d0] sm:$0xff] %v11977
    %12042 = vst [vmem:[#allocation12 + $0x1d8] sm:$0xff] %v11978
    %12043 = vst [vmem:[#allocation12 + $0x1e0] sm:$0xff] %v11979
    %12044 = vst [vmem:[#allocation12 + $0x1e8] sm:$0xff] %v11980
    %12045 = vst [vmem:[#allocation12 + $0x1f0] sm:$0xff] %v11981
    %12046 = vst.msk [vmem:[#allocation12 + $0x1f8] sm:$0xff] %vm526, %v11982
    // Predicated region
    $region34: #{tpu_custom_call.1} parent=1 // pred_check
      _
    $region35: #{tpu_custom_call.1} parent=1 // pred_check_branch
      %12048 = sbr.rel (0) target = $region37
    $region36: #{tpu_custom_call.1} parent=1 // pred_region
      %s12050 = ssub.s32 8192, 8192
      %12051 = vsyncadd [#allocation6], %s12050
      %s12052 = sshll.u32 [#allocation12], 4
      %s12053 = int_to_ptr.vmem [resolvable:$true] %s12052
      %12058 = dma.vmem_to_hbm [thread:$0]  %s12053, 8192, %s4, [#allocation6], 4096, 4096, 256
    $region37: #{tpu_custom_call.1} parent=1 // pred_fallthru
      _
    // Predicated region
    $region38: #{tpu_custom_call.1} parent=1 // pred_check
      _
    $region39: #{tpu_custom_call.1} parent=1 // pred_check_branch
      %12060 = sbr.rel (0) target = $region41
    $region40: #{tpu_custom_call.1} parent=1 // pred_region
      %12061 = dma.done [#allocation6], 8192
    $region41: #{tpu_custom_call.1} parent=1 // pred_fallthru
      _
    %12062 = vsyncpa [#allocation5], 1
    %12063 = vsyncpa [#allocation8], 1
    %12064 = vsyncpa [#allocation11], 1
    %12065 = vsyncpa [#allocation6], 1

</llo_original>
